<compile_context>
chip_gen: v7x
topology: tpu7x:2x2x1
jax: 0.10.0
libtpu: 0.0.40
codegen_flags: <defaults>
</compile_context>

<pallas_src>
import functools
import math

import numpy as np
import jax
import jax.numpy as jnp
from jax import lax
from jax.experimental import pallas as pl
from jax.experimental.pallas import tpu as pltpu

LANES = 128          # TPU lane width: output (phase, channel) columns padded to this
BN_EPS = 1e-5
LEAKY_SLOPE = 0.2


def _round_up(v, m):
    return ((v + m - 1) // m) * m


# ---------------------------------------------------------------------------
# Pallas kernels: (patches @ W) -> [BatchNorm(batch stats)] -> LeakyReLU [-> sigmoid]
# One single-block kernel per layer (BN needs whole-batch statistics and every
# activation here is far below VMEM capacity on v5e/v6e/v7x).
# ---------------------------------------------------------------------------
def _fused_bn_kernel(p_ref, w_ref, g_ref, b_ref, pool_ref, o_ref, *,
                     phases, use_sigmoid):
    # p_ref: (M, Kp) bf16   w_ref: (Kp, 128) bf16
    # g_ref/b_ref: (1, 128) f32 (gamma/beta tiled across phases, zero pad)
    # pool_ref: (128, 128) f32 0/1 matrix pooling per-column sums across phases
    acc = jnp.dot(p_ref[...], w_ref[...],
                  preferred_element_type=jnp.float32)            # (M, 128) f32

    # One-pass batch statistics: per-column sum / sum-of-squares over rows, then
    # pooled per channel (across the s*s packed sub-pixel phases) and broadcast
    # back to all 128 lanes with one tiny matmul.
    colsum = jnp.sum(acc, axis=0, keepdims=True)                 # (1, 128)
    colsq = jnp.sum(acc * acc, axis=0, keepdims=True)            # (1, 128)
    pooled_s = jnp.dot(colsum, pool_ref[...], preferred_element_type=jnp.float32)
    pooled_q = jnp.dot(colsq, pool_ref[...], preferred_element_type=jnp.float32)

    inv_count = 1.0 / float(acc.shape[0] * phases)               # true element count
    mean = pooled_s * inv_count
    var = pooled_q * inv_count - mean * mean                     # biased (train mode)
    scale = g_ref[...] * lax.rsqrt(var + BN_EPS)                 # (1, 128)
    shift = b_ref[...] - mean * scale

    y = acc * scale + shift
    y = jnp.where(y >= 0, y, LEAKY_SLOPE * y)                    # LeakyReLU(0.2)
    if use_sigmoid:
        y = jax.nn.sigmoid(y)
    o_ref[...] = y.astype(o_ref.dtype)                           # full-width store


def _fused_plain_kernel(p_ref, w_ref, o_ref):
    # conv1: no BatchNorm, just matmul + LeakyReLU.
    acc = jnp.dot(p_ref[...], w_ref[...], preferred_element_type=jnp.float32)
    y = jnp.where(acc >= 0, acc, LEAKY_SLOPE * acc)
    o_ref[...] = y.astype(o_ref.dtype)


def _compiler_params():
    return pltpu.CompilerParams(
        dimension_semantics=("arbitrary",),
        vmem_limit_bytes=32 * 1024 * 1024)


def fused_layer_bn(patches, w_mat, gamma_f, beta_f, pool, *,
                   phases, use_sigmoid, out_dtype):
    M, Kp = patches.shape
    kern = functools.partial(_fused_bn_kernel, phases=phases,
                             use_sigmoid=use_sigmoid)
    return pl.pallas_call(
        kern,
        out_shape=jax.ShapeDtypeStruct((M, LANES), out_dtype),
        grid=(1,),
        in_specs=[
            pl.BlockSpec((M, Kp), lambda i: (0, 0)),
            pl.BlockSpec((Kp, LANES), lambda i: (0, 0)),
            pl.BlockSpec((1, LANES), lambda i: (0, 0)),
            pl.BlockSpec((1, LANES), lambda i: (0, 0)),
            pl.BlockSpec((LANES, LANES), lambda i: (0, 0)),
        ],
        out_specs=pl.BlockSpec((M, LANES), lambda i: (0, 0)),
        compiler_params=_compiler_params(),
    )(patches, w_mat, gamma_f, beta_f, pool)


def fused_layer_plain(patches, w_mat, *, out_dtype):
    M, Kp = patches.shape
    return pl.pallas_call(
        _fused_plain_kernel,
        out_shape=jax.ShapeDtypeStruct((M, LANES), out_dtype),
        grid=(1,),
        in_specs=[
            pl.BlockSpec((M, Kp), lambda i: (0, 0)),
            pl.BlockSpec((Kp, LANES), lambda i: (0, 0)),
        ],
        out_specs=pl.BlockSpec((M, LANES), lambda i: (0, 0)),
        compiler_params=_compiler_params(),
    )(patches, w_mat)


# ---------------------------------------------------------------------------
# JAX-side glue inside the forward: patch extraction only.
# ---------------------------------------------------------------------------
def _im2col(x_nhwc, kh, kw, stride, pad_lo, pad_hi, k_pad):
    """Extract (kh,kw) patches -> rows (N*Ho*Wo, k_pad) with (tap, channel) columns."""
    N, H, W, C = x_nhwc.shape
    xp = jnp.pad(x_nhwc, ((0, 0), (pad_lo, pad_hi), (pad_lo, pad_hi), (0, 0)))
    Hp = H + pad_lo + pad_hi
    Wp = W + pad_lo + pad_hi
    Ho = (Hp - kh) // stride + 1
    Wo = (Wp - kw) // stride + 1
    cols = []
    for i in range(kh):
        for j in range(kw):
            cols.append(xp[:, i:i + (Ho - 1) * stride + 1:stride,
                           j:j + (Wo - 1) * stride + 1:stride, :])
    patches = jnp.stack(cols, axis=3).reshape(N * Ho * Wo, kh * kw * C)
    K = kh * kw * C
    if k_pad > K:                                   # bf16 sublane (16) alignment
        patches = jnp.pad(patches, ((0, 0), (0, k_pad - K)))
    return patches, N, Ho, Wo


def _convT_geometry(k, s, p):
    d_hi = (k - 1 - p) // s                 # furthest "earlier" input row used
    d_lo = -((s - 1 + p) // s)              # furthest "later" input row used
    R = d_hi - d_lo + 1                     # stride-1 input window per output block
    return R, max(d_hi, 0), max(-d_lo, 0)   # (window, pad_lo, pad_hi)


# ---------------------------------------------------------------------------
# One-time parameter packing (outside the jitted forward).
# ---------------------------------------------------------------------------
def _conv_weight_matrix(w_oihw):
    """Conv2d weight (Cout, Cin, k, k) -> (round16(k*k*Cin), 128) bf16 matrix
    whose rows follow the (ky, kx, cin) im2col column order."""
    w = np.asarray(w_oihw, np.float32)
    cout, cin, kh, kw = w.shape
    assert cout <= LANES
    K = kh * kw * cin
    Kp = _round_up(K, 16)
    wm = np.zeros((Kp, LANES), np.float32)
    wm[:K, :cout] = np.transpose(w, (2, 3, 1, 0)).reshape(K, cout)
    return jnp.asarray(wm, dtype=jnp.bfloat16)


def _convT_phase_weight_matrix(w_iohw, k, s, p):
    """ConvTranspose2d weight (Cin, Cout, k, k) -> packed sub-pixel-phase matrix.

    out[n, s*oq+py, s*or+px, co] =
        sum_{a,b,ci} x[n, oq-d_hi+a, or-d_hi+b, ci] * W[(a,b,ci), (py,px,co)]
    Rows follow the (a, b, cin) layout of the stride-1 (R,R) im2col window; columns
    are the packed (py, px, co) lanes (s*s*cout <= 128), zero-padded to 128; rows are
    zero-padded to a multiple of 16 (bf16 sublane packing)."""
    w = np.asarray(w_iohw, np.float32)
    cin, cout, kh, kw = w.shape
    assert kh == k and kw == k and s * s * cout <= LANES
    d_hi = (k - 1 - p) // s
    d_lo = -((s - 1 + p) // s)
    R = d_hi - d_lo + 1
    K = R * R * cin
    Kp = _round_up(K, 16)
    wm = np.zeros((R, R, cin, LANES), np.float32)
    for a in range(R):
        for b in range(R):
            for py in range(s):
                for px in range(s):
                    ky = s * (d_hi - a) + py + p
                    kx = s * (d_hi - b) + px + p
                    if 0 <= ky < k and 0 <= kx < k:
                        col0 = (py * s + px) * cout
                        wm[a, b, :, col0:col0 + cout] = w[:, :, ky, kx]
    out = np.zeros((Kp, LANES), np.float32)
    out[:K] = wm.reshape(K, LANES)
    return jnp.asarray(out, dtype=jnp.bfloat16)


def _tile_lanes(v, phases):
    """(C,) f32 -> (1, 128) f32 tiled across the packed sub-pixel phases."""
    vv = np.asarray(v, np.float32)
    c = vv.shape[0]
    out = np.zeros((1, LANES), np.float32)
    for g in range(phases):
        out[0, g * c:(g + 1) * c] = vv
    return jnp.asarray(out)


def _pool_matrix(phases, cout):
    """0/1 matrix: pools per-lane column sums across phases (same channel) and
    broadcasts the pooled value back to every lane of that channel."""
    pc = phases * cout
    P = np.zeros((LANES, LANES), np.float32)
    for i in range(pc):
        for j in range(pc):
            if i % cout == j % cout:
                P[i, j] = 1.0
    return jnp.asarray(P)


def pack_params(raw, *, channel, nfeats, k, s, p):
    """One-time re-layout of PyTorch-layout weights into the prepacked bf16 matmul
    operands + f32 BN vectors the kernels consume (kept out of the jitted forward)."""
    n = nfeats
    packed = {}
    for li in range(1, 5):                                    # conv1..conv4
        packed[f"w{li}"] = _conv_weight_matrix(raw[f"w{li}"])
    for li in range(5, 9):                                    # convT5..convT8
        packed[f"w{li}"] = _convT_phase_weight_matrix(raw[f"w{li}"], k, s, p)
    for li in range(2, 9):                                    # bn2..bn8
        phases = 1 if li <= 4 else s * s
        cout = int(raw[f"g{li}"].shape[0])
        packed[f"g{li}"] = _tile_lanes(raw[f"g{li}"], phases)
        packed[f"b{li}"] = _tile_lanes(raw[f"b{li}"], phases)
        packed[f"p{li}"] = _pool_matrix(phases, cout)
    return packed


# ---------------------------------------------------------------------------
# Full forward pass (matches PyTorch Net.forward).
# ---------------------------------------------------------------------------
def net_forward(packed, x_nchw, *, channel, nfeats, k, s, p):
    assert k - 2 * p == s, "sub-pixel phase decomposition assumes k - 2p == s"
    n = nfeats
    x = jnp.transpose(x_nchw, (0, 2, 3, 1)).astype(jnp.bfloat16)   # NCHW -> NHWC

    # ---- encoder: Conv2d(k,s,p,bias=False) [+ BN] + LeakyReLU ----
    conv_cfg = [(channel, n, False), (n, 2 * n, True),
                (2 * n, 4 * n, True), (4 * n, 8 * n, True)]
    for li, (cin, cout, use_bn) in enumerate(conv_cfg, start=1):
        Kp = _round_up(k * k * cin, 16)
        patches, N, Ho, Wo = _im2col(x, k, k, s, p, p, Kp)
        if use_bn:
            rows = fused_layer_bn(patches, packed[f"w{li}"], packed[f"g{li}"],
                                  packed[f"b{li}"], packed[f"p{li}"],
                                  phases=1, use_sigmoid=False,
                                  out_dtype=jnp.bfloat16)
        else:
            rows = fused_layer_plain(patches, packed[f"w{li}"],
                                     out_dtype=jnp.bfloat16)
        x = rows.reshape(N, Ho, Wo, LANES)[..., :cout]

    # ---- decoder: ConvTranspose2d(k,s,p,bias=False) + BN + LeakyReLU [+ sigmoid] ----
    R, pad_lo, pad_hi = _convT_geometry(k, s, p)
    convT_cfg = [(8 * n, 4 * n, False), (4 * n, 2 * n, False),
                 (2 * n, n, False), (n, 1, True)]
    for idx, (cin, cout, use_sig) in enumerate(convT_cfg):
        li = idx + 5
        Kp = _round_up(R * R * cin, 16)
        patches, N, Ho, Wo = _im2col(x, R, R, 1, pad_lo, pad_hi, Kp)
        out_dtype = jnp.float32 if use_sig else jnp.bfloat16
        rows = fused_layer_bn(patches, packed[f"w{li}"], packed[f"g{li}"],
                              packed[f"b{li}"], packed[f"p{li}"],
                              phases=s * s, use_sigmoid=use_sig,
                              out_dtype=out_dtype)
        y = rows[:, :s * s * cout].reshape(N, Ho, Wo, s, s, cout)
        x = jnp.transpose(y, (0, 1, 3, 2, 4, 5)).reshape(N, Ho * s, Wo * s, cout)

    return jnp.transpose(x, (0, 3, 1, 2))                           # NHWC -> NCHW


# ---------------------------------------------------------------------------
# Pure-JAX fp32 reference (for the numerical check in __main__).
# ---------------------------------------------------------------------------
def ref_forward(raw, x_nchw, *, k, s, p):
    x = jnp.transpose(x_nchw, (0, 2, 3, 1)).astype(jnp.float32)

    def conv(h, w_oihw):
        return lax.conv_general_dilated(
            h, jnp.transpose(w_oihw, (2, 3, 1, 0)), (s, s), [(p, p), (p, p)],
            dimension_numbers=("NHWC", "HWIO", "NHWC"),
            precision=lax.Precision.HIGHEST)

    def convT(h, w_iohw):
        w = jnp.transpose(jnp.flip(w_iohw, (2, 3)), (2, 3, 0, 1))
        return lax.conv_general_dilated(
            h, w, (1, 1), [(k - 1 - p, k - 1 - p)] * 2, lhs_dilation=(s, s),
            dimension_numbers=("NHWC", "HWIO", "NHWC"),
            precision=lax.Precision.HIGHEST)

    def bn(h, g, b):
        mean = jnp.mean(h, axis=(0, 1, 2))
        var = jnp.var(h, axis=(0, 1, 2))
        return (h - mean) * lax.rsqrt(var + BN_EPS) * g + b

    def lrelu(h):
        return jnp.where(h >= 0, h, LEAKY_SLOPE * h)

    x = lrelu(conv(x, raw["w1"]))
    for li in range(2, 5):
        x = lrelu(bn(conv(x, raw[f"w{li}"]), raw[f"g{li}"], raw[f"b{li}"]))
    for li in range(5, 9):
        x = lrelu(bn(convT(x, raw[f"w{li}"]), raw[f"g{li}"], raw[f"b{li}"]))
    x = jax.nn.sigmoid(x)
    return jnp.transpose(x, (0, 3, 1, 2))


# ---------------------------------------------------------------------------
# Deterministic synthetic parameters in the PyTorch layout.
# ---------------------------------------------------------------------------
def init_params(key, channel, nfeats, k):
    def u(kk, shape, fan_in):
        bound = 1.0 / math.sqrt(fan_in)
        return jax.random.uniform(kk, shape, jnp.float32, -bound, bound)

    n = nfeats
    kw_, kg_, kb_ = jax.random.split(key, 3)
    wkeys = jax.random.split(kw_, 8)
    gkeys = jax.random.split(kg_, 7)
    bkeys = jax.random.split(kb_, 7)

    params = {}
    conv_shapes = [(n, channel), (2 * n, n), (4 * n, 2 * n), (8 * n, 4 * n)]
    convT_shapes = [(8 * n, 4 * n), (4 * n, 2 * n), (2 * n, n), (n, 1)]
    for i, (co, ci) in enumerate(conv_shapes):
        params[f"w{i + 1}"] = u(wkeys[i], (co, ci, k, k), ci * k * k)
    for i, (ci, co) in enumerate(convT_shapes):
        params[f"w{i + 5}"] = u(wkeys[i + 4], (ci, co, k, k), co * k * k)
    bn_channels = [2 * n, 4 * n, 8 * n, 4 * n, 2 * n, n, 1]       # bn2 .. bn8
    for j, (li, c) in enumerate(zip(range(2, 9), bn_channels)):
        params[f"g{li}"] = jax.random.uniform(gkeys[j], (c,), jnp.float32, 0.5, 1.5)
        params[f"b{li}"] = jax.random.uniform(bkeys[j], (c,), jnp.float32, -0.3, 0.3)
    return params


# ---------------------------------------------------------------------------
if __name__ == "__main__":
    # Net(channel=3, nfeats=8, kernel_size=4, stride=2, padding=1)
    channel, nfeats, k, s, p = 3, 8, 4, 2, 1
    batch, spatial = 2, 32

    key = jax.random.PRNGKey(0)
    pkey, xkey = jax.random.split(key)
    raw = init_params(pkey, channel, nfeats, k)
    packed = pack_params(raw, channel=channel, nfeats=nfeats, k=k, s=s, p=p)
    x = jax.random.normal(xkey, (batch, channel, spatial, spatial), jnp.float32)

    fwd = jax.jit(functools.partial(net_forward, channel=channel, nfeats=nfeats,
                                    k=k, s=s, p=p))
    out = fwd(packed, x)
    jax.block_until_ready(out)

    assert out.shape == (batch, 1, spatial, spatial), out.shape
    assert bool(jnp.all(jnp.isfinite(out)))

    # Numerical check vs. a pure-JAX fp32 reference (bf16 MXU operands -> loose tol).
    ref = jax.jit(functools.partial(ref_forward, k=k, s=s, p=p))(raw, x)
    max_diff = float(jnp.max(jnp.abs(out.astype(jnp.float32) - ref)))
    assert max_diff < 0.1, f"mismatch vs fp32 reference: {max_diff}"

    print("KERNEL_OK")
</pallas_src>

<mosaic_0001>
module attributes {stable_mosaic.version = 11 : i64} {
  func.func @_fused_plain_kernel(%arg0: i32, %arg1: memref<512x48xbf16, #tpu.memory_space<vmem>>, %arg2: memref<48x128xbf16, #tpu.memory_space<vmem>>, %arg3: memref<512x128xbf16, #tpu.memory_space<vmem>>) attributes {dimension_semantics = [#tpu.dimension_semantics<arbitrary>], iteration_bounds = array<i64: 1>, scalar_prefetch = 0 : i64, scratch_operands = 0 : i64, tpu.core_type = #tpu.core_type<tc>, window_params = [{pipeline_mode = #tpu.pipeline_mode<synchronous>, transform_indices = @transform_0, window_bounds = array<i64: 512, 48>}, {pipeline_mode = #tpu.pipeline_mode<synchronous>, transform_indices = @transform_1, window_bounds = array<i64: 48, 128>}, {pipeline_mode = #tpu.pipeline_mode<synchronous>, transform_indices = @transform_2, window_bounds = array<i64: 512, 128>}]} {
    %c0 = arith.constant 0 : index
    %c0_0 = arith.constant 0 : index
    %0 = vector.load %arg1[%c0, %c0_0] : memref<512x48xbf16, #tpu.memory_space<vmem>>, vector<512x48xbf16>
    %c0_1 = arith.constant 0 : index
    %c0_2 = arith.constant 0 : index
    %1 = vector.load %arg2[%c0_1, %c0_2] : memref<48x128xbf16, #tpu.memory_space<vmem>>, vector<48x128xbf16>
    %cst = arith.constant dense<0.000000e+00> : vector<512x128xf32>
    %2 = tpu.matmul %0, %1, %cst {dimension_numbers = #tpu.dot_dimension_numbers<[1], [0], [0], [1], [0, 0, 1, 1], [], []>} : vector<512x48xbf16>, vector<48x128xbf16>, vector<512x128xf32> -> vector<512x128xf32>
    %cst_3 = arith.constant 0.000000e+00 : f32
    %3 = vector.broadcast %cst_3 : f32 to vector<512x128xf32>
    %4 = arith.cmpf oge, %2, %3 : vector<512x128xf32>
    %cst_4 = arith.constant 2.000000e-01 : f32
    %5 = vector.broadcast %cst_4 : f32 to vector<512x128xf32>
    %6 = arith.mulf %5, %2 : vector<512x128xf32>
    %7 = arith.select %4, %2, %6 : vector<512x128xi1>, vector<512x128xf32>
    %8 = arith.truncf %7 : vector<512x128xf32> to vector<512x128xbf16>
    %c0_5 = arith.constant 0 : index
    %c0_6 = arith.constant 0 : index
    %9 = vector.load %arg3[%c0_5, %c0_6] : memref<512x128xbf16, #tpu.memory_space<vmem>>, vector<512x128xbf16>
    tpu.vector_store %arg3[%c0_5, %c0_6], %8 {strides = array<i32>} : memref<512x128xbf16, #tpu.memory_space<vmem>>, vector<512x128xbf16>,
    return
  }
  func.func @transform_0(%arg0: i32) -> (i32, i32) {
    %c0_i32 = arith.constant 0 : i32
    %c0_i32_0 = arith.constant 0 : i32
    %c0_i32_1 = arith.constant 0 : i32
    return %c0_i32, %c0_i32_0 : i32, i32
  }
  func.func @transform_1(%arg0: i32) -> (i32, i32) {
    %c0_i32 = arith.constant 0 : i32
    %c0_i32_0 = arith.constant 0 : i32
    %c0_i32_1 = arith.constant 0 : i32
    return %c0_i32, %c0_i32_0 : i32, i32
  }
  func.func @transform_2(%arg0: i32) -> (i32, i32) {
    %c0_i32 = arith.constant 0 : i32
    %c0_i32_0 = arith.constant 0 : i32
    %c0_i32_1 = arith.constant 0 : i32
    return %c0_i32, %c0_i32_0 : i32, i32
  }
}

module attributes {stable_mosaic.version = 11 : i64} {
  func.func @_fused_bn_kernel(%arg0: i32, %arg1: memref<128x128xbf16, #tpu.memory_space<vmem>>, %arg2: memref<128x128xbf16, #tpu.memory_space<vmem>>, %arg3: memref<1x128xf32, #tpu.memory_space<vmem>>, %arg4: memref<1x128xf32, #tpu.memory_space<vmem>>, %arg5: memref<128x128xf32, #tpu.memory_space<vmem>>, %arg6: memref<128x128xbf16, #tpu.memory_space<vmem>>) attributes {dimension_semantics = [#tpu.dimension_semantics<arbitrary>], iteration_bounds = array<i64: 1>, scalar_prefetch = 0 : i64, scratch_operands = 0 : i64, tpu.core_type = #tpu.core_type<tc>, window_params = [{pipeline_mode = #tpu.pipeline_mode<synchronous>, transform_indices = @transform_0, window_bounds = array<i64: 128, 128>}, {pipeline_mode = #tpu.pipeline_mode<synchronous>, transform_indices = @transform_1, window_bounds = array<i64: 128, 128>}, {pipeline_mode = #tpu.pipeline_mode<synchronous>, transform_indices = @transform_2, window_bounds = array<i64: 1, 128>}, {pipeline_mode = #tpu.pipeline_mode<synchronous>, transform_indices = @transform_3, window_bounds = array<i64: 1, 128>}, {pipeline_mode = #tpu.pipeline_mode<synchronous>, transform_indices = @transform_4, window_bounds = array<i64: 128, 128>}, {pipeline_mode = #tpu.pipeline_mode<synchronous>, transform_indices = @transform_5, window_bounds = array<i64: 128, 128>}]} {
    %c0 = arith.constant 0 : index
    %c0_0 = arith.constant 0 : index
    %0 = vector.load %arg1[%c0, %c0_0] : memref<128x128xbf16, #tpu.memory_space<vmem>>, vector<128x128xbf16>
    %c0_1 = arith.constant 0 : index
    %c0_2 = arith.constant 0 : index
    %1 = vector.load %arg2[%c0_1, %c0_2] : memref<128x128xbf16, #tpu.memory_space<vmem>>, vector<128x128xbf16>
    %cst = arith.constant dense<0.000000e+00> : vector<128x128xf32>
    %2 = tpu.matmul %0, %1, %cst {dimension_numbers = #tpu.dot_dimension_numbers<[1], [0], [0], [1], [0, 0, 1, 1], [], []>} : vector<128x128xbf16>, vector<128x128xbf16>, vector<128x128xf32> -> vector<128x128xf32>
    %cst_3 = arith.constant dense<0.000000e+00> : vector<128xf32>
    %3 = vector.multi_reduction <add>, %2, %cst_3 [0] : vector<128x128xf32> to vector<128xf32>
    %4 = vector.shape_cast %3 : vector<128xf32> to vector<1x128xf32>
    %5 = arith.mulf %2, %2 : vector<128x128xf32>
    %cst_4 = arith.constant dense<0.000000e+00> : vector<128xf32>
    %6 = vector.multi_reduction <add>, %5, %cst_4 [0] : vector<128x128xf32> to vector<128xf32>
    %7 = vector.shape_cast %6 : vector<128xf32> to vector<1x128xf32>
    %c0_5 = arith.constant 0 : index
    %c0_6 = arith.constant 0 : index
    %8 = vector.load %arg5[%c0_5, %c0_6] : memref<128x128xf32, #tpu.memory_space<vmem>>, vector<128x128xf32>
    %cst_7 = arith.constant dense<0.000000e+00> : vector<1x128xf32>
    %9 = tpu.matmul %4, %8, %cst_7 {dimension_numbers = #tpu.dot_dimension_numbers<[1], [0], [0], [1], [0, 0, 1, 1], [], []>} : vector<1x128xf32>, vector<128x128xf32>, vector<1x128xf32> -> vector<1x128xf32>
    %c0_8 = arith.constant 0 : index
    %c0_9 = arith.constant 0 : index
    %10 = vector.load %arg5[%c0_8, %c0_9] : memref<128x128xf32, #tpu.memory_space<vmem>>, vector<128x128xf32>
    %cst_10 = arith.constant dense<0.000000e+00> : vector<1x128xf32>
    %11 = tpu.matmul %7, %10, %cst_10 {dimension_numbers = #tpu.dot_dimension_numbers<[1], [0], [0], [1], [0, 0, 1, 1], [], []>} : vector<1x128xf32>, vector<128x128xf32>, vector<1x128xf32> -> vector<1x128xf32>
    %cst_11 = arith.constant 7.812500e-03 : f32
    %12 = vector.broadcast %cst_11 : f32 to vector<1x128xf32>
    %13 = arith.mulf %9, %12 : vector<1x128xf32>
    %cst_12 = arith.constant 7.812500e-03 : f32
    %14 = vector.broadcast %cst_12 : f32 to vector<1x128xf32>
    %15 = arith.mulf %11, %14 : vector<1x128xf32>
    %16 = arith.mulf %13, %13 : vector<1x128xf32>
    %17 = arith.subf %15, %16 : vector<1x128xf32>
    %c0_13 = arith.constant 0 : index
    %c0_14 = arith.constant 0 : index
    %18 = vector.load %arg3[%c0_13, %c0_14] : memref<1x128xf32, #tpu.memory_space<vmem>>, vector<1x128xf32>
    %cst_15 = arith.constant 9.99999974E-6 : f32
    %19 = vector.broadcast %cst_15 : f32 to vector<1x128xf32>
    %20 = arith.addf %17, %19 : vector<1x128xf32>
    %21 = math.rsqrt %20 : vector<1x128xf32>
    %22 = arith.mulf %18, %21 : vector<1x128xf32>
    %c0_16 = arith.constant 0 : index
    %c0_17 = arith.constant 0 : index
    %23 = vector.load %arg4[%c0_16, %c0_17] : memref<1x128xf32, #tpu.memory_space<vmem>>, vector<1x128xf32>
    %24 = arith.mulf %13, %22 : vector<1x128xf32>
    %25 = arith.subf %23, %24 : vector<1x128xf32>
    %26 = vector.broadcast %22 : vector<1x128xf32> to vector<128x128xf32>
    %27 = arith.mulf %2, %26 : vector<128x128xf32>
    %28 = vector.broadcast %25 : vector<1x128xf32> to vector<128x128xf32>
    %29 = arith.addf %27, %28 : vector<128x128xf32>
    %cst_18 = arith.constant 0.000000e+00 : f32
    %30 = vector.broadcast %cst_18 : f32 to vector<128x128xf32>
    %31 = arith.cmpf oge, %29, %30 : vector<128x128xf32>
    %cst_19 = arith.constant 2.000000e-01 : f32
    %32 = vector.broadcast %cst_19 : f32 to vector<128x128xf32>
    %33 = arith.mulf %32, %29 : vector<128x128xf32>
    %34 = arith.select %31, %29, %33 : vector<128x128xi1>, vector<128x128xf32>
    %35 = arith.truncf %34 : vector<128x128xf32> to vector<128x128xbf16>
    %c0_20 = arith.constant 0 : index
    %c0_21 = arith.constant 0 : index
    %36 = vector.load %arg6[%c0_20, %c0_21] : memref<128x128xbf16, #tpu.memory_space<vmem>>, vector<128x128xbf16>
    tpu.vector_store %arg6[%c0_20, %c0_21], %35 {strides = array<i32>} : memref<128x128xbf16, #tpu.memory_space<vmem>>, vector<128x128xbf16>,
    return
  }
  func.func @transform_0(%arg0: i32) -> (i32, i32) {
    %c0_i32 = arith.constant 0 : i32
    %c0_i32_0 = arith.constant 0 : i32
    %c0_i32_1 = arith.constant 0 : i32
    return %c0_i32, %c0_i32_0 : i32, i32
  }
  func.func @transform_1(%arg0: i32) -> (i32, i32) {
    %c0_i32 = arith.constant 0 : i32
    %c0_i32_0 = arith.constant 0 : i32
    %c0_i32_1 = arith.constant 0 : i32
    return %c0_i32, %c0_i32_0 : i32, i32
  }
  func.func @transform_2(%arg0: i32) -> (i32, i32) {
    %c0_i32 = arith.constant 0 : i32
    %c0_i32_0 = arith.constant 0 : i32
    %c0_i32_1 = arith.constant 0 : i32
    return %c0_i32, %c0_i32_0 : i32, i32
  }
  func.func @transform_3(%arg0: i32) -> (i32, i32) {
    %c0_i32 = arith.constant 0 : i32
    %c0_i32_0 = arith.constant 0 : i32
    %c0_i32_1 = arith.constant 0 : i32
    return %c0_i32, %c0_i32_0 : i32, i32
  }
  func.func @transform_4(%arg0: i32) -> (i32, i32) {
    %c0_i32 = arith.constant 0 : i32
    %c0_i32_0 = arith.constant 0 : i32
    %c0_i32_1 = arith.constant 0 : i32
    return %c0_i32, %c0_i32_0 : i32, i32
  }
  func.func @transform_5(%arg0: i32) -> (i32, i32) {
    %c0_i32 = arith.constant 0 : i32
    %c0_i32_0 = arith.constant 0 : i32
    %c0_i32_1 = arith.constant 0 : i32
    return %c0_i32, %c0_i32_0 : i32, i32
  }
}

module attributes {stable_mosaic.version = 11 : i64} {
  func.func @_fused_bn_kernel(%arg0: i32, %arg1: memref<32x256xbf16, #tpu.memory_space<vmem>>, %arg2: memref<256x128xbf16, #tpu.memory_space<vmem>>, %arg3: memref<1x128xf32, #tpu.memory_space<vmem>>, %arg4: memref<1x128xf32, #tpu.memory_space<vmem>>, %arg5: memref<128x128xf32, #tpu.memory_space<vmem>>, %arg6: memref<32x128xbf16, #tpu.memory_space<vmem>>) attributes {dimension_semantics = [#tpu.dimension_semantics<arbitrary>], iteration_bounds = array<i64: 1>, scalar_prefetch = 0 : i64, scratch_operands = 0 : i64, tpu.core_type = #tpu.core_type<tc>, window_params = [{pipeline_mode = #tpu.pipeline_mode<synchronous>, transform_indices = @transform_0, window_bounds = array<i64: 32, 256>}, {pipeline_mode = #tpu.pipeline_mode<synchronous>, transform_indices = @transform_1, window_bounds = array<i64: 256, 128>}, {pipeline_mode = #tpu.pipeline_mode<synchronous>, transform_indices = @transform_2, window_bounds = array<i64: 1, 128>}, {pipeline_mode = #tpu.pipeline_mode<synchronous>, transform_indices = @transform_3, window_bounds = array<i64: 1, 128>}, {pipeline_mode = #tpu.pipeline_mode<synchronous>, transform_indices = @transform_4, window_bounds = array<i64: 128, 128>}, {pipeline_mode = #tpu.pipeline_mode<synchronous>, transform_indices = @transform_5, window_bounds = array<i64: 32, 128>}]} {
    %c0 = arith.constant 0 : index
    %c0_0 = arith.constant 0 : index
    %0 = vector.load %arg1[%c0, %c0_0] : memref<32x256xbf16, #tpu.memory_space<vmem>>, vector<32x256xbf16>
    %c0_1 = arith.constant 0 : index
    %c0_2 = arith.constant 0 : index
    %1 = vector.load %arg2[%c0_1, %c0_2] : memref<256x128xbf16, #tpu.memory_space<vmem>>, vector<256x128xbf16>
    %cst = arith.constant dense<0.000000e+00> : vector<32x128xf32>
    %2 = tpu.matmul %0, %1, %cst {dimension_numbers = #tpu.dot_dimension_numbers<[1], [0], [0], [1], [0, 0, 1, 1], [], []>} : vector<32x256xbf16>, vector<256x128xbf16>, vector<32x128xf32> -> vector<32x128xf32>
    %cst_3 = arith.constant dense<0.000000e+00> : vector<128xf32>
    %3 = vector.multi_reduction <add>, %2, %cst_3 [0] : vector<32x128xf32> to vector<128xf32>
    %4 = vector.shape_cast %3 : vector<128xf32> to vector<1x128xf32>
    %5 = arith.mulf %2, %2 : vector<32x128xf32>
    %cst_4 = arith.constant dense<0.000000e+00> : vector<128xf32>
    %6 = vector.multi_reduction <add>, %5, %cst_4 [0] : vector<32x128xf32> to vector<128xf32>
    %7 = vector.shape_cast %6 : vector<128xf32> to vector<1x128xf32>
    %c0_5 = arith.constant 0 : index
    %c0_6 = arith.constant 0 : index
    %8 = vector.load %arg5[%c0_5, %c0_6] : memref<128x128xf32, #tpu.memory_space<vmem>>, vector<128x128xf32>
    %cst_7 = arith.constant dense<0.000000e+00> : vector<1x128xf32>
    %9 = tpu.matmul %4, %8, %cst_7 {dimension_numbers = #tpu.dot_dimension_numbers<[1], [0], [0], [1], [0, 0, 1, 1], [], []>} : vector<1x128xf32>, vector<128x128xf32>, vector<1x128xf32> -> vector<1x128xf32>
    %c0_8 = arith.constant 0 : index
    %c0_9 = arith.constant 0 : index
    %10 = vector.load %arg5[%c0_8, %c0_9] : memref<128x128xf32, #tpu.memory_space<vmem>>, vector<128x128xf32>
    %cst_10 = arith.constant dense<0.000000e+00> : vector<1x128xf32>
    %11 = tpu.matmul %7, %10, %cst_10 {dimension_numbers = #tpu.dot_dimension_numbers<[1], [0], [0], [1], [0, 0, 1, 1], [], []>} : vector<1x128xf32>, vector<128x128xf32>, vector<1x128xf32> -> vector<1x128xf32>
    %cst_11 = arith.constant 3.125000e-02 : f32
    %12 = vector.broadcast %cst_11 : f32 to vector<1x128xf32>
    %13 = arith.mulf %9, %12 : vector<1x128xf32>
    %cst_12 = arith.constant 3.125000e-02 : f32
    %14 = vector.broadcast %cst_12 : f32 to vector<1x128xf32>
    %15 = arith.mulf %11, %14 : vector<1x128xf32>
    %16 = arith.mulf %13, %13 : vector<1x128xf32>
    %17 = arith.subf %15, %16 : vector<1x128xf32>
    %c0_13 = arith.constant 0 : index
    %c0_14 = arith.constant 0 : index
    %18 = vector.load %arg3[%c0_13, %c0_14] : memref<1x128xf32, #tpu.memory_space<vmem>>, vector<1x128xf32>
    %cst_15 = arith.constant 9.99999974E-6 : f32
    %19 = vector.broadcast %cst_15 : f32 to vector<1x128xf32>
    %20 = arith.addf %17, %19 : vector<1x128xf32>
    %21 = math.rsqrt %20 : vector<1x128xf32>
    %22 = arith.mulf %18, %21 : vector<1x128xf32>
    %c0_16 = arith.constant 0 : index
    %c0_17 = arith.constant 0 : index
    %23 = vector.load %arg4[%c0_16, %c0_17] : memref<1x128xf32, #tpu.memory_space<vmem>>, vector<1x128xf32>
    %24 = arith.mulf %13, %22 : vector<1x128xf32>
    %25 = arith.subf %23, %24 : vector<1x128xf32>
    %26 = vector.broadcast %22 : vector<1x128xf32> to vector<32x128xf32>
    %27 = arith.mulf %2, %26 : vector<32x128xf32>
    %28 = vector.broadcast %25 : vector<1x128xf32> to vector<32x128xf32>
    %29 = arith.addf %27, %28 : vector<32x128xf32>
    %cst_18 = arith.constant 0.000000e+00 : f32
    %30 = vector.broadcast %cst_18 : f32 to vector<32x128xf32>
    %31 = arith.cmpf oge, %29, %30 : vector<32x128xf32>
    %cst_19 = arith.constant 2.000000e-01 : f32
    %32 = vector.broadcast %cst_19 : f32 to vector<32x128xf32>
    %33 = arith.mulf %32, %29 : vector<32x128xf32>
    %34 = arith.select %31, %29, %33 : vector<32x128xi1>, vector<32x128xf32>
    %35 = arith.truncf %34 : vector<32x128xf32> to vector<32x128xbf16>
    %c0_20 = arith.constant 0 : index
    %c0_21 = arith.constant 0 : index
    %36 = vector.load %arg6[%c0_20, %c0_21] : memref<32x128xbf16, #tpu.memory_space<vmem>>, vector<32x128xbf16>
    tpu.vector_store %arg6[%c0_20, %c0_21], %35 {strides = array<i32>} : memref<32x128xbf16, #tpu.memory_space<vmem>>, vector<32x128xbf16>,
    return
  }
  func.func @transform_0(%arg0: i32) -> (i32, i32) {
    %c0_i32 = arith.constant 0 : i32
    %c0_i32_0 = arith.constant 0 : i32
    %c0_i32_1 = arith.constant 0 : i32
    return %c0_i32, %c0_i32_0 : i32, i32
  }
  func.func @transform_1(%arg0: i32) -> (i32, i32) {
    %c0_i32 = arith.constant 0 : i32
    %c0_i32_0 = arith.constant 0 : i32
    %c0_i32_1 = arith.constant 0 : i32
    return %c0_i32, %c0_i32_0 : i32, i32
  }
  func.func @transform_2(%arg0: i32) -> (i32, i32) {
    %c0_i32 = arith.constant 0 : i32
    %c0_i32_0 = arith.constant 0 : i32
    %c0_i32_1 = arith.constant 0 : i32
    return %c0_i32, %c0_i32_0 : i32, i32
  }
  func.func @transform_3(%arg0: i32) -> (i32, i32) {
    %c0_i32 = arith.constant 0 : i32
    %c0_i32_0 = arith.constant 0 : i32
    %c0_i32_1 = arith.constant 0 : i32
    return %c0_i32, %c0_i32_0 : i32, i32
  }
  func.func @transform_4(%arg0: i32) -> (i32, i32) {
    %c0_i32 = arith.constant 0 : i32
    %c0_i32_0 = arith.constant 0 : i32
    %c0_i32_1 = arith.constant 0 : i32
    return %c0_i32, %c0_i32_0 : i32, i32
  }
  func.func @transform_5(%arg0: i32) -> (i32, i32) {
    %c0_i32 = arith.constant 0 : i32
    %c0_i32_0 = arith.constant 0 : i32
    %c0_i32_1 = arith.constant 0 : i32
    return %c0_i32, %c0_i32_0 : i32, i32
  }
}

module attributes {stable_mosaic.version = 11 : i64} {
  func.func @_fused_bn_kernel(%arg0: i32, %arg1: memref<8x576xbf16, #tpu.memory_space<vmem>>, %arg2: memref<576x128xbf16, #tpu.memory_space<vmem>>, %arg3: memref<1x128xf32, #tpu.memory_space<vmem>>, %arg4: memref<1x128xf32, #tpu.memory_space<vmem>>, %arg5: memref<128x128xf32, #tpu.memory_space<vmem>>, %arg6: memref<8x128xbf16, #tpu.memory_space<vmem>>) attributes {dimension_semantics = [#tpu.dimension_semantics<arbitrary>], iteration_bounds = array<i64: 1>, scalar_prefetch = 0 : i64, scratch_operands = 0 : i64, tpu.core_type = #tpu.core_type<tc>, window_params = [{pipeline_mode = #tpu.pipeline_mode<synchronous>, transform_indices = @transform_0, window_bounds = array<i64: 8, 576>}, {pipeline_mode = #tpu.pipeline_mode<synchronous>, transform_indices = @transform_1, window_bounds = array<i64: 576, 128>}, {pipeline_mode = #tpu.pipeline_mode<synchronous>, transform_indices = @transform_2, window_bounds = array<i64: 1, 128>}, {pipeline_mode = #tpu.pipeline_mode<synchronous>, transform_indices = @transform_3, window_bounds = array<i64: 1, 128>}, {pipeline_mode = #tpu.pipeline_mode<synchronous>, transform_indices = @transform_4, window_bounds = array<i64: 128, 128>}, {pipeline_mode = #tpu.pipeline_mode<synchronous>, transform_indices = @transform_5, window_bounds = array<i64: 8, 128>}]} {
    %c0 = arith.constant 0 : index
    %c0_0 = arith.constant 0 : index
    %0 = vector.load %arg1[%c0, %c0_0] : memref<8x576xbf16, #tpu.memory_space<vmem>>, vector<8x576xbf16>
    %c0_1 = arith.constant 0 : index
    %c0_2 = arith.constant 0 : index
    %1 = vector.load %arg2[%c0_1, %c0_2] : memref<576x128xbf16, #tpu.memory_space<vmem>>, vector<576x128xbf16>
    %cst = arith.constant dense<0.000000e+00> : vector<8x128xf32>
    %2 = tpu.matmul %0, %1, %cst {dimension_numbers = #tpu.dot_dimension_numbers<[1], [0], [0], [1], [0, 0, 1, 1], [], []>} : vector<8x576xbf16>, vector<576x128xbf16>, vector<8x128xf32> -> vector<8x128xf32>
    %cst_3 = arith.constant dense<0.000000e+00> : vector<128xf32>
    %3 = vector.multi_reduction <add>, %2, %cst_3 [0] : vector<8x128xf32> to vector<128xf32>
    %4 = vector.shape_cast %3 : vector<128xf32> to vector<1x128xf32>
    %5 = arith.mulf %2, %2 : vector<8x128xf32>
    %cst_4 = arith.constant dense<0.000000e+00> : vector<128xf32>
    %6 = vector.multi_reduction <add>, %5, %cst_4 [0] : vector<8x128xf32> to vector<128xf32>
    %7 = vector.shape_cast %6 : vector<128xf32> to vector<1x128xf32>
    %c0_5 = arith.constant 0 : index
    %c0_6 = arith.constant 0 : index
    %8 = vector.load %arg5[%c0_5, %c0_6] : memref<128x128xf32, #tpu.memory_space<vmem>>, vector<128x128xf32>
    %cst_7 = arith.constant dense<0.000000e+00> : vector<1x128xf32>
    %9 = tpu.matmul %4, %8, %cst_7 {dimension_numbers = #tpu.dot_dimension_numbers<[1], [0], [0], [1], [0, 0, 1, 1], [], []>} : vector<1x128xf32>, vector<128x128xf32>, vector<1x128xf32> -> vector<1x128xf32>
    %c0_8 = arith.constant 0 : index
    %c0_9 = arith.constant 0 : index
    %10 = vector.load %arg5[%c0_8, %c0_9] : memref<128x128xf32, #tpu.memory_space<vmem>>, vector<128x128xf32>
    %cst_10 = arith.constant dense<0.000000e+00> : vector<1x128xf32>
    %11 = tpu.matmul %7, %10, %cst_10 {dimension_numbers = #tpu.dot_dimension_numbers<[1], [0], [0], [1], [0, 0, 1, 1], [], []>} : vector<1x128xf32>, vector<128x128xf32>, vector<1x128xf32> -> vector<1x128xf32>
    %cst_11 = arith.constant 3.125000e-02 : f32
    %12 = vector.broadcast %cst_11 : f32 to vector<1x128xf32>
    %13 = arith.mulf %9, %12 : vector<1x128xf32>
    %cst_12 = arith.constant 3.125000e-02 : f32
    %14 = vector.broadcast %cst_12 : f32 to vector<1x128xf32>
    %15 = arith.mulf %11, %14 : vector<1x128xf32>
    %16 = arith.mulf %13, %13 : vector<1x128xf32>
    %17 = arith.subf %15, %16 : vector<1x128xf32>
    %c0_13 = arith.constant 0 : index
    %c0_14 = arith.constant 0 : index
    %18 = vector.load %arg3[%c0_13, %c0_14] : memref<1x128xf32, #tpu.memory_space<vmem>>, vector<1x128xf32>
    %cst_15 = arith.constant 9.99999974E-6 : f32
    %19 = vector.broadcast %cst_15 : f32 to vector<1x128xf32>
    %20 = arith.addf %17, %19 : vector<1x128xf32>
    %21 = math.rsqrt %20 : vector<1x128xf32>
    %22 = arith.mulf %18, %21 : vector<1x128xf32>
    %c0_16 = arith.constant 0 : index
    %c0_17 = arith.constant 0 : index
    %23 = vector.load %arg4[%c0_16, %c0_17] : memref<1x128xf32, #tpu.memory_space<vmem>>, vector<1x128xf32>
    %24 = arith.mulf %13, %22 : vector<1x128xf32>
    %25 = arith.subf %23, %24 : vector<1x128xf32>
    %26 = vector.broadcast %22 : vector<1x128xf32> to vector<8x128xf32>
    %27 = arith.mulf %2, %26 : vector<8x128xf32>
    %28 = vector.broadcast %25 : vector<1x128xf32> to vector<8x128xf32>
    %29 = arith.addf %27, %28 : vector<8x128xf32>
    %cst_18 = arith.constant 0.000000e+00 : f32
    %30 = vector.broadcast %cst_18 : f32 to vector<8x128xf32>
    %31 = arith.cmpf oge, %29, %30 : vector<8x128xf32>
    %cst_19 = arith.constant 2.000000e-01 : f32
    %32 = vector.broadcast %cst_19 : f32 to vector<8x128xf32>
    %33 = arith.mulf %32, %29 : vector<8x128xf32>
    %34 = arith.select %31, %29, %33 : vector<8x128xi1>, vector<8x128xf32>
    %35 = arith.truncf %34 : vector<8x128xf32> to vector<8x128xbf16>
    %c0_20 = arith.constant 0 : index
    %c0_21 = arith.constant 0 : index
    %36 = vector.load %arg6[%c0_20, %c0_21] : memref<8x128xbf16, #tpu.memory_space<vmem>>, vector<8x128xbf16>
    tpu.vector_store %arg6[%c0_20, %c0_21], %35 {strides = array<i32>} : memref<8x128xbf16, #tpu.memory_space<vmem>>, vector<8x128xbf16>,
    return
  }
  func.func @transform_0(%arg0: i32) -> (i32, i32) {
    %c0_i32 = arith.constant 0 : i32
    %c0_i32_0 = arith.constant 0 : i32
    %c0_i32_1 = arith.constant 0 : i32
    return %c0_i32, %c0_i32_0 : i32, i32
  }
  func.func @transform_1(%arg0: i32) -> (i32, i32) {
    %c0_i32 = arith.constant 0 : i32
    %c0_i32_0 = arith.constant 0 : i32
    %c0_i32_1 = arith.constant 0 : i32
    return %c0_i32, %c0_i32_0 : i32, i32
  }
  func.func @transform_2(%arg0: i32) -> (i32, i32) {
    %c0_i32 = arith.constant 0 : i32
    %c0_i32_0 = arith.constant 0 : i32
    %c0_i32_1 = arith.constant 0 : i32
    return %c0_i32, %c0_i32_0 : i32, i32
  }
  func.func @transform_3(%arg0: i32) -> (i32, i32) {
    %c0_i32 = arith.constant 0 : i32
    %c0_i32_0 = arith.constant 0 : i32
    %c0_i32_1 = arith.constant 0 : i32
    return %c0_i32, %c0_i32_0 : i32, i32
  }
  func.func @transform_4(%arg0: i32) -> (i32, i32) {
    %c0_i32 = arith.constant 0 : i32
    %c0_i32_0 = arith.constant 0 : i32
    %c0_i32_1 = arith.constant 0 : i32
    return %c0_i32, %c0_i32_0 : i32, i32
  }
  func.func @transform_5(%arg0: i32) -> (i32, i32) {
    %c0_i32 = arith.constant 0 : i32
    %c0_i32_0 = arith.constant 0 : i32
    %c0_i32_1 = arith.constant 0 : i32
    return %c0_i32, %c0_i32_0 : i32, i32
  }
}

module attributes {stable_mosaic.version = 11 : i64} {
  func.func @_fused_bn_kernel(%arg0: i32, %arg1: memref<8x512xbf16, #tpu.memory_space<vmem>>, %arg2: memref<512x128xbf16, #tpu.memory_space<vmem>>, %arg3: memref<1x128xf32, #tpu.memory_space<vmem>>, %arg4: memref<1x128xf32, #tpu.memory_space<vmem>>, %arg5: memref<128x128xf32, #tpu.memory_space<vmem>>, %arg6: memref<8x128xbf16, #tpu.memory_space<vmem>>) attributes {dimension_semantics = [#tpu.dimension_semantics<arbitrary>], iteration_bounds = array<i64: 1>, scalar_prefetch = 0 : i64, scratch_operands = 0 : i64, tpu.core_type = #tpu.core_type<tc>, window_params = [{pipeline_mode = #tpu.pipeline_mode<synchronous>, transform_indices = @transform_0, window_bounds = array<i64: 8, 512>}, {pipeline_mode = #tpu.pipeline_mode<synchronous>, transform_indices = @transform_1, window_bounds = array<i64: 512, 128>}, {pipeline_mode = #tpu.pipeline_mode<synchronous>, transform_indices = @transform_2, window_bounds = array<i64: 1, 128>}, {pipeline_mode = #tpu.pipeline_mode<synchronous>, transform_indices = @transform_3, window_bounds = array<i64: 1, 128>}, {pipeline_mode = #tpu.pipeline_mode<synchronous>, transform_indices = @transform_4, window_bounds = array<i64: 128, 128>}, {pipeline_mode = #tpu.pipeline_mode<synchronous>, transform_indices = @transform_5, window_bounds = array<i64: 8, 128>}]} {
    %c0 = arith.constant 0 : index
    %c0_0 = arith.constant 0 : index
    %0 = vector.load %arg1[%c0, %c0_0] : memref<8x512xbf16, #tpu.memory_space<vmem>>, vector<8x512xbf16>
    %c0_1 = arith.constant 0 : index
    %c0_2 = arith.constant 0 : index
    %1 = vector.load %arg2[%c0_1, %c0_2] : memref<512x128xbf16, #tpu.memory_space<vmem>>, vector<512x128xbf16>
    %cst = arith.constant dense<0.000000e+00> : vector<8x128xf32>
    %2 = tpu.matmul %0, %1, %cst {dimension_numbers = #tpu.dot_dimension_numbers<[1], [0], [0], [1], [0, 0, 1, 1], [], []>} : vector<8x512xbf16>, vector<512x128xbf16>, vector<8x128xf32> -> vector<8x128xf32>
    %cst_3 = arith.constant dense<0.000000e+00> : vector<128xf32>
    %3 = vector.multi_reduction <add>, %2, %cst_3 [0] : vector<8x128xf32> to vector<128xf32>
    %4 = vector.shape_cast %3 : vector<128xf32> to vector<1x128xf32>
    %5 = arith.mulf %2, %2 : vector<8x128xf32>
    %cst_4 = arith.constant dense<0.000000e+00> : vector<128xf32>
    %6 = vector.multi_reduction <add>, %5, %cst_4 [0] : vector<8x128xf32> to vector<128xf32>
    %7 = vector.shape_cast %6 : vector<128xf32> to vector<1x128xf32>
    %c0_5 = arith.constant 0 : index
    %c0_6 = arith.constant 0 : index
    %8 = vector.load %arg5[%c0_5, %c0_6] : memref<128x128xf32, #tpu.memory_space<vmem>>, vector<128x128xf32>
    %cst_7 = arith.constant dense<0.000000e+00> : vector<1x128xf32>
    %9 = tpu.matmul %4, %8, %cst_7 {dimension_numbers = #tpu.dot_dimension_numbers<[1], [0], [0], [1], [0, 0, 1, 1], [], []>} : vector<1x128xf32>, vector<128x128xf32>, vector<1x128xf32> -> vector<1x128xf32>
    %c0_8 = arith.constant 0 : index
    %c0_9 = arith.constant 0 : index
    %10 = vector.load %arg5[%c0_8, %c0_9] : memref<128x128xf32, #tpu.memory_space<vmem>>, vector<128x128xf32>
    %cst_10 = arith.constant dense<0.000000e+00> : vector<1x128xf32>
    %11 = tpu.matmul %7, %10, %cst_10 {dimension_numbers = #tpu.dot_dimension_numbers<[1], [0], [0], [1], [0, 0, 1, 1], [], []>} : vector<1x128xf32>, vector<128x128xf32>, vector<1x128xf32> -> vector<1x128xf32>
    %cst_11 = arith.constant 1.250000e-01 : f32
    %12 = vector.broadcast %cst_11 : f32 to vector<1x128xf32>
    %13 = arith.mulf %9, %12 : vector<1x128xf32>
    %cst_12 = arith.constant 1.250000e-01 : f32
    %14 = vector.broadcast %cst_12 : f32 to vector<1x128xf32>
    %15 = arith.mulf %11, %14 : vector<1x128xf32>
    %16 = arith.mulf %13, %13 : vector<1x128xf32>
    %17 = arith.subf %15, %16 : vector<1x128xf32>
    %c0_13 = arith.constant 0 : index
    %c0_14 = arith.constant 0 : index
    %18 = vector.load %arg3[%c0_13, %c0_14] : memref<1x128xf32, #tpu.memory_space<vmem>>, vector<1x128xf32>
    %cst_15 = arith.constant 9.99999974E-6 : f32
    %19 = vector.broadcast %cst_15 : f32 to vector<1x128xf32>
    %20 = arith.addf %17, %19 : vector<1x128xf32>
    %21 = math.rsqrt %20 : vector<1x128xf32>
    %22 = arith.mulf %18, %21 : vector<1x128xf32>
    %c0_16 = arith.constant 0 : index
    %c0_17 = arith.constant 0 : index
    %23 = vector.load %arg4[%c0_16, %c0_17] : memref<1x128xf32, #tpu.memory_space<vmem>>, vector<1x128xf32>
    %24 = arith.mulf %13, %22 : vector<1x128xf32>
    %25 = arith.subf %23, %24 : vector<1x128xf32>
    %26 = vector.broadcast %22 : vector<1x128xf32> to vector<8x128xf32>
    %27 = arith.mulf %2, %26 : vector<8x128xf32>
    %28 = vector.broadcast %25 : vector<1x128xf32> to vector<8x128xf32>
    %29 = arith.addf %27, %28 : vector<8x128xf32>
    %cst_18 = arith.constant 0.000000e+00 : f32
    %30 = vector.broadcast %cst_18 : f32 to vector<8x128xf32>
    %31 = arith.cmpf oge, %29, %30 : vector<8x128xf32>
    %cst_19 = arith.constant 2.000000e-01 : f32
    %32 = vector.broadcast %cst_19 : f32 to vector<8x128xf32>
    %33 = arith.mulf %32, %29 : vector<8x128xf32>
    %34 = arith.select %31, %29, %33 : vector<8x128xi1>, vector<8x128xf32>
    %35 = arith.truncf %34 : vector<8x128xf32> to vector<8x128xbf16>
    %c0_20 = arith.constant 0 : index
    %c0_21 = arith.constant 0 : index
    %36 = vector.load %arg6[%c0_20, %c0_21] : memref<8x128xbf16, #tpu.memory_space<vmem>>, vector<8x128xbf16>
    tpu.vector_store %arg6[%c0_20, %c0_21], %35 {strides = array<i32>} : memref<8x128xbf16, #tpu.memory_space<vmem>>, vector<8x128xbf16>,
    return
  }
  func.func @transform_0(%arg0: i32) -> (i32, i32) {
    %c0_i32 = arith.constant 0 : i32
    %c0_i32_0 = arith.constant 0 : i32
    %c0_i32_1 = arith.constant 0 : i32
    return %c0_i32, %c0_i32_0 : i32, i32
  }
  func.func @transform_1(%arg0: i32) -> (i32, i32) {
    %c0_i32 = arith.constant 0 : i32
    %c0_i32_0 = arith.constant 0 : i32
    %c0_i32_1 = arith.constant 0 : i32
    return %c0_i32, %c0_i32_0 : i32, i32
  }
  func.func @transform_2(%arg0: i32) -> (i32, i32) {
    %c0_i32 = arith.constant 0 : i32
    %c0_i32_0 = arith.constant 0 : i32
    %c0_i32_1 = arith.constant 0 : i32
    return %c0_i32, %c0_i32_0 : i32, i32
  }
  func.func @transform_3(%arg0: i32) -> (i32, i32) {
    %c0_i32 = arith.constant 0 : i32
    %c0_i32_0 = arith.constant 0 : i32
    %c0_i32_1 = arith.constant 0 : i32
    return %c0_i32, %c0_i32_0 : i32, i32
  }
  func.func @transform_4(%arg0: i32) -> (i32, i32) {
    %c0_i32 = arith.constant 0 : i32
    %c0_i32_0 = arith.constant 0 : i32
    %c0_i32_1 = arith.constant 0 : i32
    return %c0_i32, %c0_i32_0 : i32, i32
  }
  func.func @transform_5(%arg0: i32) -> (i32, i32) {
    %c0_i32 = arith.constant 0 : i32
    %c0_i32_0 = arith.constant 0 : i32
    %c0_i32_1 = arith.constant 0 : i32
    return %c0_i32, %c0_i32_0 : i32, i32
  }
}

module attributes {stable_mosaic.version = 11 : i64} {
  func.func @_fused_bn_kernel(%arg0: i32, %arg1: memref<32x288xbf16, #tpu.memory_space<vmem>>, %arg2: memref<288x128xbf16, #tpu.memory_space<vmem>>, %arg3: memref<1x128xf32, #tpu.memory_space<vmem>>, %arg4: memref<1x128xf32, #tpu.memory_space<vmem>>, %arg5: memref<128x128xf32, #tpu.memory_space<vmem>>, %arg6: memref<32x128xbf16, #tpu.memory_space<vmem>>) attributes {dimension_semantics = [#tpu.dimension_semantics<arbitrary>], iteration_bounds = array<i64: 1>, scalar_prefetch = 0 : i64, scratch_operands = 0 : i64, tpu.core_type = #tpu.core_type<tc>, window_params = [{pipeline_mode = #tpu.pipeline_mode<synchronous>, transform_indices = @transform_0, window_bounds = array<i64: 32, 288>}, {pipeline_mode = #tpu.pipeline_mode<synchronous>, transform_indices = @transform_1, window_bounds = array<i64: 288, 128>}, {pipeline_mode = #tpu.pipeline_mode<synchronous>, transform_indices = @transform_2, window_bounds = array<i64: 1, 128>}, {pipeline_mode = #tpu.pipeline_mode<synchronous>, transform_indices = @transform_3, window_bounds = array<i64: 1, 128>}, {pipeline_mode = #tpu.pipeline_mode<synchronous>, transform_indices = @transform_4, window_bounds = array<i64: 128, 128>}, {pipeline_mode = #tpu.pipeline_mode<synchronous>, transform_indices = @transform_5, window_bounds = array<i64: 32, 128>}]} {
    %c0 = arith.constant 0 : index
    %c0_0 = arith.constant 0 : index
    %0 = vector.load %arg1[%c0, %c0_0] : memref<32x288xbf16, #tpu.memory_space<vmem>>, vector<32x288xbf16>
    %c0_1 = arith.constant 0 : index
    %c0_2 = arith.constant 0 : index
    %1 = vector.load %arg2[%c0_1, %c0_2] : memref<288x128xbf16, #tpu.memory_space<vmem>>, vector<288x128xbf16>
    %cst = arith.constant dense<0.000000e+00> : vector<32x128xf32>
    %2 = tpu.matmul %0, %1, %cst {dimension_numbers = #tpu.dot_dimension_numbers<[1], [0], [0], [1], [0, 0, 1, 1], [], []>} : vector<32x288xbf16>, vector<288x128xbf16>, vector<32x128xf32> -> vector<32x128xf32>
    %cst_3 = arith.constant dense<0.000000e+00> : vector<128xf32>
    %3 = vector.multi_reduction <add>, %2, %cst_3 [0] : vector<32x128xf32> to vector<128xf32>
    %4 = vector.shape_cast %3 : vector<128xf32> to vector<1x128xf32>
    %5 = arith.mulf %2, %2 : vector<32x128xf32>
    %cst_4 = arith.constant dense<0.000000e+00> : vector<128xf32>
    %6 = vector.multi_reduction <add>, %5, %cst_4 [0] : vector<32x128xf32> to vector<128xf32>
    %7 = vector.shape_cast %6 : vector<128xf32> to vector<1x128xf32>
    %c0_5 = arith.constant 0 : index
    %c0_6 = arith.constant 0 : index
    %8 = vector.load %arg5[%c0_5, %c0_6] : memref<128x128xf32, #tpu.memory_space<vmem>>, vector<128x128xf32>
    %cst_7 = arith.constant dense<0.000000e+00> : vector<1x128xf32>
    %9 = tpu.matmul %4, %8, %cst_7 {dimension_numbers = #tpu.dot_dimension_numbers<[1], [0], [0], [1], [0, 0, 1, 1], [], []>} : vector<1x128xf32>, vector<128x128xf32>, vector<1x128xf32> -> vector<1x128xf32>
    %c0_8 = arith.constant 0 : index
    %c0_9 = arith.constant 0 : index
    %10 = vector.load %arg5[%c0_8, %c0_9] : memref<128x128xf32, #tpu.memory_space<vmem>>, vector<128x128xf32>
    %cst_10 = arith.constant dense<0.000000e+00> : vector<1x128xf32>
    %11 = tpu.matmul %7, %10, %cst_10 {dimension_numbers = #tpu.dot_dimension_numbers<[1], [0], [0], [1], [0, 0, 1, 1], [], []>} : vector<1x128xf32>, vector<128x128xf32>, vector<1x128xf32> -> vector<1x128xf32>
    %cst_11 = arith.constant 7.812500e-03 : f32
    %12 = vector.broadcast %cst_11 : f32 to vector<1x128xf32>
    %13 = arith.mulf %9, %12 : vector<1x128xf32>
    %cst_12 = arith.constant 7.812500e-03 : f32
    %14 = vector.broadcast %cst_12 : f32 to vector<1x128xf32>
    %15 = arith.mulf %11, %14 : vector<1x128xf32>
    %16 = arith.mulf %13, %13 : vector<1x128xf32>
    %17 = arith.subf %15, %16 : vector<1x128xf32>
    %c0_13 = arith.constant 0 : index
    %c0_14 = arith.constant 0 : index
    %18 = vector.load %arg3[%c0_13, %c0_14] : memref<1x128xf32, #tpu.memory_space<vmem>>, vector<1x128xf32>
    %cst_15 = arith.constant 9.99999974E-6 : f32
    %19 = vector.broadcast %cst_15 : f32 to vector<1x128xf32>
    %20 = arith.addf %17, %19 : vector<1x128xf32>
    %21 = math.rsqrt %20 : vector<1x128xf32>
    %22 = arith.mulf %18, %21 : vector<1x128xf32>
    %c0_16 = arith.constant 0 : index
    %c0_17 = arith.constant 0 : index
    %23 = vector.load %arg4[%c0_16, %c0_17] : memref<1x128xf32, #tpu.memory_space<vmem>>, vector<1x128xf32>
    %24 = arith.mulf %13, %22 : vector<1x128xf32>
    %25 = arith.subf %23, %24 : vector<1x128xf32>
    %26 = vector.broadcast %22 : vector<1x128xf32> to vector<32x128xf32>
    %27 = arith.mulf %2, %26 : vector<32x128xf32>
    %28 = vector.broadcast %25 : vector<1x128xf32> to vector<32x128xf32>
    %29 = arith.addf %27, %28 : vector<32x128xf32>
    %cst_18 = arith.constant 0.000000e+00 : f32
    %30 = vector.broadcast %cst_18 : f32 to vector<32x128xf32>
    %31 = arith.cmpf oge, %29, %30 : vector<32x128xf32>
    %cst_19 = arith.constant 2.000000e-01 : f32
    %32 = vector.broadcast %cst_19 : f32 to vector<32x128xf32>
    %33 = arith.mulf %32, %29 : vector<32x128xf32>
    %34 = arith.select %31, %29, %33 : vector<32x128xi1>, vector<32x128xf32>
    %35 = arith.truncf %34 : vector<32x128xf32> to vector<32x128xbf16>
    %c0_20 = arith.constant 0 : index
    %c0_21 = arith.constant 0 : index
    %36 = vector.load %arg6[%c0_20, %c0_21] : memref<32x128xbf16, #tpu.memory_space<vmem>>, vector<32x128xbf16>
    tpu.vector_store %arg6[%c0_20, %c0_21], %35 {strides = array<i32>} : memref<32x128xbf16, #tpu.memory_space<vmem>>, vector<32x128xbf16>,
    return
  }
  func.func @transform_0(%arg0: i32) -> (i32, i32) {
    %c0_i32 = arith.constant 0 : i32
    %c0_i32_0 = arith.constant 0 : i32
    %c0_i32_1 = arith.constant 0 : i32
    return %c0_i32, %c0_i32_0 : i32, i32
  }
  func.func @transform_1(%arg0: i32) -> (i32, i32) {
    %c0_i32 = arith.constant 0 : i32
    %c0_i32_0 = arith.constant 0 : i32
    %c0_i32_1 = arith.constant 0 : i32
    return %c0_i32, %c0_i32_0 : i32, i32
  }
  func.func @transform_2(%arg0: i32) -> (i32, i32) {
    %c0_i32 = arith.constant 0 : i32
    %c0_i32_0 = arith.constant 0 : i32
    %c0_i32_1 = arith.constant 0 : i32
    return %c0_i32, %c0_i32_0 : i32, i32
  }
  func.func @transform_3(%arg0: i32) -> (i32, i32) {
    %c0_i32 = arith.constant 0 : i32
    %c0_i32_0 = arith.constant 0 : i32
    %c0_i32_1 = arith.constant 0 : i32
    return %c0_i32, %c0_i32_0 : i32, i32
  }
  func.func @transform_4(%arg0: i32) -> (i32, i32) {
    %c0_i32 = arith.constant 0 : i32
    %c0_i32_0 = arith.constant 0 : i32
    %c0_i32_1 = arith.constant 0 : i32
    return %c0_i32, %c0_i32_0 : i32, i32
  }
  func.func @transform_5(%arg0: i32) -> (i32, i32) {
    %c0_i32 = arith.constant 0 : i32
    %c0_i32_0 = arith.constant 0 : i32
    %c0_i32_1 = arith.constant 0 : i32
    return %c0_i32, %c0_i32_0 : i32, i32
  }
}

module attributes {stable_mosaic.version = 11 : i64} {
  func.func @_fused_bn_kernel(%arg0: i32, %arg1: memref<128x144xbf16, #tpu.memory_space<vmem>>, %arg2: memref<144x128xbf16, #tpu.memory_space<vmem>>, %arg3: memref<1x128xf32, #tpu.memory_space<vmem>>, %arg4: memref<1x128xf32, #tpu.memory_space<vmem>>, %arg5: memref<128x128xf32, #tpu.memory_space<vmem>>, %arg6: memref<128x128xbf16, #tpu.memory_space<vmem>>) attributes {dimension_semantics = [#tpu.dimension_semantics<arbitrary>], iteration_bounds = array<i64: 1>, scalar_prefetch = 0 : i64, scratch_operands = 0 : i64, tpu.core_type = #tpu.core_type<tc>, window_params = [{pipeline_mode = #tpu.pipeline_mode<synchronous>, transform_indices = @transform_0, window_bounds = array<i64: 128, 144>}, {pipeline_mode = #tpu.pipeline_mode<synchronous>, transform_indices = @transform_1, window_bounds = array<i64: 144, 128>}, {pipeline_mode = #tpu.pipeline_mode<synchronous>, transform_indices = @transform_2, window_bounds = array<i64: 1, 128>}, {pipeline_mode = #tpu.pipeline_mode<synchronous>, transform_indices = @transform_3, window_bounds = array<i64: 1, 128>}, {pipeline_mode = #tpu.pipeline_mode<synchronous>, transform_indices = @transform_4, window_bounds = array<i64: 128, 128>}, {pipeline_mode = #tpu.pipeline_mode<synchronous>, transform_indices = @transform_5, window_bounds = array<i64: 128, 128>}]} {
    %c0 = arith.constant 0 : index
    %c0_0 = arith.constant 0 : index
    %0 = vector.load %arg1[%c0, %c0_0] : memref<128x144xbf16, #tpu.memory_space<vmem>>, vector<128x144xbf16>
    %c0_1 = arith.constant 0 : index
    %c0_2 = arith.constant 0 : index
    %1 = vector.load %arg2[%c0_1, %c0_2] : memref<144x128xbf16, #tpu.memory_space<vmem>>, vector<144x128xbf16>
    %cst = arith.constant dense<0.000000e+00> : vector<128x128xf32>
    %2 = tpu.matmul %0, %1, %cst {dimension_numbers = #tpu.dot_dimension_numbers<[1], [0], [0], [1], [0, 0, 1, 1], [], []>} : vector<128x144xbf16>, vector<144x128xbf16>, vector<128x128xf32> -> vector<128x128xf32>
    %cst_3 = arith.constant dense<0.000000e+00> : vector<128xf32>
    %3 = vector.multi_reduction <add>, %2, %cst_3 [0] : vector<128x128xf32> to vector<128xf32>
    %4 = vector.shape_cast %3 : vector<128xf32> to vector<1x128xf32>
    %5 = arith.mulf %2, %2 : vector<128x128xf32>
    %cst_4 = arith.constant dense<0.000000e+00> : vector<128xf32>
    %6 = vector.multi_reduction <add>, %5, %cst_4 [0] : vector<128x128xf32> to vector<128xf32>
    %7 = vector.shape_cast %6 : vector<128xf32> to vector<1x128xf32>
    %c0_5 = arith.constant 0 : index
    %c0_6 = arith.constant 0 : index
    %8 = vector.load %arg5[%c0_5, %c0_6] : memref<128x128xf32, #tpu.memory_space<vmem>>, vector<128x128xf32>
    %cst_7 = arith.constant dense<0.000000e+00> : vector<1x128xf32>
    %9 = tpu.matmul %4, %8, %cst_7 {dimension_numbers = #tpu.dot_dimension_numbers<[1], [0], [0], [1], [0, 0, 1, 1], [], []>} : vector<1x128xf32>, vector<128x128xf32>, vector<1x128xf32> -> vector<1x128xf32>
    %c0_8 = arith.constant 0 : index
    %c0_9 = arith.constant 0 : index
    %10 = vector.load %arg5[%c0_8, %c0_9] : memref<128x128xf32, #tpu.memory_space<vmem>>, vector<128x128xf32>
    %cst_10 = arith.constant dense<0.000000e+00> : vector<1x128xf32>
    %11 = tpu.matmul %7, %10, %cst_10 {dimension_numbers = #tpu.dot_dimension_numbers<[1], [0], [0], [1], [0, 0, 1, 1], [], []>} : vector<1x128xf32>, vector<128x128xf32>, vector<1x128xf32> -> vector<1x128xf32>
    %cst_11 = arith.constant 0.001953125 : f32
    %12 = vector.broadcast %cst_11 : f32 to vector<1x128xf32>
    %13 = arith.mulf %9, %12 : vector<1x128xf32>
    %cst_12 = arith.constant 0.001953125 : f32
    %14 = vector.broadcast %cst_12 : f32 to vector<1x128xf32>
    %15 = arith.mulf %11, %14 : vector<1x128xf32>
    %16 = arith.mulf %13, %13 : vector<1x128xf32>
    %17 = arith.subf %15, %16 : vector<1x128xf32>
    %c0_13 = arith.constant 0 : index
    %c0_14 = arith.constant 0 : index
    %18 = vector.load %arg3[%c0_13, %c0_14] : memref<1x128xf32, #tpu.memory_space<vmem>>, vector<1x128xf32>
    %cst_15 = arith.constant 9.99999974E-6 : f32
    %19 = vector.broadcast %cst_15 : f32 to vector<1x128xf32>
    %20 = arith.addf %17, %19 : vector<1x128xf32>
    %21 = math.rsqrt %20 : vector<1x128xf32>
    %22 = arith.mulf %18, %21 : vector<1x128xf32>
    %c0_16 = arith.constant 0 : index
    %c0_17 = arith.constant 0 : index
    %23 = vector.load %arg4[%c0_16, %c0_17] : memref<1x128xf32, #tpu.memory_space<vmem>>, vector<1x128xf32>
    %24 = arith.mulf %13, %22 : vector<1x128xf32>
    %25 = arith.subf %23, %24 : vector<1x128xf32>
    %26 = vector.broadcast %22 : vector<1x128xf32> to vector<128x128xf32>
    %27 = arith.mulf %2, %26 : vector<128x128xf32>
    %28 = vector.broadcast %25 : vector<1x128xf32> to vector<128x128xf32>
    %29 = arith.addf %27, %28 : vector<128x128xf32>
    %cst_18 = arith.constant 0.000000e+00 : f32
    %30 = vector.broadcast %cst_18 : f32 to vector<128x128xf32>
    %31 = arith.cmpf oge, %29, %30 : vector<128x128xf32>
    %cst_19 = arith.constant 2.000000e-01 : f32
    %32 = vector.broadcast %cst_19 : f32 to vector<128x128xf32>
    %33 = arith.mulf %32, %29 : vector<128x128xf32>
    %34 = arith.select %31, %29, %33 : vector<128x128xi1>, vector<128x128xf32>
    %35 = arith.truncf %34 : vector<128x128xf32> to vector<128x128xbf16>
    %c0_20 = arith.constant 0 : index
    %c0_21 = arith.constant 0 : index
    %36 = vector.load %arg6[%c0_20, %c0_21] : memref<128x128xbf16, #tpu.memory_space<vmem>>, vector<128x128xbf16>
    tpu.vector_store %arg6[%c0_20, %c0_21], %35 {strides = array<i32>} : memref<128x128xbf16, #tpu.memory_space<vmem>>, vector<128x128xbf16>,
    return
  }
  func.func @transform_0(%arg0: i32) -> (i32, i32) {
    %c0_i32 = arith.constant 0 : i32
    %c0_i32_0 = arith.constant 0 : i32
    %c0_i32_1 = arith.constant 0 : i32
    return %c0_i32, %c0_i32_0 : i32, i32
  }
  func.func @transform_1(%arg0: i32) -> (i32, i32) {
    %c0_i32 = arith.constant 0 : i32
    %c0_i32_0 = arith.constant 0 : i32
    %c0_i32_1 = arith.constant 0 : i32
    return %c0_i32, %c0_i32_0 : i32, i32
  }
  func.func @transform_2(%arg0: i32) -> (i32, i32) {
    %c0_i32 = arith.constant 0 : i32
    %c0_i32_0 = arith.constant 0 : i32
    %c0_i32_1 = arith.constant 0 : i32
    return %c0_i32, %c0_i32_0 : i32, i32
  }
  func.func @transform_3(%arg0: i32) -> (i32, i32) {
    %c0_i32 = arith.constant 0 : i32
    %c0_i32_0 = arith.constant 0 : i32
    %c0_i32_1 = arith.constant 0 : i32
    return %c0_i32, %c0_i32_0 : i32, i32
  }
  func.func @transform_4(%arg0: i32) -> (i32, i32) {
    %c0_i32 = arith.constant 0 : i32
    %c0_i32_0 = arith.constant 0 : i32
    %c0_i32_1 = arith.constant 0 : i32
    return %c0_i32, %c0_i32_0 : i32, i32
  }
  func.func @transform_5(%arg0: i32) -> (i32, i32) {
    %c0_i32 = arith.constant 0 : i32
    %c0_i32_0 = arith.constant 0 : i32
    %c0_i32_1 = arith.constant 0 : i32
    return %c0_i32, %c0_i32_0 : i32, i32
  }
}

module attributes {stable_mosaic.version = 11 : i64} {
  func.func @_fused_bn_kernel(%arg0: i32, %arg1: memref<512x80xbf16, #tpu.memory_space<vmem>>, %arg2: memref<80x128xbf16, #tpu.memory_space<vmem>>, %arg3: memref<1x128xf32, #tpu.memory_space<vmem>>, %arg4: memref<1x128xf32, #tpu.memory_space<vmem>>, %arg5: memref<128x128xf32, #tpu.memory_space<vmem>>, %arg6: memref<512x128xf32, #tpu.memory_space<vmem>>) attributes {dimension_semantics = [#tpu.dimension_semantics<arbitrary>], iteration_bounds = array<i64: 1>, scalar_prefetch = 0 : i64, scratch_operands = 0 : i64, tpu.core_type = #tpu.core_type<tc>, window_params = [{pipeline_mode = #tpu.pipeline_mode<synchronous>, transform_indices = @transform_0, window_bounds = array<i64: 512, 80>}, {pipeline_mode = #tpu.pipeline_mode<synchronous>, transform_indices = @transform_1, window_bounds = array<i64: 80, 128>}, {pipeline_mode = #tpu.pipeline_mode<synchronous>, transform_indices = @transform_2, window_bounds = array<i64: 1, 128>}, {pipeline_mode = #tpu.pipeline_mode<synchronous>, transform_indices = @transform_3, window_bounds = array<i64: 1, 128>}, {pipeline_mode = #tpu.pipeline_mode<synchronous>, transform_indices = @transform_4, window_bounds = array<i64: 128, 128>}, {pipeline_mode = #tpu.pipeline_mode<synchronous>, transform_indices = @transform_5, window_bounds = array<i64: 512, 128>}]} {
    %c0 = arith.constant 0 : index
    %c0_0 = arith.constant 0 : index
    %0 = vector.load %arg1[%c0, %c0_0] : memref<512x80xbf16, #tpu.memory_space<vmem>>, vector<512x80xbf16>
    %c0_1 = arith.constant 0 : index
    %c0_2 = arith.constant 0 : index
    %1 = vector.load %arg2[%c0_1, %c0_2] : memref<80x128xbf16, #tpu.memory_space<vmem>>, vector<80x128xbf16>
    %cst = arith.constant dense<0.000000e+00> : vector<512x128xf32>
    %2 = tpu.matmul %0, %1, %cst {dimension_numbers = #tpu.dot_dimension_numbers<[1], [0], [0], [1], [0, 0, 1, 1], [], []>} : vector<512x80xbf16>, vector<80x128xbf16>, vector<512x128xf32> -> vector<512x128xf32>
    %cst_3 = arith.constant dense<0.000000e+00> : vector<128xf32>
    %3 = vector.multi_reduction <add>, %2, %cst_3 [0] : vector<512x128xf32> to vector<128xf32>
    %4 = vector.shape_cast %3 : vector<128xf32> to vector<1x128xf32>
    %5 = arith.mulf %2, %2 : vector<512x128xf32>
    %cst_4 = arith.constant dense<0.000000e+00> : vector<128xf32>
    %6 = vector.multi_reduction <add>, %5, %cst_4 [0] : vector<512x128xf32> to vector<128xf32>
    %7 = vector.shape_cast %6 : vector<128xf32> to vector<1x128xf32>
    %c0_5 = arith.constant 0 : index
    %c0_6 = arith.constant 0 : index
    %8 = vector.load %arg5[%c0_5, %c0_6] : memref<128x128xf32, #tpu.memory_space<vmem>>, vector<128x128xf32>
    %cst_7 = arith.constant dense<0.000000e+00> : vector<1x128xf32>
    %9 = tpu.matmul %4, %8, %cst_7 {dimension_numbers = #tpu.dot_dimension_numbers<[1], [0], [0], [1], [0, 0, 1, 1], [], []>} : vector<1x128xf32>, vector<128x128xf32>, vector<1x128xf32> -> vector<1x128xf32>
    %c0_8 = arith.constant 0 : index
    %c0_9 = arith.constant 0 : index
    %10 = vector.load %arg5[%c0_8, %c0_9] : memref<128x128xf32, #tpu.memory_space<vmem>>, vector<128x128xf32>
    %cst_10 = arith.constant dense<0.000000e+00> : vector<1x128xf32>
    %11 = tpu.matmul %7, %10, %cst_10 {dimension_numbers = #tpu.dot_dimension_numbers<[1], [0], [0], [1], [0, 0, 1, 1], [], []>} : vector<1x128xf32>, vector<128x128xf32>, vector<1x128xf32> -> vector<1x128xf32>
    %cst_11 = arith.constant 4.8828125E-4 : f32
    %12 = vector.broadcast %cst_11 : f32 to vector<1x128xf32>
    %13 = arith.mulf %9, %12 : vector<1x128xf32>
    %cst_12 = arith.constant 4.8828125E-4 : f32
    %14 = vector.broadcast %cst_12 : f32 to vector<1x128xf32>
    %15 = arith.mulf %11, %14 : vector<1x128xf32>
    %16 = arith.mulf %13, %13 : vector<1x128xf32>
    %17 = arith.subf %15, %16 : vector<1x128xf32>
    %c0_13 = arith.constant 0 : index
    %c0_14 = arith.constant 0 : index
    %18 = vector.load %arg3[%c0_13, %c0_14] : memref<1x128xf32, #tpu.memory_space<vmem>>, vector<1x128xf32>
    %cst_15 = arith.constant 9.99999974E-6 : f32
    %19 = vector.broadcast %cst_15 : f32 to vector<1x128xf32>
    %20 = arith.addf %17, %19 : vector<1x128xf32>
    %21 = math.rsqrt %20 : vector<1x128xf32>
    %22 = arith.mulf %18, %21 : vector<1x128xf32>
    %c0_16 = arith.constant 0 : index
    %c0_17 = arith.constant 0 : index
    %23 = vector.load %arg4[%c0_16, %c0_17] : memref<1x128xf32, #tpu.memory_space<vmem>>, vector<1x128xf32>
    %24 = arith.mulf %13, %22 : vector<1x128xf32>
    %25 = arith.subf %23, %24 : vector<1x128xf32>
    %26 = vector.broadcast %22 : vector<1x128xf32> to vector<512x128xf32>
    %27 = arith.mulf %2, %26 : vector<512x128xf32>
    %28 = vector.broadcast %25 : vector<1x128xf32> to vector<512x128xf32>
    %29 = arith.addf %27, %28 : vector<512x128xf32>
    %cst_18 = arith.constant 0.000000e+00 : f32
    %30 = vector.broadcast %cst_18 : f32 to vector<512x128xf32>
    %31 = arith.cmpf oge, %29, %30 : vector<512x128xf32>
    %cst_19 = arith.constant 2.000000e-01 : f32
    %32 = vector.broadcast %cst_19 : f32 to vector<512x128xf32>
    %33 = arith.mulf %32, %29 : vector<512x128xf32>
    %34 = arith.select %31, %29, %33 : vector<512x128xi1>, vector<512x128xf32>
    %35 = arith.negf %34 : vector<512x128xf32>
    %36 = math.exp %35 : vector<512x128xf32>
    %cst_20 = arith.constant 1.000000e+00 : f32
    %37 = vector.broadcast %cst_20 : f32 to vector<512x128xf32>
    %38 = arith.addf %37, %36 : vector<512x128xf32>
    %39 = arith.divf %37, %38 : vector<512x128xf32>
    %c0_21 = arith.constant 0 : index
    %c0_22 = arith.constant 0 : index
    %40 = vector.load %arg6[%c0_21, %c0_22] : memref<512x128xf32, #tpu.memory_space<vmem>>, vector<512x128xf32>
    tpu.vector_store %arg6[%c0_21, %c0_22], %39 {strides = array<i32>} : memref<512x128xf32, #tpu.memory_space<vmem>>, vector<512x128xf32>,
    return
  }
  func.func @transform_0(%arg0: i32) -> (i32, i32) {
    %c0_i32 = arith.constant 0 : i32
    %c0_i32_0 = arith.constant 0 : i32
    %c0_i32_1 = arith.constant 0 : i32
    return %c0_i32, %c0_i32_0 : i32, i32
  }
  func.func @transform_1(%arg0: i32) -> (i32, i32) {
    %c0_i32 = arith.constant 0 : i32
    %c0_i32_0 = arith.constant 0 : i32
    %c0_i32_1 = arith.constant 0 : i32
    return %c0_i32, %c0_i32_0 : i32, i32
  }
  func.func @transform_2(%arg0: i32) -> (i32, i32) {
    %c0_i32 = arith.constant 0 : i32
    %c0_i32_0 = arith.constant 0 : i32
    %c0_i32_1 = arith.constant 0 : i32
    return %c0_i32, %c0_i32_0 : i32, i32
  }
  func.func @transform_3(%arg0: i32) -> (i32, i32) {
    %c0_i32 = arith.constant 0 : i32
    %c0_i32_0 = arith.constant 0 : i32
    %c0_i32_1 = arith.constant 0 : i32
    return %c0_i32, %c0_i32_0 : i32, i32
  }
  func.func @transform_4(%arg0: i32) -> (i32, i32) {
    %c0_i32 = arith.constant 0 : i32
    %c0_i32_0 = arith.constant 0 : i32
    %c0_i32_1 = arith.constant 0 : i32
    return %c0_i32, %c0_i32_0 : i32, i32
  }
  func.func @transform_5(%arg0: i32) -> (i32, i32) {
    %c0_i32 = arith.constant 0 : i32
    %c0_i32_0 = arith.constant 0 : i32
    %c0_i32_1 = arith.constant 0 : i32
    return %c0_i32, %c0_i32_0 : i32, i32
  }
}

</mosaic_0001>

<llo_original>
// kernel: net_forward.8
$region0: #{net_forward.8}
  #allocation0 [shape = 'u32[]', space=smem, size = 0x4, offset = 0x4, fixed_abs, tag = 'smem constant byte address 0x4 - core index']
  #allocation1 [shape = 'u32[144,128]{1,0:T(1,128)}', space=vmem, size = 0x12000, scoped, tag = 'internal scratch']
  %s0 = inlined_call_operand.vmem [shape: bf16[512,48], index: 0, kind: input, shape index: {}]
  %s1 = inlined_call_operand.vmem [shape: bf16[48,128], index: 1, kind: input, shape index: {}]
  %s2 = inlined_call_operand.vmem [shape: bf16[512,128], index: 2, kind: output, shape index: {}]
  %s3 = sld [smem:[#allocation0]]
  $region18: #{net_forward.8} parent=0
    _
  %s5 = ssub.s32 1, %s3
  %s6 = scalar_select 0, %s5, %s3
  // Predicated region
  $region2: #{net_forward.8} parent=0 // pred_check
    _
  $region3: #{net_forward.8} parent=0 // pred_check_branch
    %8 = sbr.rel (0) target = $region5
  $region4: #{net_forward.8} parent=0 // pred_region
    _
  $region5: #{net_forward.8} parent=0 // pred_fallthru
    _
  // Predicated region
  $region6: #{net_forward.8} parent=0 // pred_check
    _
  $region7: #{net_forward.8} parent=0 // pred_check_branch
    %10 = sbr.rel (0) target = $region9
  $region8: #{net_forward.8} parent=0 // pred_region
    _
  $region9: #{net_forward.8} parent=0 // pred_fallthru
    _
  %v12 = vld [vmem:[%s0] sm:$0xf]
  %v13 = vld [vmem:[%s0 + $0x4] sm:$0xf]
  %v14 = vld [vmem:[%s0 + $0x8] sm:$0xf]
  %v15 = vld [vmem:[%s0 + $0xc] sm:$0xf]
  %v16 = vld [vmem:[%s0 + $0x10] sm:$0xf]
  %v17 = vld [vmem:[%s0 + $0x14] sm:$0xf]
  %v18 = vld [vmem:[%s0 + $0x18] sm:$0xf]
  %v19 = vld [vmem:[%s0 + $0x1c] sm:$0xf]
  %v20 = vld [vmem:[%s0 + $0x20] sm:$0xf]
  %v21 = vld [vmem:[%s0 + $0x24] sm:$0xf]
  %v22 = vld [vmem:[%s0 + $0x28] sm:$0xf]
  %v23 = vld [vmem:[%s0 + $0x2c] sm:$0xf]
  %v24 = vld [vmem:[%s0 + $0x30] sm:$0xf]
  %v25 = vld [vmem:[%s0 + $0x34] sm:$0xf]
  %v26 = vld [vmem:[%s0 + $0x38] sm:$0xf]
  %v27 = vld [vmem:[%s0 + $0x3c] sm:$0xf]
  %v28 = vld [vmem:[%s0 + $0x40] sm:$0xf]
  %v29 = vld [vmem:[%s0 + $0x44] sm:$0xf]
  %v30 = vld [vmem:[%s0 + $0x48] sm:$0xf]
  %v31 = vld [vmem:[%s0 + $0x4c] sm:$0xf]
  %v32 = vld [vmem:[%s0 + $0x50] sm:$0xf]
  %v33 = vld [vmem:[%s0 + $0x54] sm:$0xf]
  %v34 = vld [vmem:[%s0 + $0x58] sm:$0xf]
  %v35 = vld [vmem:[%s0 + $0x5c] sm:$0xf]
  %v36 = vld [vmem:[%s0 + $0x60] sm:$0xf]
  %v37 = vld [vmem:[%s0 + $0x64] sm:$0xf]
  %v38 = vld [vmem:[%s0 + $0x68] sm:$0xf]
  %v39 = vld [vmem:[%s0 + $0x6c] sm:$0xf]
  %v40 = vld [vmem:[%s0 + $0x70] sm:$0xf]
  %v41 = vld [vmem:[%s0 + $0x74] sm:$0xf]
  %v42 = vld [vmem:[%s0 + $0x78] sm:$0xf]
  %v43 = vld [vmem:[%s0 + $0x7c] sm:$0xf]
  %v44 = vld [vmem:[%s0 + $0x80] sm:$0xf]
  %v45 = vld [vmem:[%s0 + $0x84] sm:$0xf]
  %v46 = vld [vmem:[%s0 + $0x88] sm:$0xf]
  %v47 = vld [vmem:[%s0 + $0x8c] sm:$0xf]
  %v48 = vld [vmem:[%s0 + $0x90] sm:$0xf]
  %v49 = vld [vmem:[%s0 + $0x94] sm:$0xf]
  %v50 = vld [vmem:[%s0 + $0x98] sm:$0xf]
  %v51 = vld [vmem:[%s0 + $0x9c] sm:$0xf]
  %v52 = vld [vmem:[%s0 + $0xa0] sm:$0xf]
  %v53 = vld [vmem:[%s0 + $0xa4] sm:$0xf]
  %v54 = vld [vmem:[%s0 + $0xa8] sm:$0xf]
  %v55 = vld [vmem:[%s0 + $0xac] sm:$0xf]
  %v56 = vld [vmem:[%s0 + $0xb0] sm:$0xf]
  %v57 = vld [vmem:[%s0 + $0xb4] sm:$0xf]
  %v58 = vld [vmem:[%s0 + $0xb8] sm:$0xf]
  %v59 = vld [vmem:[%s0 + $0xbc] sm:$0xf]
  %v60 = vld [vmem:[%s0 + $0xc0] sm:$0xf]
  %v61 = vld [vmem:[%s0 + $0xc4] sm:$0xf]
  %v62 = vld [vmem:[%s0 + $0xc8] sm:$0xf]
  %v63 = vld [vmem:[%s0 + $0xcc] sm:$0xf]
  %v64 = vld [vmem:[%s0 + $0xd0] sm:$0xf]
  %v65 = vld [vmem:[%s0 + $0xd4] sm:$0xf]
  %v66 = vld [vmem:[%s0 + $0xd8] sm:$0xf]
  %v67 = vld [vmem:[%s0 + $0xdc] sm:$0xf]
  %v68 = vld [vmem:[%s0 + $0xe0] sm:$0xf]
  %v69 = vld [vmem:[%s0 + $0xe4] sm:$0xf]
  %v70 = vld [vmem:[%s0 + $0xe8] sm:$0xf]
  %v71 = vld [vmem:[%s0 + $0xec] sm:$0xf]
  %v72 = vld [vmem:[%s0 + $0xf0] sm:$0xf]
  %v73 = vld [vmem:[%s0 + $0xf4] sm:$0xf]
  %v74 = vld [vmem:[%s0 + $0xf8] sm:$0xf]
  %v75 = vld [vmem:[%s0 + $0xfc] sm:$0xf]
  %v76 = vld [vmem:[%s1] sm:$0xf]
  %v77 = vld [vmem:[%s1 + $0x4] sm:$0xf]
  %v78 = vld [vmem:[%s1 + $0x8] sm:$0xf]
  %v79 = vld [vmem:[%s1 + $0xc] sm:$0xf]
  %v80 = vld [vmem:[%s1 + $0x10] sm:$0xf]
  %v81 = vld [vmem:[%s1 + $0x14] sm:$0xf]
  %v146 = vunpack.c.l.b16 %v12
  %v147 = vunpack.c.l.b16 %v13
  %v148 = vunpack.c.l.b16 %v14
  %v149 = vunpack.c.l.b16 %v15
  %v150 = vunpack.c.l.b16 %v16
  %v151 = vunpack.c.l.b16 %v17
  %v152 = vunpack.c.l.b16 %v18
  %v153 = vunpack.c.l.b16 %v19
  %v154 = vunpack.c.l.b16 %v20
  %v155 = vunpack.c.l.b16 %v21
  %v156 = vunpack.c.l.b16 %v22
  %v157 = vunpack.c.l.b16 %v23
  %v158 = vunpack.c.l.b16 %v24
  %v159 = vunpack.c.l.b16 %v25
  %v160 = vunpack.c.l.b16 %v26
  %v161 = vunpack.c.l.b16 %v27
  %v162 = vunpack.c.l.b16 %v28
  %v163 = vunpack.c.l.b16 %v29
  %v164 = vunpack.c.l.b16 %v30
  %v165 = vunpack.c.l.b16 %v31
  %v166 = vunpack.c.l.b16 %v32
  %v167 = vunpack.c.l.b16 %v33
  %v168 = vunpack.c.l.b16 %v34
  %v169 = vunpack.c.l.b16 %v35
  %v170 = vunpack.c.l.b16 %v36
  %v171 = vunpack.c.l.b16 %v37
  %v172 = vunpack.c.l.b16 %v38
  %v173 = vunpack.c.l.b16 %v39
  %v174 = vunpack.c.l.b16 %v40
  %v175 = vunpack.c.l.b16 %v41
  %v176 = vunpack.c.l.b16 %v42
  %v177 = vunpack.c.l.b16 %v43
  %v178 = vunpack.c.l.b16 %v44
  %v179 = vunpack.c.l.b16 %v45
  %v180 = vunpack.c.l.b16 %v46
  %v181 = vunpack.c.l.b16 %v47
  %v182 = vunpack.c.l.b16 %v48
  %v183 = vunpack.c.l.b16 %v49
  %v184 = vunpack.c.l.b16 %v50
  %v185 = vunpack.c.l.b16 %v51
  %v186 = vunpack.c.l.b16 %v52
  %v187 = vunpack.c.l.b16 %v53
  %v188 = vunpack.c.l.b16 %v54
  %v189 = vunpack.c.l.b16 %v55
  %v190 = vunpack.c.l.b16 %v56
  %v191 = vunpack.c.l.b16 %v57
  %v192 = vunpack.c.l.b16 %v58
  %v193 = vunpack.c.l.b16 %v59
  %v194 = vunpack.c.l.b16 %v60
  %v195 = vunpack.c.l.b16 %v61
  %v196 = vunpack.c.l.b16 %v62
  %v197 = vunpack.c.l.b16 %v63
  %v198 = vunpack.c.l.b16 %v64
  %v199 = vunpack.c.l.b16 %v65
  %v200 = vunpack.c.l.b16 %v66
  %v201 = vunpack.c.l.b16 %v67
  %v202 = vunpack.c.l.b16 %v68
  %v203 = vunpack.c.l.b16 %v69
  %v204 = vunpack.c.l.b16 %v70
  %v205 = vunpack.c.l.b16 %v71
  %v206 = vunpack.c.l.b16 %v72
  %v207 = vunpack.c.l.b16 %v73
  %v208 = vunpack.c.l.b16 %v74
  %v209 = vunpack.c.l.b16 %v75
  %v210 = vpack.c.b16 %v147, %v146
  %v211 = vpack.c.b16 %v149, %v148
  %v212 = vpack.c.b16 %v151, %v150
  %v213 = vpack.c.b16 %v153, %v152
  %v214 = vpack.c.b16 %v155, %v154
  %v215 = vpack.c.b16 %v157, %v156
  %v216 = vpack.c.b16 %v159, %v158
  %v217 = vpack.c.b16 %v161, %v160
  %v218 = vpack.c.b16 %v163, %v162
  %v219 = vpack.c.b16 %v165, %v164
  %v220 = vpack.c.b16 %v167, %v166
  %v221 = vpack.c.b16 %v169, %v168
  %v222 = vpack.c.b16 %v171, %v170
  %v223 = vpack.c.b16 %v173, %v172
  %v224 = vpack.c.b16 %v175, %v174
  %v225 = vpack.c.b16 %v177, %v176
  %v226 = vpack.c.b16 %v179, %v178
  %v227 = vpack.c.b16 %v181, %v180
  %v228 = vpack.c.b16 %v183, %v182
  %v229 = vpack.c.b16 %v185, %v184
  %v230 = vpack.c.b16 %v187, %v186
  %v231 = vpack.c.b16 %v189, %v188
  %v232 = vpack.c.b16 %v191, %v190
  %v233 = vpack.c.b16 %v193, %v192
  %v234 = vpack.c.b16 %v195, %v194
  %v235 = vpack.c.b16 %v197, %v196
  %v236 = vpack.c.b16 %v199, %v198
  %v237 = vpack.c.b16 %v201, %v200
  %v238 = vpack.c.b16 %v203, %v202
  %v239 = vpack.c.b16 %v205, %v204
  %v240 = vpack.c.b16 %v207, %v206
  %v241 = vpack.c.b16 %v209, %v208
  %v248 = vunpack.c.l.b16 %v76
  %v249 = vunpack.c.l.b16 %v77
  %v250 = vunpack.c.l.b16 %v78
  %v251 = vunpack.c.l.b16 %v79
  %v252 = vunpack.c.l.b16 %v80
  %v253 = vunpack.c.l.b16 %v81
  %v254 = vpack.c.b16 %v249, %v248
  %v255 = vpack.c.b16 %v251, %v250
  %v256 = vpack.c.b16 %v253, %v252
  %vm260 = vcmask 392192
  %v262 = vsel %vm260, %v210, 0
  %v265 = vsel %vm260, %v211, 0
  %v268 = vsel %vm260, %v212, 0
  %v271 = vsel %vm260, %v213, 0
  %v274 = vsel %vm260, %v214, 0
  %v277 = vsel %vm260, %v215, 0
  %v280 = vsel %vm260, %v216, 0
  %v283 = vsel %vm260, %v217, 0
  %v286 = vsel %vm260, %v218, 0
  %v289 = vsel %vm260, %v219, 0
  %v292 = vsel %vm260, %v220, 0
  %v295 = vsel %vm260, %v221, 0
  %v298 = vsel %vm260, %v222, 0
  %v301 = vsel %vm260, %v223, 0
  %v304 = vsel %vm260, %v224, 0
  %v307 = vsel %vm260, %v225, 0
  %v310 = vsel %vm260, %v226, 0
  %v313 = vsel %vm260, %v227, 0
  %v316 = vsel %vm260, %v228, 0
  %v319 = vsel %vm260, %v229, 0
  %v322 = vsel %vm260, %v230, 0
  %v325 = vsel %vm260, %v231, 0
  %v328 = vsel %vm260, %v232, 0
  %v331 = vsel %vm260, %v233, 0
  %v334 = vsel %vm260, %v234, 0
  %v337 = vsel %vm260, %v235, 0
  %v340 = vsel %vm260, %v236, 0
  %v343 = vsel %vm260, %v237, 0
  %v346 = vsel %vm260, %v238, 0
  %v349 = vsel %vm260, %v239, 0
  %v352 = vsel %vm260, %v240, 0
  %v355 = vsel %vm260, %v241, 0
  %357 = vmatprep.subr.bf16.mxu0 0
  %358 = vmatpush1.bf16.msra.mxu0 %v254
  %359 = vmatprep.subr.bf16.mxu0 0
  %360 = vmatpush1.bf16.msra.mxu0 %v255
  %361 = vmatprep.subr.bf16.mxu0 0
  %362 = vmatpush1.bf16.msra.mxu0 %v256
  %363 = vmatprep.subr.bf16.mxu0 0
  %364 = vmatpush1.bf16.msra.mxu0 0
  %365 = vmatprep.subr.bf16.mxu0 0
  %366 = vmatpush1.bf16.msra.mxu0 0
  %367 = vmatprep.subr.bf16.mxu0 0
  %368 = vmatpush1.bf16.msra.mxu0 0
  %369 = vmatprep.subr.bf16.mxu0 0
  %370 = vmatpush1.bf16.msra.mxu0 0
  %371 = vmatprep.subr.bf16.mxu0 0
  %372 = vmatpush1.bf16.msra.mxu0 0
  %373 = vmatprep.subr.bf16.mxu0 0
  %374 = vmatpush1.bf16.msra.mxu0 0
  %375 = vmatprep.subr.bf16.mxu0 0
  %376 = vmatpush1.bf16.msra.mxu0 0
  %377 = vmatprep.subr.bf16.mxu0 0
  %378 = vmatpush1.bf16.msra.mxu0 0
  %379 = vmatprep.subr.bf16.mxu0 0
  %380 = vmatpush1.bf16.msra.mxu0 0
  %381 = vmatprep.subr.bf16.mxu0 0
  %382 = vmatpush1.bf16.msra.mxu0 0
  %383 = vmatprep.subr.bf16.mxu0 0
  %384 = vmatpush1.bf16.msra.mxu0 0
  %385 = vmatprep.subr.bf16.mxu0 0
  %386 = vmatpush1.bf16.msra.mxu0 0
  %387 = vmatprep.subr.bf16.mxu0 0
  %388 = vmatpush1.bf16.msra.mxu0 0
  %389 = vmatprep.mubr.bf16.mxu0 0
  %390 = vmatmul.mubr.bf16.gmra.mrb[0].mxu0 %v262
  %v391 = vpop.f32.mrb[0].mxu0
  %v392 = vadd.f32 0.0, %v391
  %v393 = vpop.f32.mrb[0].mxu0
  %v394 = vpop.f32.mrb[0].mxu0
  %v395 = vadd.f32 0.0, %v394
  %v396 = vpop.f32.mrb[0].mxu0
  %397 = vmatprep.mubr.bf16.mxu0 0
  %398 = vmatmul.mubr.bf16.gmra.mrb[0].mxu0 %v265
  %v399 = vpop.f32.mrb[0].mxu0
  %v400 = vadd.f32 0.0, %v399
  %v401 = vpop.f32.mrb[0].mxu0
  %v402 = vpop.f32.mrb[0].mxu0
  %v403 = vadd.f32 0.0, %v402
  %v404 = vpop.f32.mrb[0].mxu0
  %405 = vmatprep.mubr.bf16.mxu0 0
  %406 = vmatmul.mubr.bf16.gmra.mrb[0].mxu0 %v268
  %v407 = vpop.f32.mrb[0].mxu0
  %v408 = vadd.f32 0.0, %v407
  %v409 = vpop.f32.mrb[0].mxu0
  %v410 = vpop.f32.mrb[0].mxu0
  %v411 = vadd.f32 0.0, %v410
  %v412 = vpop.f32.mrb[0].mxu0
  %413 = vmatprep.mubr.bf16.mxu0 0
  %414 = vmatmul.mubr.bf16.gmra.mrb[0].mxu0 %v271
  %v415 = vpop.f32.mrb[0].mxu0
  %v416 = vadd.f32 0.0, %v415
  %v417 = vpop.f32.mrb[0].mxu0
  %v418 = vpop.f32.mrb[0].mxu0
  %v419 = vadd.f32 0.0, %v418
  %v420 = vpop.f32.mrb[0].mxu0
  %421 = vmatprep.mubr.bf16.mxu0 0
  %422 = vmatmul.mubr.bf16.gmra.mrb[0].mxu0 %v274
  %v423 = vpop.f32.mrb[0].mxu0
  %v424 = vadd.f32 0.0, %v423
  %v425 = vpop.f32.mrb[0].mxu0
  %v426 = vpop.f32.mrb[0].mxu0
  %v427 = vadd.f32 0.0, %v426
  %v428 = vpop.f32.mrb[0].mxu0
  %429 = vmatprep.mubr.bf16.mxu0 0
  %430 = vmatmul.mubr.bf16.gmra.mrb[0].mxu0 %v277
  %v431 = vpop.f32.mrb[0].mxu0
  %v432 = vadd.f32 0.0, %v431
  %v433 = vpop.f32.mrb[0].mxu0
  %v434 = vpop.f32.mrb[0].mxu0
  %v435 = vadd.f32 0.0, %v434
  %v436 = vpop.f32.mrb[0].mxu0
  %437 = vmatprep.mubr.bf16.mxu0 0
  %438 = vmatmul.mubr.bf16.gmra.mrb[0].mxu0 %v280
  %v439 = vpop.f32.mrb[0].mxu0
  %v440 = vadd.f32 0.0, %v439
  %v441 = vpop.f32.mrb[0].mxu0
  %v442 = vpop.f32.mrb[0].mxu0
  %v443 = vadd.f32 0.0, %v442
  %v444 = vpop.f32.mrb[0].mxu0
  %445 = vmatprep.mubr.bf16.mxu0 0
  %446 = vmatmul.mubr.bf16.gmra.mrb[0].mxu0 %v283
  %v447 = vpop.f32.mrb[0].mxu0
  %v448 = vadd.f32 0.0, %v447
  %v449 = vpop.f32.mrb[0].mxu0
  %v450 = vpop.f32.mrb[0].mxu0
  %v451 = vadd.f32 0.0, %v450
  %v452 = vpop.f32.mrb[0].mxu0
  %453 = vmatprep.mubr.bf16.mxu0 0
  %454 = vmatmul.mubr.bf16.gmra.mrb[0].mxu0 %v286
  %v455 = vpop.f32.mrb[0].mxu0
  %v456 = vadd.f32 0.0, %v455
  %v457 = vpop.f32.mrb[0].mxu0
  %v458 = vpop.f32.mrb[0].mxu0
  %v459 = vadd.f32 0.0, %v458
  %v460 = vpop.f32.mrb[0].mxu0
  %461 = vmatprep.mubr.bf16.mxu0 0
  %462 = vmatmul.mubr.bf16.gmra.mrb[0].mxu0 %v289
  %v463 = vpop.f32.mrb[0].mxu0
  %v464 = vadd.f32 0.0, %v463
  %v465 = vpop.f32.mrb[0].mxu0
  %v466 = vpop.f32.mrb[0].mxu0
  %v467 = vadd.f32 0.0, %v466
  %v468 = vpop.f32.mrb[0].mxu0
  %469 = vmatprep.mubr.bf16.mxu0 0
  %470 = vmatmul.mubr.bf16.gmra.mrb[0].mxu0 %v292
  %v471 = vpop.f32.mrb[0].mxu0
  %v472 = vadd.f32 0.0, %v471
  %v473 = vpop.f32.mrb[0].mxu0
  %v474 = vpop.f32.mrb[0].mxu0
  %v475 = vadd.f32 0.0, %v474
  %v476 = vpop.f32.mrb[0].mxu0
  %477 = vmatprep.mubr.bf16.mxu0 0
  %478 = vmatmul.mubr.bf16.gmra.mrb[0].mxu0 %v295
  %v479 = vpop.f32.mrb[0].mxu0
  %v480 = vadd.f32 0.0, %v479
  %v481 = vpop.f32.mrb[0].mxu0
  %v482 = vpop.f32.mrb[0].mxu0
  %v483 = vadd.f32 0.0, %v482
  %v484 = vpop.f32.mrb[0].mxu0
  %485 = vmatprep.mubr.bf16.mxu0 0
  %486 = vmatmul.mubr.bf16.gmra.mrb[0].mxu0 %v298
  %v487 = vpop.f32.mrb[0].mxu0
  %v488 = vadd.f32 0.0, %v487
  %v489 = vpop.f32.mrb[0].mxu0
  %v490 = vpop.f32.mrb[0].mxu0
  %v491 = vadd.f32 0.0, %v490
  %v492 = vpop.f32.mrb[0].mxu0
  %493 = vmatprep.mubr.bf16.mxu0 0
  %494 = vmatmul.mubr.bf16.gmra.mrb[0].mxu0 %v301
  %v495 = vpop.f32.mrb[0].mxu0
  %v496 = vadd.f32 0.0, %v495
  %v497 = vpop.f32.mrb[0].mxu0
  %v498 = vpop.f32.mrb[0].mxu0
  %v499 = vadd.f32 0.0, %v498
  %v500 = vpop.f32.mrb[0].mxu0
  %501 = vmatprep.mubr.bf16.mxu0 0
  %502 = vmatmul.mubr.bf16.gmra.mrb[0].mxu0 %v304
  %v503 = vpop.f32.mrb[0].mxu0
  %v504 = vadd.f32 0.0, %v503
  %v505 = vpop.f32.mrb[0].mxu0
  %v506 = vpop.f32.mrb[0].mxu0
  %v507 = vadd.f32 0.0, %v506
  %v508 = vpop.f32.mrb[0].mxu0
  %509 = vmatprep.mubr.bf16.mxu0 0
  %510 = vmatmul.mubr.bf16.gmra.mrb[0].mxu0 %v307
  %v511 = vpop.f32.mrb[0].mxu0
  %v512 = vadd.f32 0.0, %v511
  %v513 = vpop.f32.mrb[0].mxu0
  %v514 = vpop.f32.mrb[0].mxu0
  %v515 = vadd.f32 0.0, %v514
  %v516 = vpop.f32.mrb[0].mxu0
  %517 = vmatprep.mubr.bf16.mxu0 0
  %518 = vmatmul.mubr.bf16.gmra.mrb[0].mxu0 %v310
  %v519 = vpop.f32.mrb[0].mxu0
  %v520 = vadd.f32 0.0, %v519
  %v521 = vpop.f32.mrb[0].mxu0
  %v522 = vpop.f32.mrb[0].mxu0
  %v523 = vadd.f32 0.0, %v522
  %v524 = vpop.f32.mrb[0].mxu0
  %525 = vmatprep.mubr.bf16.mxu0 0
  %526 = vmatmul.mubr.bf16.gmra.mrb[0].mxu0 %v313
  %v527 = vpop.f32.mrb[0].mxu0
  %v528 = vadd.f32 0.0, %v527
  %v529 = vpop.f32.mrb[0].mxu0
  %v530 = vpop.f32.mrb[0].mxu0
  %v531 = vadd.f32 0.0, %v530
  %v532 = vpop.f32.mrb[0].mxu0
  %533 = vmatprep.mubr.bf16.mxu0 0
  %534 = vmatmul.mubr.bf16.gmra.mrb[0].mxu0 %v316
  %v535 = vpop.f32.mrb[0].mxu0
  %v536 = vadd.f32 0.0, %v535
  %v537 = vpop.f32.mrb[0].mxu0
  %v538 = vpop.f32.mrb[0].mxu0
  %v539 = vadd.f32 0.0, %v538
  %v540 = vpop.f32.mrb[0].mxu0
  %541 = vmatprep.mubr.bf16.mxu0 0
  %542 = vmatmul.mubr.bf16.gmra.mrb[0].mxu0 %v319
  %v543 = vpop.f32.mrb[0].mxu0
  %v544 = vadd.f32 0.0, %v543
  %v545 = vpop.f32.mrb[0].mxu0
  %v546 = vpop.f32.mrb[0].mxu0
  %v547 = vadd.f32 0.0, %v546
  %v548 = vpop.f32.mrb[0].mxu0
  %549 = vmatprep.mubr.bf16.mxu0 0
  %550 = vmatmul.mubr.bf16.gmra.mrb[0].mxu0 %v322
  %v551 = vpop.f32.mrb[0].mxu0
  %v552 = vadd.f32 0.0, %v551
  %v553 = vpop.f32.mrb[0].mxu0
  %v554 = vpop.f32.mrb[0].mxu0
  %v555 = vadd.f32 0.0, %v554
  %v556 = vpop.f32.mrb[0].mxu0
  %557 = vmatprep.mubr.bf16.mxu0 0
  %558 = vmatmul.mubr.bf16.gmra.mrb[0].mxu0 %v325
  %v559 = vpop.f32.mrb[0].mxu0
  %v560 = vadd.f32 0.0, %v559
  %v561 = vpop.f32.mrb[0].mxu0
  %v562 = vpop.f32.mrb[0].mxu0
  %v563 = vadd.f32 0.0, %v562
  %v564 = vpop.f32.mrb[0].mxu0
  %565 = vmatprep.mubr.bf16.mxu0 0
  %566 = vmatmul.mubr.bf16.gmra.mrb[0].mxu0 %v328
  %v567 = vpop.f32.mrb[0].mxu0
  %v568 = vadd.f32 0.0, %v567
  %v569 = vpop.f32.mrb[0].mxu0
  %v570 = vpop.f32.mrb[0].mxu0
  %v571 = vadd.f32 0.0, %v570
  %v572 = vpop.f32.mrb[0].mxu0
  %573 = vmatprep.mubr.bf16.mxu0 0
  %574 = vmatmul.mubr.bf16.gmra.mrb[0].mxu0 %v331
  %v575 = vpop.f32.mrb[0].mxu0
  %v576 = vadd.f32 0.0, %v575
  %v577 = vpop.f32.mrb[0].mxu0
  %v578 = vpop.f32.mrb[0].mxu0
  %v579 = vadd.f32 0.0, %v578
  %v580 = vpop.f32.mrb[0].mxu0
  %581 = vmatprep.mubr.bf16.mxu0 0
  %582 = vmatmul.mubr.bf16.gmra.mrb[0].mxu0 %v334
  %v583 = vpop.f32.mrb[0].mxu0
  %v584 = vadd.f32 0.0, %v583
  %v585 = vpop.f32.mrb[0].mxu0
  %v586 = vpop.f32.mrb[0].mxu0
  %v587 = vadd.f32 0.0, %v586
  %v588 = vpop.f32.mrb[0].mxu0
  %589 = vmatprep.mubr.bf16.mxu0 0
  %590 = vmatmul.mubr.bf16.gmra.mrb[0].mxu0 %v337
  %v591 = vpop.f32.mrb[0].mxu0
  %v592 = vadd.f32 0.0, %v591
  %v593 = vpop.f32.mrb[0].mxu0
  %v594 = vpop.f32.mrb[0].mxu0
  %v595 = vadd.f32 0.0, %v594
  %v596 = vpop.f32.mrb[0].mxu0
  %597 = vmatprep.mubr.bf16.mxu0 0
  %598 = vmatmul.mubr.bf16.gmra.mrb[0].mxu0 %v340
  %v599 = vpop.f32.mrb[0].mxu0
  %v600 = vadd.f32 0.0, %v599
  %v601 = vpop.f32.mrb[0].mxu0
  %v602 = vpop.f32.mrb[0].mxu0
  %v603 = vadd.f32 0.0, %v602
  %v604 = vpop.f32.mrb[0].mxu0
  %605 = vmatprep.mubr.bf16.mxu0 0
  %606 = vmatmul.mubr.bf16.gmra.mrb[0].mxu0 %v343
  %v607 = vpop.f32.mrb[0].mxu0
  %v608 = vadd.f32 0.0, %v607
  %v609 = vpop.f32.mrb[0].mxu0
  %v610 = vpop.f32.mrb[0].mxu0
  %v611 = vadd.f32 0.0, %v610
  %v612 = vpop.f32.mrb[0].mxu0
  %613 = vmatprep.mubr.bf16.mxu0 0
  %614 = vmatmul.mubr.bf16.gmra.mrb[0].mxu0 %v346
  %v615 = vpop.f32.mrb[0].mxu0
  %v616 = vadd.f32 0.0, %v615
  %v617 = vpop.f32.mrb[0].mxu0
  %v618 = vpop.f32.mrb[0].mxu0
  %v619 = vadd.f32 0.0, %v618
  %v620 = vpop.f32.mrb[0].mxu0
  %621 = vmatprep.mubr.bf16.mxu0 0
  %622 = vmatmul.mubr.bf16.gmra.mrb[0].mxu0 %v349
  %v623 = vpop.f32.mrb[0].mxu0
  %v624 = vadd.f32 0.0, %v623
  %v625 = vpop.f32.mrb[0].mxu0
  %v626 = vpop.f32.mrb[0].mxu0
  %v627 = vadd.f32 0.0, %v626
  %v628 = vpop.f32.mrb[0].mxu0
  %629 = vmatprep.mubr.bf16.mxu0 0
  %630 = vmatmul.mubr.bf16.gmra.mrb[0].mxu0 %v352
  %v631 = vpop.f32.mrb[0].mxu0
  %v632 = vadd.f32 0.0, %v631
  %v633 = vpop.f32.mrb[0].mxu0
  %v634 = vpop.f32.mrb[0].mxu0
  %v635 = vadd.f32 0.0, %v634
  %v636 = vpop.f32.mrb[0].mxu0
  %637 = vmatprep.mubr.bf16.mxu0 0
  %638 = vmatmul.mubr.bf16.gmra.mrb[0].mxu0 %v355
  %v639 = vpop.f32.mrb[0].mxu0
  %v640 = vadd.f32 0.0, %v639
  %v641 = vpop.f32.mrb[0].mxu0
  %v642 = vpop.f32.mrb[0].mxu0
  %v643 = vadd.f32 0.0, %v642
  %v644 = vpop.f32.mrb[0].mxu0
  %645 = vdwg.mxu0
  %vm646 = vcmp.ge.f32.partialorder %v392, 0.0
  %vm647 = vcmp.ge.f32.partialorder %v395, 0.0
  %vm648 = vcmp.ge.f32.partialorder %v400, 0.0
  %vm649 = vcmp.ge.f32.partialorder %v403, 0.0
  %vm650 = vcmp.ge.f32.partialorder %v408, 0.0
  %vm651 = vcmp.ge.f32.partialorder %v411, 0.0
  %vm652 = vcmp.ge.f32.partialorder %v416, 0.0
  %vm653 = vcmp.ge.f32.partialorder %v419, 0.0
  %vm654 = vcmp.ge.f32.partialorder %v424, 0.0
  %vm655 = vcmp.ge.f32.partialorder %v427, 0.0
  %vm656 = vcmp.ge.f32.partialorder %v432, 0.0
  %vm657 = vcmp.ge.f32.partialorder %v435, 0.0
  %vm658 = vcmp.ge.f32.partialorder %v440, 0.0
  %vm659 = vcmp.ge.f32.partialorder %v443, 0.0
  %vm660 = vcmp.ge.f32.partialorder %v448, 0.0
  %vm661 = vcmp.ge.f32.partialorder %v451, 0.0
  %vm662 = vcmp.ge.f32.partialorder %v456, 0.0
  %vm663 = vcmp.ge.f32.partialorder %v459, 0.0
  %vm664 = vcmp.ge.f32.partialorder %v464, 0.0
  %vm665 = vcmp.ge.f32.partialorder %v467, 0.0
  %vm666 = vcmp.ge.f32.partialorder %v472, 0.0
  %vm667 = vcmp.ge.f32.partialorder %v475, 0.0
  %vm668 = vcmp.ge.f32.partialorder %v480, 0.0
  %vm669 = vcmp.ge.f32.partialorder %v483, 0.0
  %vm670 = vcmp.ge.f32.partialorder %v488, 0.0
  %vm671 = vcmp.ge.f32.partialorder %v491, 0.0
  %vm672 = vcmp.ge.f32.partialorder %v496, 0.0
  %vm673 = vcmp.ge.f32.partialorder %v499, 0.0
  %vm674 = vcmp.ge.f32.partialorder %v504, 0.0
  %vm675 = vcmp.ge.f32.partialorder %v507, 0.0
  %vm676 = vcmp.ge.f32.partialorder %v512, 0.0
  %vm677 = vcmp.ge.f32.partialorder %v515, 0.0
  %vm678 = vcmp.ge.f32.partialorder %v520, 0.0
  %vm679 = vcmp.ge.f32.partialorder %v523, 0.0
  %vm680 = vcmp.ge.f32.partialorder %v528, 0.0
  %vm681 = vcmp.ge.f32.partialorder %v531, 0.0
  %vm682 = vcmp.ge.f32.partialorder %v536, 0.0
  %vm683 = vcmp.ge.f32.partialorder %v539, 0.0
  %vm684 = vcmp.ge.f32.partialorder %v544, 0.0
  %vm685 = vcmp.ge.f32.partialorder %v547, 0.0
  %vm686 = vcmp.ge.f32.partialorder %v552, 0.0
  %vm687 = vcmp.ge.f32.partialorder %v555, 0.0
  %vm688 = vcmp.ge.f32.partialorder %v560, 0.0
  %vm689 = vcmp.ge.f32.partialorder %v563, 0.0
  %vm690 = vcmp.ge.f32.partialorder %v568, 0.0
  %vm691 = vcmp.ge.f32.partialorder %v571, 0.0
  %vm692 = vcmp.ge.f32.partialorder %v576, 0.0
  %vm693 = vcmp.ge.f32.partialorder %v579, 0.0
  %vm694 = vcmp.ge.f32.partialorder %v584, 0.0
  %vm695 = vcmp.ge.f32.partialorder %v587, 0.0
  %vm696 = vcmp.ge.f32.partialorder %v592, 0.0
  %vm697 = vcmp.ge.f32.partialorder %v595, 0.0
  %vm698 = vcmp.ge.f32.partialorder %v600, 0.0
  %vm699 = vcmp.ge.f32.partialorder %v603, 0.0
  %vm700 = vcmp.ge.f32.partialorder %v608, 0.0
  %vm701 = vcmp.ge.f32.partialorder %v611, 0.0
  %vm702 = vcmp.ge.f32.partialorder %v616, 0.0
  %vm703 = vcmp.ge.f32.partialorder %v619, 0.0
  %vm704 = vcmp.ge.f32.partialorder %v624, 0.0
  %vm705 = vcmp.ge.f32.partialorder %v627, 0.0
  %vm706 = vcmp.ge.f32.partialorder %v632, 0.0
  %vm707 = vcmp.ge.f32.partialorder %v635, 0.0
  %vm708 = vcmp.ge.f32.partialorder %v640, 0.0
  %vm709 = vcmp.ge.f32.partialorder %v643, 0.0
  %v710 = vmul.f32 %v392, 0.2
  %v711 = vmul.f32 %v395, 0.2
  %v712 = vmul.f32 %v400, 0.2
  %v713 = vmul.f32 %v403, 0.2
  %v714 = vmul.f32 %v408, 0.2
  %v715 = vmul.f32 %v411, 0.2
  %v716 = vmul.f32 %v416, 0.2
  %v717 = vmul.f32 %v419, 0.2
  %v718 = vmul.f32 %v424, 0.2
  %v719 = vmul.f32 %v427, 0.2
  %v720 = vmul.f32 %v432, 0.2
  %v721 = vmul.f32 %v435, 0.2
  %v722 = vmul.f32 %v440, 0.2
  %v723 = vmul.f32 %v443, 0.2
  %v724 = vmul.f32 %v448, 0.2
  %v725 = vmul.f32 %v451, 0.2
  %v726 = vmul.f32 %v456, 0.2
  %v727 = vmul.f32 %v459, 0.2
  %v728 = vmul.f32 %v464, 0.2
  %v729 = vmul.f32 %v467, 0.2
  %v730 = vmul.f32 %v472, 0.2
  %v731 = vmul.f32 %v475, 0.2
  %v732 = vmul.f32 %v480, 0.2
  %v733 = vmul.f32 %v483, 0.2
  %v734 = vmul.f32 %v488, 0.2
  %v735 = vmul.f32 %v491, 0.2
  %v736 = vmul.f32 %v496, 0.2
  %v737 = vmul.f32 %v499, 0.2
  %v738 = vmul.f32 %v504, 0.2
  %v739 = vmul.f32 %v507, 0.2
  %v740 = vmul.f32 %v512, 0.2
  %v741 = vmul.f32 %v515, 0.2
  %v742 = vmul.f32 %v520, 0.2
  %v743 = vmul.f32 %v523, 0.2
  %v744 = vmul.f32 %v528, 0.2
  %v745 = vmul.f32 %v531, 0.2
  %v746 = vmul.f32 %v536, 0.2
  %v747 = vmul.f32 %v539, 0.2
  %v748 = vmul.f32 %v544, 0.2
  %v749 = vmul.f32 %v547, 0.2
  %v750 = vmul.f32 %v552, 0.2
  %v751 = vmul.f32 %v555, 0.2
  %v752 = vmul.f32 %v560, 0.2
  %v753 = vmul.f32 %v563, 0.2
  %v754 = vmul.f32 %v568, 0.2
  %v755 = vmul.f32 %v571, 0.2
  %v756 = vmul.f32 %v576, 0.2
  %v757 = vmul.f32 %v579, 0.2
  %v758 = vmul.f32 %v584, 0.2
  %v759 = vmul.f32 %v587, 0.2
  %v760 = vmul.f32 %v592, 0.2
  %v761 = vmul.f32 %v595, 0.2
  %v762 = vmul.f32 %v600, 0.2
  %v763 = vmul.f32 %v603, 0.2
  %v764 = vmul.f32 %v608, 0.2
  %v765 = vmul.f32 %v611, 0.2
  %v766 = vmul.f32 %v616, 0.2
  %v767 = vmul.f32 %v619, 0.2
  %v768 = vmul.f32 %v624, 0.2
  %v769 = vmul.f32 %v627, 0.2
  %v770 = vmul.f32 %v632, 0.2
  %v771 = vmul.f32 %v635, 0.2
  %v772 = vmul.f32 %v640, 0.2
  %v773 = vmul.f32 %v643, 0.2
  %v774 = vsel %vm646, %v392, %v710
  %v775 = vsel %vm647, %v395, %v711
  %v776 = vsel %vm648, %v400, %v712
  %v777 = vsel %vm649, %v403, %v713
  %v778 = vsel %vm650, %v408, %v714
  %v779 = vsel %vm651, %v411, %v715
  %v780 = vsel %vm652, %v416, %v716
  %v781 = vsel %vm653, %v419, %v717
  %v782 = vsel %vm654, %v424, %v718
  %v783 = vsel %vm655, %v427, %v719
  %v784 = vsel %vm656, %v432, %v720
  %v785 = vsel %vm657, %v435, %v721
  %v786 = vsel %vm658, %v440, %v722
  %v787 = vsel %vm659, %v443, %v723
  %v788 = vsel %vm660, %v448, %v724
  %v789 = vsel %vm661, %v451, %v725
  %v790 = vsel %vm662, %v456, %v726
  %v791 = vsel %vm663, %v459, %v727
  %v792 = vsel %vm664, %v464, %v728
  %v793 = vsel %vm665, %v467, %v729
  %v794 = vsel %vm666, %v472, %v730
  %v795 = vsel %vm667, %v475, %v731
  %v796 = vsel %vm668, %v480, %v732
  %v797 = vsel %vm669, %v483, %v733
  %v798 = vsel %vm670, %v488, %v734
  %v799 = vsel %vm671, %v491, %v735
  %v800 = vsel %vm672, %v496, %v736
  %v801 = vsel %vm673, %v499, %v737
  %v802 = vsel %vm674, %v504, %v738
  %v803 = vsel %vm675, %v507, %v739
  %v804 = vsel %vm676, %v512, %v740
  %v805 = vsel %vm677, %v515, %v741
  %v806 = vsel %vm678, %v520, %v742
  %v807 = vsel %vm679, %v523, %v743
  %v808 = vsel %vm680, %v528, %v744
  %v809 = vsel %vm681, %v531, %v745
  %v810 = vsel %vm682, %v536, %v746
  %v811 = vsel %vm683, %v539, %v747
  %v812 = vsel %vm684, %v544, %v748
  %v813 = vsel %vm685, %v547, %v749
  %v814 = vsel %vm686, %v552, %v750
  %v815 = vsel %vm687, %v555, %v751
  %v816 = vsel %vm688, %v560, %v752
  %v817 = vsel %vm689, %v563, %v753
  %v818 = vsel %vm690, %v568, %v754
  %v819 = vsel %vm691, %v571, %v755
  %v820 = vsel %vm692, %v576, %v756
  %v821 = vsel %vm693, %v579, %v757
  %v822 = vsel %vm694, %v584, %v758
  %v823 = vsel %vm695, %v587, %v759
  %v824 = vsel %vm696, %v592, %v760
  %v825 = vsel %vm697, %v595, %v761
  %v826 = vsel %vm698, %v600, %v762
  %v827 = vsel %vm699, %v603, %v763
  %v828 = vsel %vm700, %v608, %v764
  %v829 = vsel %vm701, %v611, %v765
  %v830 = vsel %vm702, %v616, %v766
  %v831 = vsel %vm703, %v619, %v767
  %v832 = vsel %vm704, %v624, %v768
  %v833 = vsel %vm705, %v627, %v769
  %v834 = vsel %vm706, %v632, %v770
  %v835 = vsel %vm707, %v635, %v771
  %v836 = vsel %vm708, %v640, %v772
  %v837 = vsel %vm709, %v643, %v773
  %v838 = vpack.c.bf16 %v775, %v774
  %v839 = vpack.c.bf16 %v777, %v776
  %v840 = vpack.c.bf16 %v779, %v778
  %v841 = vpack.c.bf16 %v781, %v780
  %v842 = vpack.c.bf16 %v783, %v782
  %v843 = vpack.c.bf16 %v785, %v784
  %v844 = vpack.c.bf16 %v787, %v786
  %v845 = vpack.c.bf16 %v789, %v788
  %v846 = vpack.c.bf16 %v791, %v790
  %v847 = vpack.c.bf16 %v793, %v792
  %v848 = vpack.c.bf16 %v795, %v794
  %v849 = vpack.c.bf16 %v797, %v796
  %v850 = vpack.c.bf16 %v799, %v798
  %v851 = vpack.c.bf16 %v801, %v800
  %v852 = vpack.c.bf16 %v803, %v802
  %v853 = vpack.c.bf16 %v805, %v804
  %v854 = vpack.c.bf16 %v807, %v806
  %v855 = vpack.c.bf16 %v809, %v808
  %v856 = vpack.c.bf16 %v811, %v810
  %v857 = vpack.c.bf16 %v813, %v812
  %v858 = vpack.c.bf16 %v815, %v814
  %v859 = vpack.c.bf16 %v817, %v816
  %v860 = vpack.c.bf16 %v819, %v818
  %v861 = vpack.c.bf16 %v821, %v820
  %v862 = vpack.c.bf16 %v823, %v822
  %v863 = vpack.c.bf16 %v825, %v824
  %v864 = vpack.c.bf16 %v827, %v826
  %v865 = vpack.c.bf16 %v829, %v828
  %v866 = vpack.c.bf16 %v831, %v830
  %v867 = vpack.c.bf16 %v833, %v832
  %v868 = vpack.c.bf16 %v835, %v834
  %v869 = vpack.c.bf16 %v837, %v836
  %v902 = vunpack.c.l.b16 %v838
  %v903 = vunpack.c.h.b16 %v838
  %v904 = vunpack.c.l.b16 %v839
  %v905 = vunpack.c.h.b16 %v839
  %v906 = vunpack.c.l.b16 %v840
  %v907 = vunpack.c.h.b16 %v840
  %v908 = vunpack.c.l.b16 %v841
  %v909 = vunpack.c.h.b16 %v841
  %v910 = vunpack.c.l.b16 %v842
  %v911 = vunpack.c.h.b16 %v842
  %v912 = vunpack.c.l.b16 %v843
  %v913 = vunpack.c.h.b16 %v843
  %v914 = vunpack.c.l.b16 %v844
  %v915 = vunpack.c.h.b16 %v844
  %v916 = vunpack.c.l.b16 %v845
  %v917 = vunpack.c.h.b16 %v845
  %v918 = vunpack.c.l.b16 %v846
  %v919 = vunpack.c.h.b16 %v846
  %v920 = vunpack.c.l.b16 %v847
  %v921 = vunpack.c.h.b16 %v847
  %v922 = vunpack.c.l.b16 %v848
  %v923 = vunpack.c.h.b16 %v848
  %v924 = vunpack.c.l.b16 %v849
  %v925 = vunpack.c.h.b16 %v849
  %v926 = vunpack.c.l.b16 %v850
  %v927 = vunpack.c.h.b16 %v850
  %v928 = vunpack.c.l.b16 %v851
  %v929 = vunpack.c.h.b16 %v851
  %v930 = vunpack.c.l.b16 %v852
  %v931 = vunpack.c.h.b16 %v852
  %v932 = vunpack.c.l.b16 %v853
  %v933 = vunpack.c.h.b16 %v853
  %v934 = vunpack.c.l.b16 %v854
  %v935 = vunpack.c.h.b16 %v854
  %v936 = vunpack.c.l.b16 %v855
  %v937 = vunpack.c.h.b16 %v855
  %v938 = vunpack.c.l.b16 %v856
  %v939 = vunpack.c.h.b16 %v856
  %v940 = vunpack.c.l.b16 %v857
  %v941 = vunpack.c.h.b16 %v857
  %v942 = vunpack.c.l.b16 %v858
  %v943 = vunpack.c.h.b16 %v858
  %v944 = vunpack.c.l.b16 %v859
  %v945 = vunpack.c.h.b16 %v859
  %v946 = vunpack.c.l.b16 %v860
  %v947 = vunpack.c.h.b16 %v860
  %v948 = vunpack.c.l.b16 %v861
  %v949 = vunpack.c.h.b16 %v861
  %v950 = vunpack.c.l.b16 %v862
  %v951 = vunpack.c.h.b16 %v862
  %v952 = vunpack.c.l.b16 %v863
  %v953 = vunpack.c.h.b16 %v863
  %v954 = vunpack.c.l.b16 %v864
  %v955 = vunpack.c.h.b16 %v864
  %v956 = vunpack.c.l.b16 %v865
  %v957 = vunpack.c.h.b16 %v865
  %v958 = vunpack.c.l.b16 %v866
  %v959 = vunpack.c.h.b16 %v866
  %v960 = vunpack.c.l.b16 %v867
  %v961 = vunpack.c.h.b16 %v867
  %v962 = vunpack.c.l.b16 %v868
  %v963 = vunpack.c.h.b16 %v868
  %v964 = vunpack.c.l.b16 %v869
  %v965 = vunpack.c.h.b16 %v869
  %v966 = vpack.c.b16 %v902, %v902
  %v967 = vpack.c.b16 %v903, %v903
  %v968 = vpack.c.b16 %v904, %v904
  %v969 = vpack.c.b16 %v905, %v905
  %v970 = vpack.c.b16 %v906, %v906
  %v971 = vpack.c.b16 %v907, %v907
  %v972 = vpack.c.b16 %v908, %v908
  %v973 = vpack.c.b16 %v909, %v909
  %v974 = vpack.c.b16 %v910, %v910
  %v975 = vpack.c.b16 %v911, %v911
  %v976 = vpack.c.b16 %v912, %v912
  %v977 = vpack.c.b16 %v913, %v913
  %v978 = vpack.c.b16 %v914, %v914
  %v979 = vpack.c.b16 %v915, %v915
  %v980 = vpack.c.b16 %v916, %v916
  %v981 = vpack.c.b16 %v917, %v917
  %v982 = vpack.c.b16 %v918, %v918
  %v983 = vpack.c.b16 %v919, %v919
  %v984 = vpack.c.b16 %v920, %v920
  %v985 = vpack.c.b16 %v921, %v921
  %v986 = vpack.c.b16 %v922, %v922
  %v987 = vpack.c.b16 %v923, %v923
  %v988 = vpack.c.b16 %v924, %v924
  %v989 = vpack.c.b16 %v925, %v925
  %v990 = vpack.c.b16 %v926, %v926
  %v991 = vpack.c.b16 %v927, %v927
  %v992 = vpack.c.b16 %v928, %v928
  %v993 = vpack.c.b16 %v929, %v929
  %v994 = vpack.c.b16 %v930, %v930
  %v995 = vpack.c.b16 %v931, %v931
  %v996 = vpack.c.b16 %v932, %v932
  %v997 = vpack.c.b16 %v933, %v933
  %v998 = vpack.c.b16 %v934, %v934
  %v999 = vpack.c.b16 %v935, %v935
  %v1000 = vpack.c.b16 %v936, %v936
  %v1001 = vpack.c.b16 %v937, %v937
  %v1002 = vpack.c.b16 %v938, %v938
  %v1003 = vpack.c.b16 %v939, %v939
  %v1004 = vpack.c.b16 %v940, %v940
  %v1005 = vpack.c.b16 %v941, %v941
  %v1006 = vpack.c.b16 %v942, %v942
  %v1007 = vpack.c.b16 %v943, %v943
  %v1008 = vpack.c.b16 %v944, %v944
  %v1009 = vpack.c.b16 %v945, %v945
  %v1010 = vpack.c.b16 %v946, %v946
  %v1011 = vpack.c.b16 %v947, %v947
  %v1012 = vpack.c.b16 %v948, %v948
  %v1013 = vpack.c.b16 %v949, %v949
  %v1014 = vpack.c.b16 %v950, %v950
  %v1015 = vpack.c.b16 %v951, %v951
  %v1016 = vpack.c.b16 %v952, %v952
  %v1017 = vpack.c.b16 %v953, %v953
  %v1018 = vpack.c.b16 %v954, %v954
  %v1019 = vpack.c.b16 %v955, %v955
  %v1020 = vpack.c.b16 %v956, %v956
  %v1021 = vpack.c.b16 %v957, %v957
  %v1022 = vpack.c.b16 %v958, %v958
  %v1023 = vpack.c.b16 %v959, %v959
  %v1024 = vpack.c.b16 %v960, %v960
  %v1025 = vpack.c.b16 %v961, %v961
  %v1026 = vpack.c.b16 %v962, %v962
  %v1027 = vpack.c.b16 %v963, %v963
  %v1028 = vpack.c.b16 %v964, %v964
  %v1029 = vpack.c.b16 %v965, %v965
  %1094 = vst [vmem:[%s2] sm:$0xf] %v966
  %1095 = vst [vmem:[%s2 + $0x4] sm:$0xf] %v967
  %1096 = vst [vmem:[%s2 + $0x8] sm:$0xf] %v968
  %1097 = vst [vmem:[%s2 + $0xc] sm:$0xf] %v969
  %1098 = vst [vmem:[%s2 + $0x10] sm:$0xf] %v970
  %1099 = vst [vmem:[%s2 + $0x14] sm:$0xf] %v971
  %1100 = vst [vmem:[%s2 + $0x18] sm:$0xf] %v972
  %1101 = vst [vmem:[%s2 + $0x1c] sm:$0xf] %v973
  %1102 = vst [vmem:[%s2 + $0x20] sm:$0xf] %v974
  %1103 = vst [vmem:[%s2 + $0x24] sm:$0xf] %v975
  %1104 = vst [vmem:[%s2 + $0x28] sm:$0xf] %v976
  %1105 = vst [vmem:[%s2 + $0x2c] sm:$0xf] %v977
  %1106 = vst [vmem:[%s2 + $0x30] sm:$0xf] %v978
  %1107 = vst [vmem:[%s2 + $0x34] sm:$0xf] %v979
  %1108 = vst [vmem:[%s2 + $0x38] sm:$0xf] %v980
  %1109 = vst [vmem:[%s2 + $0x3c] sm:$0xf] %v981
  %1110 = vst [vmem:[%s2 + $0x40] sm:$0xf] %v982
  %1111 = vst [vmem:[%s2 + $0x44] sm:$0xf] %v983
  %1112 = vst [vmem:[%s2 + $0x48] sm:$0xf] %v984
  %1113 = vst [vmem:[%s2 + $0x4c] sm:$0xf] %v985
  %1114 = vst [vmem:[%s2 + $0x50] sm:$0xf] %v986
  %1115 = vst [vmem:[%s2 + $0x54] sm:$0xf] %v987
  %1116 = vst [vmem:[%s2 + $0x58] sm:$0xf] %v988
  %1117 = vst [vmem:[%s2 + $0x5c] sm:$0xf] %v989
  %1118 = vst [vmem:[%s2 + $0x60] sm:$0xf] %v990
  %1119 = vst [vmem:[%s2 + $0x64] sm:$0xf] %v991
  %1120 = vst [vmem:[%s2 + $0x68] sm:$0xf] %v992
  %1121 = vst [vmem:[%s2 + $0x6c] sm:$0xf] %v993
  %1122 = vst [vmem:[%s2 + $0x70] sm:$0xf] %v994
  %1123 = vst [vmem:[%s2 + $0x74] sm:$0xf] %v995
  %1124 = vst [vmem:[%s2 + $0x78] sm:$0xf] %v996
  %1125 = vst [vmem:[%s2 + $0x7c] sm:$0xf] %v997
  %1126 = vst [vmem:[%s2 + $0x80] sm:$0xf] %v998
  %1127 = vst [vmem:[%s2 + $0x84] sm:$0xf] %v999
  %1128 = vst [vmem:[%s2 + $0x88] sm:$0xf] %v1000
  %1129 = vst [vmem:[%s2 + $0x8c] sm:$0xf] %v1001
  %1130 = vst [vmem:[%s2 + $0x90] sm:$0xf] %v1002
  %1131 = vst [vmem:[%s2 + $0x94] sm:$0xf] %v1003
  %1132 = vst [vmem:[%s2 + $0x98] sm:$0xf] %v1004
  %1133 = vst [vmem:[%s2 + $0x9c] sm:$0xf] %v1005
  %1134 = vst [vmem:[%s2 + $0xa0] sm:$0xf] %v1006
  %1135 = vst [vmem:[%s2 + $0xa4] sm:$0xf] %v1007
  %1136 = vst [vmem:[%s2 + $0xa8] sm:$0xf] %v1008
  %1137 = vst [vmem:[%s2 + $0xac] sm:$0xf] %v1009
  %1138 = vst [vmem:[%s2 + $0xb0] sm:$0xf] %v1010
  %1139 = vst [vmem:[%s2 + $0xb4] sm:$0xf] %v1011
  %1140 = vst [vmem:[%s2 + $0xb8] sm:$0xf] %v1012
  %1141 = vst [vmem:[%s2 + $0xbc] sm:$0xf] %v1013
  %1142 = vst [vmem:[%s2 + $0xc0] sm:$0xf] %v1014
  %1143 = vst [vmem:[%s2 + $0xc4] sm:$0xf] %v1015
  %1144 = vst [vmem:[%s2 + $0xc8] sm:$0xf] %v1016
  %1145 = vst [vmem:[%s2 + $0xcc] sm:$0xf] %v1017
  %1146 = vst [vmem:[%s2 + $0xd0] sm:$0xf] %v1018
  %1147 = vst [vmem:[%s2 + $0xd4] sm:$0xf] %v1019
  %1148 = vst [vmem:[%s2 + $0xd8] sm:$0xf] %v1020
  %1149 = vst [vmem:[%s2 + $0xdc] sm:$0xf] %v1021
  %1150 = vst [vmem:[%s2 + $0xe0] sm:$0xf] %v1022
  %1151 = vst [vmem:[%s2 + $0xe4] sm:$0xf] %v1023
  %1152 = vst [vmem:[%s2 + $0xe8] sm:$0xf] %v1024
  %1153 = vst [vmem:[%s2 + $0xec] sm:$0xf] %v1025
  %1154 = vst [vmem:[%s2 + $0xf0] sm:$0xf] %v1026
  %1155 = vst [vmem:[%s2 + $0xf4] sm:$0xf] %v1027
  %1156 = vst [vmem:[%s2 + $0xf8] sm:$0xf] %v1028
  %1157 = vst [vmem:[%s2 + $0xfc] sm:$0xf] %v1029
  // Predicated region
  $region10: #{net_forward.8} parent=0 // pred_check
    _
  $region11: #{net_forward.8} parent=0 // pred_check_branch
    %1159 = sbr.rel (0) target = $region13
  $region12: #{net_forward.8} parent=0 // pred_region
    _
  $region13: #{net_forward.8} parent=0 // pred_fallthru
    _
  // Predicated region
  $region14: #{net_forward.8} parent=0 // pred_check
    _
  $region15: #{net_forward.8} parent=0 // pred_check_branch
    %1161 = sbr.rel (0) target = $region17
  $region16: #{net_forward.8} parent=0 // pred_region
    _
  $region17: #{net_forward.8} parent=0 // pred_fallthru
    _

// kernel: net_forward.9
$region0: #{net_forward.9}
  #allocation0 [shape = 'u32[]', space=smem, size = 0x4, offset = 0x4, fixed_abs, tag = 'smem constant byte address 0x4 - core index']
  #allocation1 [shape = 'u32[144,128]{1,0:T(1,128)}', space=vmem, size = 0x12000, scoped, tag = 'internal scratch']
  %s0 = inlined_call_operand.vmem [shape: bf16[128,128], index: 0, kind: input, shape index: {}]
  %s1 = inlined_call_operand.vmem [shape: bf16[128,128], index: 1, kind: input, shape index: {}]
  %s2 = inlined_call_operand.vmem [shape: f32[1,128], index: 2, kind: input, shape index: {}]
  %s3 = inlined_call_operand.vmem [shape: f32[1,128], index: 3, kind: input, shape index: {}]
  %s4 = inlined_call_operand.vmem [shape: f32[128,128], index: 4, kind: input, shape index: {}]
  %s5 = inlined_call_operand.vmem [shape: bf16[128,128], index: 5, kind: output, shape index: {}]
  %s6 = sld [smem:[#allocation0]]
  $region30: #{net_forward.9} parent=0
    _
  %s8 = ssub.s32 1, %s6
  %s9 = scalar_select 0, %s8, %s6
  // Predicated region
  $region2: #{net_forward.9} parent=0 // pred_check
    _
  $region3: #{net_forward.9} parent=0 // pred_check_branch
    %11 = sbr.rel (0) target = $region5
  $region4: #{net_forward.9} parent=0 // pred_region
    _
  $region5: #{net_forward.9} parent=0 // pred_fallthru
    _
  // Predicated region
  $region6: #{net_forward.9} parent=0 // pred_check
    _
  $region7: #{net_forward.9} parent=0 // pred_check_branch
    %13 = sbr.rel (0) target = $region9
  $region8: #{net_forward.9} parent=0 // pred_region
    _
  $region9: #{net_forward.9} parent=0 // pred_fallthru
    _
  // Predicated region
  $region10: #{net_forward.9} parent=0 // pred_check
    _
  $region11: #{net_forward.9} parent=0 // pred_check_branch
    %15 = sbr.rel (0) target = $region13
  $region12: #{net_forward.9} parent=0 // pred_region
    _
  $region13: #{net_forward.9} parent=0 // pred_fallthru
    _
  // Predicated region
  $region14: #{net_forward.9} parent=0 // pred_check
    _
  $region15: #{net_forward.9} parent=0 // pred_check_branch
    %17 = sbr.rel (0) target = $region17
  $region16: #{net_forward.9} parent=0 // pred_region
    _
  $region17: #{net_forward.9} parent=0 // pred_fallthru
    _
  // Predicated region
  $region18: #{net_forward.9} parent=0 // pred_check
    _
  $region19: #{net_forward.9} parent=0 // pred_check_branch
    %19 = sbr.rel (0) target = $region21
  $region20: #{net_forward.9} parent=0 // pred_region
    _
  $region21: #{net_forward.9} parent=0 // pred_fallthru
    _
  %v21 = vld [vmem:[%s0] sm:$0xf]
  %v22 = vld [vmem:[%s0 + $0x4] sm:$0xf]
  %v23 = vld [vmem:[%s0 + $0x8] sm:$0xf]
  %v24 = vld [vmem:[%s0 + $0xc] sm:$0xf]
  %v25 = vld [vmem:[%s0 + $0x10] sm:$0xf]
  %v26 = vld [vmem:[%s0 + $0x14] sm:$0xf]
  %v27 = vld [vmem:[%s0 + $0x18] sm:$0xf]
  %v28 = vld [vmem:[%s0 + $0x1c] sm:$0xf]
  %v29 = vld [vmem:[%s0 + $0x20] sm:$0xf]
  %v30 = vld [vmem:[%s0 + $0x24] sm:$0xf]
  %v31 = vld [vmem:[%s0 + $0x28] sm:$0xf]
  %v32 = vld [vmem:[%s0 + $0x2c] sm:$0xf]
  %v33 = vld [vmem:[%s0 + $0x30] sm:$0xf]
  %v34 = vld [vmem:[%s0 + $0x34] sm:$0xf]
  %v35 = vld [vmem:[%s0 + $0x38] sm:$0xf]
  %v36 = vld [vmem:[%s0 + $0x3c] sm:$0xf]
  %v37 = vld [vmem:[%s1] sm:$0xf]
  %v38 = vld [vmem:[%s1 + $0x4] sm:$0xf]
  %v39 = vld [vmem:[%s1 + $0x8] sm:$0xf]
  %v40 = vld [vmem:[%s1 + $0xc] sm:$0xf]
  %v41 = vld [vmem:[%s1 + $0x10] sm:$0xf]
  %v42 = vld [vmem:[%s1 + $0x14] sm:$0xf]
  %v43 = vld [vmem:[%s1 + $0x18] sm:$0xf]
  %v44 = vld [vmem:[%s1 + $0x1c] sm:$0xf]
  %v45 = vld [vmem:[%s1 + $0x20] sm:$0xf]
  %v46 = vld [vmem:[%s1 + $0x24] sm:$0xf]
  %v47 = vld [vmem:[%s1 + $0x28] sm:$0xf]
  %v48 = vld [vmem:[%s1 + $0x2c] sm:$0xf]
  %v49 = vld [vmem:[%s1 + $0x30] sm:$0xf]
  %v50 = vld [vmem:[%s1 + $0x34] sm:$0xf]
  %v51 = vld [vmem:[%s1 + $0x38] sm:$0xf]
  %v52 = vld [vmem:[%s1 + $0x3c] sm:$0xf]
  %v69 = vunpack.c.l.b16 %v21
  %v70 = vunpack.c.l.b16 %v22
  %v71 = vunpack.c.l.b16 %v23
  %v72 = vunpack.c.l.b16 %v24
  %v73 = vunpack.c.l.b16 %v25
  %v74 = vunpack.c.l.b16 %v26
  %v75 = vunpack.c.l.b16 %v27
  %v76 = vunpack.c.l.b16 %v28
  %v77 = vunpack.c.l.b16 %v29
  %v78 = vunpack.c.l.b16 %v30
  %v79 = vunpack.c.l.b16 %v31
  %v80 = vunpack.c.l.b16 %v32
  %v81 = vunpack.c.l.b16 %v33
  %v82 = vunpack.c.l.b16 %v34
  %v83 = vunpack.c.l.b16 %v35
  %v84 = vunpack.c.l.b16 %v36
  %v85 = vpack.c.b16 %v70, %v69
  %v86 = vpack.c.b16 %v72, %v71
  %v87 = vpack.c.b16 %v74, %v73
  %v88 = vpack.c.b16 %v76, %v75
  %v89 = vpack.c.b16 %v78, %v77
  %v90 = vpack.c.b16 %v80, %v79
  %v91 = vpack.c.b16 %v82, %v81
  %v92 = vpack.c.b16 %v84, %v83
  %v117 = vunpack.c.l.b16 %v37
  %v118 = vunpack.c.l.b16 %v38
  %v119 = vunpack.c.l.b16 %v39
  %v120 = vunpack.c.l.b16 %v40
  %v121 = vunpack.c.l.b16 %v41
  %v122 = vunpack.c.l.b16 %v42
  %v123 = vunpack.c.l.b16 %v43
  %v124 = vunpack.c.l.b16 %v44
  %v125 = vunpack.c.l.b16 %v45
  %v126 = vunpack.c.l.b16 %v46
  %v127 = vunpack.c.l.b16 %v47
  %v128 = vunpack.c.l.b16 %v48
  %v129 = vunpack.c.l.b16 %v49
  %v130 = vunpack.c.l.b16 %v50
  %v131 = vunpack.c.l.b16 %v51
  %v132 = vunpack.c.l.b16 %v52
  %v133 = vpack.c.b16 %v118, %v117
  %v134 = vpack.c.b16 %v120, %v119
  %v135 = vpack.c.b16 %v122, %v121
  %v136 = vpack.c.b16 %v124, %v123
  %v137 = vpack.c.b16 %v126, %v125
  %v138 = vpack.c.b16 %v128, %v127
  %v139 = vpack.c.b16 %v130, %v129
  %v140 = vpack.c.b16 %v132, %v131
  %149 = vmatprep.subr.bf16.mxu0 0
  %150 = vmatpush1.bf16.msra.mxu0 %v133
  %151 = vmatprep.subr.bf16.mxu0 0
  %152 = vmatpush1.bf16.msra.mxu0 %v134
  %153 = vmatprep.subr.bf16.mxu0 0
  %154 = vmatpush1.bf16.msra.mxu0 %v135
  %155 = vmatprep.subr.bf16.mxu0 0
  %156 = vmatpush1.bf16.msra.mxu0 %v136
  %157 = vmatprep.subr.bf16.mxu0 0
  %158 = vmatpush1.bf16.msra.mxu0 %v137
  %159 = vmatprep.subr.bf16.mxu0 0
  %160 = vmatpush1.bf16.msra.mxu0 %v138
  %161 = vmatprep.subr.bf16.mxu0 0
  %162 = vmatpush1.bf16.msra.mxu0 %v139
  %163 = vmatprep.subr.bf16.mxu0 0
  %164 = vmatpush1.bf16.msra.mxu0 %v140
  %165 = vmatprep.subr.bf16.mxu0 0
  %166 = vmatpush1.bf16.msra.mxu0 0
  %167 = vmatprep.subr.bf16.mxu0 0
  %168 = vmatpush1.bf16.msra.mxu0 0
  %169 = vmatprep.subr.bf16.mxu0 0
  %170 = vmatpush1.bf16.msra.mxu0 0
  %171 = vmatprep.subr.bf16.mxu0 0
  %172 = vmatpush1.bf16.msra.mxu0 0
  %173 = vmatprep.subr.bf16.mxu0 0
  %174 = vmatpush1.bf16.msra.mxu0 0
  %175 = vmatprep.subr.bf16.mxu0 0
  %176 = vmatpush1.bf16.msra.mxu0 0
  %177 = vmatprep.subr.bf16.mxu0 0
  %178 = vmatpush1.bf16.msra.mxu0 0
  %179 = vmatprep.subr.bf16.mxu0 0
  %180 = vmatpush1.bf16.msra.mxu0 0
  %181 = vmatprep.mubr.bf16.mxu0 0
  %182 = vmatmul.mubr.bf16.gmra.mrb[0].mxu0 %v85
  %v183 = vpop.f32.mrb[0].mxu0
  %v184 = vadd.f32 0.0, %v183
  %v185 = vpop.f32.mrb[0].mxu0
  %v186 = vpop.f32.mrb[0].mxu0
  %v187 = vadd.f32 0.0, %v186
  %v188 = vpop.f32.mrb[0].mxu0
  %189 = vmatprep.mubr.bf16.mxu0 0
  %190 = vmatmul.mubr.bf16.gmra.mrb[0].mxu0 %v86
  %v191 = vpop.f32.mrb[0].mxu0
  %v192 = vadd.f32 0.0, %v191
  %v193 = vpop.f32.mrb[0].mxu0
  %v194 = vpop.f32.mrb[0].mxu0
  %v195 = vadd.f32 0.0, %v194
  %v196 = vpop.f32.mrb[0].mxu0
  %197 = vmatprep.mubr.bf16.mxu0 0
  %198 = vmatmul.mubr.bf16.gmra.mrb[0].mxu0 %v87
  %v199 = vpop.f32.mrb[0].mxu0
  %v200 = vadd.f32 0.0, %v199
  %v201 = vpop.f32.mrb[0].mxu0
  %v202 = vpop.f32.mrb[0].mxu0
  %v203 = vadd.f32 0.0, %v202
  %v204 = vpop.f32.mrb[0].mxu0
  %205 = vmatprep.mubr.bf16.mxu0 0
  %206 = vmatmul.mubr.bf16.gmra.mrb[0].mxu0 %v88
  %v207 = vpop.f32.mrb[0].mxu0
  %v208 = vadd.f32 0.0, %v207
  %v209 = vpop.f32.mrb[0].mxu0
  %v210 = vpop.f32.mrb[0].mxu0
  %v211 = vadd.f32 0.0, %v210
  %v212 = vpop.f32.mrb[0].mxu0
  %213 = vmatprep.mubr.bf16.mxu0 0
  %214 = vmatmul.mubr.bf16.gmra.mrb[0].mxu0 %v89
  %v215 = vpop.f32.mrb[0].mxu0
  %v216 = vadd.f32 0.0, %v215
  %v217 = vpop.f32.mrb[0].mxu0
  %v218 = vpop.f32.mrb[0].mxu0
  %v219 = vadd.f32 0.0, %v218
  %v220 = vpop.f32.mrb[0].mxu0
  %221 = vmatprep.mubr.bf16.mxu0 0
  %222 = vmatmul.mubr.bf16.gmra.mrb[0].mxu0 %v90
  %v223 = vpop.f32.mrb[0].mxu0
  %v224 = vadd.f32 0.0, %v223
  %v225 = vpop.f32.mrb[0].mxu0
  %v226 = vpop.f32.mrb[0].mxu0
  %v227 = vadd.f32 0.0, %v226
  %v228 = vpop.f32.mrb[0].mxu0
  %229 = vmatprep.mubr.bf16.mxu0 0
  %230 = vmatmul.mubr.bf16.gmra.mrb[0].mxu0 %v91
  %v231 = vpop.f32.mrb[0].mxu0
  %v232 = vadd.f32 0.0, %v231
  %v233 = vpop.f32.mrb[0].mxu0
  %v234 = vpop.f32.mrb[0].mxu0
  %v235 = vadd.f32 0.0, %v234
  %v236 = vpop.f32.mrb[0].mxu0
  %237 = vmatprep.mubr.bf16.mxu0 0
  %238 = vmatmul.mubr.bf16.gmra.mrb[0].mxu0 %v92
  %v239 = vpop.f32.mrb[0].mxu0
  %v240 = vadd.f32 0.0, %v239
  %v241 = vpop.f32.mrb[0].mxu0
  %v242 = vpop.f32.mrb[0].mxu0
  %v243 = vadd.f32 0.0, %v242
  %v244 = vpop.f32.mrb[0].mxu0
  %245 = vdwg.mxu0
  %v246 = vadd.f32 %v184, %v187
  %v247 = vadd.f32 %v246, %v192
  %v248 = vadd.f32 %v247, %v195
  %v249 = vadd.f32 %v248, %v200
  %v250 = vadd.f32 %v249, %v203
  %v251 = vadd.f32 %v250, %v208
  %v252 = vadd.f32 %v251, %v211
  %v253 = vadd.f32 %v252, %v216
  %v254 = vadd.f32 %v253, %v219
  %v255 = vadd.f32 %v254, %v224
  %v256 = vadd.f32 %v255, %v227
  %v257 = vadd.f32 %v256, %v232
  %v258 = vadd.f32 %v257, %v235
  %v259 = vadd.f32 %v258, %v240
  %v260 = vadd.f32 %v259, %v243
  %v261 = vrot.slane %v260, 4
  %v262 = vadd.f32 %v260, %v261
  %v263 = vrot.slane %v262, 2
  %v264 = vadd.f32 %v262, %v263
  %v265 = vrot.slane %v264, 1
  %v266 = vadd.f32 %v264, %v265
  %v267 = vmul.f32 %v184, %v184
  %v268 = vmul.f32 %v187, %v187
  %v269 = vmul.f32 %v192, %v192
  %v270 = vmul.f32 %v195, %v195
  %v271 = vmul.f32 %v200, %v200
  %v272 = vmul.f32 %v203, %v203
  %v273 = vmul.f32 %v208, %v208
  %v274 = vmul.f32 %v211, %v211
  %v275 = vmul.f32 %v216, %v216
  %v276 = vmul.f32 %v219, %v219
  %v277 = vmul.f32 %v224, %v224
  %v278 = vmul.f32 %v227, %v227
  %v279 = vmul.f32 %v232, %v232
  %v280 = vmul.f32 %v235, %v235
  %v281 = vmul.f32 %v240, %v240
  %v282 = vmul.f32 %v243, %v243
  %v283 = vadd.f32 %v267, %v268
  %v284 = vadd.f32 %v283, %v269
  %v285 = vadd.f32 %v284, %v270
  %v286 = vadd.f32 %v285, %v271
  %v287 = vadd.f32 %v286, %v272
  %v288 = vadd.f32 %v287, %v273
  %v289 = vadd.f32 %v288, %v274
  %v290 = vadd.f32 %v289, %v275
  %v291 = vadd.f32 %v290, %v276
  %v292 = vadd.f32 %v291, %v277
  %v293 = vadd.f32 %v292, %v278
  %v294 = vadd.f32 %v293, %v279
  %v295 = vadd.f32 %v294, %v280
  %v296 = vadd.f32 %v295, %v281
  %v297 = vadd.f32 %v296, %v282
  %v298 = vrot.slane %v297, 4
  %v299 = vadd.f32 %v297, %v298
  %v300 = vrot.slane %v299, 2
  %v301 = vadd.f32 %v299, %v300
  %v302 = vrot.slane %v301, 1
  %v303 = vadd.f32 %v301, %v302
  %v304 = vld [vmem:[%s4] sm:$0xff]
  %v305 = vld [vmem:[%s4 + $0x8] sm:$0xff]
  %v306 = vld [vmem:[%s4 + $0x10] sm:$0xff]
  %v307 = vld [vmem:[%s4 + $0x18] sm:$0xff]
  %v308 = vld [vmem:[%s4 + $0x20] sm:$0xff]
  %v309 = vld [vmem:[%s4 + $0x28] sm:$0xff]
  %v310 = vld [vmem:[%s4 + $0x30] sm:$0xff]
  %v311 = vld [vmem:[%s4 + $0x38] sm:$0xff]
  %v312 = vld [vmem:[%s4 + $0x40] sm:$0xff]
  %v313 = vld [vmem:[%s4 + $0x48] sm:$0xff]
  %v314 = vld [vmem:[%s4 + $0x50] sm:$0xff]
  %v315 = vld [vmem:[%s4 + $0x58] sm:$0xff]
  %v316 = vld [vmem:[%s4 + $0x60] sm:$0xff]
  %v317 = vld [vmem:[%s4 + $0x68] sm:$0xff]
  %v318 = vld [vmem:[%s4 + $0x70] sm:$0xff]
  %v319 = vld [vmem:[%s4 + $0x78] sm:$0xff]
  %320 = vmatprep.subr.mxu0 0.0
  %321 = vmatpush1.msra.mxu0 %v304
  %322 = vmatprep.subr.mxu0 0.0
  %323 = vmatpush1.msra.mxu0 %v305
  %324 = vmatprep.subr.mxu0 0.0
  %325 = vmatpush1.msra.mxu0 %v306
  %326 = vmatprep.subr.mxu0 0.0
  %327 = vmatpush1.msra.mxu0 %v307
  %328 = vmatprep.subr.mxu0 0.0
  %329 = vmatpush1.msra.mxu0 %v308
  %330 = vmatprep.subr.mxu0 0.0
  %331 = vmatpush1.msra.mxu0 %v309
  %332 = vmatprep.subr.mxu0 0.0
  %333 = vmatpush1.msra.mxu0 %v310
  %334 = vmatprep.subr.mxu0 0.0
  %335 = vmatpush1.msra.mxu0 %v311
  %336 = vmatprep.subr.mxu0 0.0
  %337 = vmatpush1.msra.mxu0 %v312
  %338 = vmatprep.subr.mxu0 0.0
  %339 = vmatpush1.msra.mxu0 %v313
  %340 = vmatprep.subr.mxu0 0.0
  %341 = vmatpush1.msra.mxu0 %v314
  %342 = vmatprep.subr.mxu0 0.0
  %343 = vmatpush1.msra.mxu0 %v315
  %344 = vmatprep.subr.mxu0 0.0
  %345 = vmatpush1.msra.mxu0 %v316
  %346 = vmatprep.subr.mxu0 0.0
  %347 = vmatpush1.msra.mxu0 %v317
  %348 = vmatprep.subr.mxu0 0.0
  %349 = vmatpush1.msra.mxu0 %v318
  %350 = vmatprep.subr.mxu0 0.0
  %351 = vmatpush1.msra.mxu0 %v319
  %352 = vmatprep.subr.mxu0 0.0
  %353 = vmatpush1.msra.mxu0 0.0
  %354 = vmatprep.subr.mxu0 0.0
  %355 = vmatpush1.msra.mxu0 0.0
  %356 = vmatprep.subr.mxu0 0.0
  %357 = vmatpush1.msra.mxu0 0.0
  %358 = vmatprep.subr.mxu0 0.0
  %359 = vmatpush1.msra.mxu0 0.0
  %360 = vmatprep.subr.mxu0 0.0
  %361 = vmatpush1.msra.mxu0 0.0
  %362 = vmatprep.subr.mxu0 0.0
  %363 = vmatpush1.msra.mxu0 0.0
  %364 = vmatprep.subr.mxu0 0.0
  %365 = vmatpush1.msra.mxu0 0.0
  %366 = vmatprep.subr.mxu0 0.0
  %367 = vmatpush1.msra.mxu0 0.0
  %368 = vmatprep.subr.mxu0 0.0
  %369 = vmatpush1.msra.mxu0 0.0
  %370 = vmatprep.subr.mxu0 0.0
  %371 = vmatpush1.msra.mxu0 0.0
  %372 = vmatprep.subr.mxu0 0.0
  %373 = vmatpush1.msra.mxu0 0.0
  %374 = vmatprep.subr.mxu0 0.0
  %375 = vmatpush1.msra.mxu0 0.0
  %376 = vmatprep.subr.mxu0 0.0
  %377 = vmatpush1.msra.mxu0 0.0
  %378 = vmatprep.subr.mxu0 0.0
  %379 = vmatpush1.msra.mxu0 0.0
  %380 = vmatprep.subr.mxu0 0.0
  %381 = vmatpush1.msra.mxu0 0.0
  %382 = vmatprep.subr.mxu0 0.0
  %383 = vmatpush1.msra.mxu0 0.0
  %384 = vmatprep.mubr.f32.mxu0 0.0
  %385 = vmatmul.mubr.f32.gmra.mrb[0].mxu0 %v266
  %v386 = vpop.f32.mrb[0].mxu0
  %v387 = vadd.f32 0.0, %v386
  %v388 = vpop.f32.mrb[0].mxu0
  %389 = vdwg.mxu0
  %390 = vmatprep.subr.mxu0 0.0
  %391 = vmatpush1.msra.mxu0 %v304
  %392 = vmatprep.subr.mxu0 0.0
  %393 = vmatpush1.msra.mxu0 %v305
  %394 = vmatprep.subr.mxu0 0.0
  %395 = vmatpush1.msra.mxu0 %v306
  %396 = vmatprep.subr.mxu0 0.0
  %397 = vmatpush1.msra.mxu0 %v307
  %398 = vmatprep.subr.mxu0 0.0
  %399 = vmatpush1.msra.mxu0 %v308
  %400 = vmatprep.subr.mxu0 0.0
  %401 = vmatpush1.msra.mxu0 %v309
  %402 = vmatprep.subr.mxu0 0.0
  %403 = vmatpush1.msra.mxu0 %v310
  %404 = vmatprep.subr.mxu0 0.0
  %405 = vmatpush1.msra.mxu0 %v311
  %406 = vmatprep.subr.mxu0 0.0
  %407 = vmatpush1.msra.mxu0 %v312
  %408 = vmatprep.subr.mxu0 0.0
  %409 = vmatpush1.msra.mxu0 %v313
  %410 = vmatprep.subr.mxu0 0.0
  %411 = vmatpush1.msra.mxu0 %v314
  %412 = vmatprep.subr.mxu0 0.0
  %413 = vmatpush1.msra.mxu0 %v315
  %414 = vmatprep.subr.mxu0 0.0
  %415 = vmatpush1.msra.mxu0 %v316
  %416 = vmatprep.subr.mxu0 0.0
  %417 = vmatpush1.msra.mxu0 %v317
  %418 = vmatprep.subr.mxu0 0.0
  %419 = vmatpush1.msra.mxu0 %v318
  %420 = vmatprep.subr.mxu0 0.0
  %421 = vmatpush1.msra.mxu0 %v319
  %422 = vmatprep.subr.mxu0 0.0
  %423 = vmatpush1.msra.mxu0 0.0
  %424 = vmatprep.subr.mxu0 0.0
  %425 = vmatpush1.msra.mxu0 0.0
  %426 = vmatprep.subr.mxu0 0.0
  %427 = vmatpush1.msra.mxu0 0.0
  %428 = vmatprep.subr.mxu0 0.0
  %429 = vmatpush1.msra.mxu0 0.0
  %430 = vmatprep.subr.mxu0 0.0
  %431 = vmatpush1.msra.mxu0 0.0
  %432 = vmatprep.subr.mxu0 0.0
  %433 = vmatpush1.msra.mxu0 0.0
  %434 = vmatprep.subr.mxu0 0.0
  %435 = vmatpush1.msra.mxu0 0.0
  %436 = vmatprep.subr.mxu0 0.0
  %437 = vmatpush1.msra.mxu0 0.0
  %438 = vmatprep.subr.mxu0 0.0
  %439 = vmatpush1.msra.mxu0 0.0
  %440 = vmatprep.subr.mxu0 0.0
  %441 = vmatpush1.msra.mxu0 0.0
  %442 = vmatprep.subr.mxu0 0.0
  %443 = vmatpush1.msra.mxu0 0.0
  %444 = vmatprep.subr.mxu0 0.0
  %445 = vmatpush1.msra.mxu0 0.0
  %446 = vmatprep.subr.mxu0 0.0
  %447 = vmatpush1.msra.mxu0 0.0
  %448 = vmatprep.subr.mxu0 0.0
  %449 = vmatpush1.msra.mxu0 0.0
  %450 = vmatprep.subr.mxu0 0.0
  %451 = vmatpush1.msra.mxu0 0.0
  %452 = vmatprep.subr.mxu0 0.0
  %453 = vmatpush1.msra.mxu0 0.0
  %454 = vmatprep.mubr.f32.mxu0 0.0
  %455 = vmatmul.mubr.f32.gmra.mrb[0].mxu0 %v303
  %v456 = vpop.f32.mrb[0].mxu0
  %v457 = vadd.f32 0.0, %v456
  %v458 = vpop.f32.mrb[0].mxu0
  %459 = vdwg.mxu0
  %v460 = vmul.f32 %v387, 0.0078125
  %v461 = vmul.f32 %v457, 0.0078125
  %v462 = vmul.f32 %v460, %v460
  %v463 = vsub.f32 %v461, %v462
  %v464 = vld [vmem:[%s2] sm:$0x1]
  %v465 = vadd.f32 %v463, 1e-05
  %v466 = vrsqrt.pop %v465
  %v467 = vmul.f32 %v464, %v466
  %v468 = vld [vmem:[%s3] sm:$0x1]
  %v469 = vmul.f32 %v460, %v467
  %v470 = vsub.f32 %v468, %v469
  %v472 = vlaneseq
  %v473 = vshrl.u32 %v472, 7
  %v474 = vsub.s32 0, %v473
  %v475 = vrot.slane %v467, %v474
  %v477 = vmul.f32 %v184, %v475
  %v478 = vmul.f32 %v187, %v475
  %v479 = vmul.f32 %v192, %v475
  %v480 = vmul.f32 %v195, %v475
  %v481 = vmul.f32 %v200, %v475
  %v482 = vmul.f32 %v203, %v475
  %v483 = vmul.f32 %v208, %v475
  %v484 = vmul.f32 %v211, %v475
  %v485 = vmul.f32 %v216, %v475
  %v486 = vmul.f32 %v219, %v475
  %v487 = vmul.f32 %v224, %v475
  %v488 = vmul.f32 %v227, %v475
  %v489 = vmul.f32 %v232, %v475
  %v490 = vmul.f32 %v235, %v475
  %v491 = vmul.f32 %v240, %v475
  %v492 = vmul.f32 %v243, %v475
  %v494 = vlaneseq
  %v495 = vshrl.u32 %v494, 7
  %v496 = vsub.s32 0, %v495
  %v497 = vrot.slane %v470, %v496
  %v499 = vadd.f32 %v477, %v497
  %v500 = vadd.f32 %v478, %v497
  %v501 = vadd.f32 %v479, %v497
  %v502 = vadd.f32 %v480, %v497
  %v503 = vadd.f32 %v481, %v497
  %v504 = vadd.f32 %v482, %v497
  %v505 = vadd.f32 %v483, %v497
  %v506 = vadd.f32 %v484, %v497
  %v507 = vadd.f32 %v485, %v497
  %v508 = vadd.f32 %v486, %v497
  %v509 = vadd.f32 %v487, %v497
  %v510 = vadd.f32 %v488, %v497
  %v511 = vadd.f32 %v489, %v497
  %v512 = vadd.f32 %v490, %v497
  %v513 = vadd.f32 %v491, %v497
  %v514 = vadd.f32 %v492, %v497
  %vm515 = vcmp.ge.f32.partialorder %v499, 0.0
  %vm516 = vcmp.ge.f32.partialorder %v500, 0.0
  %vm517 = vcmp.ge.f32.partialorder %v501, 0.0
  %vm518 = vcmp.ge.f32.partialorder %v502, 0.0
  %vm519 = vcmp.ge.f32.partialorder %v503, 0.0
  %vm520 = vcmp.ge.f32.partialorder %v504, 0.0
  %vm521 = vcmp.ge.f32.partialorder %v505, 0.0
  %vm522 = vcmp.ge.f32.partialorder %v506, 0.0
  %vm523 = vcmp.ge.f32.partialorder %v507, 0.0
  %vm524 = vcmp.ge.f32.partialorder %v508, 0.0
  %vm525 = vcmp.ge.f32.partialorder %v509, 0.0
  %vm526 = vcmp.ge.f32.partialorder %v510, 0.0
  %vm527 = vcmp.ge.f32.partialorder %v511, 0.0
  %vm528 = vcmp.ge.f32.partialorder %v512, 0.0
  %vm529 = vcmp.ge.f32.partialorder %v513, 0.0
  %vm530 = vcmp.ge.f32.partialorder %v514, 0.0
  %v531 = vmul.f32 %v499, 0.2
  %v532 = vmul.f32 %v500, 0.2
  %v533 = vmul.f32 %v501, 0.2
  %v534 = vmul.f32 %v502, 0.2
  %v535 = vmul.f32 %v503, 0.2
  %v536 = vmul.f32 %v504, 0.2
  %v537 = vmul.f32 %v505, 0.2
  %v538 = vmul.f32 %v506, 0.2
  %v539 = vmul.f32 %v507, 0.2
  %v540 = vmul.f32 %v508, 0.2
  %v541 = vmul.f32 %v509, 0.2
  %v542 = vmul.f32 %v510, 0.2
  %v543 = vmul.f32 %v511, 0.2
  %v544 = vmul.f32 %v512, 0.2
  %v545 = vmul.f32 %v513, 0.2
  %v546 = vmul.f32 %v514, 0.2
  %v547 = vsel %vm515, %v499, %v531
  %v548 = vsel %vm516, %v500, %v532
  %v549 = vsel %vm517, %v501, %v533
  %v550 = vsel %vm518, %v502, %v534
  %v551 = vsel %vm519, %v503, %v535
  %v552 = vsel %vm520, %v504, %v536
  %v553 = vsel %vm521, %v505, %v537
  %v554 = vsel %vm522, %v506, %v538
  %v555 = vsel %vm523, %v507, %v539
  %v556 = vsel %vm524, %v508, %v540
  %v557 = vsel %vm525, %v509, %v541
  %v558 = vsel %vm526, %v510, %v542
  %v559 = vsel %vm527, %v511, %v543
  %v560 = vsel %vm528, %v512, %v544
  %v561 = vsel %vm529, %v513, %v545
  %v562 = vsel %vm530, %v514, %v546
  %v563 = vpack.c.bf16 %v548, %v547
  %v564 = vpack.c.bf16 %v550, %v549
  %v565 = vpack.c.bf16 %v552, %v551
  %v566 = vpack.c.bf16 %v554, %v553
  %v567 = vpack.c.bf16 %v556, %v555
  %v568 = vpack.c.bf16 %v558, %v557
  %v569 = vpack.c.bf16 %v560, %v559
  %v570 = vpack.c.bf16 %v562, %v561
  %v579 = vunpack.c.l.b16 %v563
  %v580 = vunpack.c.h.b16 %v563
  %v581 = vunpack.c.l.b16 %v564
  %v582 = vunpack.c.h.b16 %v564
  %v583 = vunpack.c.l.b16 %v565
  %v584 = vunpack.c.h.b16 %v565
  %v585 = vunpack.c.l.b16 %v566
  %v586 = vunpack.c.h.b16 %v566
  %v587 = vunpack.c.l.b16 %v567
  %v588 = vunpack.c.h.b16 %v567
  %v589 = vunpack.c.l.b16 %v568
  %v590 = vunpack.c.h.b16 %v568
  %v591 = vunpack.c.l.b16 %v569
  %v592 = vunpack.c.h.b16 %v569
  %v593 = vunpack.c.l.b16 %v570
  %v594 = vunpack.c.h.b16 %v570
  %v595 = vpack.c.b16 %v579, %v579
  %v596 = vpack.c.b16 %v580, %v580
  %v597 = vpack.c.b16 %v581, %v581
  %v598 = vpack.c.b16 %v582, %v582
  %v599 = vpack.c.b16 %v583, %v583
  %v600 = vpack.c.b16 %v584, %v584
  %v601 = vpack.c.b16 %v585, %v585
  %v602 = vpack.c.b16 %v586, %v586
  %v603 = vpack.c.b16 %v587, %v587
  %v604 = vpack.c.b16 %v588, %v588
  %v605 = vpack.c.b16 %v589, %v589
  %v606 = vpack.c.b16 %v590, %v590
  %v607 = vpack.c.b16 %v591, %v591
  %v608 = vpack.c.b16 %v592, %v592
  %v609 = vpack.c.b16 %v593, %v593
  %v610 = vpack.c.b16 %v594, %v594
  %627 = vst [vmem:[%s5] sm:$0xf] %v595
  %628 = vst [vmem:[%s5 + $0x4] sm:$0xf] %v596
  %629 = vst [vmem:[%s5 + $0x8] sm:$0xf] %v597
  %630 = vst [vmem:[%s5 + $0xc] sm:$0xf] %v598
  %631 = vst [vmem:[%s5 + $0x10] sm:$0xf] %v599
  %632 = vst [vmem:[%s5 + $0x14] sm:$0xf] %v600
  %633 = vst [vmem:[%s5 + $0x18] sm:$0xf] %v601
  %634 = vst [vmem:[%s5 + $0x1c] sm:$0xf] %v602
  %635 = vst [vmem:[%s5 + $0x20] sm:$0xf] %v603
  %636 = vst [vmem:[%s5 + $0x24] sm:$0xf] %v604
  %637 = vst [vmem:[%s5 + $0x28] sm:$0xf] %v605
  %638 = vst [vmem:[%s5 + $0x2c] sm:$0xf] %v606
  %639 = vst [vmem:[%s5 + $0x30] sm:$0xf] %v607
  %640 = vst [vmem:[%s5 + $0x34] sm:$0xf] %v608
  %641 = vst [vmem:[%s5 + $0x38] sm:$0xf] %v609
  %642 = vst [vmem:[%s5 + $0x3c] sm:$0xf] %v610
  // Predicated region
  $region22: #{net_forward.9} parent=0 // pred_check
    _
  $region23: #{net_forward.9} parent=0 // pred_check_branch
    %644 = sbr.rel (0) target = $region25
  $region24: #{net_forward.9} parent=0 // pred_region
    _
  $region25: #{net_forward.9} parent=0 // pred_fallthru
    _
  // Predicated region
  $region26: #{net_forward.9} parent=0 // pred_check
    _
  $region27: #{net_forward.9} parent=0 // pred_check_branch
    %646 = sbr.rel (0) target = $region29
  $region28: #{net_forward.9} parent=0 // pred_region
    _
  $region29: #{net_forward.9} parent=0 // pred_fallthru
    _

// kernel: net_forward.10
$region0: #{net_forward.10}
  #allocation0 [shape = 'u32[]', space=smem, size = 0x4, offset = 0x4, fixed_abs, tag = 'smem constant byte address 0x4 - core index']
  #allocation1 [shape = 'u32[144,128]{1,0:T(1,128)}', space=vmem, size = 0x12000, scoped, tag = 'internal scratch']
  %s0 = inlined_call_operand.vmem [shape: bf16[32,256], index: 0, kind: input, shape index: {}]
  %s1 = inlined_call_operand.vmem [shape: bf16[256,128], index: 1, kind: input, shape index: {}]
  %s2 = inlined_call_operand.vmem [shape: f32[1,128], index: 2, kind: input, shape index: {}]
  %s3 = inlined_call_operand.vmem [shape: f32[1,128], index: 3, kind: input, shape index: {}]
  %s4 = inlined_call_operand.vmem [shape: f32[128,128], index: 4, kind: input, shape index: {}]
  %s5 = inlined_call_operand.vmem [shape: bf16[32,128], index: 5, kind: output, shape index: {}]
  %s6 = sld [smem:[#allocation0]]
  $region30: #{net_forward.10} parent=0
    _
  %s8 = ssub.s32 1, %s6
  %s9 = scalar_select 0, %s8, %s6
  // Predicated region
  $region2: #{net_forward.10} parent=0 // pred_check
    _
  $region3: #{net_forward.10} parent=0 // pred_check_branch
    %11 = sbr.rel (0) target = $region5
  $region4: #{net_forward.10} parent=0 // pred_region
    _
  $region5: #{net_forward.10} parent=0 // pred_fallthru
    _
  // Predicated region
  $region6: #{net_forward.10} parent=0 // pred_check
    _
  $region7: #{net_forward.10} parent=0 // pred_check_branch
    %13 = sbr.rel (0) target = $region9
  $region8: #{net_forward.10} parent=0 // pred_region
    _
  $region9: #{net_forward.10} parent=0 // pred_fallthru
    _
  // Predicated region
  $region10: #{net_forward.10} parent=0 // pred_check
    _
  $region11: #{net_forward.10} parent=0 // pred_check_branch
    %15 = sbr.rel (0) target = $region13
  $region12: #{net_forward.10} parent=0 // pred_region
    _
  $region13: #{net_forward.10} parent=0 // pred_fallthru
    _
  // Predicated region
  $region14: #{net_forward.10} parent=0 // pred_check
    _
  $region15: #{net_forward.10} parent=0 // pred_check_branch
    %17 = sbr.rel (0) target = $region17
  $region16: #{net_forward.10} parent=0 // pred_region
    _
  $region17: #{net_forward.10} parent=0 // pred_fallthru
    _
  // Predicated region
  $region18: #{net_forward.10} parent=0 // pred_check
    _
  $region19: #{net_forward.10} parent=0 // pred_check_branch
    %19 = sbr.rel (0) target = $region21
  $region20: #{net_forward.10} parent=0 // pred_region
    _
  $region21: #{net_forward.10} parent=0 // pred_fallthru
    _
  %v21 = vld [vmem:[%s0] sm:$0xff]
  %v22 = vld [vmem:[%s0 + $0x8] sm:$0xff]
  %v23 = vld [vmem:[%s0 + $0x10] sm:$0xff]
  %v24 = vld [vmem:[%s0 + $0x18] sm:$0xff]
  %v25 = vld [vmem:[%s1] sm:$0xf]
  %v26 = vld [vmem:[%s1 + $0x4] sm:$0xf]
  %v27 = vld [vmem:[%s1 + $0x8] sm:$0xf]
  %v28 = vld [vmem:[%s1 + $0xc] sm:$0xf]
  %v29 = vld [vmem:[%s1 + $0x10] sm:$0xf]
  %v30 = vld [vmem:[%s1 + $0x14] sm:$0xf]
  %v31 = vld [vmem:[%s1 + $0x18] sm:$0xf]
  %v32 = vld [vmem:[%s1 + $0x1c] sm:$0xf]
  %v33 = vld [vmem:[%s1 + $0x20] sm:$0xf]
  %v34 = vld [vmem:[%s1 + $0x24] sm:$0xf]
  %v35 = vld [vmem:[%s1 + $0x28] sm:$0xf]
  %v36 = vld [vmem:[%s1 + $0x2c] sm:$0xf]
  %v37 = vld [vmem:[%s1 + $0x30] sm:$0xf]
  %v38 = vld [vmem:[%s1 + $0x34] sm:$0xf]
  %v39 = vld [vmem:[%s1 + $0x38] sm:$0xf]
  %v40 = vld [vmem:[%s1 + $0x3c] sm:$0xf]
  %v41 = vld [vmem:[%s1 + $0x40] sm:$0xf]
  %v42 = vld [vmem:[%s1 + $0x44] sm:$0xf]
  %v43 = vld [vmem:[%s1 + $0x48] sm:$0xf]
  %v44 = vld [vmem:[%s1 + $0x4c] sm:$0xf]
  %v45 = vld [vmem:[%s1 + $0x50] sm:$0xf]
  %v46 = vld [vmem:[%s1 + $0x54] sm:$0xf]
  %v47 = vld [vmem:[%s1 + $0x58] sm:$0xf]
  %v48 = vld [vmem:[%s1 + $0x5c] sm:$0xf]
  %v49 = vld [vmem:[%s1 + $0x60] sm:$0xf]
  %v50 = vld [vmem:[%s1 + $0x64] sm:$0xf]
  %v51 = vld [vmem:[%s1 + $0x68] sm:$0xf]
  %v52 = vld [vmem:[%s1 + $0x6c] sm:$0xf]
  %v53 = vld [vmem:[%s1 + $0x70] sm:$0xf]
  %v54 = vld [vmem:[%s1 + $0x74] sm:$0xf]
  %v55 = vld [vmem:[%s1 + $0x78] sm:$0xf]
  %v56 = vld [vmem:[%s1 + $0x7c] sm:$0xf]
  %v61 = vunpack.c.l.b16 %v21
  %v62 = vunpack.c.h.b16 %v21
  %v63 = vunpack.c.l.b16 %v22
  %v64 = vunpack.c.h.b16 %v22
  %v65 = vunpack.c.l.b16 %v23
  %v66 = vunpack.c.h.b16 %v23
  %v67 = vunpack.c.l.b16 %v24
  %v68 = vunpack.c.h.b16 %v24
  %v69 = vpack.c.b16 %v63, %v61
  %v70 = vpack.c.b16 %v64, %v62
  %v71 = vpack.c.b16 %v67, %v65
  %v72 = vpack.c.b16 %v68, %v66
  %v109 = vunpack.c.l.b16 %v25
  %v110 = vunpack.c.l.b16 %v26
  %v111 = vunpack.c.l.b16 %v27
  %v112 = vunpack.c.l.b16 %v28
  %v113 = vunpack.c.l.b16 %v29
  %v114 = vunpack.c.l.b16 %v30
  %v115 = vunpack.c.l.b16 %v31
  %v116 = vunpack.c.l.b16 %v32
  %v117 = vunpack.c.l.b16 %v33
  %v118 = vunpack.c.l.b16 %v34
  %v119 = vunpack.c.l.b16 %v35
  %v120 = vunpack.c.l.b16 %v36
  %v121 = vunpack.c.l.b16 %v37
  %v122 = vunpack.c.l.b16 %v38
  %v123 = vunpack.c.l.b16 %v39
  %v124 = vunpack.c.l.b16 %v40
  %v125 = vunpack.c.l.b16 %v41
  %v126 = vunpack.c.l.b16 %v42
  %v127 = vunpack.c.l.b16 %v43
  %v128 = vunpack.c.l.b16 %v44
  %v129 = vunpack.c.l.b16 %v45
  %v130 = vunpack.c.l.b16 %v46
  %v131 = vunpack.c.l.b16 %v47
  %v132 = vunpack.c.l.b16 %v48
  %v133 = vunpack.c.l.b16 %v49
  %v134 = vunpack.c.l.b16 %v50
  %v135 = vunpack.c.l.b16 %v51
  %v136 = vunpack.c.l.b16 %v52
  %v137 = vunpack.c.l.b16 %v53
  %v138 = vunpack.c.l.b16 %v54
  %v139 = vunpack.c.l.b16 %v55
  %v140 = vunpack.c.l.b16 %v56
  %v141 = vpack.c.b16 %v110, %v109
  %v142 = vpack.c.b16 %v112, %v111
  %v143 = vpack.c.b16 %v114, %v113
  %v144 = vpack.c.b16 %v116, %v115
  %v145 = vpack.c.b16 %v118, %v117
  %v146 = vpack.c.b16 %v120, %v119
  %v147 = vpack.c.b16 %v122, %v121
  %v148 = vpack.c.b16 %v124, %v123
  %v149 = vpack.c.b16 %v126, %v125
  %v150 = vpack.c.b16 %v128, %v127
  %v151 = vpack.c.b16 %v130, %v129
  %v152 = vpack.c.b16 %v132, %v131
  %v153 = vpack.c.b16 %v134, %v133
  %v154 = vpack.c.b16 %v136, %v135
  %v155 = vpack.c.b16 %v138, %v137
  %v156 = vpack.c.b16 %v140, %v139
  %173 = vmatprep.subr.bf16.mxu0 0
  %174 = vmatpush1.bf16.msra.mxu0 %v141
  %175 = vmatprep.subr.bf16.mxu0 0
  %176 = vmatpush1.bf16.msra.mxu0 %v142
  %177 = vmatprep.subr.bf16.mxu0 0
  %178 = vmatpush1.bf16.msra.mxu0 %v143
  %179 = vmatprep.subr.bf16.mxu0 0
  %180 = vmatpush1.bf16.msra.mxu0 %v144
  %181 = vmatprep.subr.bf16.mxu0 0
  %182 = vmatpush1.bf16.msra.mxu0 %v145
  %183 = vmatprep.subr.bf16.mxu0 0
  %184 = vmatpush1.bf16.msra.mxu0 %v146
  %185 = vmatprep.subr.bf16.mxu0 0
  %186 = vmatpush1.bf16.msra.mxu0 %v147
  %187 = vmatprep.subr.bf16.mxu0 0
  %188 = vmatpush1.bf16.msra.mxu0 %v148
  %189 = vmatprep.subr.bf16.mxu0 0
  %190 = vmatpush1.bf16.msra.mxu0 %v149
  %191 = vmatprep.subr.bf16.mxu0 0
  %192 = vmatpush1.bf16.msra.mxu0 %v150
  %193 = vmatprep.subr.bf16.mxu0 0
  %194 = vmatpush1.bf16.msra.mxu0 %v151
  %195 = vmatprep.subr.bf16.mxu0 0
  %196 = vmatpush1.bf16.msra.mxu0 %v152
  %197 = vmatprep.subr.bf16.mxu0 0
  %198 = vmatpush1.bf16.msra.mxu0 %v153
  %199 = vmatprep.subr.bf16.mxu0 0
  %200 = vmatpush1.bf16.msra.mxu0 %v154
  %201 = vmatprep.subr.bf16.mxu0 0
  %202 = vmatpush1.bf16.msra.mxu0 %v155
  %203 = vmatprep.subr.bf16.mxu0 0
  %204 = vmatpush1.bf16.msra.mxu0 %v156
  %205 = vmatprep.mubr.bf16.mxu0 %v70
  %206 = vmatmul.mubr.bf16.gmra.mrb[0].mxu0 %v69
  %v207 = vpop.f32.mrb[0].mxu0
  %v208 = vadd.f32 0.0, %v207
  %v209 = vpop.f32.mrb[0].mxu0
  %v210 = vpop.f32.mrb[0].mxu0
  %v211 = vadd.f32 0.0, %v210
  %v212 = vpop.f32.mrb[0].mxu0
  %213 = vmatprep.mubr.bf16.mxu0 %v72
  %214 = vmatmul.mubr.bf16.gmra.mrb[0].mxu0 %v71
  %v215 = vpop.f32.mrb[0].mxu0
  %v216 = vadd.f32 0.0, %v215
  %v217 = vpop.f32.mrb[0].mxu0
  %v218 = vpop.f32.mrb[0].mxu0
  %v219 = vadd.f32 0.0, %v218
  %v220 = vpop.f32.mrb[0].mxu0
  %221 = vdwg.mxu0
  %v222 = vadd.f32 %v208, %v211
  %v223 = vadd.f32 %v222, %v216
  %v224 = vadd.f32 %v223, %v219
  %v225 = vrot.slane %v224, 4
  %v226 = vadd.f32 %v224, %v225
  %v227 = vrot.slane %v226, 2
  %v228 = vadd.f32 %v226, %v227
  %v229 = vrot.slane %v228, 1
  %v230 = vadd.f32 %v228, %v229
  %v231 = vmul.f32 %v208, %v208
  %v232 = vmul.f32 %v211, %v211
  %v233 = vmul.f32 %v216, %v216
  %v234 = vmul.f32 %v219, %v219
  %v235 = vadd.f32 %v231, %v232
  %v236 = vadd.f32 %v235, %v233
  %v237 = vadd.f32 %v236, %v234
  %v238 = vrot.slane %v237, 4
  %v239 = vadd.f32 %v237, %v238
  %v240 = vrot.slane %v239, 2
  %v241 = vadd.f32 %v239, %v240
  %v242 = vrot.slane %v241, 1
  %v243 = vadd.f32 %v241, %v242
  %v244 = vld [vmem:[%s4] sm:$0xff]
  %v245 = vld [vmem:[%s4 + $0x8] sm:$0xff]
  %v246 = vld [vmem:[%s4 + $0x10] sm:$0xff]
  %v247 = vld [vmem:[%s4 + $0x18] sm:$0xff]
  %v248 = vld [vmem:[%s4 + $0x20] sm:$0xff]
  %v249 = vld [vmem:[%s4 + $0x28] sm:$0xff]
  %v250 = vld [vmem:[%s4 + $0x30] sm:$0xff]
  %v251 = vld [vmem:[%s4 + $0x38] sm:$0xff]
  %v252 = vld [vmem:[%s4 + $0x40] sm:$0xff]
  %v253 = vld [vmem:[%s4 + $0x48] sm:$0xff]
  %v254 = vld [vmem:[%s4 + $0x50] sm:$0xff]
  %v255 = vld [vmem:[%s4 + $0x58] sm:$0xff]
  %v256 = vld [vmem:[%s4 + $0x60] sm:$0xff]
  %v257 = vld [vmem:[%s4 + $0x68] sm:$0xff]
  %v258 = vld [vmem:[%s4 + $0x70] sm:$0xff]
  %v259 = vld [vmem:[%s4 + $0x78] sm:$0xff]
  %260 = vmatprep.subr.mxu0 0.0
  %261 = vmatpush1.msra.mxu0 %v244
  %262 = vmatprep.subr.mxu0 0.0
  %263 = vmatpush1.msra.mxu0 %v245
  %264 = vmatprep.subr.mxu0 0.0
  %265 = vmatpush1.msra.mxu0 %v246
  %266 = vmatprep.subr.mxu0 0.0
  %267 = vmatpush1.msra.mxu0 %v247
  %268 = vmatprep.subr.mxu0 0.0
  %269 = vmatpush1.msra.mxu0 %v248
  %270 = vmatprep.subr.mxu0 0.0
  %271 = vmatpush1.msra.mxu0 %v249
  %272 = vmatprep.subr.mxu0 0.0
  %273 = vmatpush1.msra.mxu0 %v250
  %274 = vmatprep.subr.mxu0 0.0
  %275 = vmatpush1.msra.mxu0 %v251
  %276 = vmatprep.subr.mxu0 0.0
  %277 = vmatpush1.msra.mxu0 %v252
  %278 = vmatprep.subr.mxu0 0.0
  %279 = vmatpush1.msra.mxu0 %v253
  %280 = vmatprep.subr.mxu0 0.0
  %281 = vmatpush1.msra.mxu0 %v254
  %282 = vmatprep.subr.mxu0 0.0
  %283 = vmatpush1.msra.mxu0 %v255
  %284 = vmatprep.subr.mxu0 0.0
  %285 = vmatpush1.msra.mxu0 %v256
  %286 = vmatprep.subr.mxu0 0.0
  %287 = vmatpush1.msra.mxu0 %v257
  %288 = vmatprep.subr.mxu0 0.0
  %289 = vmatpush1.msra.mxu0 %v258
  %290 = vmatprep.subr.mxu0 0.0
  %291 = vmatpush1.msra.mxu0 %v259
  %292 = vmatprep.subr.mxu0 0.0
  %293 = vmatpush1.msra.mxu0 0.0
  %294 = vmatprep.subr.mxu0 0.0
  %295 = vmatpush1.msra.mxu0 0.0
  %296 = vmatprep.subr.mxu0 0.0
  %297 = vmatpush1.msra.mxu0 0.0
  %298 = vmatprep.subr.mxu0 0.0
  %299 = vmatpush1.msra.mxu0 0.0
  %300 = vmatprep.subr.mxu0 0.0
  %301 = vmatpush1.msra.mxu0 0.0
  %302 = vmatprep.subr.mxu0 0.0
  %303 = vmatpush1.msra.mxu0 0.0
  %304 = vmatprep.subr.mxu0 0.0
  %305 = vmatpush1.msra.mxu0 0.0
  %306 = vmatprep.subr.mxu0 0.0
  %307 = vmatpush1.msra.mxu0 0.0
  %308 = vmatprep.subr.mxu0 0.0
  %309 = vmatpush1.msra.mxu0 0.0
  %310 = vmatprep.subr.mxu0 0.0
  %311 = vmatpush1.msra.mxu0 0.0
  %312 = vmatprep.subr.mxu0 0.0
  %313 = vmatpush1.msra.mxu0 0.0
  %314 = vmatprep.subr.mxu0 0.0
  %315 = vmatpush1.msra.mxu0 0.0
  %316 = vmatprep.subr.mxu0 0.0
  %317 = vmatpush1.msra.mxu0 0.0
  %318 = vmatprep.subr.mxu0 0.0
  %319 = vmatpush1.msra.mxu0 0.0
  %320 = vmatprep.subr.mxu0 0.0
  %321 = vmatpush1.msra.mxu0 0.0
  %322 = vmatprep.subr.mxu0 0.0
  %323 = vmatpush1.msra.mxu0 0.0
  %324 = vmatprep.mubr.f32.mxu0 0.0
  %325 = vmatmul.mubr.f32.gmra.mrb[0].mxu0 %v230
  %v326 = vpop.f32.mrb[0].mxu0
  %v327 = vadd.f32 0.0, %v326
  %v328 = vpop.f32.mrb[0].mxu0
  %329 = vdwg.mxu0
  %330 = vmatprep.subr.mxu0 0.0
  %331 = vmatpush1.msra.mxu0 %v244
  %332 = vmatprep.subr.mxu0 0.0
  %333 = vmatpush1.msra.mxu0 %v245
  %334 = vmatprep.subr.mxu0 0.0
  %335 = vmatpush1.msra.mxu0 %v246
  %336 = vmatprep.subr.mxu0 0.0
  %337 = vmatpush1.msra.mxu0 %v247
  %338 = vmatprep.subr.mxu0 0.0
  %339 = vmatpush1.msra.mxu0 %v248
  %340 = vmatprep.subr.mxu0 0.0
  %341 = vmatpush1.msra.mxu0 %v249
  %342 = vmatprep.subr.mxu0 0.0
  %343 = vmatpush1.msra.mxu0 %v250
  %344 = vmatprep.subr.mxu0 0.0
  %345 = vmatpush1.msra.mxu0 %v251
  %346 = vmatprep.subr.mxu0 0.0
  %347 = vmatpush1.msra.mxu0 %v252
  %348 = vmatprep.subr.mxu0 0.0
  %349 = vmatpush1.msra.mxu0 %v253
  %350 = vmatprep.subr.mxu0 0.0
  %351 = vmatpush1.msra.mxu0 %v254
  %352 = vmatprep.subr.mxu0 0.0
  %353 = vmatpush1.msra.mxu0 %v255
  %354 = vmatprep.subr.mxu0 0.0
  %355 = vmatpush1.msra.mxu0 %v256
  %356 = vmatprep.subr.mxu0 0.0
  %357 = vmatpush1.msra.mxu0 %v257
  %358 = vmatprep.subr.mxu0 0.0
  %359 = vmatpush1.msra.mxu0 %v258
  %360 = vmatprep.subr.mxu0 0.0
  %361 = vmatpush1.msra.mxu0 %v259
  %362 = vmatprep.subr.mxu0 0.0
  %363 = vmatpush1.msra.mxu0 0.0
  %364 = vmatprep.subr.mxu0 0.0
  %365 = vmatpush1.msra.mxu0 0.0
  %366 = vmatprep.subr.mxu0 0.0
  %367 = vmatpush1.msra.mxu0 0.0
  %368 = vmatprep.subr.mxu0 0.0
  %369 = vmatpush1.msra.mxu0 0.0
  %370 = vmatprep.subr.mxu0 0.0
  %371 = vmatpush1.msra.mxu0 0.0
  %372 = vmatprep.subr.mxu0 0.0
  %373 = vmatpush1.msra.mxu0 0.0
  %374 = vmatprep.subr.mxu0 0.0
  %375 = vmatpush1.msra.mxu0 0.0
  %376 = vmatprep.subr.mxu0 0.0
  %377 = vmatpush1.msra.mxu0 0.0
  %378 = vmatprep.subr.mxu0 0.0
  %379 = vmatpush1.msra.mxu0 0.0
  %380 = vmatprep.subr.mxu0 0.0
  %381 = vmatpush1.msra.mxu0 0.0
  %382 = vmatprep.subr.mxu0 0.0
  %383 = vmatpush1.msra.mxu0 0.0
  %384 = vmatprep.subr.mxu0 0.0
  %385 = vmatpush1.msra.mxu0 0.0
  %386 = vmatprep.subr.mxu0 0.0
  %387 = vmatpush1.msra.mxu0 0.0
  %388 = vmatprep.subr.mxu0 0.0
  %389 = vmatpush1.msra.mxu0 0.0
  %390 = vmatprep.subr.mxu0 0.0
  %391 = vmatpush1.msra.mxu0 0.0
  %392 = vmatprep.subr.mxu0 0.0
  %393 = vmatpush1.msra.mxu0 0.0
  %394 = vmatprep.mubr.f32.mxu0 0.0
  %395 = vmatmul.mubr.f32.gmra.mrb[0].mxu0 %v243
  %v396 = vpop.f32.mrb[0].mxu0
  %v397 = vadd.f32 0.0, %v396
  %v398 = vpop.f32.mrb[0].mxu0
  %399 = vdwg.mxu0
  %v400 = vmul.f32 %v327, 0.03125
  %v401 = vmul.f32 %v397, 0.03125
  %v402 = vmul.f32 %v400, %v400
  %v403 = vsub.f32 %v401, %v402
  %v404 = vld [vmem:[%s2] sm:$0x1]
  %v405 = vadd.f32 %v403, 1e-05
  %v406 = vrsqrt.pop %v405
  %v407 = vmul.f32 %v404, %v406
  %v408 = vld [vmem:[%s3] sm:$0x1]
  %v409 = vmul.f32 %v400, %v407
  %v410 = vsub.f32 %v408, %v409
  %v412 = vlaneseq
  %v413 = vshrl.u32 %v412, 7
  %v414 = vsub.s32 0, %v413
  %v415 = vrot.slane %v407, %v414
  %v417 = vmul.f32 %v208, %v415
  %v418 = vmul.f32 %v211, %v415
  %v419 = vmul.f32 %v216, %v415
  %v420 = vmul.f32 %v219, %v415
  %v422 = vlaneseq
  %v423 = vshrl.u32 %v422, 7
  %v424 = vsub.s32 0, %v423
  %v425 = vrot.slane %v410, %v424
  %v427 = vadd.f32 %v417, %v425
  %v428 = vadd.f32 %v418, %v425
  %v429 = vadd.f32 %v419, %v425
  %v430 = vadd.f32 %v420, %v425
  %vm431 = vcmp.ge.f32.partialorder %v427, 0.0
  %vm432 = vcmp.ge.f32.partialorder %v428, 0.0
  %vm433 = vcmp.ge.f32.partialorder %v429, 0.0
  %vm434 = vcmp.ge.f32.partialorder %v430, 0.0
  %v435 = vmul.f32 %v427, 0.2
  %v436 = vmul.f32 %v428, 0.2
  %v437 = vmul.f32 %v429, 0.2
  %v438 = vmul.f32 %v430, 0.2
  %v439 = vsel %vm431, %v427, %v435
  %v440 = vsel %vm432, %v428, %v436
  %v441 = vsel %vm433, %v429, %v437
  %v442 = vsel %vm434, %v430, %v438
  %v443 = vpack.c.bf16 %v440, %v439
  %v444 = vpack.c.bf16 %v442, %v441
  %v447 = vunpack.c.l.b16 %v443
  %v448 = vunpack.c.h.b16 %v443
  %v449 = vunpack.c.l.b16 %v444
  %v450 = vunpack.c.h.b16 %v444
  %v451 = vpack.c.b16 %v447, %v447
  %v452 = vpack.c.b16 %v448, %v448
  %v453 = vpack.c.b16 %v449, %v449
  %v454 = vpack.c.b16 %v450, %v450
  %459 = vst [vmem:[%s5] sm:$0xf] %v451
  %460 = vst [vmem:[%s5 + $0x4] sm:$0xf] %v452
  %461 = vst [vmem:[%s5 + $0x8] sm:$0xf] %v453
  %462 = vst [vmem:[%s5 + $0xc] sm:$0xf] %v454
  // Predicated region
  $region22: #{net_forward.10} parent=0 // pred_check
    _
  $region23: #{net_forward.10} parent=0 // pred_check_branch
    %464 = sbr.rel (0) target = $region25
  $region24: #{net_forward.10} parent=0 // pred_region
    _
  $region25: #{net_forward.10} parent=0 // pred_fallthru
    _
  // Predicated region
  $region26: #{net_forward.10} parent=0 // pred_check
    _
  $region27: #{net_forward.10} parent=0 // pred_check_branch
    %466 = sbr.rel (0) target = $region29
  $region28: #{net_forward.10} parent=0 // pred_region
    _
  $region29: #{net_forward.10} parent=0 // pred_fallthru
    _

// kernel: net_forward.12
$region0: #{net_forward.12}
  #allocation0 [shape = 'u32[]', space=smem, size = 0x4, offset = 0x4, fixed_abs, tag = 'smem constant byte address 0x4 - core index']
  #allocation1 [shape = 'u32[144,128]{1,0:T(1,128)}', space=vmem, size = 0x12000, scoped, tag = 'internal scratch']
  %s0 = inlined_call_operand.vmem [shape: bf16[8,576], index: 0, kind: input, shape index: {}]
  %s1 = inlined_call_operand.vmem [shape: bf16[576,128], index: 1, kind: input, shape index: {}]
  %s2 = inlined_call_operand.vmem [shape: f32[1,128], index: 2, kind: input, shape index: {}]
  %s3 = inlined_call_operand.vmem [shape: f32[1,128], index: 3, kind: input, shape index: {}]
  %s4 = inlined_call_operand.vmem [shape: f32[128,128], index: 4, kind: input, shape index: {}]
  %s5 = inlined_call_operand.vmem [shape: bf16[8,128], index: 5, kind: output, shape index: {}]
  %s6 = sld [smem:[#allocation0]]
  $region30: #{net_forward.12} parent=0
    _
  %s8 = ssub.s32 1, %s6
  %s9 = scalar_select 0, %s8, %s6
  // Predicated region
  $region2: #{net_forward.12} parent=0 // pred_check
    _
  $region3: #{net_forward.12} parent=0 // pred_check_branch
    %11 = sbr.rel (0) target = $region5
  $region4: #{net_forward.12} parent=0 // pred_region
    _
  $region5: #{net_forward.12} parent=0 // pred_fallthru
    _
  // Predicated region
  $region6: #{net_forward.12} parent=0 // pred_check
    _
  $region7: #{net_forward.12} parent=0 // pred_check_branch
    %13 = sbr.rel (0) target = $region9
  $region8: #{net_forward.12} parent=0 // pred_region
    _
  $region9: #{net_forward.12} parent=0 // pred_fallthru
    _
  // Predicated region
  $region10: #{net_forward.12} parent=0 // pred_check
    _
  $region11: #{net_forward.12} parent=0 // pred_check_branch
    %15 = sbr.rel (0) target = $region13
  $region12: #{net_forward.12} parent=0 // pred_region
    _
  $region13: #{net_forward.12} parent=0 // pred_fallthru
    _
  // Predicated region
  $region14: #{net_forward.12} parent=0 // pred_check
    _
  $region15: #{net_forward.12} parent=0 // pred_check_branch
    %17 = sbr.rel (0) target = $region17
  $region16: #{net_forward.12} parent=0 // pred_region
    _
  $region17: #{net_forward.12} parent=0 // pred_fallthru
    _
  // Predicated region
  $region18: #{net_forward.12} parent=0 // pred_check
    _
  $region19: #{net_forward.12} parent=0 // pred_check_branch
    %19 = sbr.rel (0) target = $region21
  $region20: #{net_forward.12} parent=0 // pred_region
    _
  $region21: #{net_forward.12} parent=0 // pred_fallthru
    _
  %v21 = vld [vmem:[%s0] sm:$0xff]
  %v22 = vld [vmem:[%s0 + $0x8] sm:$0xff]
  %v23 = vld [vmem:[%s0 + $0x10] sm:$0xf]
  %v24 = vld [vmem:[%s1] sm:$0xf]
  %v25 = vld [vmem:[%s1 + $0x4] sm:$0xf]
  %v26 = vld [vmem:[%s1 + $0x8] sm:$0xf]
  %v27 = vld [vmem:[%s1 + $0xc] sm:$0xf]
  %v28 = vld [vmem:[%s1 + $0x10] sm:$0xf]
  %v29 = vld [vmem:[%s1 + $0x14] sm:$0xf]
  %v30 = vld [vmem:[%s1 + $0x18] sm:$0xf]
  %v31 = vld [vmem:[%s1 + $0x1c] sm:$0xf]
  %v32 = vld [vmem:[%s1 + $0x20] sm:$0xf]
  %v33 = vld [vmem:[%s1 + $0x24] sm:$0xf]
  %v34 = vld [vmem:[%s1 + $0x28] sm:$0xf]
  %v35 = vld [vmem:[%s1 + $0x2c] sm:$0xf]
  %v36 = vld [vmem:[%s1 + $0x30] sm:$0xf]
  %v37 = vld [vmem:[%s1 + $0x34] sm:$0xf]
  %v38 = vld [vmem:[%s1 + $0x38] sm:$0xf]
  %v39 = vld [vmem:[%s1 + $0x3c] sm:$0xf]
  %v40 = vld [vmem:[%s1 + $0x40] sm:$0xf]
  %v41 = vld [vmem:[%s1 + $0x44] sm:$0xf]
  %v42 = vld [vmem:[%s1 + $0x48] sm:$0xf]
  %v43 = vld [vmem:[%s1 + $0x4c] sm:$0xf]
  %v44 = vld [vmem:[%s1 + $0x50] sm:$0xf]
  %v45 = vld [vmem:[%s1 + $0x54] sm:$0xf]
  %v46 = vld [vmem:[%s1 + $0x58] sm:$0xf]
  %v47 = vld [vmem:[%s1 + $0x5c] sm:$0xf]
  %v48 = vld [vmem:[%s1 + $0x60] sm:$0xf]
  %v49 = vld [vmem:[%s1 + $0x64] sm:$0xf]
  %v50 = vld [vmem:[%s1 + $0x68] sm:$0xf]
  %v51 = vld [vmem:[%s1 + $0x6c] sm:$0xf]
  %v52 = vld [vmem:[%s1 + $0x70] sm:$0xf]
  %v53 = vld [vmem:[%s1 + $0x74] sm:$0xf]
  %v54 = vld [vmem:[%s1 + $0x78] sm:$0xf]
  %v55 = vld [vmem:[%s1 + $0x7c] sm:$0xf]
  %v56 = vld [vmem:[%s1 + $0x80] sm:$0xf]
  %v57 = vld [vmem:[%s1 + $0x84] sm:$0xf]
  %v58 = vld [vmem:[%s1 + $0x88] sm:$0xf]
  %v59 = vld [vmem:[%s1 + $0x8c] sm:$0xf]
  %v60 = vld [vmem:[%s1 + $0x90] sm:$0xf]
  %v61 = vld [vmem:[%s1 + $0x94] sm:$0xf]
  %v62 = vld [vmem:[%s1 + $0x98] sm:$0xf]
  %v63 = vld [vmem:[%s1 + $0x9c] sm:$0xf]
  %v64 = vld [vmem:[%s1 + $0xa0] sm:$0xf]
  %v65 = vld [vmem:[%s1 + $0xa4] sm:$0xf]
  %v66 = vld [vmem:[%s1 + $0xa8] sm:$0xf]
  %v67 = vld [vmem:[%s1 + $0xac] sm:$0xf]
  %v68 = vld [vmem:[%s1 + $0xb0] sm:$0xf]
  %v69 = vld [vmem:[%s1 + $0xb4] sm:$0xf]
  %v70 = vld [vmem:[%s1 + $0xb8] sm:$0xf]
  %v71 = vld [vmem:[%s1 + $0xbc] sm:$0xf]
  %v72 = vld [vmem:[%s1 + $0xc0] sm:$0xf]
  %v73 = vld [vmem:[%s1 + $0xc4] sm:$0xf]
  %v74 = vld [vmem:[%s1 + $0xc8] sm:$0xf]
  %v75 = vld [vmem:[%s1 + $0xcc] sm:$0xf]
  %v76 = vld [vmem:[%s1 + $0xd0] sm:$0xf]
  %v77 = vld [vmem:[%s1 + $0xd4] sm:$0xf]
  %v78 = vld [vmem:[%s1 + $0xd8] sm:$0xf]
  %v79 = vld [vmem:[%s1 + $0xdc] sm:$0xf]
  %v80 = vld [vmem:[%s1 + $0xe0] sm:$0xf]
  %v81 = vld [vmem:[%s1 + $0xe4] sm:$0xf]
  %v82 = vld [vmem:[%s1 + $0xe8] sm:$0xf]
  %v83 = vld [vmem:[%s1 + $0xec] sm:$0xf]
  %v84 = vld [vmem:[%s1 + $0xf0] sm:$0xf]
  %v85 = vld [vmem:[%s1 + $0xf4] sm:$0xf]
  %v86 = vld [vmem:[%s1 + $0xf8] sm:$0xf]
  %v87 = vld [vmem:[%s1 + $0xfc] sm:$0xf]
  %v88 = vld [vmem:[%s1 + $0x100] sm:$0xf]
  %v89 = vld [vmem:[%s1 + $0x104] sm:$0xf]
  %v90 = vld [vmem:[%s1 + $0x108] sm:$0xf]
  %v91 = vld [vmem:[%s1 + $0x10c] sm:$0xf]
  %v92 = vld [vmem:[%s1 + $0x110] sm:$0xf]
  %v93 = vld [vmem:[%s1 + $0x114] sm:$0xf]
  %v94 = vld [vmem:[%s1 + $0x118] sm:$0xf]
  %v95 = vld [vmem:[%s1 + $0x11c] sm:$0xf]
  %v99 = vunpack.c.l.b16 %v21
  %v100 = vunpack.c.h.b16 %v21
  %v101 = vunpack.c.l.b16 %v22
  %v102 = vunpack.c.h.b16 %v22
  %v103 = vunpack.c.l.b16 %v23
  %v104 = vpack.c.b16 %v99, %v99
  %v105 = vpack.c.b16 %v100, %v100
  %v106 = vpack.c.b16 %v101, %v101
  %v107 = vpack.c.b16 %v102, %v102
  %v108 = vpack.c.b16 %v103, %v103
  %v185 = vunpack.c.l.b16 %v24
  %v186 = vunpack.c.l.b16 %v25
  %v187 = vunpack.c.l.b16 %v26
  %v188 = vunpack.c.l.b16 %v27
  %v189 = vunpack.c.l.b16 %v28
  %v190 = vunpack.c.l.b16 %v29
  %v191 = vunpack.c.l.b16 %v30
  %v192 = vunpack.c.l.b16 %v31
  %v193 = vunpack.c.l.b16 %v32
  %v194 = vunpack.c.l.b16 %v33
  %v195 = vunpack.c.l.b16 %v34
  %v196 = vunpack.c.l.b16 %v35
  %v197 = vunpack.c.l.b16 %v36
  %v198 = vunpack.c.l.b16 %v37
  %v199 = vunpack.c.l.b16 %v38
  %v200 = vunpack.c.l.b16 %v39
  %v201 = vunpack.c.l.b16 %v40
  %v202 = vunpack.c.l.b16 %v41
  %v203 = vunpack.c.l.b16 %v42
  %v204 = vunpack.c.l.b16 %v43
  %v205 = vunpack.c.l.b16 %v44
  %v206 = vunpack.c.l.b16 %v45
  %v207 = vunpack.c.l.b16 %v46
  %v208 = vunpack.c.l.b16 %v47
  %v209 = vunpack.c.l.b16 %v48
  %v210 = vunpack.c.l.b16 %v49
  %v211 = vunpack.c.l.b16 %v50
  %v212 = vunpack.c.l.b16 %v51
  %v213 = vunpack.c.l.b16 %v52
  %v214 = vunpack.c.l.b16 %v53
  %v215 = vunpack.c.l.b16 %v54
  %v216 = vunpack.c.l.b16 %v55
  %v217 = vunpack.c.l.b16 %v56
  %v218 = vunpack.c.l.b16 %v57
  %v219 = vunpack.c.l.b16 %v58
  %v220 = vunpack.c.l.b16 %v59
  %v221 = vunpack.c.l.b16 %v60
  %v222 = vunpack.c.l.b16 %v61
  %v223 = vunpack.c.l.b16 %v62
  %v224 = vunpack.c.l.b16 %v63
  %v225 = vunpack.c.l.b16 %v64
  %v226 = vunpack.c.l.b16 %v65
  %v227 = vunpack.c.l.b16 %v66
  %v228 = vunpack.c.l.b16 %v67
  %v229 = vunpack.c.l.b16 %v68
  %v230 = vunpack.c.l.b16 %v69
  %v231 = vunpack.c.l.b16 %v70
  %v232 = vunpack.c.l.b16 %v71
  %v233 = vunpack.c.l.b16 %v72
  %v234 = vunpack.c.l.b16 %v73
  %v235 = vunpack.c.l.b16 %v74
  %v236 = vunpack.c.l.b16 %v75
  %v237 = vunpack.c.l.b16 %v76
  %v238 = vunpack.c.l.b16 %v77
  %v239 = vunpack.c.l.b16 %v78
  %v240 = vunpack.c.l.b16 %v79
  %v241 = vunpack.c.l.b16 %v80
  %v242 = vunpack.c.l.b16 %v81
  %v243 = vunpack.c.l.b16 %v82
  %v244 = vunpack.c.l.b16 %v83
  %v245 = vunpack.c.l.b16 %v84
  %v246 = vunpack.c.l.b16 %v85
  %v247 = vunpack.c.l.b16 %v86
  %v248 = vunpack.c.l.b16 %v87
  %v249 = vunpack.c.l.b16 %v88
  %v250 = vunpack.c.l.b16 %v89
  %v251 = vunpack.c.l.b16 %v90
  %v252 = vunpack.c.l.b16 %v91
  %v253 = vunpack.c.l.b16 %v92
  %v254 = vunpack.c.l.b16 %v93
  %v255 = vunpack.c.l.b16 %v94
  %v256 = vunpack.c.l.b16 %v95
  %v257 = vpack.c.b16 %v186, %v185
  %v258 = vpack.c.b16 %v188, %v187
  %v259 = vpack.c.b16 %v190, %v189
  %v260 = vpack.c.b16 %v192, %v191
  %v261 = vpack.c.b16 %v194, %v193
  %v262 = vpack.c.b16 %v196, %v195
  %v263 = vpack.c.b16 %v198, %v197
  %v264 = vpack.c.b16 %v200, %v199
  %v265 = vpack.c.b16 %v202, %v201
  %v266 = vpack.c.b16 %v204, %v203
  %v267 = vpack.c.b16 %v206, %v205
  %v268 = vpack.c.b16 %v208, %v207
  %v269 = vpack.c.b16 %v210, %v209
  %v270 = vpack.c.b16 %v212, %v211
  %v271 = vpack.c.b16 %v214, %v213
  %v272 = vpack.c.b16 %v216, %v215
  %v273 = vpack.c.b16 %v218, %v217
  %v274 = vpack.c.b16 %v220, %v219
  %v275 = vpack.c.b16 %v222, %v221
  %v276 = vpack.c.b16 %v224, %v223
  %v277 = vpack.c.b16 %v226, %v225
  %v278 = vpack.c.b16 %v228, %v227
  %v279 = vpack.c.b16 %v230, %v229
  %v280 = vpack.c.b16 %v232, %v231
  %v281 = vpack.c.b16 %v234, %v233
  %v282 = vpack.c.b16 %v236, %v235
  %v283 = vpack.c.b16 %v238, %v237
  %v284 = vpack.c.b16 %v240, %v239
  %v285 = vpack.c.b16 %v242, %v241
  %v286 = vpack.c.b16 %v244, %v243
  %v287 = vpack.c.b16 %v246, %v245
  %v288 = vpack.c.b16 %v248, %v247
  %v289 = vpack.c.b16 %v250, %v249
  %v290 = vpack.c.b16 %v252, %v251
  %v291 = vpack.c.b16 %v254, %v253
  %v292 = vpack.c.b16 %v256, %v255
  %vm329 = vcmask 523264
  %v331 = vsel %vm329, %v108, 0
  %333 = vmatprep.subr.bf16.mxu0 0
  %334 = vmatpush1.bf16.msra.mxu0 %v257
  %335 = vmatprep.subr.bf16.mxu0 0
  %336 = vmatpush1.bf16.msra.mxu0 %v258
  %337 = vmatprep.subr.bf16.mxu0 0
  %338 = vmatpush1.bf16.msra.mxu0 %v259
  %339 = vmatprep.subr.bf16.mxu0 0
  %340 = vmatpush1.bf16.msra.mxu0 %v260
  %341 = vmatprep.subr.bf16.mxu0 0
  %342 = vmatpush1.bf16.msra.mxu0 %v261
  %343 = vmatprep.subr.bf16.mxu0 0
  %344 = vmatpush1.bf16.msra.mxu0 %v262
  %345 = vmatprep.subr.bf16.mxu0 0
  %346 = vmatpush1.bf16.msra.mxu0 %v263
  %347 = vmatprep.subr.bf16.mxu0 0
  %348 = vmatpush1.bf16.msra.mxu0 %v264
  %349 = vmatprep.subr.bf16.mxu0 0
  %350 = vmatpush1.bf16.msra.mxu0 %v265
  %351 = vmatprep.subr.bf16.mxu0 0
  %352 = vmatpush1.bf16.msra.mxu0 %v266
  %353 = vmatprep.subr.bf16.mxu0 0
  %354 = vmatpush1.bf16.msra.mxu0 %v267
  %355 = vmatprep.subr.bf16.mxu0 0
  %356 = vmatpush1.bf16.msra.mxu0 %v268
  %357 = vmatprep.subr.bf16.mxu0 0
  %358 = vmatpush1.bf16.msra.mxu0 %v269
  %359 = vmatprep.subr.bf16.mxu0 0
  %360 = vmatpush1.bf16.msra.mxu0 %v270
  %361 = vmatprep.subr.bf16.mxu0 0
  %362 = vmatpush1.bf16.msra.mxu0 %v271
  %363 = vmatprep.subr.bf16.mxu0 0
  %364 = vmatpush1.bf16.msra.mxu0 %v272
  %365 = vmatprep.mubr.bf16.mxu0 %v105
  %366 = vmatmul.mubr.bf16.gmra.mrb[0].mxu0 %v104
  %v367 = vpop.f32.mrb[0].mxu0
  %v368 = vadd.f32 0.0, %v367
  %v369 = vpop.f32.mrb[0].mxu0
  %v370 = vpop.f32.mrb[0].mxu0
  %v371 = vpop.f32.mrb[0].mxu0
  %372 = vdwg.mxu0
  %373 = vmatprep.subr.bf16.mxu0 0
  %374 = vmatpush1.bf16.msra.mxu0 %v273
  %375 = vmatprep.subr.bf16.mxu0 0
  %376 = vmatpush1.bf16.msra.mxu0 %v274
  %377 = vmatprep.subr.bf16.mxu0 0
  %378 = vmatpush1.bf16.msra.mxu0 %v275
  %379 = vmatprep.subr.bf16.mxu0 0
  %380 = vmatpush1.bf16.msra.mxu0 %v276
  %381 = vmatprep.subr.bf16.mxu0 0
  %382 = vmatpush1.bf16.msra.mxu0 %v277
  %383 = vmatprep.subr.bf16.mxu0 0
  %384 = vmatpush1.bf16.msra.mxu0 %v278
  %385 = vmatprep.subr.bf16.mxu0 0
  %386 = vmatpush1.bf16.msra.mxu0 %v279
  %387 = vmatprep.subr.bf16.mxu0 0
  %388 = vmatpush1.bf16.msra.mxu0 %v280
  %389 = vmatprep.subr.bf16.mxu0 0
  %390 = vmatpush1.bf16.msra.mxu0 %v281
  %391 = vmatprep.subr.bf16.mxu0 0
  %392 = vmatpush1.bf16.msra.mxu0 %v282
  %393 = vmatprep.subr.bf16.mxu0 0
  %394 = vmatpush1.bf16.msra.mxu0 %v283
  %395 = vmatprep.subr.bf16.mxu0 0
  %396 = vmatpush1.bf16.msra.mxu0 %v284
  %397 = vmatprep.subr.bf16.mxu0 0
  %398 = vmatpush1.bf16.msra.mxu0 %v285
  %399 = vmatprep.subr.bf16.mxu0 0
  %400 = vmatpush1.bf16.msra.mxu0 %v286
  %401 = vmatprep.subr.bf16.mxu0 0
  %402 = vmatpush1.bf16.msra.mxu0 %v287
  %403 = vmatprep.subr.bf16.mxu0 0
  %404 = vmatpush1.bf16.msra.mxu0 %v288
  %405 = vmatprep.mubr.bf16.mxu0 %v107
  %406 = vmatmul.mubr.bf16.gmra.mrb[0].mxu0 %v106
  %v407 = vpop.f32.mrb[0].mxu0
  %v408 = vadd.f32 %v368, %v407
  %v409 = vpop.f32.mrb[0].mxu0
  %v410 = vpop.f32.mrb[0].mxu0
  %v411 = vpop.f32.mrb[0].mxu0
  %412 = vdwg.mxu0
  %413 = vmatprep.subr.bf16.mxu0 0
  %414 = vmatpush1.bf16.msra.mxu0 %v289
  %415 = vmatprep.subr.bf16.mxu0 0
  %416 = vmatpush1.bf16.msra.mxu0 %v290
  %417 = vmatprep.subr.bf16.mxu0 0
  %418 = vmatpush1.bf16.msra.mxu0 %v291
  %419 = vmatprep.subr.bf16.mxu0 0
  %420 = vmatpush1.bf16.msra.mxu0 %v292
  %421 = vmatprep.subr.bf16.mxu0 0
  %422 = vmatpush1.bf16.msra.mxu0 0
  %423 = vmatprep.subr.bf16.mxu0 0
  %424 = vmatpush1.bf16.msra.mxu0 0
  %425 = vmatprep.subr.bf16.mxu0 0
  %426 = vmatpush1.bf16.msra.mxu0 0
  %427 = vmatprep.subr.bf16.mxu0 0
  %428 = vmatpush1.bf16.msra.mxu0 0
  %429 = vmatprep.subr.bf16.mxu0 0
  %430 = vmatpush1.bf16.msra.mxu0 0
  %431 = vmatprep.subr.bf16.mxu0 0
  %432 = vmatpush1.bf16.msra.mxu0 0
  %433 = vmatprep.subr.bf16.mxu0 0
  %434 = vmatpush1.bf16.msra.mxu0 0
  %435 = vmatprep.subr.bf16.mxu0 0
  %436 = vmatpush1.bf16.msra.mxu0 0
  %437 = vmatprep.subr.bf16.mxu0 0
  %438 = vmatpush1.bf16.msra.mxu0 0
  %439 = vmatprep.subr.bf16.mxu0 0
  %440 = vmatpush1.bf16.msra.mxu0 0
  %441 = vmatprep.subr.bf16.mxu0 0
  %442 = vmatpush1.bf16.msra.mxu0 0
  %443 = vmatprep.subr.bf16.mxu0 0
  %444 = vmatpush1.bf16.msra.mxu0 0
  %445 = vmatprep.mubr.bf16.mxu0 0
  %446 = vmatmul.mubr.bf16.gmra.mrb[0].mxu0 %v331
  %v447 = vpop.f32.mrb[0].mxu0
  %v448 = vadd.f32 %v408, %v447
  %v449 = vpop.f32.mrb[0].mxu0
  %v450 = vpop.f32.mrb[0].mxu0
  %v451 = vpop.f32.mrb[0].mxu0
  %452 = vdwg.mxu0
  %v453 = vrot.slane %v448, 4
  %v454 = vadd.f32 %v448, %v453
  %v455 = vrot.slane %v454, 2
  %v456 = vadd.f32 %v454, %v455
  %v457 = vrot.slane %v456, 1
  %v458 = vadd.f32 %v456, %v457
  %v459 = vmul.f32 %v448, %v448
  %v460 = vrot.slane %v459, 4
  %v461 = vadd.f32 %v459, %v460
  %v462 = vrot.slane %v461, 2
  %v463 = vadd.f32 %v461, %v462
  %v464 = vrot.slane %v463, 1
  %v465 = vadd.f32 %v463, %v464
  %v466 = vld [vmem:[%s4] sm:$0xff]
  %v467 = vld [vmem:[%s4 + $0x8] sm:$0xff]
  %v468 = vld [vmem:[%s4 + $0x10] sm:$0xff]
  %v469 = vld [vmem:[%s4 + $0x18] sm:$0xff]
  %v470 = vld [vmem:[%s4 + $0x20] sm:$0xff]
  %v471 = vld [vmem:[%s4 + $0x28] sm:$0xff]
  %v472 = vld [vmem:[%s4 + $0x30] sm:$0xff]
  %v473 = vld [vmem:[%s4 + $0x38] sm:$0xff]
  %v474 = vld [vmem:[%s4 + $0x40] sm:$0xff]
  %v475 = vld [vmem:[%s4 + $0x48] sm:$0xff]
  %v476 = vld [vmem:[%s4 + $0x50] sm:$0xff]
  %v477 = vld [vmem:[%s4 + $0x58] sm:$0xff]
  %v478 = vld [vmem:[%s4 + $0x60] sm:$0xff]
  %v479 = vld [vmem:[%s4 + $0x68] sm:$0xff]
  %v480 = vld [vmem:[%s4 + $0x70] sm:$0xff]
  %v481 = vld [vmem:[%s4 + $0x78] sm:$0xff]
  %482 = vmatprep.subr.mxu0 0.0
  %483 = vmatpush1.msra.mxu0 %v466
  %484 = vmatprep.subr.mxu0 0.0
  %485 = vmatpush1.msra.mxu0 %v467
  %486 = vmatprep.subr.mxu0 0.0
  %487 = vmatpush1.msra.mxu0 %v468
  %488 = vmatprep.subr.mxu0 0.0
  %489 = vmatpush1.msra.mxu0 %v469
  %490 = vmatprep.subr.mxu0 0.0
  %491 = vmatpush1.msra.mxu0 %v470
  %492 = vmatprep.subr.mxu0 0.0
  %493 = vmatpush1.msra.mxu0 %v471
  %494 = vmatprep.subr.mxu0 0.0
  %495 = vmatpush1.msra.mxu0 %v472
  %496 = vmatprep.subr.mxu0 0.0
  %497 = vmatpush1.msra.mxu0 %v473
  %498 = vmatprep.subr.mxu0 0.0
  %499 = vmatpush1.msra.mxu0 %v474
  %500 = vmatprep.subr.mxu0 0.0
  %501 = vmatpush1.msra.mxu0 %v475
  %502 = vmatprep.subr.mxu0 0.0
  %503 = vmatpush1.msra.mxu0 %v476
  %504 = vmatprep.subr.mxu0 0.0
  %505 = vmatpush1.msra.mxu0 %v477
  %506 = vmatprep.subr.mxu0 0.0
  %507 = vmatpush1.msra.mxu0 %v478
  %508 = vmatprep.subr.mxu0 0.0
  %509 = vmatpush1.msra.mxu0 %v479
  %510 = vmatprep.subr.mxu0 0.0
  %511 = vmatpush1.msra.mxu0 %v480
  %512 = vmatprep.subr.mxu0 0.0
  %513 = vmatpush1.msra.mxu0 %v481
  %514 = vmatprep.subr.mxu0 0.0
  %515 = vmatpush1.msra.mxu0 0.0
  %516 = vmatprep.subr.mxu0 0.0
  %517 = vmatpush1.msra.mxu0 0.0
  %518 = vmatprep.subr.mxu0 0.0
  %519 = vmatpush1.msra.mxu0 0.0
  %520 = vmatprep.subr.mxu0 0.0
  %521 = vmatpush1.msra.mxu0 0.0
  %522 = vmatprep.subr.mxu0 0.0
  %523 = vmatpush1.msra.mxu0 0.0
  %524 = vmatprep.subr.mxu0 0.0
  %525 = vmatpush1.msra.mxu0 0.0
  %526 = vmatprep.subr.mxu0 0.0
  %527 = vmatpush1.msra.mxu0 0.0
  %528 = vmatprep.subr.mxu0 0.0
  %529 = vmatpush1.msra.mxu0 0.0
  %530 = vmatprep.subr.mxu0 0.0
  %531 = vmatpush1.msra.mxu0 0.0
  %532 = vmatprep.subr.mxu0 0.0
  %533 = vmatpush1.msra.mxu0 0.0
  %534 = vmatprep.subr.mxu0 0.0
  %535 = vmatpush1.msra.mxu0 0.0
  %536 = vmatprep.subr.mxu0 0.0
  %537 = vmatpush1.msra.mxu0 0.0
  %538 = vmatprep.subr.mxu0 0.0
  %539 = vmatpush1.msra.mxu0 0.0
  %540 = vmatprep.subr.mxu0 0.0
  %541 = vmatpush1.msra.mxu0 0.0
  %542 = vmatprep.subr.mxu0 0.0
  %543 = vmatpush1.msra.mxu0 0.0
  %544 = vmatprep.subr.mxu0 0.0
  %545 = vmatpush1.msra.mxu0 0.0
  %546 = vmatprep.mubr.f32.mxu0 0.0
  %547 = vmatmul.mubr.f32.gmra.mrb[0].mxu0 %v458
  %v548 = vpop.f32.mrb[0].mxu0
  %v549 = vadd.f32 0.0, %v548
  %v550 = vpop.f32.mrb[0].mxu0
  %551 = vdwg.mxu0
  %552 = vmatprep.subr.mxu0 0.0
  %553 = vmatpush1.msra.mxu0 %v466
  %554 = vmatprep.subr.mxu0 0.0
  %555 = vmatpush1.msra.mxu0 %v467
  %556 = vmatprep.subr.mxu0 0.0
  %557 = vmatpush1.msra.mxu0 %v468
  %558 = vmatprep.subr.mxu0 0.0
  %559 = vmatpush1.msra.mxu0 %v469
  %560 = vmatprep.subr.mxu0 0.0
  %561 = vmatpush1.msra.mxu0 %v470
  %562 = vmatprep.subr.mxu0 0.0
  %563 = vmatpush1.msra.mxu0 %v471
  %564 = vmatprep.subr.mxu0 0.0
  %565 = vmatpush1.msra.mxu0 %v472
  %566 = vmatprep.subr.mxu0 0.0
  %567 = vmatpush1.msra.mxu0 %v473
  %568 = vmatprep.subr.mxu0 0.0
  %569 = vmatpush1.msra.mxu0 %v474
  %570 = vmatprep.subr.mxu0 0.0
  %571 = vmatpush1.msra.mxu0 %v475
  %572 = vmatprep.subr.mxu0 0.0
  %573 = vmatpush1.msra.mxu0 %v476
  %574 = vmatprep.subr.mxu0 0.0
  %575 = vmatpush1.msra.mxu0 %v477
  %576 = vmatprep.subr.mxu0 0.0
  %577 = vmatpush1.msra.mxu0 %v478
  %578 = vmatprep.subr.mxu0 0.0
  %579 = vmatpush1.msra.mxu0 %v479
  %580 = vmatprep.subr.mxu0 0.0
  %581 = vmatpush1.msra.mxu0 %v480
  %582 = vmatprep.subr.mxu0 0.0
  %583 = vmatpush1.msra.mxu0 %v481
  %584 = vmatprep.subr.mxu0 0.0
  %585 = vmatpush1.msra.mxu0 0.0
  %586 = vmatprep.subr.mxu0 0.0
  %587 = vmatpush1.msra.mxu0 0.0
  %588 = vmatprep.subr.mxu0 0.0
  %589 = vmatpush1.msra.mxu0 0.0
  %590 = vmatprep.subr.mxu0 0.0
  %591 = vmatpush1.msra.mxu0 0.0
  %592 = vmatprep.subr.mxu0 0.0
  %593 = vmatpush1.msra.mxu0 0.0
  %594 = vmatprep.subr.mxu0 0.0
  %595 = vmatpush1.msra.mxu0 0.0
  %596 = vmatprep.subr.mxu0 0.0
  %597 = vmatpush1.msra.mxu0 0.0
  %598 = vmatprep.subr.mxu0 0.0
  %599 = vmatpush1.msra.mxu0 0.0
  %600 = vmatprep.subr.mxu0 0.0
  %601 = vmatpush1.msra.mxu0 0.0
  %602 = vmatprep.subr.mxu0 0.0
  %603 = vmatpush1.msra.mxu0 0.0
  %604 = vmatprep.subr.mxu0 0.0
  %605 = vmatpush1.msra.mxu0 0.0
  %606 = vmatprep.subr.mxu0 0.0
  %607 = vmatpush1.msra.mxu0 0.0
  %608 = vmatprep.subr.mxu0 0.0
  %609 = vmatpush1.msra.mxu0 0.0
  %610 = vmatprep.subr.mxu0 0.0
  %611 = vmatpush1.msra.mxu0 0.0
  %612 = vmatprep.subr.mxu0 0.0
  %613 = vmatpush1.msra.mxu0 0.0
  %614 = vmatprep.subr.mxu0 0.0
  %615 = vmatpush1.msra.mxu0 0.0
  %616 = vmatprep.mubr.f32.mxu0 0.0
  %617 = vmatmul.mubr.f32.gmra.mrb[0].mxu0 %v465
  %v618 = vpop.f32.mrb[0].mxu0
  %v619 = vadd.f32 0.0, %v618
  %v620 = vpop.f32.mrb[0].mxu0
  %621 = vdwg.mxu0
  %v622 = vmul.f32 %v549, 0.03125
  %v623 = vmul.f32 %v619, 0.03125
  %v624 = vmul.f32 %v622, %v622
  %v625 = vsub.f32 %v623, %v624
  %v626 = vld [vmem:[%s2] sm:$0x1]
  %v627 = vadd.f32 %v625, 1e-05
  %v628 = vrsqrt.pop %v627
  %v629 = vmul.f32 %v626, %v628
  %v630 = vld [vmem:[%s3] sm:$0x1]
  %v631 = vmul.f32 %v622, %v629
  %v632 = vsub.f32 %v630, %v631
  %v634 = vlaneseq
  %v635 = vshrl.u32 %v634, 7
  %v636 = vsub.s32 0, %v635
  %v637 = vrot.slane %v629, %v636
  %v639 = vmul.f32 %v448, %v637
  %v641 = vlaneseq
  %v642 = vshrl.u32 %v641, 7
  %v643 = vsub.s32 0, %v642
  %v644 = vrot.slane %v632, %v643
  %v646 = vadd.f32 %v639, %v644
  %vm647 = vcmp.ge.f32.partialorder %v646, 0.0
  %v648 = vmul.f32 %v646, 0.2
  %v649 = vsel %vm647, %v646, %v648
  %v650 = vpack.c.bf16 %v649, %v649
  %651 = vst [vmem:[%s5] sm:$0xf] %v650
  // Predicated region
  $region22: #{net_forward.12} parent=0 // pred_check
    _
  $region23: #{net_forward.12} parent=0 // pred_check_branch
    %653 = sbr.rel (0) target = $region25
  $region24: #{net_forward.12} parent=0 // pred_region
    _
  $region25: #{net_forward.12} parent=0 // pred_fallthru
    _
  // Predicated region
  $region26: #{net_forward.12} parent=0 // pred_check
    _
  $region27: #{net_forward.12} parent=0 // pred_check_branch
    %655 = sbr.rel (0) target = $region29
  $region28: #{net_forward.12} parent=0 // pred_region
    _
  $region29: #{net_forward.12} parent=0 // pred_fallthru
    _

// kernel: net_forward.11
$region0: #{net_forward.11}
  #allocation0 [shape = 'u32[]', space=smem, size = 0x4, offset = 0x4, fixed_abs, tag = 'smem constant byte address 0x4 - core index']
  #allocation1 [shape = 'u32[144,128]{1,0:T(1,128)}', space=vmem, size = 0x12000, scoped, tag = 'internal scratch']
  %s0 = inlined_call_operand.vmem [shape: bf16[8,512], index: 0, kind: input, shape index: {}]
  %s1 = inlined_call_operand.vmem [shape: bf16[512,128], index: 1, kind: input, shape index: {}]
  %s2 = inlined_call_operand.vmem [shape: f32[1,128], index: 2, kind: input, shape index: {}]
  %s3 = inlined_call_operand.vmem [shape: f32[1,128], index: 3, kind: input, shape index: {}]
  %s4 = inlined_call_operand.vmem [shape: f32[128,128], index: 4, kind: input, shape index: {}]
  %s5 = inlined_call_operand.vmem [shape: bf16[8,128], index: 5, kind: output, shape index: {}]
  %s6 = sld [smem:[#allocation0]]
  $region30: #{net_forward.11} parent=0
    _
  %s8 = ssub.s32 1, %s6
  %s9 = scalar_select 0, %s8, %s6
  // Predicated region
  $region2: #{net_forward.11} parent=0 // pred_check
    _
  $region3: #{net_forward.11} parent=0 // pred_check_branch
    %11 = sbr.rel (0) target = $region5
  $region4: #{net_forward.11} parent=0 // pred_region
    _
  $region5: #{net_forward.11} parent=0 // pred_fallthru
    _
  // Predicated region
  $region6: #{net_forward.11} parent=0 // pred_check
    _
  $region7: #{net_forward.11} parent=0 // pred_check_branch
    %13 = sbr.rel (0) target = $region9
  $region8: #{net_forward.11} parent=0 // pred_region
    _
  $region9: #{net_forward.11} parent=0 // pred_fallthru
    _
  // Predicated region
  $region10: #{net_forward.11} parent=0 // pred_check
    _
  $region11: #{net_forward.11} parent=0 // pred_check_branch
    %15 = sbr.rel (0) target = $region13
  $region12: #{net_forward.11} parent=0 // pred_region
    _
  $region13: #{net_forward.11} parent=0 // pred_fallthru
    _
  // Predicated region
  $region14: #{net_forward.11} parent=0 // pred_check
    _
  $region15: #{net_forward.11} parent=0 // pred_check_branch
    %17 = sbr.rel (0) target = $region17
  $region16: #{net_forward.11} parent=0 // pred_region
    _
  $region17: #{net_forward.11} parent=0 // pred_fallthru
    _
  // Predicated region
  $region18: #{net_forward.11} parent=0 // pred_check
    _
  $region19: #{net_forward.11} parent=0 // pred_check_branch
    %19 = sbr.rel (0) target = $region21
  $region20: #{net_forward.11} parent=0 // pred_region
    _
  $region21: #{net_forward.11} parent=0 // pred_fallthru
    _
  %v21 = vld [vmem:[%s0] sm:$0xff]
  %v22 = vld [vmem:[%s0 + $0x8] sm:$0xff]
  %v23 = vld [vmem:[%s1] sm:$0xf]
  %v24 = vld [vmem:[%s1 + $0x4] sm:$0xf]
  %v25 = vld [vmem:[%s1 + $0x8] sm:$0xf]
  %v26 = vld [vmem:[%s1 + $0xc] sm:$0xf]
  %v27 = vld [vmem:[%s1 + $0x10] sm:$0xf]
  %v28 = vld [vmem:[%s1 + $0x14] sm:$0xf]
  %v29 = vld [vmem:[%s1 + $0x18] sm:$0xf]
  %v30 = vld [vmem:[%s1 + $0x1c] sm:$0xf]
  %v31 = vld [vmem:[%s1 + $0x20] sm:$0xf]
  %v32 = vld [vmem:[%s1 + $0x24] sm:$0xf]
  %v33 = vld [vmem:[%s1 + $0x28] sm:$0xf]
  %v34 = vld [vmem:[%s1 + $0x2c] sm:$0xf]
  %v35 = vld [vmem:[%s1 + $0x30] sm:$0xf]
  %v36 = vld [vmem:[%s1 + $0x34] sm:$0xf]
  %v37 = vld [vmem:[%s1 + $0x38] sm:$0xf]
  %v38 = vld [vmem:[%s1 + $0x3c] sm:$0xf]
  %v39 = vld [vmem:[%s1 + $0x40] sm:$0xf]
  %v40 = vld [vmem:[%s1 + $0x44] sm:$0xf]
  %v41 = vld [vmem:[%s1 + $0x48] sm:$0xf]
  %v42 = vld [vmem:[%s1 + $0x4c] sm:$0xf]
  %v43 = vld [vmem:[%s1 + $0x50] sm:$0xf]
  %v44 = vld [vmem:[%s1 + $0x54] sm:$0xf]
  %v45 = vld [vmem:[%s1 + $0x58] sm:$0xf]
  %v46 = vld [vmem:[%s1 + $0x5c] sm:$0xf]
  %v47 = vld [vmem:[%s1 + $0x60] sm:$0xf]
  %v48 = vld [vmem:[%s1 + $0x64] sm:$0xf]
  %v49 = vld [vmem:[%s1 + $0x68] sm:$0xf]
  %v50 = vld [vmem:[%s1 + $0x6c] sm:$0xf]
  %v51 = vld [vmem:[%s1 + $0x70] sm:$0xf]
  %v52 = vld [vmem:[%s1 + $0x74] sm:$0xf]
  %v53 = vld [vmem:[%s1 + $0x78] sm:$0xf]
  %v54 = vld [vmem:[%s1 + $0x7c] sm:$0xf]
  %v55 = vld [vmem:[%s1 + $0x80] sm:$0xf]
  %v56 = vld [vmem:[%s1 + $0x84] sm:$0xf]
  %v57 = vld [vmem:[%s1 + $0x88] sm:$0xf]
  %v58 = vld [vmem:[%s1 + $0x8c] sm:$0xf]
  %v59 = vld [vmem:[%s1 + $0x90] sm:$0xf]
  %v60 = vld [vmem:[%s1 + $0x94] sm:$0xf]
  %v61 = vld [vmem:[%s1 + $0x98] sm:$0xf]
  %v62 = vld [vmem:[%s1 + $0x9c] sm:$0xf]
  %v63 = vld [vmem:[%s1 + $0xa0] sm:$0xf]
  %v64 = vld [vmem:[%s1 + $0xa4] sm:$0xf]
  %v65 = vld [vmem:[%s1 + $0xa8] sm:$0xf]
  %v66 = vld [vmem:[%s1 + $0xac] sm:$0xf]
  %v67 = vld [vmem:[%s1 + $0xb0] sm:$0xf]
  %v68 = vld [vmem:[%s1 + $0xb4] sm:$0xf]
  %v69 = vld [vmem:[%s1 + $0xb8] sm:$0xf]
  %v70 = vld [vmem:[%s1 + $0xbc] sm:$0xf]
  %v71 = vld [vmem:[%s1 + $0xc0] sm:$0xf]
  %v72 = vld [vmem:[%s1 + $0xc4] sm:$0xf]
  %v73 = vld [vmem:[%s1 + $0xc8] sm:$0xf]
  %v74 = vld [vmem:[%s1 + $0xcc] sm:$0xf]
  %v75 = vld [vmem:[%s1 + $0xd0] sm:$0xf]
  %v76 = vld [vmem:[%s1 + $0xd4] sm:$0xf]
  %v77 = vld [vmem:[%s1 + $0xd8] sm:$0xf]
  %v78 = vld [vmem:[%s1 + $0xdc] sm:$0xf]
  %v79 = vld [vmem:[%s1 + $0xe0] sm:$0xf]
  %v80 = vld [vmem:[%s1 + $0xe4] sm:$0xf]
  %v81 = vld [vmem:[%s1 + $0xe8] sm:$0xf]
  %v82 = vld [vmem:[%s1 + $0xec] sm:$0xf]
  %v83 = vld [vmem:[%s1 + $0xf0] sm:$0xf]
  %v84 = vld [vmem:[%s1 + $0xf4] sm:$0xf]
  %v85 = vld [vmem:[%s1 + $0xf8] sm:$0xf]
  %v86 = vld [vmem:[%s1 + $0xfc] sm:$0xf]
  %v89 = vunpack.c.l.b16 %v21
  %v90 = vunpack.c.h.b16 %v21
  %v91 = vunpack.c.l.b16 %v22
  %v92 = vunpack.c.h.b16 %v22
  %v93 = vpack.c.b16 %v89, %v89
  %v94 = vpack.c.b16 %v90, %v90
  %v95 = vpack.c.b16 %v91, %v91
  %v96 = vpack.c.b16 %v92, %v92
  %v165 = vunpack.c.l.b16 %v23
  %v166 = vunpack.c.l.b16 %v24
  %v167 = vunpack.c.l.b16 %v25
  %v168 = vunpack.c.l.b16 %v26
  %v169 = vunpack.c.l.b16 %v27
  %v170 = vunpack.c.l.b16 %v28
  %v171 = vunpack.c.l.b16 %v29
  %v172 = vunpack.c.l.b16 %v30
  %v173 = vunpack.c.l.b16 %v31
  %v174 = vunpack.c.l.b16 %v32
  %v175 = vunpack.c.l.b16 %v33
  %v176 = vunpack.c.l.b16 %v34
  %v177 = vunpack.c.l.b16 %v35
  %v178 = vunpack.c.l.b16 %v36
  %v179 = vunpack.c.l.b16 %v37
  %v180 = vunpack.c.l.b16 %v38
  %v181 = vunpack.c.l.b16 %v39
  %v182 = vunpack.c.l.b16 %v40
  %v183 = vunpack.c.l.b16 %v41
  %v184 = vunpack.c.l.b16 %v42
  %v185 = vunpack.c.l.b16 %v43
  %v186 = vunpack.c.l.b16 %v44
  %v187 = vunpack.c.l.b16 %v45
  %v188 = vunpack.c.l.b16 %v46
  %v189 = vunpack.c.l.b16 %v47
  %v190 = vunpack.c.l.b16 %v48
  %v191 = vunpack.c.l.b16 %v49
  %v192 = vunpack.c.l.b16 %v50
  %v193 = vunpack.c.l.b16 %v51
  %v194 = vunpack.c.l.b16 %v52
  %v195 = vunpack.c.l.b16 %v53
  %v196 = vunpack.c.l.b16 %v54
  %v197 = vunpack.c.l.b16 %v55
  %v198 = vunpack.c.l.b16 %v56
  %v199 = vunpack.c.l.b16 %v57
  %v200 = vunpack.c.l.b16 %v58
  %v201 = vunpack.c.l.b16 %v59
  %v202 = vunpack.c.l.b16 %v60
  %v203 = vunpack.c.l.b16 %v61
  %v204 = vunpack.c.l.b16 %v62
  %v205 = vunpack.c.l.b16 %v63
  %v206 = vunpack.c.l.b16 %v64
  %v207 = vunpack.c.l.b16 %v65
  %v208 = vunpack.c.l.b16 %v66
  %v209 = vunpack.c.l.b16 %v67
  %v210 = vunpack.c.l.b16 %v68
  %v211 = vunpack.c.l.b16 %v69
  %v212 = vunpack.c.l.b16 %v70
  %v213 = vunpack.c.l.b16 %v71
  %v214 = vunpack.c.l.b16 %v72
  %v215 = vunpack.c.l.b16 %v73
  %v216 = vunpack.c.l.b16 %v74
  %v217 = vunpack.c.l.b16 %v75
  %v218 = vunpack.c.l.b16 %v76
  %v219 = vunpack.c.l.b16 %v77
  %v220 = vunpack.c.l.b16 %v78
  %v221 = vunpack.c.l.b16 %v79
  %v222 = vunpack.c.l.b16 %v80
  %v223 = vunpack.c.l.b16 %v81
  %v224 = vunpack.c.l.b16 %v82
  %v225 = vunpack.c.l.b16 %v83
  %v226 = vunpack.c.l.b16 %v84
  %v227 = vunpack.c.l.b16 %v85
  %v228 = vunpack.c.l.b16 %v86
  %v229 = vpack.c.b16 %v166, %v165
  %v230 = vpack.c.b16 %v168, %v167
  %v231 = vpack.c.b16 %v170, %v169
  %v232 = vpack.c.b16 %v172, %v171
  %v233 = vpack.c.b16 %v174, %v173
  %v234 = vpack.c.b16 %v176, %v175
  %v235 = vpack.c.b16 %v178, %v177
  %v236 = vpack.c.b16 %v180, %v179
  %v237 = vpack.c.b16 %v182, %v181
  %v238 = vpack.c.b16 %v184, %v183
  %v239 = vpack.c.b16 %v186, %v185
  %v240 = vpack.c.b16 %v188, %v187
  %v241 = vpack.c.b16 %v190, %v189
  %v242 = vpack.c.b16 %v192, %v191
  %v243 = vpack.c.b16 %v194, %v193
  %v244 = vpack.c.b16 %v196, %v195
  %v245 = vpack.c.b16 %v198, %v197
  %v246 = vpack.c.b16 %v200, %v199
  %v247 = vpack.c.b16 %v202, %v201
  %v248 = vpack.c.b16 %v204, %v203
  %v249 = vpack.c.b16 %v206, %v205
  %v250 = vpack.c.b16 %v208, %v207
  %v251 = vpack.c.b16 %v210, %v209
  %v252 = vpack.c.b16 %v212, %v211
  %v253 = vpack.c.b16 %v214, %v213
  %v254 = vpack.c.b16 %v216, %v215
  %v255 = vpack.c.b16 %v218, %v217
  %v256 = vpack.c.b16 %v220, %v219
  %v257 = vpack.c.b16 %v222, %v221
  %v258 = vpack.c.b16 %v224, %v223
  %v259 = vpack.c.b16 %v226, %v225
  %v260 = vpack.c.b16 %v228, %v227
  %293 = vmatprep.subr.bf16.mxu0 0
  %294 = vmatpush1.bf16.msra.mxu0 %v229
  %295 = vmatprep.subr.bf16.mxu0 0
  %296 = vmatpush1.bf16.msra.mxu0 %v230
  %297 = vmatprep.subr.bf16.mxu0 0
  %298 = vmatpush1.bf16.msra.mxu0 %v231
  %299 = vmatprep.subr.bf16.mxu0 0
  %300 = vmatpush1.bf16.msra.mxu0 %v232
  %301 = vmatprep.subr.bf16.mxu0 0
  %302 = vmatpush1.bf16.msra.mxu0 %v233
  %303 = vmatprep.subr.bf16.mxu0 0
  %304 = vmatpush1.bf16.msra.mxu0 %v234
  %305 = vmatprep.subr.bf16.mxu0 0
  %306 = vmatpush1.bf16.msra.mxu0 %v235
  %307 = vmatprep.subr.bf16.mxu0 0
  %308 = vmatpush1.bf16.msra.mxu0 %v236
  %309 = vmatprep.subr.bf16.mxu0 0
  %310 = vmatpush1.bf16.msra.mxu0 %v237
  %311 = vmatprep.subr.bf16.mxu0 0
  %312 = vmatpush1.bf16.msra.mxu0 %v238
  %313 = vmatprep.subr.bf16.mxu0 0
  %314 = vmatpush1.bf16.msra.mxu0 %v239
  %315 = vmatprep.subr.bf16.mxu0 0
  %316 = vmatpush1.bf16.msra.mxu0 %v240
  %317 = vmatprep.subr.bf16.mxu0 0
  %318 = vmatpush1.bf16.msra.mxu0 %v241
  %319 = vmatprep.subr.bf16.mxu0 0
  %320 = vmatpush1.bf16.msra.mxu0 %v242
  %321 = vmatprep.subr.bf16.mxu0 0
  %322 = vmatpush1.bf16.msra.mxu0 %v243
  %323 = vmatprep.subr.bf16.mxu0 0
  %324 = vmatpush1.bf16.msra.mxu0 %v244
  %325 = vmatprep.mubr.bf16.mxu0 %v94
  %326 = vmatmul.mubr.bf16.gmra.mrb[0].mxu0 %v93
  %v327 = vpop.f32.mrb[0].mxu0
  %v328 = vadd.f32 0.0, %v327
  %v329 = vpop.f32.mrb[0].mxu0
  %v330 = vpop.f32.mrb[0].mxu0
  %v331 = vpop.f32.mrb[0].mxu0
  %332 = vdwg.mxu0
  %333 = vmatprep.subr.bf16.mxu0 0
  %334 = vmatpush1.bf16.msra.mxu0 %v245
  %335 = vmatprep.subr.bf16.mxu0 0
  %336 = vmatpush1.bf16.msra.mxu0 %v246
  %337 = vmatprep.subr.bf16.mxu0 0
  %338 = vmatpush1.bf16.msra.mxu0 %v247
  %339 = vmatprep.subr.bf16.mxu0 0
  %340 = vmatpush1.bf16.msra.mxu0 %v248
  %341 = vmatprep.subr.bf16.mxu0 0
  %342 = vmatpush1.bf16.msra.mxu0 %v249
  %343 = vmatprep.subr.bf16.mxu0 0
  %344 = vmatpush1.bf16.msra.mxu0 %v250
  %345 = vmatprep.subr.bf16.mxu0 0
  %346 = vmatpush1.bf16.msra.mxu0 %v251
  %347 = vmatprep.subr.bf16.mxu0 0
  %348 = vmatpush1.bf16.msra.mxu0 %v252
  %349 = vmatprep.subr.bf16.mxu0 0
  %350 = vmatpush1.bf16.msra.mxu0 %v253
  %351 = vmatprep.subr.bf16.mxu0 0
  %352 = vmatpush1.bf16.msra.mxu0 %v254
  %353 = vmatprep.subr.bf16.mxu0 0
  %354 = vmatpush1.bf16.msra.mxu0 %v255
  %355 = vmatprep.subr.bf16.mxu0 0
  %356 = vmatpush1.bf16.msra.mxu0 %v256
  %357 = vmatprep.subr.bf16.mxu0 0
  %358 = vmatpush1.bf16.msra.mxu0 %v257
  %359 = vmatprep.subr.bf16.mxu0 0
  %360 = vmatpush1.bf16.msra.mxu0 %v258
  %361 = vmatprep.subr.bf16.mxu0 0
  %362 = vmatpush1.bf16.msra.mxu0 %v259
  %363 = vmatprep.subr.bf16.mxu0 0
  %364 = vmatpush1.bf16.msra.mxu0 %v260
  %365 = vmatprep.mubr.bf16.mxu0 %v96
  %366 = vmatmul.mubr.bf16.gmra.mrb[0].mxu0 %v95
  %v367 = vpop.f32.mrb[0].mxu0
  %v368 = vadd.f32 %v328, %v367
  %v369 = vpop.f32.mrb[0].mxu0
  %v370 = vpop.f32.mrb[0].mxu0
  %v371 = vpop.f32.mrb[0].mxu0
  %372 = vdwg.mxu0
  %v373 = vrot.slane %v368, 4
  %v374 = vadd.f32 %v368, %v373
  %v375 = vrot.slane %v374, 2
  %v376 = vadd.f32 %v374, %v375
  %v377 = vrot.slane %v376, 1
  %v378 = vadd.f32 %v376, %v377
  %v379 = vmul.f32 %v368, %v368
  %v380 = vrot.slane %v379, 4
  %v381 = vadd.f32 %v379, %v380
  %v382 = vrot.slane %v381, 2
  %v383 = vadd.f32 %v381, %v382
  %v384 = vrot.slane %v383, 1
  %v385 = vadd.f32 %v383, %v384
  %v386 = vld [vmem:[%s4] sm:$0xff]
  %v387 = vld [vmem:[%s4 + $0x8] sm:$0xff]
  %v388 = vld [vmem:[%s4 + $0x10] sm:$0xff]
  %v389 = vld [vmem:[%s4 + $0x18] sm:$0xff]
  %v390 = vld [vmem:[%s4 + $0x20] sm:$0xff]
  %v391 = vld [vmem:[%s4 + $0x28] sm:$0xff]
  %v392 = vld [vmem:[%s4 + $0x30] sm:$0xff]
  %v393 = vld [vmem:[%s4 + $0x38] sm:$0xff]
  %v394 = vld [vmem:[%s4 + $0x40] sm:$0xff]
  %v395 = vld [vmem:[%s4 + $0x48] sm:$0xff]
  %v396 = vld [vmem:[%s4 + $0x50] sm:$0xff]
  %v397 = vld [vmem:[%s4 + $0x58] sm:$0xff]
  %v398 = vld [vmem:[%s4 + $0x60] sm:$0xff]
  %v399 = vld [vmem:[%s4 + $0x68] sm:$0xff]
  %v400 = vld [vmem:[%s4 + $0x70] sm:$0xff]
  %v401 = vld [vmem:[%s4 + $0x78] sm:$0xff]
  %402 = vmatprep.subr.mxu0 0.0
  %403 = vmatpush1.msra.mxu0 %v386
  %404 = vmatprep.subr.mxu0 0.0
  %405 = vmatpush1.msra.mxu0 %v387
  %406 = vmatprep.subr.mxu0 0.0
  %407 = vmatpush1.msra.mxu0 %v388
  %408 = vmatprep.subr.mxu0 0.0
  %409 = vmatpush1.msra.mxu0 %v389
  %410 = vmatprep.subr.mxu0 0.0
  %411 = vmatpush1.msra.mxu0 %v390
  %412 = vmatprep.subr.mxu0 0.0
  %413 = vmatpush1.msra.mxu0 %v391
  %414 = vmatprep.subr.mxu0 0.0
  %415 = vmatpush1.msra.mxu0 %v392
  %416 = vmatprep.subr.mxu0 0.0
  %417 = vmatpush1.msra.mxu0 %v393
  %418 = vmatprep.subr.mxu0 0.0
  %419 = vmatpush1.msra.mxu0 %v394
  %420 = vmatprep.subr.mxu0 0.0
  %421 = vmatpush1.msra.mxu0 %v395
  %422 = vmatprep.subr.mxu0 0.0
  %423 = vmatpush1.msra.mxu0 %v396
  %424 = vmatprep.subr.mxu0 0.0
  %425 = vmatpush1.msra.mxu0 %v397
  %426 = vmatprep.subr.mxu0 0.0
  %427 = vmatpush1.msra.mxu0 %v398
  %428 = vmatprep.subr.mxu0 0.0
  %429 = vmatpush1.msra.mxu0 %v399
  %430 = vmatprep.subr.mxu0 0.0
  %431 = vmatpush1.msra.mxu0 %v400
  %432 = vmatprep.subr.mxu0 0.0
  %433 = vmatpush1.msra.mxu0 %v401
  %434 = vmatprep.subr.mxu0 0.0
  %435 = vmatpush1.msra.mxu0 0.0
  %436 = vmatprep.subr.mxu0 0.0
  %437 = vmatpush1.msra.mxu0 0.0
  %438 = vmatprep.subr.mxu0 0.0
  %439 = vmatpush1.msra.mxu0 0.0
  %440 = vmatprep.subr.mxu0 0.0
  %441 = vmatpush1.msra.mxu0 0.0
  %442 = vmatprep.subr.mxu0 0.0
  %443 = vmatpush1.msra.mxu0 0.0
  %444 = vmatprep.subr.mxu0 0.0
  %445 = vmatpush1.msra.mxu0 0.0
  %446 = vmatprep.subr.mxu0 0.0
  %447 = vmatpush1.msra.mxu0 0.0
  %448 = vmatprep.subr.mxu0 0.0
  %449 = vmatpush1.msra.mxu0 0.0
  %450 = vmatprep.subr.mxu0 0.0
  %451 = vmatpush1.msra.mxu0 0.0
  %452 = vmatprep.subr.mxu0 0.0
  %453 = vmatpush1.msra.mxu0 0.0
  %454 = vmatprep.subr.mxu0 0.0
  %455 = vmatpush1.msra.mxu0 0.0
  %456 = vmatprep.subr.mxu0 0.0
  %457 = vmatpush1.msra.mxu0 0.0
  %458 = vmatprep.subr.mxu0 0.0
  %459 = vmatpush1.msra.mxu0 0.0
  %460 = vmatprep.subr.mxu0 0.0
  %461 = vmatpush1.msra.mxu0 0.0
  %462 = vmatprep.subr.mxu0 0.0
  %463 = vmatpush1.msra.mxu0 0.0
  %464 = vmatprep.subr.mxu0 0.0
  %465 = vmatpush1.msra.mxu0 0.0
  %466 = vmatprep.mubr.f32.mxu0 0.0
  %467 = vmatmul.mubr.f32.gmra.mrb[0].mxu0 %v378
  %v468 = vpop.f32.mrb[0].mxu0
  %v469 = vadd.f32 0.0, %v468
  %v470 = vpop.f32.mrb[0].mxu0
  %471 = vdwg.mxu0
  %472 = vmatprep.subr.mxu0 0.0
  %473 = vmatpush1.msra.mxu0 %v386
  %474 = vmatprep.subr.mxu0 0.0
  %475 = vmatpush1.msra.mxu0 %v387
  %476 = vmatprep.subr.mxu0 0.0
  %477 = vmatpush1.msra.mxu0 %v388
  %478 = vmatprep.subr.mxu0 0.0
  %479 = vmatpush1.msra.mxu0 %v389
  %480 = vmatprep.subr.mxu0 0.0
  %481 = vmatpush1.msra.mxu0 %v390
  %482 = vmatprep.subr.mxu0 0.0
  %483 = vmatpush1.msra.mxu0 %v391
  %484 = vmatprep.subr.mxu0 0.0
  %485 = vmatpush1.msra.mxu0 %v392
  %486 = vmatprep.subr.mxu0 0.0
  %487 = vmatpush1.msra.mxu0 %v393
  %488 = vmatprep.subr.mxu0 0.0
  %489 = vmatpush1.msra.mxu0 %v394
  %490 = vmatprep.subr.mxu0 0.0
  %491 = vmatpush1.msra.mxu0 %v395
  %492 = vmatprep.subr.mxu0 0.0
  %493 = vmatpush1.msra.mxu0 %v396
  %494 = vmatprep.subr.mxu0 0.0
  %495 = vmatpush1.msra.mxu0 %v397
  %496 = vmatprep.subr.mxu0 0.0
  %497 = vmatpush1.msra.mxu0 %v398
  %498 = vmatprep.subr.mxu0 0.0
  %499 = vmatpush1.msra.mxu0 %v399
  %500 = vmatprep.subr.mxu0 0.0
  %501 = vmatpush1.msra.mxu0 %v400
  %502 = vmatprep.subr.mxu0 0.0
  %503 = vmatpush1.msra.mxu0 %v401
  %504 = vmatprep.subr.mxu0 0.0
  %505 = vmatpush1.msra.mxu0 0.0
  %506 = vmatprep.subr.mxu0 0.0
  %507 = vmatpush1.msra.mxu0 0.0
  %508 = vmatprep.subr.mxu0 0.0
  %509 = vmatpush1.msra.mxu0 0.0
  %510 = vmatprep.subr.mxu0 0.0
  %511 = vmatpush1.msra.mxu0 0.0
  %512 = vmatprep.subr.mxu0 0.0
  %513 = vmatpush1.msra.mxu0 0.0
  %514 = vmatprep.subr.mxu0 0.0
  %515 = vmatpush1.msra.mxu0 0.0
  %516 = vmatprep.subr.mxu0 0.0
  %517 = vmatpush1.msra.mxu0 0.0
  %518 = vmatprep.subr.mxu0 0.0
  %519 = vmatpush1.msra.mxu0 0.0
  %520 = vmatprep.subr.mxu0 0.0
  %521 = vmatpush1.msra.mxu0 0.0
  %522 = vmatprep.subr.mxu0 0.0
  %523 = vmatpush1.msra.mxu0 0.0
  %524 = vmatprep.subr.mxu0 0.0
  %525 = vmatpush1.msra.mxu0 0.0
  %526 = vmatprep.subr.mxu0 0.0
  %527 = vmatpush1.msra.mxu0 0.0
  %528 = vmatprep.subr.mxu0 0.0
  %529 = vmatpush1.msra.mxu0 0.0
  %530 = vmatprep.subr.mxu0 0.0
  %531 = vmatpush1.msra.mxu0 0.0
  %532 = vmatprep.subr.mxu0 0.0
  %533 = vmatpush1.msra.mxu0 0.0
  %534 = vmatprep.subr.mxu0 0.0
  %535 = vmatpush1.msra.mxu0 0.0
  %536 = vmatprep.mubr.f32.mxu0 0.0
  %537 = vmatmul.mubr.f32.gmra.mrb[0].mxu0 %v385
  %v538 = vpop.f32.mrb[0].mxu0
  %v539 = vadd.f32 0.0, %v538
  %v540 = vpop.f32.mrb[0].mxu0
  %541 = vdwg.mxu0
  %v542 = vmul.f32 %v469, 0.125
  %v543 = vmul.f32 %v539, 0.125
  %v544 = vmul.f32 %v542, %v542
  %v545 = vsub.f32 %v543, %v544
  %v546 = vld [vmem:[%s2] sm:$0x1]
  %v547 = vadd.f32 %v545, 1e-05
  %v548 = vrsqrt.pop %v547
  %v549 = vmul.f32 %v546, %v548
  %v550 = vld [vmem:[%s3] sm:$0x1]
  %v551 = vmul.f32 %v542, %v549
  %v552 = vsub.f32 %v550, %v551
  %v554 = vlaneseq
  %v555 = vshrl.u32 %v554, 7
  %v556 = vsub.s32 0, %v555
  %v557 = vrot.slane %v549, %v556
  %v559 = vmul.f32 %v368, %v557
  %v561 = vlaneseq
  %v562 = vshrl.u32 %v561, 7
  %v563 = vsub.s32 0, %v562
  %v564 = vrot.slane %v552, %v563
  %v566 = vadd.f32 %v559, %v564
  %vm567 = vcmp.ge.f32.partialorder %v566, 0.0
  %v568 = vmul.f32 %v566, 0.2
  %v569 = vsel %vm567, %v566, %v568
  %v570 = vpack.c.bf16 %v569, %v569
  %571 = vst [vmem:[%s5] sm:$0xf] %v570
  // Predicated region
  $region22: #{net_forward.11} parent=0 // pred_check
    _
  $region23: #{net_forward.11} parent=0 // pred_check_branch
    %573 = sbr.rel (0) target = $region25
  $region24: #{net_forward.11} parent=0 // pred_region
    _
  $region25: #{net_forward.11} parent=0 // pred_fallthru
    _
  // Predicated region
  $region26: #{net_forward.11} parent=0 // pred_check
    _
  $region27: #{net_forward.11} parent=0 // pred_check_branch
    %575 = sbr.rel (0) target = $region29
  $region28: #{net_forward.11} parent=0 // pred_region
    _
  $region29: #{net_forward.11} parent=0 // pred_fallthru
    _

// kernel: net_forward.13
$region0: #{net_forward.13}
  #allocation0 [shape = 'u32[]', space=smem, size = 0x4, offset = 0x4, fixed_abs, tag = 'smem constant byte address 0x4 - core index']
  #allocation1 [shape = 'u32[144,128]{1,0:T(1,128)}', space=vmem, size = 0x12000, scoped, tag = 'internal scratch']
  %s0 = inlined_call_operand.vmem [shape: bf16[32,288], index: 0, kind: input, shape index: {}]
  %s1 = inlined_call_operand.vmem [shape: bf16[288,128], index: 1, kind: input, shape index: {}]
  %s2 = inlined_call_operand.vmem [shape: f32[1,128], index: 2, kind: input, shape index: {}]
  %s3 = inlined_call_operand.vmem [shape: f32[1,128], index: 3, kind: input, shape index: {}]
  %s4 = inlined_call_operand.vmem [shape: f32[128,128], index: 4, kind: input, shape index: {}]
  %s5 = inlined_call_operand.vmem [shape: bf16[32,128], index: 5, kind: output, shape index: {}]
  %s6 = sld [smem:[#allocation0]]
  $region30: #{net_forward.13} parent=0
    _
  %s8 = ssub.s32 1, %s6
  %s9 = scalar_select 0, %s8, %s6
  // Predicated region
  $region2: #{net_forward.13} parent=0 // pred_check
    _
  $region3: #{net_forward.13} parent=0 // pred_check_branch
    %11 = sbr.rel (0) target = $region5
  $region4: #{net_forward.13} parent=0 // pred_region
    _
  $region5: #{net_forward.13} parent=0 // pred_fallthru
    _
  // Predicated region
  $region6: #{net_forward.13} parent=0 // pred_check
    _
  $region7: #{net_forward.13} parent=0 // pred_check_branch
    %13 = sbr.rel (0) target = $region9
  $region8: #{net_forward.13} parent=0 // pred_region
    _
  $region9: #{net_forward.13} parent=0 // pred_fallthru
    _
  // Predicated region
  $region10: #{net_forward.13} parent=0 // pred_check
    _
  $region11: #{net_forward.13} parent=0 // pred_check_branch
    %15 = sbr.rel (0) target = $region13
  $region12: #{net_forward.13} parent=0 // pred_region
    _
  $region13: #{net_forward.13} parent=0 // pred_fallthru
    _
  // Predicated region
  $region14: #{net_forward.13} parent=0 // pred_check
    _
  $region15: #{net_forward.13} parent=0 // pred_check_branch
    %17 = sbr.rel (0) target = $region17
  $region16: #{net_forward.13} parent=0 // pred_region
    _
  $region17: #{net_forward.13} parent=0 // pred_fallthru
    _
  // Predicated region
  $region18: #{net_forward.13} parent=0 // pred_check
    _
  $region19: #{net_forward.13} parent=0 // pred_check_branch
    %19 = sbr.rel (0) target = $region21
  $region20: #{net_forward.13} parent=0 // pred_region
    _
  $region21: #{net_forward.13} parent=0 // pred_fallthru
    _
  %v21 = vld [vmem:[%s0] sm:$0xff]
  %v22 = vld [vmem:[%s0 + $0x8] sm:$0xf]
  %v23 = vld [vmem:[%s0 + $0xc] sm:$0xff]
  %v24 = vld [vmem:[%s0 + $0x14] sm:$0xf]
  %v25 = vld [vmem:[%s0 + $0x18] sm:$0xff]
  %v26 = vld [vmem:[%s0 + $0x20] sm:$0xf]
  %v27 = vld [vmem:[%s0 + $0x24] sm:$0xff]
  %v28 = vld [vmem:[%s0 + $0x2c] sm:$0xf]
  %v29 = vld [vmem:[%s1] sm:$0xf]
  %v30 = vld [vmem:[%s1 + $0x4] sm:$0xf]
  %v31 = vld [vmem:[%s1 + $0x8] sm:$0xf]
  %v32 = vld [vmem:[%s1 + $0xc] sm:$0xf]
  %v33 = vld [vmem:[%s1 + $0x10] sm:$0xf]
  %v34 = vld [vmem:[%s1 + $0x14] sm:$0xf]
  %v35 = vld [vmem:[%s1 + $0x18] sm:$0xf]
  %v36 = vld [vmem:[%s1 + $0x1c] sm:$0xf]
  %v37 = vld [vmem:[%s1 + $0x20] sm:$0xf]
  %v38 = vld [vmem:[%s1 + $0x24] sm:$0xf]
  %v39 = vld [vmem:[%s1 + $0x28] sm:$0xf]
  %v40 = vld [vmem:[%s1 + $0x2c] sm:$0xf]
  %v41 = vld [vmem:[%s1 + $0x30] sm:$0xf]
  %v42 = vld [vmem:[%s1 + $0x34] sm:$0xf]
  %v43 = vld [vmem:[%s1 + $0x38] sm:$0xf]
  %v44 = vld [vmem:[%s1 + $0x3c] sm:$0xf]
  %v45 = vld [vmem:[%s1 + $0x40] sm:$0xf]
  %v46 = vld [vmem:[%s1 + $0x44] sm:$0xf]
  %v47 = vld [vmem:[%s1 + $0x48] sm:$0xf]
  %v48 = vld [vmem:[%s1 + $0x4c] sm:$0xf]
  %v49 = vld [vmem:[%s1 + $0x50] sm:$0xf]
  %v50 = vld [vmem:[%s1 + $0x54] sm:$0xf]
  %v51 = vld [vmem:[%s1 + $0x58] sm:$0xf]
  %v52 = vld [vmem:[%s1 + $0x5c] sm:$0xf]
  %v53 = vld [vmem:[%s1 + $0x60] sm:$0xf]
  %v54 = vld [vmem:[%s1 + $0x64] sm:$0xf]
  %v55 = vld [vmem:[%s1 + $0x68] sm:$0xf]
  %v56 = vld [vmem:[%s1 + $0x6c] sm:$0xf]
  %v57 = vld [vmem:[%s1 + $0x70] sm:$0xf]
  %v58 = vld [vmem:[%s1 + $0x74] sm:$0xf]
  %v59 = vld [vmem:[%s1 + $0x78] sm:$0xf]
  %v60 = vld [vmem:[%s1 + $0x7c] sm:$0xf]
  %v61 = vld [vmem:[%s1 + $0x80] sm:$0xf]
  %v62 = vld [vmem:[%s1 + $0x84] sm:$0xf]
  %v63 = vld [vmem:[%s1 + $0x88] sm:$0xf]
  %v64 = vld [vmem:[%s1 + $0x8c] sm:$0xf]
  %v73 = vunpack.c.l.b16 %v21
  %v74 = vunpack.c.h.b16 %v21
  %v75 = vunpack.c.l.b16 %v22
  %v76 = vunpack.c.l.b16 %v23
  %v77 = vunpack.c.h.b16 %v23
  %v78 = vunpack.c.l.b16 %v24
  %v79 = vunpack.c.l.b16 %v25
  %v80 = vunpack.c.h.b16 %v25
  %v81 = vunpack.c.l.b16 %v26
  %v82 = vunpack.c.l.b16 %v27
  %v83 = vunpack.c.h.b16 %v27
  %v84 = vunpack.c.l.b16 %v28
  %v85 = vpack.c.b16 %v76, %v73
  %v86 = vpack.c.b16 %v77, %v74
  %v87 = vpack.c.b16 %v78, %v75
  %v88 = vpack.c.b16 %v82, %v79
  %v89 = vpack.c.b16 %v83, %v80
  %v90 = vpack.c.b16 %v84, %v81
  %v131 = vunpack.c.l.b16 %v29
  %v132 = vunpack.c.l.b16 %v30
  %v133 = vunpack.c.l.b16 %v31
  %v134 = vunpack.c.l.b16 %v32
  %v135 = vunpack.c.l.b16 %v33
  %v136 = vunpack.c.l.b16 %v34
  %v137 = vunpack.c.l.b16 %v35
  %v138 = vunpack.c.l.b16 %v36
  %v139 = vunpack.c.l.b16 %v37
  %v140 = vunpack.c.l.b16 %v38
  %v141 = vunpack.c.l.b16 %v39
  %v142 = vunpack.c.l.b16 %v40
  %v143 = vunpack.c.l.b16 %v41
  %v144 = vunpack.c.l.b16 %v42
  %v145 = vunpack.c.l.b16 %v43
  %v146 = vunpack.c.l.b16 %v44
  %v147 = vunpack.c.l.b16 %v45
  %v148 = vunpack.c.l.b16 %v46
  %v149 = vunpack.c.l.b16 %v47
  %v150 = vunpack.c.l.b16 %v48
  %v151 = vunpack.c.l.b16 %v49
  %v152 = vunpack.c.l.b16 %v50
  %v153 = vunpack.c.l.b16 %v51
  %v154 = vunpack.c.l.b16 %v52
  %v155 = vunpack.c.l.b16 %v53
  %v156 = vunpack.c.l.b16 %v54
  %v157 = vunpack.c.l.b16 %v55
  %v158 = vunpack.c.l.b16 %v56
  %v159 = vunpack.c.l.b16 %v57
  %v160 = vunpack.c.l.b16 %v58
  %v161 = vunpack.c.l.b16 %v59
  %v162 = vunpack.c.l.b16 %v60
  %v163 = vunpack.c.l.b16 %v61
  %v164 = vunpack.c.l.b16 %v62
  %v165 = vunpack.c.l.b16 %v63
  %v166 = vunpack.c.l.b16 %v64
  %v167 = vpack.c.b16 %v132, %v131
  %v168 = vpack.c.b16 %v134, %v133
  %v169 = vpack.c.b16 %v136, %v135
  %v170 = vpack.c.b16 %v138, %v137
  %v171 = vpack.c.b16 %v140, %v139
  %v172 = vpack.c.b16 %v142, %v141
  %v173 = vpack.c.b16 %v144, %v143
  %v174 = vpack.c.b16 %v146, %v145
  %v175 = vpack.c.b16 %v148, %v147
  %v176 = vpack.c.b16 %v150, %v149
  %v177 = vpack.c.b16 %v152, %v151
  %v178 = vpack.c.b16 %v154, %v153
  %v179 = vpack.c.b16 %v156, %v155
  %v180 = vpack.c.b16 %v158, %v157
  %v181 = vpack.c.b16 %v160, %v159
  %v182 = vpack.c.b16 %v162, %v161
  %v183 = vpack.c.b16 %v164, %v163
  %v184 = vpack.c.b16 %v166, %v165
  %vm203 = vcmask 261120
  %v205 = vsel %vm203, %v87, 0
  %v208 = vsel %vm203, %v90, 0
  %210 = vmatprep.subr.bf16.mxu0 0
  %211 = vmatpush1.bf16.msra.mxu0 %v167
  %212 = vmatprep.subr.bf16.mxu0 0
  %213 = vmatpush1.bf16.msra.mxu0 %v168
  %214 = vmatprep.subr.bf16.mxu0 0
  %215 = vmatpush1.bf16.msra.mxu0 %v169
  %216 = vmatprep.subr.bf16.mxu0 0
  %217 = vmatpush1.bf16.msra.mxu0 %v170
  %218 = vmatprep.subr.bf16.mxu0 0
  %219 = vmatpush1.bf16.msra.mxu0 %v171
  %220 = vmatprep.subr.bf16.mxu0 0
  %221 = vmatpush1.bf16.msra.mxu0 %v172
  %222 = vmatprep.subr.bf16.mxu0 0
  %223 = vmatpush1.bf16.msra.mxu0 %v173
  %224 = vmatprep.subr.bf16.mxu0 0
  %225 = vmatpush1.bf16.msra.mxu0 %v174
  %226 = vmatprep.subr.bf16.mxu0 0
  %227 = vmatpush1.bf16.msra.mxu0 %v175
  %228 = vmatprep.subr.bf16.mxu0 0
  %229 = vmatpush1.bf16.msra.mxu0 %v176
  %230 = vmatprep.subr.bf16.mxu0 0
  %231 = vmatpush1.bf16.msra.mxu0 %v177
  %232 = vmatprep.subr.bf16.mxu0 0
  %233 = vmatpush1.bf16.msra.mxu0 %v178
  %234 = vmatprep.subr.bf16.mxu0 0
  %235 = vmatpush1.bf16.msra.mxu0 %v179
  %236 = vmatprep.subr.bf16.mxu0 0
  %237 = vmatpush1.bf16.msra.mxu0 %v180
  %238 = vmatprep.subr.bf16.mxu0 0
  %239 = vmatpush1.bf16.msra.mxu0 %v181
  %240 = vmatprep.subr.bf16.mxu0 0
  %241 = vmatpush1.bf16.msra.mxu0 %v182
  %242 = vmatprep.mubr.bf16.mxu0 %v86
  %243 = vmatmul.mubr.bf16.gmra.mrb[0].mxu0 %v85
  %v244 = vpop.f32.mrb[0].mxu0
  %v245 = vadd.f32 0.0, %v244
  %v246 = vpop.f32.mrb[0].mxu0
  %v247 = vpop.f32.mrb[0].mxu0
  %v248 = vadd.f32 0.0, %v247
  %v249 = vpop.f32.mrb[0].mxu0
  %250 = vmatprep.mubr.bf16.mxu0 %v89
  %251 = vmatmul.mubr.bf16.gmra.mrb[0].mxu0 %v88
  %v252 = vpop.f32.mrb[0].mxu0
  %v253 = vadd.f32 0.0, %v252
  %v254 = vpop.f32.mrb[0].mxu0
  %v255 = vpop.f32.mrb[0].mxu0
  %v256 = vadd.f32 0.0, %v255
  %v257 = vpop.f32.mrb[0].mxu0
  %258 = vdwg.mxu0
  %259 = vmatprep.subr.bf16.mxu0 0
  %260 = vmatpush1.bf16.msra.mxu0 %v183
  %261 = vmatprep.subr.bf16.mxu0 0
  %262 = vmatpush1.bf16.msra.mxu0 %v184
  %263 = vmatprep.subr.bf16.mxu0 0
  %264 = vmatpush1.bf16.msra.mxu0 0
  %265 = vmatprep.subr.bf16.mxu0 0
  %266 = vmatpush1.bf16.msra.mxu0 0
  %267 = vmatprep.subr.bf16.mxu0 0
  %268 = vmatpush1.bf16.msra.mxu0 0
  %269 = vmatprep.subr.bf16.mxu0 0
  %270 = vmatpush1.bf16.msra.mxu0 0
  %271 = vmatprep.subr.bf16.mxu0 0
  %272 = vmatpush1.bf16.msra.mxu0 0
  %273 = vmatprep.subr.bf16.mxu0 0
  %274 = vmatpush1.bf16.msra.mxu0 0
  %275 = vmatprep.subr.bf16.mxu0 0
  %276 = vmatpush1.bf16.msra.mxu0 0
  %277 = vmatprep.subr.bf16.mxu0 0
  %278 = vmatpush1.bf16.msra.mxu0 0
  %279 = vmatprep.subr.bf16.mxu0 0
  %280 = vmatpush1.bf16.msra.mxu0 0
  %281 = vmatprep.subr.bf16.mxu0 0
  %282 = vmatpush1.bf16.msra.mxu0 0
  %283 = vmatprep.subr.bf16.mxu0 0
  %284 = vmatpush1.bf16.msra.mxu0 0
  %285 = vmatprep.subr.bf16.mxu0 0
  %286 = vmatpush1.bf16.msra.mxu0 0
  %287 = vmatprep.subr.bf16.mxu0 0
  %288 = vmatpush1.bf16.msra.mxu0 0
  %289 = vmatprep.subr.bf16.mxu0 0
  %290 = vmatpush1.bf16.msra.mxu0 0
  %291 = vmatprep.mubr.bf16.mxu0 0
  %292 = vmatmul.mubr.bf16.gmra.mrb[0].mxu0 %v205
  %v293 = vpop.f32.mrb[0].mxu0
  %v294 = vadd.f32 %v245, %v293
  %v295 = vpop.f32.mrb[0].mxu0
  %v296 = vpop.f32.mrb[0].mxu0
  %v297 = vadd.f32 %v248, %v296
  %v298 = vpop.f32.mrb[0].mxu0
  %299 = vmatprep.mubr.bf16.mxu0 0
  %300 = vmatmul.mubr.bf16.gmra.mrb[0].mxu0 %v208
  %v301 = vpop.f32.mrb[0].mxu0
  %v302 = vadd.f32 %v253, %v301
  %v303 = vpop.f32.mrb[0].mxu0
  %v304 = vpop.f32.mrb[0].mxu0
  %v305 = vadd.f32 %v256, %v304
  %v306 = vpop.f32.mrb[0].mxu0
  %307 = vdwg.mxu0
  %v308 = vadd.f32 %v294, %v297
  %v309 = vadd.f32 %v308, %v302
  %v310 = vadd.f32 %v309, %v305
  %v311 = vrot.slane %v310, 4
  %v312 = vadd.f32 %v310, %v311
  %v313 = vrot.slane %v312, 2
  %v314 = vadd.f32 %v312, %v313
  %v315 = vrot.slane %v314, 1
  %v316 = vadd.f32 %v314, %v315
  %v317 = vmul.f32 %v294, %v294
  %v318 = vmul.f32 %v297, %v297
  %v319 = vmul.f32 %v302, %v302
  %v320 = vmul.f32 %v305, %v305
  %v321 = vadd.f32 %v317, %v318
  %v322 = vadd.f32 %v321, %v319
  %v323 = vadd.f32 %v322, %v320
  %v324 = vrot.slane %v323, 4
  %v325 = vadd.f32 %v323, %v324
  %v326 = vrot.slane %v325, 2
  %v327 = vadd.f32 %v325, %v326
  %v328 = vrot.slane %v327, 1
  %v329 = vadd.f32 %v327, %v328
  %v330 = vld [vmem:[%s4] sm:$0xff]
  %v331 = vld [vmem:[%s4 + $0x8] sm:$0xff]
  %v332 = vld [vmem:[%s4 + $0x10] sm:$0xff]
  %v333 = vld [vmem:[%s4 + $0x18] sm:$0xff]
  %v334 = vld [vmem:[%s4 + $0x20] sm:$0xff]
  %v335 = vld [vmem:[%s4 + $0x28] sm:$0xff]
  %v336 = vld [vmem:[%s4 + $0x30] sm:$0xff]
  %v337 = vld [vmem:[%s4 + $0x38] sm:$0xff]
  %v338 = vld [vmem:[%s4 + $0x40] sm:$0xff]
  %v339 = vld [vmem:[%s4 + $0x48] sm:$0xff]
  %v340 = vld [vmem:[%s4 + $0x50] sm:$0xff]
  %v341 = vld [vmem:[%s4 + $0x58] sm:$0xff]
  %v342 = vld [vmem:[%s4 + $0x60] sm:$0xff]
  %v343 = vld [vmem:[%s4 + $0x68] sm:$0xff]
  %v344 = vld [vmem:[%s4 + $0x70] sm:$0xff]
  %v345 = vld [vmem:[%s4 + $0x78] sm:$0xff]
  %346 = vmatprep.subr.mxu0 0.0
  %347 = vmatpush1.msra.mxu0 %v330
  %348 = vmatprep.subr.mxu0 0.0
  %349 = vmatpush1.msra.mxu0 %v331
  %350 = vmatprep.subr.mxu0 0.0
  %351 = vmatpush1.msra.mxu0 %v332
  %352 = vmatprep.subr.mxu0 0.0
  %353 = vmatpush1.msra.mxu0 %v333
  %354 = vmatprep.subr.mxu0 0.0
  %355 = vmatpush1.msra.mxu0 %v334
  %356 = vmatprep.subr.mxu0 0.0
  %357 = vmatpush1.msra.mxu0 %v335
  %358 = vmatprep.subr.mxu0 0.0
  %359 = vmatpush1.msra.mxu0 %v336
  %360 = vmatprep.subr.mxu0 0.0
  %361 = vmatpush1.msra.mxu0 %v337
  %362 = vmatprep.subr.mxu0 0.0
  %363 = vmatpush1.msra.mxu0 %v338
  %364 = vmatprep.subr.mxu0 0.0
  %365 = vmatpush1.msra.mxu0 %v339
  %366 = vmatprep.subr.mxu0 0.0
  %367 = vmatpush1.msra.mxu0 %v340
  %368 = vmatprep.subr.mxu0 0.0
  %369 = vmatpush1.msra.mxu0 %v341
  %370 = vmatprep.subr.mxu0 0.0
  %371 = vmatpush1.msra.mxu0 %v342
  %372 = vmatprep.subr.mxu0 0.0
  %373 = vmatpush1.msra.mxu0 %v343
  %374 = vmatprep.subr.mxu0 0.0
  %375 = vmatpush1.msra.mxu0 %v344
  %376 = vmatprep.subr.mxu0 0.0
  %377 = vmatpush1.msra.mxu0 %v345
  %378 = vmatprep.subr.mxu0 0.0
  %379 = vmatpush1.msra.mxu0 0.0
  %380 = vmatprep.subr.mxu0 0.0
  %381 = vmatpush1.msra.mxu0 0.0
  %382 = vmatprep.subr.mxu0 0.0
  %383 = vmatpush1.msra.mxu0 0.0
  %384 = vmatprep.subr.mxu0 0.0
  %385 = vmatpush1.msra.mxu0 0.0
  %386 = vmatprep.subr.mxu0 0.0
  %387 = vmatpush1.msra.mxu0 0.0
  %388 = vmatprep.subr.mxu0 0.0
  %389 = vmatpush1.msra.mxu0 0.0
  %390 = vmatprep.subr.mxu0 0.0
  %391 = vmatpush1.msra.mxu0 0.0
  %392 = vmatprep.subr.mxu0 0.0
  %393 = vmatpush1.msra.mxu0 0.0
  %394 = vmatprep.subr.mxu0 0.0
  %395 = vmatpush1.msra.mxu0 0.0
  %396 = vmatprep.subr.mxu0 0.0
  %397 = vmatpush1.msra.mxu0 0.0
  %398 = vmatprep.subr.mxu0 0.0
  %399 = vmatpush1.msra.mxu0 0.0
  %400 = vmatprep.subr.mxu0 0.0
  %401 = vmatpush1.msra.mxu0 0.0
  %402 = vmatprep.subr.mxu0 0.0
  %403 = vmatpush1.msra.mxu0 0.0
  %404 = vmatprep.subr.mxu0 0.0
  %405 = vmatpush1.msra.mxu0 0.0
  %406 = vmatprep.subr.mxu0 0.0
  %407 = vmatpush1.msra.mxu0 0.0
  %408 = vmatprep.subr.mxu0 0.0
  %409 = vmatpush1.msra.mxu0 0.0
  %410 = vmatprep.mubr.f32.mxu0 0.0
  %411 = vmatmul.mubr.f32.gmra.mrb[0].mxu0 %v316
  %v412 = vpop.f32.mrb[0].mxu0
  %v413 = vadd.f32 0.0, %v412
  %v414 = vpop.f32.mrb[0].mxu0
  %415 = vdwg.mxu0
  %416 = vmatprep.subr.mxu0 0.0
  %417 = vmatpush1.msra.mxu0 %v330
  %418 = vmatprep.subr.mxu0 0.0
  %419 = vmatpush1.msra.mxu0 %v331
  %420 = vmatprep.subr.mxu0 0.0
  %421 = vmatpush1.msra.mxu0 %v332
  %422 = vmatprep.subr.mxu0 0.0
  %423 = vmatpush1.msra.mxu0 %v333
  %424 = vmatprep.subr.mxu0 0.0
  %425 = vmatpush1.msra.mxu0 %v334
  %426 = vmatprep.subr.mxu0 0.0
  %427 = vmatpush1.msra.mxu0 %v335
  %428 = vmatprep.subr.mxu0 0.0
  %429 = vmatpush1.msra.mxu0 %v336
  %430 = vmatprep.subr.mxu0 0.0
  %431 = vmatpush1.msra.mxu0 %v337
  %432 = vmatprep.subr.mxu0 0.0
  %433 = vmatpush1.msra.mxu0 %v338
  %434 = vmatprep.subr.mxu0 0.0
  %435 = vmatpush1.msra.mxu0 %v339
  %436 = vmatprep.subr.mxu0 0.0
  %437 = vmatpush1.msra.mxu0 %v340
  %438 = vmatprep.subr.mxu0 0.0
  %439 = vmatpush1.msra.mxu0 %v341
  %440 = vmatprep.subr.mxu0 0.0
  %441 = vmatpush1.msra.mxu0 %v342
  %442 = vmatprep.subr.mxu0 0.0
  %443 = vmatpush1.msra.mxu0 %v343
  %444 = vmatprep.subr.mxu0 0.0
  %445 = vmatpush1.msra.mxu0 %v344
  %446 = vmatprep.subr.mxu0 0.0
  %447 = vmatpush1.msra.mxu0 %v345
  %448 = vmatprep.subr.mxu0 0.0
  %449 = vmatpush1.msra.mxu0 0.0
  %450 = vmatprep.subr.mxu0 0.0
  %451 = vmatpush1.msra.mxu0 0.0
  %452 = vmatprep.subr.mxu0 0.0
  %453 = vmatpush1.msra.mxu0 0.0
  %454 = vmatprep.subr.mxu0 0.0
  %455 = vmatpush1.msra.mxu0 0.0
  %456 = vmatprep.subr.mxu0 0.0
  %457 = vmatpush1.msra.mxu0 0.0
  %458 = vmatprep.subr.mxu0 0.0
  %459 = vmatpush1.msra.mxu0 0.0
  %460 = vmatprep.subr.mxu0 0.0
  %461 = vmatpush1.msra.mxu0 0.0
  %462 = vmatprep.subr.mxu0 0.0
  %463 = vmatpush1.msra.mxu0 0.0
  %464 = vmatprep.subr.mxu0 0.0
  %465 = vmatpush1.msra.mxu0 0.0
  %466 = vmatprep.subr.mxu0 0.0
  %467 = vmatpush1.msra.mxu0 0.0
  %468 = vmatprep.subr.mxu0 0.0
  %469 = vmatpush1.msra.mxu0 0.0
  %470 = vmatprep.subr.mxu0 0.0
  %471 = vmatpush1.msra.mxu0 0.0
  %472 = vmatprep.subr.mxu0 0.0
  %473 = vmatpush1.msra.mxu0 0.0
  %474 = vmatprep.subr.mxu0 0.0
  %475 = vmatpush1.msra.mxu0 0.0
  %476 = vmatprep.subr.mxu0 0.0
  %477 = vmatpush1.msra.mxu0 0.0
  %478 = vmatprep.subr.mxu0 0.0
  %479 = vmatpush1.msra.mxu0 0.0
  %480 = vmatprep.mubr.f32.mxu0 0.0
  %481 = vmatmul.mubr.f32.gmra.mrb[0].mxu0 %v329
  %v482 = vpop.f32.mrb[0].mxu0
  %v483 = vadd.f32 0.0, %v482
  %v484 = vpop.f32.mrb[0].mxu0
  %485 = vdwg.mxu0
  %v486 = vmul.f32 %v413, 0.0078125
  %v487 = vmul.f32 %v483, 0.0078125
  %v488 = vmul.f32 %v486, %v486
  %v489 = vsub.f32 %v487, %v488
  %v490 = vld [vmem:[%s2] sm:$0x1]
  %v491 = vadd.f32 %v489, 1e-05
  %v492 = vrsqrt.pop %v491
  %v493 = vmul.f32 %v490, %v492
  %v494 = vld [vmem:[%s3] sm:$0x1]
  %v495 = vmul.f32 %v486, %v493
  %v496 = vsub.f32 %v494, %v495
  %v498 = vlaneseq
  %v499 = vshrl.u32 %v498, 7
  %v500 = vsub.s32 0, %v499
  %v501 = vrot.slane %v493, %v500
  %v503 = vmul.f32 %v294, %v501
  %v504 = vmul.f32 %v297, %v501
  %v505 = vmul.f32 %v302, %v501
  %v506 = vmul.f32 %v305, %v501
  %v508 = vlaneseq
  %v509 = vshrl.u32 %v508, 7
  %v510 = vsub.s32 0, %v509
  %v511 = vrot.slane %v496, %v510
  %v513 = vadd.f32 %v503, %v511
  %v514 = vadd.f32 %v504, %v511
  %v515 = vadd.f32 %v505, %v511
  %v516 = vadd.f32 %v506, %v511
  %vm517 = vcmp.ge.f32.partialorder %v513, 0.0
  %vm518 = vcmp.ge.f32.partialorder %v514, 0.0
  %vm519 = vcmp.ge.f32.partialorder %v515, 0.0
  %vm520 = vcmp.ge.f32.partialorder %v516, 0.0
  %v521 = vmul.f32 %v513, 0.2
  %v522 = vmul.f32 %v514, 0.2
  %v523 = vmul.f32 %v515, 0.2
  %v524 = vmul.f32 %v516, 0.2
  %v525 = vsel %vm517, %v513, %v521
  %v526 = vsel %vm518, %v514, %v522
  %v527 = vsel %vm519, %v515, %v523
  %v528 = vsel %vm520, %v516, %v524
  %v529 = vpack.c.bf16 %v526, %v525
  %v530 = vpack.c.bf16 %v528, %v527
  %v533 = vunpack.c.l.b16 %v529
  %v534 = vunpack.c.h.b16 %v529
  %v535 = vunpack.c.l.b16 %v530
  %v536 = vunpack.c.h.b16 %v530
  %v537 = vpack.c.b16 %v533, %v533
  %v538 = vpack.c.b16 %v534, %v534
  %v539 = vpack.c.b16 %v535, %v535
  %v540 = vpack.c.b16 %v536, %v536
  %545 = vst [vmem:[%s5] sm:$0xf] %v537
  %546 = vst [vmem:[%s5 + $0x4] sm:$0xf] %v538
  %547 = vst [vmem:[%s5 + $0x8] sm:$0xf] %v539
  %548 = vst [vmem:[%s5 + $0xc] sm:$0xf] %v540
  // Predicated region
  $region22: #{net_forward.13} parent=0 // pred_check
    _
  $region23: #{net_forward.13} parent=0 // pred_check_branch
    %550 = sbr.rel (0) target = $region25
  $region24: #{net_forward.13} parent=0 // pred_region
    _
  $region25: #{net_forward.13} parent=0 // pred_fallthru
    _
  // Predicated region
  $region26: #{net_forward.13} parent=0 // pred_check
    _
  $region27: #{net_forward.13} parent=0 // pred_check_branch
    %552 = sbr.rel (0) target = $region29
  $region28: #{net_forward.13} parent=0 // pred_region
    _
  $region29: #{net_forward.13} parent=0 // pred_fallthru
    _

// kernel: net_forward.14
$region0: #{net_forward.14}
  #allocation0 [shape = 'u32[]', space=smem, size = 0x4, offset = 0x4, fixed_abs, tag = 'smem constant byte address 0x4 - core index']
  #allocation1 [shape = 'u32[144,128]{1,0:T(1,128)}', space=vmem, size = 0x12000, scoped, tag = 'internal scratch']
  %s0 = inlined_call_operand.vmem [shape: bf16[128,144], index: 0, kind: input, shape index: {}]
  %s1 = inlined_call_operand.vmem [shape: bf16[144,128], index: 1, kind: input, shape index: {}]
  %s2 = inlined_call_operand.vmem [shape: f32[1,128], index: 2, kind: input, shape index: {}]
  %s3 = inlined_call_operand.vmem [shape: f32[1,128], index: 3, kind: input, shape index: {}]
  %s4 = inlined_call_operand.vmem [shape: f32[128,128], index: 4, kind: input, shape index: {}]
  %s5 = inlined_call_operand.vmem [shape: bf16[128,128], index: 5, kind: output, shape index: {}]
  %s6 = sld [smem:[#allocation0]]
  $region30: #{net_forward.14} parent=0
    _
  %s8 = ssub.s32 1, %s6
  %s9 = scalar_select 0, %s8, %s6
  // Predicated region
  $region2: #{net_forward.14} parent=0 // pred_check
    _
  $region3: #{net_forward.14} parent=0 // pred_check_branch
    %11 = sbr.rel (0) target = $region5
  $region4: #{net_forward.14} parent=0 // pred_region
    _
  $region5: #{net_forward.14} parent=0 // pred_fallthru
    _
  // Predicated region
  $region6: #{net_forward.14} parent=0 // pred_check
    _
  $region7: #{net_forward.14} parent=0 // pred_check_branch
    %13 = sbr.rel (0) target = $region9
  $region8: #{net_forward.14} parent=0 // pred_region
    _
  $region9: #{net_forward.14} parent=0 // pred_fallthru
    _
  // Predicated region
  $region10: #{net_forward.14} parent=0 // pred_check
    _
  $region11: #{net_forward.14} parent=0 // pred_check_branch
    %15 = sbr.rel (0) target = $region13
  $region12: #{net_forward.14} parent=0 // pred_region
    _
  $region13: #{net_forward.14} parent=0 // pred_fallthru
    _
  // Predicated region
  $region14: #{net_forward.14} parent=0 // pred_check
    _
  $region15: #{net_forward.14} parent=0 // pred_check_branch
    %17 = sbr.rel (0) target = $region17
  $region16: #{net_forward.14} parent=0 // pred_region
    _
  $region17: #{net_forward.14} parent=0 // pred_fallthru
    _
  // Predicated region
  $region18: #{net_forward.14} parent=0 // pred_check
    _
  $region19: #{net_forward.14} parent=0 // pred_check_branch
    %19 = sbr.rel (0) target = $region21
  $region20: #{net_forward.14} parent=0 // pred_region
    _
  $region21: #{net_forward.14} parent=0 // pred_fallthru
    _
  %v21 = vld [vmem:[%s0] sm:$0xff]
  %v22 = vld [vmem:[%s0 + $0x8] sm:$0xff]
  %v23 = vld [vmem:[%s0 + $0x10] sm:$0xff]
  %v24 = vld [vmem:[%s0 + $0x18] sm:$0xff]
  %v25 = vld [vmem:[%s0 + $0x20] sm:$0xff]
  %v26 = vld [vmem:[%s0 + $0x28] sm:$0xff]
  %v27 = vld [vmem:[%s0 + $0x30] sm:$0xff]
  %v28 = vld [vmem:[%s0 + $0x38] sm:$0xff]
  %v29 = vld [vmem:[%s0 + $0x40] sm:$0xff]
  %v30 = vld [vmem:[%s0 + $0x48] sm:$0xff]
  %v31 = vld [vmem:[%s0 + $0x50] sm:$0xff]
  %v32 = vld [vmem:[%s0 + $0x58] sm:$0xff]
  %v33 = vld [vmem:[%s0 + $0x60] sm:$0xff]
  %v34 = vld [vmem:[%s0 + $0x68] sm:$0xff]
  %v35 = vld [vmem:[%s0 + $0x70] sm:$0xff]
  %v36 = vld [vmem:[%s0 + $0x78] sm:$0xff]
  %v37 = vld [vmem:[%s1] sm:$0xf]
  %v38 = vld [vmem:[%s1 + $0x4] sm:$0xf]
  %v39 = vld [vmem:[%s1 + $0x8] sm:$0xf]
  %v40 = vld [vmem:[%s1 + $0xc] sm:$0xf]
  %v41 = vld [vmem:[%s1 + $0x10] sm:$0xf]
  %v42 = vld [vmem:[%s1 + $0x14] sm:$0xf]
  %v43 = vld [vmem:[%s1 + $0x18] sm:$0xf]
  %v44 = vld [vmem:[%s1 + $0x1c] sm:$0xf]
  %v45 = vld [vmem:[%s1 + $0x20] sm:$0xf]
  %v46 = vld [vmem:[%s1 + $0x24] sm:$0xf]
  %v47 = vld [vmem:[%s1 + $0x28] sm:$0xf]
  %v48 = vld [vmem:[%s1 + $0x2c] sm:$0xf]
  %v49 = vld [vmem:[%s1 + $0x30] sm:$0xf]
  %v50 = vld [vmem:[%s1 + $0x34] sm:$0xf]
  %v51 = vld [vmem:[%s1 + $0x38] sm:$0xf]
  %v52 = vld [vmem:[%s1 + $0x3c] sm:$0xf]
  %v53 = vld [vmem:[%s1 + $0x40] sm:$0xf]
  %v54 = vld [vmem:[%s1 + $0x44] sm:$0xf]
  %v71 = vunpack.c.l.b16 %v21
  %v72 = vunpack.c.h.b16 %v21
  %v73 = vunpack.c.l.b16 %v22
  %v74 = vunpack.c.h.b16 %v22
  %v75 = vunpack.c.l.b16 %v23
  %v76 = vunpack.c.h.b16 %v23
  %v77 = vunpack.c.l.b16 %v24
  %v78 = vunpack.c.h.b16 %v24
  %v79 = vunpack.c.l.b16 %v25
  %v80 = vunpack.c.h.b16 %v25
  %v81 = vunpack.c.l.b16 %v26
  %v82 = vunpack.c.h.b16 %v26
  %v83 = vunpack.c.l.b16 %v27
  %v84 = vunpack.c.h.b16 %v27
  %v85 = vunpack.c.l.b16 %v28
  %v86 = vunpack.c.h.b16 %v28
  %v87 = vunpack.c.l.b16 %v29
  %v88 = vunpack.c.h.b16 %v29
  %v89 = vunpack.c.l.b16 %v30
  %v90 = vunpack.c.h.b16 %v30
  %v91 = vunpack.c.l.b16 %v31
  %v92 = vunpack.c.h.b16 %v31
  %v93 = vunpack.c.l.b16 %v32
  %v94 = vunpack.c.h.b16 %v32
  %v95 = vunpack.c.l.b16 %v33
  %v96 = vunpack.c.h.b16 %v33
  %v97 = vunpack.c.l.b16 %v34
  %v98 = vunpack.c.h.b16 %v34
  %v99 = vunpack.c.l.b16 %v35
  %v100 = vunpack.c.h.b16 %v35
  %v101 = vunpack.c.l.b16 %v36
  %v102 = vunpack.c.h.b16 %v36
  %v103 = vpack.c.b16 %v73, %v71
  %v104 = vpack.c.b16 %v74, %v72
  %v105 = vpack.c.b16 %v77, %v75
  %v106 = vpack.c.b16 %v78, %v76
  %v107 = vpack.c.b16 %v81, %v79
  %v108 = vpack.c.b16 %v82, %v80
  %v109 = vpack.c.b16 %v85, %v83
  %v110 = vpack.c.b16 %v86, %v84
  %v111 = vpack.c.b16 %v89, %v87
  %v112 = vpack.c.b16 %v90, %v88
  %v113 = vpack.c.b16 %v93, %v91
  %v114 = vpack.c.b16 %v94, %v92
  %v115 = vpack.c.b16 %v97, %v95
  %v116 = vpack.c.b16 %v98, %v96
  %v117 = vpack.c.b16 %v101, %v99
  %v118 = vpack.c.b16 %v102, %v100
  %v145 = vunpack.c.l.b16 %v37
  %v146 = vunpack.c.l.b16 %v38
  %v147 = vunpack.c.l.b16 %v39
  %v148 = vunpack.c.l.b16 %v40
  %v149 = vunpack.c.l.b16 %v41
  %v150 = vunpack.c.l.b16 %v42
  %v151 = vunpack.c.l.b16 %v43
  %v152 = vunpack.c.l.b16 %v44
  %v153 = vunpack.c.l.b16 %v45
  %v154 = vunpack.c.l.b16 %v46
  %v155 = vunpack.c.l.b16 %v47
  %v156 = vunpack.c.l.b16 %v48
  %v157 = vunpack.c.l.b16 %v49
  %v158 = vunpack.c.l.b16 %v50
  %v159 = vunpack.c.l.b16 %v51
  %v160 = vunpack.c.l.b16 %v52
  %v161 = vunpack.c.l.b16 %v53
  %v162 = vunpack.c.l.b16 %v54
  %v163 = vpack.c.b16 %v146, %v145
  %v164 = vpack.c.b16 %v148, %v147
  %v165 = vpack.c.b16 %v150, %v149
  %v166 = vpack.c.b16 %v152, %v151
  %v167 = vpack.c.b16 %v154, %v153
  %v168 = vpack.c.b16 %v156, %v155
  %v169 = vpack.c.b16 %v158, %v157
  %v170 = vpack.c.b16 %v160, %v159
  %v171 = vpack.c.b16 %v162, %v161
  %vm181 = vcmask 130048
  %v183 = vsel %vm181, %v104, 0
  %v186 = vsel %vm181, %v106, 0
  %v189 = vsel %vm181, %v108, 0
  %v192 = vsel %vm181, %v110, 0
  %v195 = vsel %vm181, %v112, 0
  %v198 = vsel %vm181, %v114, 0
  %v201 = vsel %vm181, %v116, 0
  %v204 = vsel %vm181, %v118, 0
  %206 = vmatprep.subr.bf16.mxu0 0
  %207 = vmatpush1.bf16.msra.mxu0 %v163
  %208 = vmatprep.subr.bf16.mxu0 0
  %209 = vmatpush1.bf16.msra.mxu0 %v164
  %210 = vmatprep.subr.bf16.mxu0 0
  %211 = vmatpush1.bf16.msra.mxu0 %v165
  %212 = vmatprep.subr.bf16.mxu0 0
  %213 = vmatpush1.bf16.msra.mxu0 %v166
  %214 = vmatprep.subr.bf16.mxu0 0
  %215 = vmatpush1.bf16.msra.mxu0 %v167
  %216 = vmatprep.subr.bf16.mxu0 0
  %217 = vmatpush1.bf16.msra.mxu0 %v168
  %218 = vmatprep.subr.bf16.mxu0 0
  %219 = vmatpush1.bf16.msra.mxu0 %v169
  %220 = vmatprep.subr.bf16.mxu0 0
  %221 = vmatpush1.bf16.msra.mxu0 %v170
  %222 = vmatprep.subr.bf16.mxu0 0
  %223 = vmatpush1.bf16.msra.mxu0 %v171
  %224 = vmatprep.subr.bf16.mxu0 0
  %225 = vmatpush1.bf16.msra.mxu0 0
  %226 = vmatprep.subr.bf16.mxu0 0
  %227 = vmatpush1.bf16.msra.mxu0 0
  %228 = vmatprep.subr.bf16.mxu0 0
  %229 = vmatpush1.bf16.msra.mxu0 0
  %230 = vmatprep.subr.bf16.mxu0 0
  %231 = vmatpush1.bf16.msra.mxu0 0
  %232 = vmatprep.subr.bf16.mxu0 0
  %233 = vmatpush1.bf16.msra.mxu0 0
  %234 = vmatprep.subr.bf16.mxu0 0
  %235 = vmatpush1.bf16.msra.mxu0 0
  %236 = vmatprep.subr.bf16.mxu0 0
  %237 = vmatpush1.bf16.msra.mxu0 0
  %238 = vmatprep.mubr.bf16.mxu0 %v183
  %239 = vmatmul.mubr.bf16.gmra.mrb[0].mxu0 %v103
  %v240 = vpop.f32.mrb[0].mxu0
  %v241 = vadd.f32 0.0, %v240
  %v242 = vpop.f32.mrb[0].mxu0
  %v243 = vpop.f32.mrb[0].mxu0
  %v244 = vadd.f32 0.0, %v243
  %v245 = vpop.f32.mrb[0].mxu0
  %246 = vmatprep.mubr.bf16.mxu0 %v186
  %247 = vmatmul.mubr.bf16.gmra.mrb[0].mxu0 %v105
  %v248 = vpop.f32.mrb[0].mxu0
  %v249 = vadd.f32 0.0, %v248
  %v250 = vpop.f32.mrb[0].mxu0
  %v251 = vpop.f32.mrb[0].mxu0
  %v252 = vadd.f32 0.0, %v251
  %v253 = vpop.f32.mrb[0].mxu0
  %254 = vmatprep.mubr.bf16.mxu0 %v189
  %255 = vmatmul.mubr.bf16.gmra.mrb[0].mxu0 %v107
  %v256 = vpop.f32.mrb[0].mxu0
  %v257 = vadd.f32 0.0, %v256
  %v258 = vpop.f32.mrb[0].mxu0
  %v259 = vpop.f32.mrb[0].mxu0
  %v260 = vadd.f32 0.0, %v259
  %v261 = vpop.f32.mrb[0].mxu0
  %262 = vmatprep.mubr.bf16.mxu0 %v192
  %263 = vmatmul.mubr.bf16.gmra.mrb[0].mxu0 %v109
  %v264 = vpop.f32.mrb[0].mxu0
  %v265 = vadd.f32 0.0, %v264
  %v266 = vpop.f32.mrb[0].mxu0
  %v267 = vpop.f32.mrb[0].mxu0
  %v268 = vadd.f32 0.0, %v267
  %v269 = vpop.f32.mrb[0].mxu0
  %270 = vmatprep.mubr.bf16.mxu0 %v195
  %271 = vmatmul.mubr.bf16.gmra.mrb[0].mxu0 %v111
  %v272 = vpop.f32.mrb[0].mxu0
  %v273 = vadd.f32 0.0, %v272
  %v274 = vpop.f32.mrb[0].mxu0
  %v275 = vpop.f32.mrb[0].mxu0
  %v276 = vadd.f32 0.0, %v275
  %v277 = vpop.f32.mrb[0].mxu0
  %278 = vmatprep.mubr.bf16.mxu0 %v198
  %279 = vmatmul.mubr.bf16.gmra.mrb[0].mxu0 %v113
  %v280 = vpop.f32.mrb[0].mxu0
  %v281 = vadd.f32 0.0, %v280
  %v282 = vpop.f32.mrb[0].mxu0
  %v283 = vpop.f32.mrb[0].mxu0
  %v284 = vadd.f32 0.0, %v283
  %v285 = vpop.f32.mrb[0].mxu0
  %286 = vmatprep.mubr.bf16.mxu0 %v201
  %287 = vmatmul.mubr.bf16.gmra.mrb[0].mxu0 %v115
  %v288 = vpop.f32.mrb[0].mxu0
  %v289 = vadd.f32 0.0, %v288
  %v290 = vpop.f32.mrb[0].mxu0
  %v291 = vpop.f32.mrb[0].mxu0
  %v292 = vadd.f32 0.0, %v291
  %v293 = vpop.f32.mrb[0].mxu0
  %294 = vmatprep.mubr.bf16.mxu0 %v204
  %295 = vmatmul.mubr.bf16.gmra.mrb[0].mxu0 %v117
  %v296 = vpop.f32.mrb[0].mxu0
  %v297 = vadd.f32 0.0, %v296
  %v298 = vpop.f32.mrb[0].mxu0
  %v299 = vpop.f32.mrb[0].mxu0
  %v300 = vadd.f32 0.0, %v299
  %v301 = vpop.f32.mrb[0].mxu0
  %302 = vdwg.mxu0
  %v303 = vadd.f32 %v241, %v244
  %v304 = vadd.f32 %v303, %v249
  %v305 = vadd.f32 %v304, %v252
  %v306 = vadd.f32 %v305, %v257
  %v307 = vadd.f32 %v306, %v260
  %v308 = vadd.f32 %v307, %v265
  %v309 = vadd.f32 %v308, %v268
  %v310 = vadd.f32 %v309, %v273
  %v311 = vadd.f32 %v310, %v276
  %v312 = vadd.f32 %v311, %v281
  %v313 = vadd.f32 %v312, %v284
  %v314 = vadd.f32 %v313, %v289
  %v315 = vadd.f32 %v314, %v292
  %v316 = vadd.f32 %v315, %v297
  %v317 = vadd.f32 %v316, %v300
  %v318 = vrot.slane %v317, 4
  %v319 = vadd.f32 %v317, %v318
  %v320 = vrot.slane %v319, 2
  %v321 = vadd.f32 %v319, %v320
  %v322 = vrot.slane %v321, 1
  %v323 = vadd.f32 %v321, %v322
  %v324 = vmul.f32 %v241, %v241
  %v325 = vmul.f32 %v244, %v244
  %v326 = vmul.f32 %v249, %v249
  %v327 = vmul.f32 %v252, %v252
  %v328 = vmul.f32 %v257, %v257
  %v329 = vmul.f32 %v260, %v260
  %v330 = vmul.f32 %v265, %v265
  %v331 = vmul.f32 %v268, %v268
  %v332 = vmul.f32 %v273, %v273
  %v333 = vmul.f32 %v276, %v276
  %v334 = vmul.f32 %v281, %v281
  %v335 = vmul.f32 %v284, %v284
  %v336 = vmul.f32 %v289, %v289
  %v337 = vmul.f32 %v292, %v292
  %v338 = vmul.f32 %v297, %v297
  %v339 = vmul.f32 %v300, %v300
  %v340 = vadd.f32 %v324, %v325
  %v341 = vadd.f32 %v340, %v326
  %v342 = vadd.f32 %v341, %v327
  %v343 = vadd.f32 %v342, %v328
  %v344 = vadd.f32 %v343, %v329
  %v345 = vadd.f32 %v344, %v330
  %v346 = vadd.f32 %v345, %v331
  %v347 = vadd.f32 %v346, %v332
  %v348 = vadd.f32 %v347, %v333
  %v349 = vadd.f32 %v348, %v334
  %v350 = vadd.f32 %v349, %v335
  %v351 = vadd.f32 %v350, %v336
  %v352 = vadd.f32 %v351, %v337
  %v353 = vadd.f32 %v352, %v338
  %v354 = vadd.f32 %v353, %v339
  %v355 = vrot.slane %v354, 4
  %v356 = vadd.f32 %v354, %v355
  %v357 = vrot.slane %v356, 2
  %v358 = vadd.f32 %v356, %v357
  %v359 = vrot.slane %v358, 1
  %v360 = vadd.f32 %v358, %v359
  %v361 = vld [vmem:[%s4] sm:$0xff]
  %v362 = vld [vmem:[%s4 + $0x8] sm:$0xff]
  %v363 = vld [vmem:[%s4 + $0x10] sm:$0xff]
  %v364 = vld [vmem:[%s4 + $0x18] sm:$0xff]
  %v365 = vld [vmem:[%s4 + $0x20] sm:$0xff]
  %v366 = vld [vmem:[%s4 + $0x28] sm:$0xff]
  %v367 = vld [vmem:[%s4 + $0x30] sm:$0xff]
  %v368 = vld [vmem:[%s4 + $0x38] sm:$0xff]
  %v369 = vld [vmem:[%s4 + $0x40] sm:$0xff]
  %v370 = vld [vmem:[%s4 + $0x48] sm:$0xff]
  %v371 = vld [vmem:[%s4 + $0x50] sm:$0xff]
  %v372 = vld [vmem:[%s4 + $0x58] sm:$0xff]
  %v373 = vld [vmem:[%s4 + $0x60] sm:$0xff]
  %v374 = vld [vmem:[%s4 + $0x68] sm:$0xff]
  %v375 = vld [vmem:[%s4 + $0x70] sm:$0xff]
  %v376 = vld [vmem:[%s4 + $0x78] sm:$0xff]
  %377 = vmatprep.subr.mxu0 0.0
  %378 = vmatpush1.msra.mxu0 %v361
  %379 = vmatprep.subr.mxu0 0.0
  %380 = vmatpush1.msra.mxu0 %v362
  %381 = vmatprep.subr.mxu0 0.0
  %382 = vmatpush1.msra.mxu0 %v363
  %383 = vmatprep.subr.mxu0 0.0
  %384 = vmatpush1.msra.mxu0 %v364
  %385 = vmatprep.subr.mxu0 0.0
  %386 = vmatpush1.msra.mxu0 %v365
  %387 = vmatprep.subr.mxu0 0.0
  %388 = vmatpush1.msra.mxu0 %v366
  %389 = vmatprep.subr.mxu0 0.0
  %390 = vmatpush1.msra.mxu0 %v367
  %391 = vmatprep.subr.mxu0 0.0
  %392 = vmatpush1.msra.mxu0 %v368
  %393 = vmatprep.subr.mxu0 0.0
  %394 = vmatpush1.msra.mxu0 %v369
  %395 = vmatprep.subr.mxu0 0.0
  %396 = vmatpush1.msra.mxu0 %v370
  %397 = vmatprep.subr.mxu0 0.0
  %398 = vmatpush1.msra.mxu0 %v371
  %399 = vmatprep.subr.mxu0 0.0
  %400 = vmatpush1.msra.mxu0 %v372
  %401 = vmatprep.subr.mxu0 0.0
  %402 = vmatpush1.msra.mxu0 %v373
  %403 = vmatprep.subr.mxu0 0.0
  %404 = vmatpush1.msra.mxu0 %v374
  %405 = vmatprep.subr.mxu0 0.0
  %406 = vmatpush1.msra.mxu0 %v375
  %407 = vmatprep.subr.mxu0 0.0
  %408 = vmatpush1.msra.mxu0 %v376
  %409 = vmatprep.subr.mxu0 0.0
  %410 = vmatpush1.msra.mxu0 0.0
  %411 = vmatprep.subr.mxu0 0.0
  %412 = vmatpush1.msra.mxu0 0.0
  %413 = vmatprep.subr.mxu0 0.0
  %414 = vmatpush1.msra.mxu0 0.0
  %415 = vmatprep.subr.mxu0 0.0
  %416 = vmatpush1.msra.mxu0 0.0
  %417 = vmatprep.subr.mxu0 0.0
  %418 = vmatpush1.msra.mxu0 0.0
  %419 = vmatprep.subr.mxu0 0.0
  %420 = vmatpush1.msra.mxu0 0.0
  %421 = vmatprep.subr.mxu0 0.0
  %422 = vmatpush1.msra.mxu0 0.0
  %423 = vmatprep.subr.mxu0 0.0
  %424 = vmatpush1.msra.mxu0 0.0
  %425 = vmatprep.subr.mxu0 0.0
  %426 = vmatpush1.msra.mxu0 0.0
  %427 = vmatprep.subr.mxu0 0.0
  %428 = vmatpush1.msra.mxu0 0.0
  %429 = vmatprep.subr.mxu0 0.0
  %430 = vmatpush1.msra.mxu0 0.0
  %431 = vmatprep.subr.mxu0 0.0
  %432 = vmatpush1.msra.mxu0 0.0
  %433 = vmatprep.subr.mxu0 0.0
  %434 = vmatpush1.msra.mxu0 0.0
  %435 = vmatprep.subr.mxu0 0.0
  %436 = vmatpush1.msra.mxu0 0.0
  %437 = vmatprep.subr.mxu0 0.0
  %438 = vmatpush1.msra.mxu0 0.0
  %439 = vmatprep.subr.mxu0 0.0
  %440 = vmatpush1.msra.mxu0 0.0
  %441 = vmatprep.mubr.f32.mxu0 0.0
  %442 = vmatmul.mubr.f32.gmra.mrb[0].mxu0 %v323
  %v443 = vpop.f32.mrb[0].mxu0
  %v444 = vadd.f32 0.0, %v443
  %v445 = vpop.f32.mrb[0].mxu0
  %446 = vdwg.mxu0
  %447 = vmatprep.subr.mxu0 0.0
  %448 = vmatpush1.msra.mxu0 %v361
  %449 = vmatprep.subr.mxu0 0.0
  %450 = vmatpush1.msra.mxu0 %v362
  %451 = vmatprep.subr.mxu0 0.0
  %452 = vmatpush1.msra.mxu0 %v363
  %453 = vmatprep.subr.mxu0 0.0
  %454 = vmatpush1.msra.mxu0 %v364
  %455 = vmatprep.subr.mxu0 0.0
  %456 = vmatpush1.msra.mxu0 %v365
  %457 = vmatprep.subr.mxu0 0.0
  %458 = vmatpush1.msra.mxu0 %v366
  %459 = vmatprep.subr.mxu0 0.0
  %460 = vmatpush1.msra.mxu0 %v367
  %461 = vmatprep.subr.mxu0 0.0
  %462 = vmatpush1.msra.mxu0 %v368
  %463 = vmatprep.subr.mxu0 0.0
  %464 = vmatpush1.msra.mxu0 %v369
  %465 = vmatprep.subr.mxu0 0.0
  %466 = vmatpush1.msra.mxu0 %v370
  %467 = vmatprep.subr.mxu0 0.0
  %468 = vmatpush1.msra.mxu0 %v371
  %469 = vmatprep.subr.mxu0 0.0
  %470 = vmatpush1.msra.mxu0 %v372
  %471 = vmatprep.subr.mxu0 0.0
  %472 = vmatpush1.msra.mxu0 %v373
  %473 = vmatprep.subr.mxu0 0.0
  %474 = vmatpush1.msra.mxu0 %v374
  %475 = vmatprep.subr.mxu0 0.0
  %476 = vmatpush1.msra.mxu0 %v375
  %477 = vmatprep.subr.mxu0 0.0
  %478 = vmatpush1.msra.mxu0 %v376
  %479 = vmatprep.subr.mxu0 0.0
  %480 = vmatpush1.msra.mxu0 0.0
  %481 = vmatprep.subr.mxu0 0.0
  %482 = vmatpush1.msra.mxu0 0.0
  %483 = vmatprep.subr.mxu0 0.0
  %484 = vmatpush1.msra.mxu0 0.0
  %485 = vmatprep.subr.mxu0 0.0
  %486 = vmatpush1.msra.mxu0 0.0
  %487 = vmatprep.subr.mxu0 0.0
  %488 = vmatpush1.msra.mxu0 0.0
  %489 = vmatprep.subr.mxu0 0.0
  %490 = vmatpush1.msra.mxu0 0.0
  %491 = vmatprep.subr.mxu0 0.0
  %492 = vmatpush1.msra.mxu0 0.0
  %493 = vmatprep.subr.mxu0 0.0
  %494 = vmatpush1.msra.mxu0 0.0
  %495 = vmatprep.subr.mxu0 0.0
  %496 = vmatpush1.msra.mxu0 0.0
  %497 = vmatprep.subr.mxu0 0.0
  %498 = vmatpush1.msra.mxu0 0.0
  %499 = vmatprep.subr.mxu0 0.0
  %500 = vmatpush1.msra.mxu0 0.0
  %501 = vmatprep.subr.mxu0 0.0
  %502 = vmatpush1.msra.mxu0 0.0
  %503 = vmatprep.subr.mxu0 0.0
  %504 = vmatpush1.msra.mxu0 0.0
  %505 = vmatprep.subr.mxu0 0.0
  %506 = vmatpush1.msra.mxu0 0.0
  %507 = vmatprep.subr.mxu0 0.0
  %508 = vmatpush1.msra.mxu0 0.0
  %509 = vmatprep.subr.mxu0 0.0
  %510 = vmatpush1.msra.mxu0 0.0
  %511 = vmatprep.mubr.f32.mxu0 0.0
  %512 = vmatmul.mubr.f32.gmra.mrb[0].mxu0 %v360
  %v513 = vpop.f32.mrb[0].mxu0
  %v514 = vadd.f32 0.0, %v513
  %v515 = vpop.f32.mrb[0].mxu0
  %516 = vdwg.mxu0
  %v517 = vmul.f32 %v444, 0.001953125
  %v518 = vmul.f32 %v514, 0.001953125
  %v519 = vmul.f32 %v517, %v517
  %v520 = vsub.f32 %v518, %v519
  %v521 = vld [vmem:[%s2] sm:$0x1]
  %v522 = vadd.f32 %v520, 1e-05
  %v523 = vrsqrt.pop %v522
  %v524 = vmul.f32 %v521, %v523
  %v525 = vld [vmem:[%s3] sm:$0x1]
  %v526 = vmul.f32 %v517, %v524
  %v527 = vsub.f32 %v525, %v526
  %v529 = vlaneseq
  %v530 = vshrl.u32 %v529, 7
  %v531 = vsub.s32 0, %v530
  %v532 = vrot.slane %v524, %v531
  %v534 = vmul.f32 %v241, %v532
  %v535 = vmul.f32 %v244, %v532
  %v536 = vmul.f32 %v249, %v532
  %v537 = vmul.f32 %v252, %v532
  %v538 = vmul.f32 %v257, %v532
  %v539 = vmul.f32 %v260, %v532
  %v540 = vmul.f32 %v265, %v532
  %v541 = vmul.f32 %v268, %v532
  %v542 = vmul.f32 %v273, %v532
  %v543 = vmul.f32 %v276, %v532
  %v544 = vmul.f32 %v281, %v532
  %v545 = vmul.f32 %v284, %v532
  %v546 = vmul.f32 %v289, %v532
  %v547 = vmul.f32 %v292, %v532
  %v548 = vmul.f32 %v297, %v532
  %v549 = vmul.f32 %v300, %v532
  %v551 = vlaneseq
  %v552 = vshrl.u32 %v551, 7
  %v553 = vsub.s32 0, %v552
  %v554 = vrot.slane %v527, %v553
  %v556 = vadd.f32 %v534, %v554
  %v557 = vadd.f32 %v535, %v554
  %v558 = vadd.f32 %v536, %v554
  %v559 = vadd.f32 %v537, %v554
  %v560 = vadd.f32 %v538, %v554
  %v561 = vadd.f32 %v539, %v554
  %v562 = vadd.f32 %v540, %v554
  %v563 = vadd.f32 %v541, %v554
  %v564 = vadd.f32 %v542, %v554
  %v565 = vadd.f32 %v543, %v554
  %v566 = vadd.f32 %v544, %v554
  %v567 = vadd.f32 %v545, %v554
  %v568 = vadd.f32 %v546, %v554
  %v569 = vadd.f32 %v547, %v554
  %v570 = vadd.f32 %v548, %v554
  %v571 = vadd.f32 %v549, %v554
  %vm572 = vcmp.ge.f32.partialorder %v556, 0.0
  %vm573 = vcmp.ge.f32.partialorder %v557, 0.0
  %vm574 = vcmp.ge.f32.partialorder %v558, 0.0
  %vm575 = vcmp.ge.f32.partialorder %v559, 0.0
  %vm576 = vcmp.ge.f32.partialorder %v560, 0.0
  %vm577 = vcmp.ge.f32.partialorder %v561, 0.0
  %vm578 = vcmp.ge.f32.partialorder %v562, 0.0
  %vm579 = vcmp.ge.f32.partialorder %v563, 0.0
  %vm580 = vcmp.ge.f32.partialorder %v564, 0.0
  %vm581 = vcmp.ge.f32.partialorder %v565, 0.0
  %vm582 = vcmp.ge.f32.partialorder %v566, 0.0
  %vm583 = vcmp.ge.f32.partialorder %v567, 0.0
  %vm584 = vcmp.ge.f32.partialorder %v568, 0.0
  %vm585 = vcmp.ge.f32.partialorder %v569, 0.0
  %vm586 = vcmp.ge.f32.partialorder %v570, 0.0
  %vm587 = vcmp.ge.f32.partialorder %v571, 0.0
  %v588 = vmul.f32 %v556, 0.2
  %v589 = vmul.f32 %v557, 0.2
  %v590 = vmul.f32 %v558, 0.2
  %v591 = vmul.f32 %v559, 0.2
  %v592 = vmul.f32 %v560, 0.2
  %v593 = vmul.f32 %v561, 0.2
  %v594 = vmul.f32 %v562, 0.2
  %v595 = vmul.f32 %v563, 0.2
  %v596 = vmul.f32 %v564, 0.2
  %v597 = vmul.f32 %v565, 0.2
  %v598 = vmul.f32 %v566, 0.2
  %v599 = vmul.f32 %v567, 0.2
  %v600 = vmul.f32 %v568, 0.2
  %v601 = vmul.f32 %v569, 0.2
  %v602 = vmul.f32 %v570, 0.2
  %v603 = vmul.f32 %v571, 0.2
  %v604 = vsel %vm572, %v556, %v588
  %v605 = vsel %vm573, %v557, %v589
  %v606 = vsel %vm574, %v558, %v590
  %v607 = vsel %vm575, %v559, %v591
  %v608 = vsel %vm576, %v560, %v592
  %v609 = vsel %vm577, %v561, %v593
  %v610 = vsel %vm578, %v562, %v594
  %v611 = vsel %vm579, %v563, %v595
  %v612 = vsel %vm580, %v564, %v596
  %v613 = vsel %vm581, %v565, %v597
  %v614 = vsel %vm582, %v566, %v598
  %v615 = vsel %vm583, %v567, %v599
  %v616 = vsel %vm584, %v568, %v600
  %v617 = vsel %vm585, %v569, %v601
  %v618 = vsel %vm586, %v570, %v602
  %v619 = vsel %vm587, %v571, %v603
  %v620 = vpack.c.bf16 %v605, %v604
  %v621 = vpack.c.bf16 %v607, %v606
  %v622 = vpack.c.bf16 %v609, %v608
  %v623 = vpack.c.bf16 %v611, %v610
  %v624 = vpack.c.bf16 %v613, %v612
  %v625 = vpack.c.bf16 %v615, %v614
  %v626 = vpack.c.bf16 %v617, %v616
  %v627 = vpack.c.bf16 %v619, %v618
  %v636 = vunpack.c.l.b16 %v620
  %v637 = vunpack.c.h.b16 %v620
  %v638 = vunpack.c.l.b16 %v621
  %v639 = vunpack.c.h.b16 %v621
  %v640 = vunpack.c.l.b16 %v622
  %v641 = vunpack.c.h.b16 %v622
  %v642 = vunpack.c.l.b16 %v623
  %v643 = vunpack.c.h.b16 %v623
  %v644 = vunpack.c.l.b16 %v624
  %v645 = vunpack.c.h.b16 %v624
  %v646 = vunpack.c.l.b16 %v625
  %v647 = vunpack.c.h.b16 %v625
  %v648 = vunpack.c.l.b16 %v626
  %v649 = vunpack.c.h.b16 %v626
  %v650 = vunpack.c.l.b16 %v627
  %v651 = vunpack.c.h.b16 %v627
  %v652 = vpack.c.b16 %v636, %v636
  %v653 = vpack.c.b16 %v637, %v637
  %v654 = vpack.c.b16 %v638, %v638
  %v655 = vpack.c.b16 %v639, %v639
  %v656 = vpack.c.b16 %v640, %v640
  %v657 = vpack.c.b16 %v641, %v641
  %v658 = vpack.c.b16 %v642, %v642
  %v659 = vpack.c.b16 %v643, %v643
  %v660 = vpack.c.b16 %v644, %v644
  %v661 = vpack.c.b16 %v645, %v645
  %v662 = vpack.c.b16 %v646, %v646
  %v663 = vpack.c.b16 %v647, %v647
  %v664 = vpack.c.b16 %v648, %v648
  %v665 = vpack.c.b16 %v649, %v649
  %v666 = vpack.c.b16 %v650, %v650
  %v667 = vpack.c.b16 %v651, %v651
  %684 = vst [vmem:[%s5] sm:$0xf] %v652
  %685 = vst [vmem:[%s5 + $0x4] sm:$0xf] %v653
  %686 = vst [vmem:[%s5 + $0x8] sm:$0xf] %v654
  %687 = vst [vmem:[%s5 + $0xc] sm:$0xf] %v655
  %688 = vst [vmem:[%s5 + $0x10] sm:$0xf] %v656
  %689 = vst [vmem:[%s5 + $0x14] sm:$0xf] %v657
  %690 = vst [vmem:[%s5 + $0x18] sm:$0xf] %v658
  %691 = vst [vmem:[%s5 + $0x1c] sm:$0xf] %v659
  %692 = vst [vmem:[%s5 + $0x20] sm:$0xf] %v660
  %693 = vst [vmem:[%s5 + $0x24] sm:$0xf] %v661
  %694 = vst [vmem:[%s5 + $0x28] sm:$0xf] %v662
  %695 = vst [vmem:[%s5 + $0x2c] sm:$0xf] %v663
  %696 = vst [vmem:[%s5 + $0x30] sm:$0xf] %v664
  %697 = vst [vmem:[%s5 + $0x34] sm:$0xf] %v665
  %698 = vst [vmem:[%s5 + $0x38] sm:$0xf] %v666
  %699 = vst [vmem:[%s5 + $0x3c] sm:$0xf] %v667
  // Predicated region
  $region22: #{net_forward.14} parent=0 // pred_check
    _
  $region23: #{net_forward.14} parent=0 // pred_check_branch
    %701 = sbr.rel (0) target = $region25
  $region24: #{net_forward.14} parent=0 // pred_region
    _
  $region25: #{net_forward.14} parent=0 // pred_fallthru
    _
  // Predicated region
  $region26: #{net_forward.14} parent=0 // pred_check
    _
  $region27: #{net_forward.14} parent=0 // pred_check_branch
    %703 = sbr.rel (0) target = $region29
  $region28: #{net_forward.14} parent=0 // pred_region
    _
  $region29: #{net_forward.14} parent=0 // pred_fallthru
    _

// kernel: net_forward.15
$region0: #{net_forward.15}
  #allocation0 [shape = 'u32[]', space=smem, size = 0x4, offset = 0x4, fixed_abs, tag = 'smem constant byte address 0x4 - core index']
  #allocation1 [shape = 'u32[144,128]{1,0:T(1,128)}', space=vmem, size = 0x12000, scoped, tag = 'internal scratch']
  %s0 = inlined_call_operand.vmem [shape: bf16[512,80], index: 0, kind: input, shape index: {}]
  %s1 = inlined_call_operand.vmem [shape: bf16[80,128], index: 1, kind: input, shape index: {}]
  %s2 = inlined_call_operand.vmem [shape: f32[1,128], index: 2, kind: input, shape index: {}]
  %s3 = inlined_call_operand.vmem [shape: f32[1,128], index: 3, kind: input, shape index: {}]
  %s4 = inlined_call_operand.vmem [shape: f32[128,128], index: 4, kind: input, shape index: {}]
  %s5 = inlined_call_operand.vmem [shape: f32[512,128], index: 5, kind: output, shape index: {}]
  %s6 = sld [smem:[#allocation0]]
  $region30: #{net_forward.15} parent=0
    _
  %s8 = ssub.s32 1, %s6
  %s9 = scalar_select 0, %s8, %s6
  // Predicated region
  $region2: #{net_forward.15} parent=0 // pred_check
    _
  $region3: #{net_forward.15} parent=0 // pred_check_branch
    %11 = sbr.rel (0) target = $region5
  $region4: #{net_forward.15} parent=0 // pred_region
    _
  $region5: #{net_forward.15} parent=0 // pred_fallthru
    _
  // Predicated region
  $region6: #{net_forward.15} parent=0 // pred_check
    _
  $region7: #{net_forward.15} parent=0 // pred_check_branch
    %13 = sbr.rel (0) target = $region9
  $region8: #{net_forward.15} parent=0 // pred_region
    _
  $region9: #{net_forward.15} parent=0 // pred_fallthru
    _
  // Predicated region
  $region10: #{net_forward.15} parent=0 // pred_check
    _
  $region11: #{net_forward.15} parent=0 // pred_check_branch
    %15 = sbr.rel (0) target = $region13
  $region12: #{net_forward.15} parent=0 // pred_region
    _
  $region13: #{net_forward.15} parent=0 // pred_fallthru
    _
  // Predicated region
  $region14: #{net_forward.15} parent=0 // pred_check
    _
  $region15: #{net_forward.15} parent=0 // pred_check_branch
    %17 = sbr.rel (0) target = $region17
  $region16: #{net_forward.15} parent=0 // pred_region
    _
  $region17: #{net_forward.15} parent=0 // pred_fallthru
    _
  // Predicated region
  $region18: #{net_forward.15} parent=0 // pred_check
    _
  $region19: #{net_forward.15} parent=0 // pred_check_branch
    %19 = sbr.rel (0) target = $region21
  $region20: #{net_forward.15} parent=0 // pred_region
    _
  $region21: #{net_forward.15} parent=0 // pred_fallthru
    _
  %v21 = vld [vmem:[%s0] sm:$0xf]
  %v22 = vld [vmem:[%s0 + $0x4] sm:$0xf]
  %v23 = vld [vmem:[%s0 + $0x8] sm:$0xf]
  %v24 = vld [vmem:[%s0 + $0xc] sm:$0xf]
  %v25 = vld [vmem:[%s0 + $0x10] sm:$0xf]
  %v26 = vld [vmem:[%s0 + $0x14] sm:$0xf]
  %v27 = vld [vmem:[%s0 + $0x18] sm:$0xf]
  %v28 = vld [vmem:[%s0 + $0x1c] sm:$0xf]
  %v29 = vld [vmem:[%s0 + $0x20] sm:$0xf]
  %v30 = vld [vmem:[%s0 + $0x24] sm:$0xf]
  %v31 = vld [vmem:[%s0 + $0x28] sm:$0xf]
  %v32 = vld [vmem:[%s0 + $0x2c] sm:$0xf]
  %v33 = vld [vmem:[%s0 + $0x30] sm:$0xf]
  %v34 = vld [vmem:[%s0 + $0x34] sm:$0xf]
  %v35 = vld [vmem:[%s0 + $0x38] sm:$0xf]
  %v36 = vld [vmem:[%s0 + $0x3c] sm:$0xf]
  %v37 = vld [vmem:[%s0 + $0x40] sm:$0xf]
  %v38 = vld [vmem:[%s0 + $0x44] sm:$0xf]
  %v39 = vld [vmem:[%s0 + $0x48] sm:$0xf]
  %v40 = vld [vmem:[%s0 + $0x4c] sm:$0xf]
  %v41 = vld [vmem:[%s0 + $0x50] sm:$0xf]
  %v42 = vld [vmem:[%s0 + $0x54] sm:$0xf]
  %v43 = vld [vmem:[%s0 + $0x58] sm:$0xf]
  %v44 = vld [vmem:[%s0 + $0x5c] sm:$0xf]
  %v45 = vld [vmem:[%s0 + $0x60] sm:$0xf]
  %v46 = vld [vmem:[%s0 + $0x64] sm:$0xf]
  %v47 = vld [vmem:[%s0 + $0x68] sm:$0xf]
  %v48 = vld [vmem:[%s0 + $0x6c] sm:$0xf]
  %v49 = vld [vmem:[%s0 + $0x70] sm:$0xf]
  %v50 = vld [vmem:[%s0 + $0x74] sm:$0xf]
  %v51 = vld [vmem:[%s0 + $0x78] sm:$0xf]
  %v52 = vld [vmem:[%s0 + $0x7c] sm:$0xf]
  %v53 = vld [vmem:[%s0 + $0x80] sm:$0xf]
  %v54 = vld [vmem:[%s0 + $0x84] sm:$0xf]
  %v55 = vld [vmem:[%s0 + $0x88] sm:$0xf]
  %v56 = vld [vmem:[%s0 + $0x8c] sm:$0xf]
  %v57 = vld [vmem:[%s0 + $0x90] sm:$0xf]
  %v58 = vld [vmem:[%s0 + $0x94] sm:$0xf]
  %v59 = vld [vmem:[%s0 + $0x98] sm:$0xf]
  %v60 = vld [vmem:[%s0 + $0x9c] sm:$0xf]
  %v61 = vld [vmem:[%s0 + $0xa0] sm:$0xf]
  %v62 = vld [vmem:[%s0 + $0xa4] sm:$0xf]
  %v63 = vld [vmem:[%s0 + $0xa8] sm:$0xf]
  %v64 = vld [vmem:[%s0 + $0xac] sm:$0xf]
  %v65 = vld [vmem:[%s0 + $0xb0] sm:$0xf]
  %v66 = vld [vmem:[%s0 + $0xb4] sm:$0xf]
  %v67 = vld [vmem:[%s0 + $0xb8] sm:$0xf]
  %v68 = vld [vmem:[%s0 + $0xbc] sm:$0xf]
  %v69 = vld [vmem:[%s0 + $0xc0] sm:$0xf]
  %v70 = vld [vmem:[%s0 + $0xc4] sm:$0xf]
  %v71 = vld [vmem:[%s0 + $0xc8] sm:$0xf]
  %v72 = vld [vmem:[%s0 + $0xcc] sm:$0xf]
  %v73 = vld [vmem:[%s0 + $0xd0] sm:$0xf]
  %v74 = vld [vmem:[%s0 + $0xd4] sm:$0xf]
  %v75 = vld [vmem:[%s0 + $0xd8] sm:$0xf]
  %v76 = vld [vmem:[%s0 + $0xdc] sm:$0xf]
  %v77 = vld [vmem:[%s0 + $0xe0] sm:$0xf]
  %v78 = vld [vmem:[%s0 + $0xe4] sm:$0xf]
  %v79 = vld [vmem:[%s0 + $0xe8] sm:$0xf]
  %v80 = vld [vmem:[%s0 + $0xec] sm:$0xf]
  %v81 = vld [vmem:[%s0 + $0xf0] sm:$0xf]
  %v82 = vld [vmem:[%s0 + $0xf4] sm:$0xf]
  %v83 = vld [vmem:[%s0 + $0xf8] sm:$0xf]
  %v84 = vld [vmem:[%s0 + $0xfc] sm:$0xf]
  %v85 = vld [vmem:[%s1] sm:$0xf]
  %v86 = vld [vmem:[%s1 + $0x4] sm:$0xf]
  %v87 = vld [vmem:[%s1 + $0x8] sm:$0xf]
  %v88 = vld [vmem:[%s1 + $0xc] sm:$0xf]
  %v89 = vld [vmem:[%s1 + $0x10] sm:$0xf]
  %v90 = vld [vmem:[%s1 + $0x14] sm:$0xf]
  %v91 = vld [vmem:[%s1 + $0x18] sm:$0xf]
  %v92 = vld [vmem:[%s1 + $0x1c] sm:$0xf]
  %v93 = vld [vmem:[%s1 + $0x20] sm:$0xf]
  %v94 = vld [vmem:[%s1 + $0x24] sm:$0xf]
  %v159 = vunpack.c.l.b16 %v21
  %v160 = vunpack.c.l.b16 %v22
  %v161 = vunpack.c.l.b16 %v23
  %v162 = vunpack.c.l.b16 %v24
  %v163 = vunpack.c.l.b16 %v25
  %v164 = vunpack.c.l.b16 %v26
  %v165 = vunpack.c.l.b16 %v27
  %v166 = vunpack.c.l.b16 %v28
  %v167 = vunpack.c.l.b16 %v29
  %v168 = vunpack.c.l.b16 %v30
  %v169 = vunpack.c.l.b16 %v31
  %v170 = vunpack.c.l.b16 %v32
  %v171 = vunpack.c.l.b16 %v33
  %v172 = vunpack.c.l.b16 %v34
  %v173 = vunpack.c.l.b16 %v35
  %v174 = vunpack.c.l.b16 %v36
  %v175 = vunpack.c.l.b16 %v37
  %v176 = vunpack.c.l.b16 %v38
  %v177 = vunpack.c.l.b16 %v39
  %v178 = vunpack.c.l.b16 %v40
  %v179 = vunpack.c.l.b16 %v41
  %v180 = vunpack.c.l.b16 %v42
  %v181 = vunpack.c.l.b16 %v43
  %v182 = vunpack.c.l.b16 %v44
  %v183 = vunpack.c.l.b16 %v45
  %v184 = vunpack.c.l.b16 %v46
  %v185 = vunpack.c.l.b16 %v47
  %v186 = vunpack.c.l.b16 %v48
  %v187 = vunpack.c.l.b16 %v49
  %v188 = vunpack.c.l.b16 %v50
  %v189 = vunpack.c.l.b16 %v51
  %v190 = vunpack.c.l.b16 %v52
  %v191 = vunpack.c.l.b16 %v53
  %v192 = vunpack.c.l.b16 %v54
  %v193 = vunpack.c.l.b16 %v55
  %v194 = vunpack.c.l.b16 %v56
  %v195 = vunpack.c.l.b16 %v57
  %v196 = vunpack.c.l.b16 %v58
  %v197 = vunpack.c.l.b16 %v59
  %v198 = vunpack.c.l.b16 %v60
  %v199 = vunpack.c.l.b16 %v61
  %v200 = vunpack.c.l.b16 %v62
  %v201 = vunpack.c.l.b16 %v63
  %v202 = vunpack.c.l.b16 %v64
  %v203 = vunpack.c.l.b16 %v65
  %v204 = vunpack.c.l.b16 %v66
  %v205 = vunpack.c.l.b16 %v67
  %v206 = vunpack.c.l.b16 %v68
  %v207 = vunpack.c.l.b16 %v69
  %v208 = vunpack.c.l.b16 %v70
  %v209 = vunpack.c.l.b16 %v71
  %v210 = vunpack.c.l.b16 %v72
  %v211 = vunpack.c.l.b16 %v73
  %v212 = vunpack.c.l.b16 %v74
  %v213 = vunpack.c.l.b16 %v75
  %v214 = vunpack.c.l.b16 %v76
  %v215 = vunpack.c.l.b16 %v77
  %v216 = vunpack.c.l.b16 %v78
  %v217 = vunpack.c.l.b16 %v79
  %v218 = vunpack.c.l.b16 %v80
  %v219 = vunpack.c.l.b16 %v81
  %v220 = vunpack.c.l.b16 %v82
  %v221 = vunpack.c.l.b16 %v83
  %v222 = vunpack.c.l.b16 %v84
  %v223 = vpack.c.b16 %v160, %v159
  %v224 = vpack.c.b16 %v162, %v161
  %v225 = vpack.c.b16 %v164, %v163
  %v226 = vpack.c.b16 %v166, %v165
  %v227 = vpack.c.b16 %v168, %v167
  %v228 = vpack.c.b16 %v170, %v169
  %v229 = vpack.c.b16 %v172, %v171
  %v230 = vpack.c.b16 %v174, %v173
  %v231 = vpack.c.b16 %v176, %v175
  %v232 = vpack.c.b16 %v178, %v177
  %v233 = vpack.c.b16 %v180, %v179
  %v234 = vpack.c.b16 %v182, %v181
  %v235 = vpack.c.b16 %v184, %v183
  %v236 = vpack.c.b16 %v186, %v185
  %v237 = vpack.c.b16 %v188, %v187
  %v238 = vpack.c.b16 %v190, %v189
  %v239 = vpack.c.b16 %v192, %v191
  %v240 = vpack.c.b16 %v194, %v193
  %v241 = vpack.c.b16 %v196, %v195
  %v242 = vpack.c.b16 %v198, %v197
  %v243 = vpack.c.b16 %v200, %v199
  %v244 = vpack.c.b16 %v202, %v201
  %v245 = vpack.c.b16 %v204, %v203
  %v246 = vpack.c.b16 %v206, %v205
  %v247 = vpack.c.b16 %v208, %v207
  %v248 = vpack.c.b16 %v210, %v209
  %v249 = vpack.c.b16 %v212, %v211
  %v250 = vpack.c.b16 %v214, %v213
  %v251 = vpack.c.b16 %v216, %v215
  %v252 = vpack.c.b16 %v218, %v217
  %v253 = vpack.c.b16 %v220, %v219
  %v254 = vpack.c.b16 %v222, %v221
  %v265 = vunpack.c.l.b16 %v85
  %v266 = vunpack.c.l.b16 %v86
  %v267 = vunpack.c.l.b16 %v87
  %v268 = vunpack.c.l.b16 %v88
  %v269 = vunpack.c.l.b16 %v89
  %v270 = vunpack.c.l.b16 %v90
  %v271 = vunpack.c.l.b16 %v91
  %v272 = vunpack.c.l.b16 %v92
  %v273 = vunpack.c.l.b16 %v93
  %v274 = vunpack.c.l.b16 %v94
  %v275 = vpack.c.b16 %v266, %v265
  %v276 = vpack.c.b16 %v268, %v267
  %v277 = vpack.c.b16 %v270, %v269
  %v278 = vpack.c.b16 %v272, %v271
  %v279 = vpack.c.b16 %v274, %v273
  %vm285 = vcmask 654336
  %v287 = vsel %vm285, %v223, 0
  %v290 = vsel %vm285, %v224, 0
  %v293 = vsel %vm285, %v225, 0
  %v296 = vsel %vm285, %v226, 0
  %v299 = vsel %vm285, %v227, 0
  %v302 = vsel %vm285, %v228, 0
  %v305 = vsel %vm285, %v229, 0
  %v308 = vsel %vm285, %v230, 0
  %v311 = vsel %vm285, %v231, 0
  %v314 = vsel %vm285, %v232, 0
  %v317 = vsel %vm285, %v233, 0
  %v320 = vsel %vm285, %v234, 0
  %v323 = vsel %vm285, %v235, 0
  %v326 = vsel %vm285, %v236, 0
  %v329 = vsel %vm285, %v237, 0
  %v332 = vsel %vm285, %v238, 0
  %v335 = vsel %vm285, %v239, 0
  %v338 = vsel %vm285, %v240, 0
  %v341 = vsel %vm285, %v241, 0
  %v344 = vsel %vm285, %v242, 0
  %v347 = vsel %vm285, %v243, 0
  %v350 = vsel %vm285, %v244, 0
  %v353 = vsel %vm285, %v245, 0
  %v356 = vsel %vm285, %v246, 0
  %v359 = vsel %vm285, %v247, 0
  %v362 = vsel %vm285, %v248, 0
  %v365 = vsel %vm285, %v249, 0
  %v368 = vsel %vm285, %v250, 0
  %v371 = vsel %vm285, %v251, 0
  %v374 = vsel %vm285, %v252, 0
  %v377 = vsel %vm285, %v253, 0
  %v380 = vsel %vm285, %v254, 0
  %382 = vmatprep.subr.bf16.mxu0 0
  %383 = vmatpush1.bf16.msra.mxu0 %v275
  %384 = vmatprep.subr.bf16.mxu0 0
  %385 = vmatpush1.bf16.msra.mxu0 %v276
  %386 = vmatprep.subr.bf16.mxu0 0
  %387 = vmatpush1.bf16.msra.mxu0 %v277
  %388 = vmatprep.subr.bf16.mxu0 0
  %389 = vmatpush1.bf16.msra.mxu0 %v278
  %390 = vmatprep.subr.bf16.mxu0 0
  %391 = vmatpush1.bf16.msra.mxu0 %v279
  %392 = vmatprep.subr.bf16.mxu0 0
  %393 = vmatpush1.bf16.msra.mxu0 0
  %394 = vmatprep.subr.bf16.mxu0 0
  %395 = vmatpush1.bf16.msra.mxu0 0
  %396 = vmatprep.subr.bf16.mxu0 0
  %397 = vmatpush1.bf16.msra.mxu0 0
  %398 = vmatprep.subr.bf16.mxu0 0
  %399 = vmatpush1.bf16.msra.mxu0 0
  %400 = vmatprep.subr.bf16.mxu0 0
  %401 = vmatpush1.bf16.msra.mxu0 0
  %402 = vmatprep.subr.bf16.mxu0 0
  %403 = vmatpush1.bf16.msra.mxu0 0
  %404 = vmatprep.subr.bf16.mxu0 0
  %405 = vmatpush1.bf16.msra.mxu0 0
  %406 = vmatprep.subr.bf16.mxu0 0
  %407 = vmatpush1.bf16.msra.mxu0 0
  %408 = vmatprep.subr.bf16.mxu0 0
  %409 = vmatpush1.bf16.msra.mxu0 0
  %410 = vmatprep.subr.bf16.mxu0 0
  %411 = vmatpush1.bf16.msra.mxu0 0
  %412 = vmatprep.subr.bf16.mxu0 0
  %413 = vmatpush1.bf16.msra.mxu0 0
  %414 = vmatprep.mubr.bf16.mxu0 0
  %415 = vmatmul.mubr.bf16.gmra.mrb[0].mxu0 %v287
  %v416 = vpop.f32.mrb[0].mxu0
  %v417 = vadd.f32 0.0, %v416
  %v418 = vpop.f32.mrb[0].mxu0
  %v419 = vpop.f32.mrb[0].mxu0
  %v420 = vadd.f32 0.0, %v419
  %v421 = vpop.f32.mrb[0].mxu0
  %422 = vmatprep.mubr.bf16.mxu0 0
  %423 = vmatmul.mubr.bf16.gmra.mrb[0].mxu0 %v290
  %v424 = vpop.f32.mrb[0].mxu0
  %v425 = vadd.f32 0.0, %v424
  %v426 = vpop.f32.mrb[0].mxu0
  %v427 = vpop.f32.mrb[0].mxu0
  %v428 = vadd.f32 0.0, %v427
  %v429 = vpop.f32.mrb[0].mxu0
  %430 = vmatprep.mubr.bf16.mxu0 0
  %431 = vmatmul.mubr.bf16.gmra.mrb[0].mxu0 %v293
  %v432 = vpop.f32.mrb[0].mxu0
  %v433 = vadd.f32 0.0, %v432
  %v434 = vpop.f32.mrb[0].mxu0
  %v435 = vpop.f32.mrb[0].mxu0
  %v436 = vadd.f32 0.0, %v435
  %v437 = vpop.f32.mrb[0].mxu0
  %438 = vmatprep.mubr.bf16.mxu0 0
  %439 = vmatmul.mubr.bf16.gmra.mrb[0].mxu0 %v296
  %v440 = vpop.f32.mrb[0].mxu0
  %v441 = vadd.f32 0.0, %v440
  %v442 = vpop.f32.mrb[0].mxu0
  %v443 = vpop.f32.mrb[0].mxu0
  %v444 = vadd.f32 0.0, %v443
  %v445 = vpop.f32.mrb[0].mxu0
  %446 = vmatprep.mubr.bf16.mxu0 0
  %447 = vmatmul.mubr.bf16.gmra.mrb[0].mxu0 %v299
  %v448 = vpop.f32.mrb[0].mxu0
  %v449 = vadd.f32 0.0, %v448
  %v450 = vpop.f32.mrb[0].mxu0
  %v451 = vpop.f32.mrb[0].mxu0
  %v452 = vadd.f32 0.0, %v451
  %v453 = vpop.f32.mrb[0].mxu0
  %454 = vmatprep.mubr.bf16.mxu0 0
  %455 = vmatmul.mubr.bf16.gmra.mrb[0].mxu0 %v302
  %v456 = vpop.f32.mrb[0].mxu0
  %v457 = vadd.f32 0.0, %v456
  %v458 = vpop.f32.mrb[0].mxu0
  %v459 = vpop.f32.mrb[0].mxu0
  %v460 = vadd.f32 0.0, %v459
  %v461 = vpop.f32.mrb[0].mxu0
  %462 = vmatprep.mubr.bf16.mxu0 0
  %463 = vmatmul.mubr.bf16.gmra.mrb[0].mxu0 %v305
  %v464 = vpop.f32.mrb[0].mxu0
  %v465 = vadd.f32 0.0, %v464
  %v466 = vpop.f32.mrb[0].mxu0
  %v467 = vpop.f32.mrb[0].mxu0
  %v468 = vadd.f32 0.0, %v467
  %v469 = vpop.f32.mrb[0].mxu0
  %470 = vmatprep.mubr.bf16.mxu0 0
  %471 = vmatmul.mubr.bf16.gmra.mrb[0].mxu0 %v308
  %v472 = vpop.f32.mrb[0].mxu0
  %v473 = vadd.f32 0.0, %v472
  %v474 = vpop.f32.mrb[0].mxu0
  %v475 = vpop.f32.mrb[0].mxu0
  %v476 = vadd.f32 0.0, %v475
  %v477 = vpop.f32.mrb[0].mxu0
  %478 = vmatprep.mubr.bf16.mxu0 0
  %479 = vmatmul.mubr.bf16.gmra.mrb[0].mxu0 %v311
  %v480 = vpop.f32.mrb[0].mxu0
  %v481 = vadd.f32 0.0, %v480
  %v482 = vpop.f32.mrb[0].mxu0
  %v483 = vpop.f32.mrb[0].mxu0
  %v484 = vadd.f32 0.0, %v483
  %v485 = vpop.f32.mrb[0].mxu0
  %486 = vmatprep.mubr.bf16.mxu0 0
  %487 = vmatmul.mubr.bf16.gmra.mrb[0].mxu0 %v314
  %v488 = vpop.f32.mrb[0].mxu0
  %v489 = vadd.f32 0.0, %v488
  %v490 = vpop.f32.mrb[0].mxu0
  %v491 = vpop.f32.mrb[0].mxu0
  %v492 = vadd.f32 0.0, %v491
  %v493 = vpop.f32.mrb[0].mxu0
  %494 = vmatprep.mubr.bf16.mxu0 0
  %495 = vmatmul.mubr.bf16.gmra.mrb[0].mxu0 %v317
  %v496 = vpop.f32.mrb[0].mxu0
  %v497 = vadd.f32 0.0, %v496
  %v498 = vpop.f32.mrb[0].mxu0
  %v499 = vpop.f32.mrb[0].mxu0
  %v500 = vadd.f32 0.0, %v499
  %v501 = vpop.f32.mrb[0].mxu0
  %502 = vmatprep.mubr.bf16.mxu0 0
  %503 = vmatmul.mubr.bf16.gmra.mrb[0].mxu0 %v320
  %v504 = vpop.f32.mrb[0].mxu0
  %v505 = vadd.f32 0.0, %v504
  %v506 = vpop.f32.mrb[0].mxu0
  %v507 = vpop.f32.mrb[0].mxu0
  %v508 = vadd.f32 0.0, %v507
  %v509 = vpop.f32.mrb[0].mxu0
  %510 = vmatprep.mubr.bf16.mxu0 0
  %511 = vmatmul.mubr.bf16.gmra.mrb[0].mxu0 %v323
  %v512 = vpop.f32.mrb[0].mxu0
  %v513 = vadd.f32 0.0, %v512
  %v514 = vpop.f32.mrb[0].mxu0
  %v515 = vpop.f32.mrb[0].mxu0
  %v516 = vadd.f32 0.0, %v515
  %v517 = vpop.f32.mrb[0].mxu0
  %518 = vmatprep.mubr.bf16.mxu0 0
  %519 = vmatmul.mubr.bf16.gmra.mrb[0].mxu0 %v326
  %v520 = vpop.f32.mrb[0].mxu0
  %v521 = vadd.f32 0.0, %v520
  %v522 = vpop.f32.mrb[0].mxu0
  %v523 = vpop.f32.mrb[0].mxu0
  %v524 = vadd.f32 0.0, %v523
  %v525 = vpop.f32.mrb[0].mxu0
  %526 = vmatprep.mubr.bf16.mxu0 0
  %527 = vmatmul.mubr.bf16.gmra.mrb[0].mxu0 %v329
  %v528 = vpop.f32.mrb[0].mxu0
  %v529 = vadd.f32 0.0, %v528
  %v530 = vpop.f32.mrb[0].mxu0
  %v531 = vpop.f32.mrb[0].mxu0
  %v532 = vadd.f32 0.0, %v531
  %v533 = vpop.f32.mrb[0].mxu0
  %534 = vmatprep.mubr.bf16.mxu0 0
  %535 = vmatmul.mubr.bf16.gmra.mrb[0].mxu0 %v332
  %v536 = vpop.f32.mrb[0].mxu0
  %v537 = vadd.f32 0.0, %v536
  %v538 = vpop.f32.mrb[0].mxu0
  %v539 = vpop.f32.mrb[0].mxu0
  %v540 = vadd.f32 0.0, %v539
  %v541 = vpop.f32.mrb[0].mxu0
  %542 = vmatprep.mubr.bf16.mxu0 0
  %543 = vmatmul.mubr.bf16.gmra.mrb[0].mxu0 %v335
  %v544 = vpop.f32.mrb[0].mxu0
  %v545 = vadd.f32 0.0, %v544
  %v546 = vpop.f32.mrb[0].mxu0
  %v547 = vpop.f32.mrb[0].mxu0
  %v548 = vadd.f32 0.0, %v547
  %v549 = vpop.f32.mrb[0].mxu0
  %550 = vmatprep.mubr.bf16.mxu0 0
  %551 = vmatmul.mubr.bf16.gmra.mrb[0].mxu0 %v338
  %v552 = vpop.f32.mrb[0].mxu0
  %v553 = vadd.f32 0.0, %v552
  %v554 = vpop.f32.mrb[0].mxu0
  %v555 = vpop.f32.mrb[0].mxu0
  %v556 = vadd.f32 0.0, %v555
  %v557 = vpop.f32.mrb[0].mxu0
  %558 = vmatprep.mubr.bf16.mxu0 0
  %559 = vmatmul.mubr.bf16.gmra.mrb[0].mxu0 %v341
  %v560 = vpop.f32.mrb[0].mxu0
  %v561 = vadd.f32 0.0, %v560
  %v562 = vpop.f32.mrb[0].mxu0
  %v563 = vpop.f32.mrb[0].mxu0
  %v564 = vadd.f32 0.0, %v563
  %v565 = vpop.f32.mrb[0].mxu0
  %566 = vmatprep.mubr.bf16.mxu0 0
  %567 = vmatmul.mubr.bf16.gmra.mrb[0].mxu0 %v344
  %v568 = vpop.f32.mrb[0].mxu0
  %v569 = vadd.f32 0.0, %v568
  %v570 = vpop.f32.mrb[0].mxu0
  %v571 = vpop.f32.mrb[0].mxu0
  %v572 = vadd.f32 0.0, %v571
  %v573 = vpop.f32.mrb[0].mxu0
  %574 = vmatprep.mubr.bf16.mxu0 0
  %575 = vmatmul.mubr.bf16.gmra.mrb[0].mxu0 %v347
  %v576 = vpop.f32.mrb[0].mxu0
  %v577 = vadd.f32 0.0, %v576
  %v578 = vpop.f32.mrb[0].mxu0
  %v579 = vpop.f32.mrb[0].mxu0
  %v580 = vadd.f32 0.0, %v579
  %v581 = vpop.f32.mrb[0].mxu0
  %582 = vmatprep.mubr.bf16.mxu0 0
  %583 = vmatmul.mubr.bf16.gmra.mrb[0].mxu0 %v350
  %v584 = vpop.f32.mrb[0].mxu0
  %v585 = vadd.f32 0.0, %v584
  %v586 = vpop.f32.mrb[0].mxu0
  %v587 = vpop.f32.mrb[0].mxu0
  %v588 = vadd.f32 0.0, %v587
  %v589 = vpop.f32.mrb[0].mxu0
  %590 = vmatprep.mubr.bf16.mxu0 0
  %591 = vmatmul.mubr.bf16.gmra.mrb[0].mxu0 %v353
  %v592 = vpop.f32.mrb[0].mxu0
  %v593 = vadd.f32 0.0, %v592
  %v594 = vpop.f32.mrb[0].mxu0
  %v595 = vpop.f32.mrb[0].mxu0
  %v596 = vadd.f32 0.0, %v595
  %v597 = vpop.f32.mrb[0].mxu0
  %598 = vmatprep.mubr.bf16.mxu0 0
  %599 = vmatmul.mubr.bf16.gmra.mrb[0].mxu0 %v356
  %v600 = vpop.f32.mrb[0].mxu0
  %v601 = vadd.f32 0.0, %v600
  %v602 = vpop.f32.mrb[0].mxu0
  %v603 = vpop.f32.mrb[0].mxu0
  %v604 = vadd.f32 0.0, %v603
  %v605 = vpop.f32.mrb[0].mxu0
  %606 = vmatprep.mubr.bf16.mxu0 0
  %607 = vmatmul.mubr.bf16.gmra.mrb[0].mxu0 %v359
  %v608 = vpop.f32.mrb[0].mxu0
  %v609 = vadd.f32 0.0, %v608
  %v610 = vpop.f32.mrb[0].mxu0
  %v611 = vpop.f32.mrb[0].mxu0
  %v612 = vadd.f32 0.0, %v611
  %v613 = vpop.f32.mrb[0].mxu0
  %614 = vmatprep.mubr.bf16.mxu0 0
  %615 = vmatmul.mubr.bf16.gmra.mrb[0].mxu0 %v362
  %v616 = vpop.f32.mrb[0].mxu0
  %v617 = vadd.f32 0.0, %v616
  %v618 = vpop.f32.mrb[0].mxu0
  %v619 = vpop.f32.mrb[0].mxu0
  %v620 = vadd.f32 0.0, %v619
  %v621 = vpop.f32.mrb[0].mxu0
  %622 = vmatprep.mubr.bf16.mxu0 0
  %623 = vmatmul.mubr.bf16.gmra.mrb[0].mxu0 %v365
  %v624 = vpop.f32.mrb[0].mxu0
  %v625 = vadd.f32 0.0, %v624
  %v626 = vpop.f32.mrb[0].mxu0
  %v627 = vpop.f32.mrb[0].mxu0
  %v628 = vadd.f32 0.0, %v627
  %v629 = vpop.f32.mrb[0].mxu0
  %630 = vmatprep.mubr.bf16.mxu0 0
  %631 = vmatmul.mubr.bf16.gmra.mrb[0].mxu0 %v368
  %v632 = vpop.f32.mrb[0].mxu0
  %v633 = vadd.f32 0.0, %v632
  %v634 = vpop.f32.mrb[0].mxu0
  %v635 = vpop.f32.mrb[0].mxu0
  %v636 = vadd.f32 0.0, %v635
  %v637 = vpop.f32.mrb[0].mxu0
  %638 = vmatprep.mubr.bf16.mxu0 0
  %639 = vmatmul.mubr.bf16.gmra.mrb[0].mxu0 %v371
  %v640 = vpop.f32.mrb[0].mxu0
  %v641 = vadd.f32 0.0, %v640
  %v642 = vpop.f32.mrb[0].mxu0
  %v643 = vpop.f32.mrb[0].mxu0
  %v644 = vadd.f32 0.0, %v643
  %v645 = vpop.f32.mrb[0].mxu0
  %646 = vmatprep.mubr.bf16.mxu0 0
  %647 = vmatmul.mubr.bf16.gmra.mrb[0].mxu0 %v374
  %v648 = vpop.f32.mrb[0].mxu0
  %v649 = vadd.f32 0.0, %v648
  %v650 = vpop.f32.mrb[0].mxu0
  %v651 = vpop.f32.mrb[0].mxu0
  %v652 = vadd.f32 0.0, %v651
  %v653 = vpop.f32.mrb[0].mxu0
  %654 = vmatprep.mubr.bf16.mxu0 0
  %655 = vmatmul.mubr.bf16.gmra.mrb[0].mxu0 %v377
  %v656 = vpop.f32.mrb[0].mxu0
  %v657 = vadd.f32 0.0, %v656
  %v658 = vpop.f32.mrb[0].mxu0
  %v659 = vpop.f32.mrb[0].mxu0
  %v660 = vadd.f32 0.0, %v659
  %v661 = vpop.f32.mrb[0].mxu0
  %662 = vmatprep.mubr.bf16.mxu0 0
  %663 = vmatmul.mubr.bf16.gmra.mrb[0].mxu0 %v380
  %v664 = vpop.f32.mrb[0].mxu0
  %v665 = vadd.f32 0.0, %v664
  %v666 = vpop.f32.mrb[0].mxu0
  %v667 = vpop.f32.mrb[0].mxu0
  %v668 = vadd.f32 0.0, %v667
  %v669 = vpop.f32.mrb[0].mxu0
  %670 = vdwg.mxu0
  %v671 = vadd.f32 %v417, %v420
  %v672 = vadd.f32 %v671, %v425
  %v673 = vadd.f32 %v672, %v428
  %v674 = vadd.f32 %v673, %v433
  %v675 = vadd.f32 %v674, %v436
  %v676 = vadd.f32 %v675, %v441
  %v677 = vadd.f32 %v676, %v444
  %v678 = vadd.f32 %v677, %v449
  %v679 = vadd.f32 %v678, %v452
  %v680 = vadd.f32 %v679, %v457
  %v681 = vadd.f32 %v680, %v460
  %v682 = vadd.f32 %v681, %v465
  %v683 = vadd.f32 %v682, %v468
  %v684 = vadd.f32 %v683, %v473
  %v685 = vadd.f32 %v684, %v476
  %v686 = vadd.f32 %v685, %v481
  %v687 = vadd.f32 %v686, %v484
  %v688 = vadd.f32 %v687, %v489
  %v689 = vadd.f32 %v688, %v492
  %v690 = vadd.f32 %v689, %v497
  %v691 = vadd.f32 %v690, %v500
  %v692 = vadd.f32 %v691, %v505
  %v693 = vadd.f32 %v692, %v508
  %v694 = vadd.f32 %v693, %v513
  %v695 = vadd.f32 %v694, %v516
  %v696 = vadd.f32 %v695, %v521
  %v697 = vadd.f32 %v696, %v524
  %v698 = vadd.f32 %v697, %v529
  %v699 = vadd.f32 %v698, %v532
  %v700 = vadd.f32 %v699, %v537
  %v701 = vadd.f32 %v700, %v540
  %v702 = vadd.f32 %v701, %v545
  %v703 = vadd.f32 %v702, %v548
  %v704 = vadd.f32 %v703, %v553
  %v705 = vadd.f32 %v704, %v556
  %v706 = vadd.f32 %v705, %v561
  %v707 = vadd.f32 %v706, %v564
  %v708 = vadd.f32 %v707, %v569
  %v709 = vadd.f32 %v708, %v572
  %v710 = vadd.f32 %v709, %v577
  %v711 = vadd.f32 %v710, %v580
  %v712 = vadd.f32 %v711, %v585
  %v713 = vadd.f32 %v712, %v588
  %v714 = vadd.f32 %v713, %v593
  %v715 = vadd.f32 %v714, %v596
  %v716 = vadd.f32 %v715, %v601
  %v717 = vadd.f32 %v716, %v604
  %v718 = vadd.f32 %v717, %v609
  %v719 = vadd.f32 %v718, %v612
  %v720 = vadd.f32 %v719, %v617
  %v721 = vadd.f32 %v720, %v620
  %v722 = vadd.f32 %v721, %v625
  %v723 = vadd.f32 %v722, %v628
  %v724 = vadd.f32 %v723, %v633
  %v725 = vadd.f32 %v724, %v636
  %v726 = vadd.f32 %v725, %v641
  %v727 = vadd.f32 %v726, %v644
  %v728 = vadd.f32 %v727, %v649
  %v729 = vadd.f32 %v728, %v652
  %v730 = vadd.f32 %v729, %v657
  %v731 = vadd.f32 %v730, %v660
  %v732 = vadd.f32 %v731, %v665
  %v733 = vadd.f32 %v732, %v668
  %v734 = vrot.slane %v733, 4
  %v735 = vadd.f32 %v733, %v734
  %v736 = vrot.slane %v735, 2
  %v737 = vadd.f32 %v735, %v736
  %v738 = vrot.slane %v737, 1
  %v739 = vadd.f32 %v737, %v738
  %v740 = vmul.f32 %v417, %v417
  %v741 = vmul.f32 %v420, %v420
  %v742 = vmul.f32 %v425, %v425
  %v743 = vmul.f32 %v428, %v428
  %v744 = vmul.f32 %v433, %v433
  %v745 = vmul.f32 %v436, %v436
  %v746 = vmul.f32 %v441, %v441
  %v747 = vmul.f32 %v444, %v444
  %v748 = vmul.f32 %v449, %v449
  %v749 = vmul.f32 %v452, %v452
  %v750 = vmul.f32 %v457, %v457
  %v751 = vmul.f32 %v460, %v460
  %v752 = vmul.f32 %v465, %v465
  %v753 = vmul.f32 %v468, %v468
  %v754 = vmul.f32 %v473, %v473
  %v755 = vmul.f32 %v476, %v476
  %v756 = vmul.f32 %v481, %v481
  %v757 = vmul.f32 %v484, %v484
  %v758 = vmul.f32 %v489, %v489
  %v759 = vmul.f32 %v492, %v492
  %v760 = vmul.f32 %v497, %v497
  %v761 = vmul.f32 %v500, %v500
  %v762 = vmul.f32 %v505, %v505
  %v763 = vmul.f32 %v508, %v508
  %v764 = vmul.f32 %v513, %v513
  %v765 = vmul.f32 %v516, %v516
  %v766 = vmul.f32 %v521, %v521
  %v767 = vmul.f32 %v524, %v524
  %v768 = vmul.f32 %v529, %v529
  %v769 = vmul.f32 %v532, %v532
  %v770 = vmul.f32 %v537, %v537
  %v771 = vmul.f32 %v540, %v540
  %v772 = vmul.f32 %v545, %v545
  %v773 = vmul.f32 %v548, %v548
  %v774 = vmul.f32 %v553, %v553
  %v775 = vmul.f32 %v556, %v556
  %v776 = vmul.f32 %v561, %v561
  %v777 = vmul.f32 %v564, %v564
  %v778 = vmul.f32 %v569, %v569
  %v779 = vmul.f32 %v572, %v572
  %v780 = vmul.f32 %v577, %v577
  %v781 = vmul.f32 %v580, %v580
  %v782 = vmul.f32 %v585, %v585
  %v783 = vmul.f32 %v588, %v588
  %v784 = vmul.f32 %v593, %v593
  %v785 = vmul.f32 %v596, %v596
  %v786 = vmul.f32 %v601, %v601
  %v787 = vmul.f32 %v604, %v604
  %v788 = vmul.f32 %v609, %v609
  %v789 = vmul.f32 %v612, %v612
  %v790 = vmul.f32 %v617, %v617
  %v791 = vmul.f32 %v620, %v620
  %v792 = vmul.f32 %v625, %v625
  %v793 = vmul.f32 %v628, %v628
  %v794 = vmul.f32 %v633, %v633
  %v795 = vmul.f32 %v636, %v636
  %v796 = vmul.f32 %v641, %v641
  %v797 = vmul.f32 %v644, %v644
  %v798 = vmul.f32 %v649, %v649
  %v799 = vmul.f32 %v652, %v652
  %v800 = vmul.f32 %v657, %v657
  %v801 = vmul.f32 %v660, %v660
  %v802 = vmul.f32 %v665, %v665
  %v803 = vmul.f32 %v668, %v668
  %v804 = vadd.f32 %v740, %v741
  %v805 = vadd.f32 %v804, %v742
  %v806 = vadd.f32 %v805, %v743
  %v807 = vadd.f32 %v806, %v744
  %v808 = vadd.f32 %v807, %v745
  %v809 = vadd.f32 %v808, %v746
  %v810 = vadd.f32 %v809, %v747
  %v811 = vadd.f32 %v810, %v748
  %v812 = vadd.f32 %v811, %v749
  %v813 = vadd.f32 %v812, %v750
  %v814 = vadd.f32 %v813, %v751
  %v815 = vadd.f32 %v814, %v752
  %v816 = vadd.f32 %v815, %v753
  %v817 = vadd.f32 %v816, %v754
  %v818 = vadd.f32 %v817, %v755
  %v819 = vadd.f32 %v818, %v756
  %v820 = vadd.f32 %v819, %v757
  %v821 = vadd.f32 %v820, %v758
  %v822 = vadd.f32 %v821, %v759
  %v823 = vadd.f32 %v822, %v760
  %v824 = vadd.f32 %v823, %v761
  %v825 = vadd.f32 %v824, %v762
  %v826 = vadd.f32 %v825, %v763
  %v827 = vadd.f32 %v826, %v764
  %v828 = vadd.f32 %v827, %v765
  %v829 = vadd.f32 %v828, %v766
  %v830 = vadd.f32 %v829, %v767
  %v831 = vadd.f32 %v830, %v768
  %v832 = vadd.f32 %v831, %v769
  %v833 = vadd.f32 %v832, %v770
  %v834 = vadd.f32 %v833, %v771
  %v835 = vadd.f32 %v834, %v772
  %v836 = vadd.f32 %v835, %v773
  %v837 = vadd.f32 %v836, %v774
  %v838 = vadd.f32 %v837, %v775
  %v839 = vadd.f32 %v838, %v776
  %v840 = vadd.f32 %v839, %v777
  %v841 = vadd.f32 %v840, %v778
  %v842 = vadd.f32 %v841, %v779
  %v843 = vadd.f32 %v842, %v780
  %v844 = vadd.f32 %v843, %v781
  %v845 = vadd.f32 %v844, %v782
  %v846 = vadd.f32 %v845, %v783
  %v847 = vadd.f32 %v846, %v784
  %v848 = vadd.f32 %v847, %v785
  %v849 = vadd.f32 %v848, %v786
  %v850 = vadd.f32 %v849, %v787
  %v851 = vadd.f32 %v850, %v788
  %v852 = vadd.f32 %v851, %v789
  %v853 = vadd.f32 %v852, %v790
  %v854 = vadd.f32 %v853, %v791
  %v855 = vadd.f32 %v854, %v792
  %v856 = vadd.f32 %v855, %v793
  %v857 = vadd.f32 %v856, %v794
  %v858 = vadd.f32 %v857, %v795
  %v859 = vadd.f32 %v858, %v796
  %v860 = vadd.f32 %v859, %v797
  %v861 = vadd.f32 %v860, %v798
  %v862 = vadd.f32 %v861, %v799
  %v863 = vadd.f32 %v862, %v800
  %v864 = vadd.f32 %v863, %v801
  %v865 = vadd.f32 %v864, %v802
  %v866 = vadd.f32 %v865, %v803
  %v867 = vrot.slane %v866, 4
  %v868 = vadd.f32 %v866, %v867
  %v869 = vrot.slane %v868, 2
  %v870 = vadd.f32 %v868, %v869
  %v871 = vrot.slane %v870, 1
  %v872 = vadd.f32 %v870, %v871
  %v873 = vld [vmem:[%s4] sm:$0xff]
  %v874 = vld [vmem:[%s4 + $0x8] sm:$0xff]
  %v875 = vld [vmem:[%s4 + $0x10] sm:$0xff]
  %v876 = vld [vmem:[%s4 + $0x18] sm:$0xff]
  %v877 = vld [vmem:[%s4 + $0x20] sm:$0xff]
  %v878 = vld [vmem:[%s4 + $0x28] sm:$0xff]
  %v879 = vld [vmem:[%s4 + $0x30] sm:$0xff]
  %v880 = vld [vmem:[%s4 + $0x38] sm:$0xff]
  %v881 = vld [vmem:[%s4 + $0x40] sm:$0xff]
  %v882 = vld [vmem:[%s4 + $0x48] sm:$0xff]
  %v883 = vld [vmem:[%s4 + $0x50] sm:$0xff]
  %v884 = vld [vmem:[%s4 + $0x58] sm:$0xff]
  %v885 = vld [vmem:[%s4 + $0x60] sm:$0xff]
  %v886 = vld [vmem:[%s4 + $0x68] sm:$0xff]
  %v887 = vld [vmem:[%s4 + $0x70] sm:$0xff]
  %v888 = vld [vmem:[%s4 + $0x78] sm:$0xff]
  %889 = vmatprep.subr.mxu0 0.0
  %890 = vmatpush1.msra.mxu0 %v873
  %891 = vmatprep.subr.mxu0 0.0
  %892 = vmatpush1.msra.mxu0 %v874
  %893 = vmatprep.subr.mxu0 0.0
  %894 = vmatpush1.msra.mxu0 %v875
  %895 = vmatprep.subr.mxu0 0.0
  %896 = vmatpush1.msra.mxu0 %v876
  %897 = vmatprep.subr.mxu0 0.0
  %898 = vmatpush1.msra.mxu0 %v877
  %899 = vmatprep.subr.mxu0 0.0
  %900 = vmatpush1.msra.mxu0 %v878
  %901 = vmatprep.subr.mxu0 0.0
  %902 = vmatpush1.msra.mxu0 %v879
  %903 = vmatprep.subr.mxu0 0.0
  %904 = vmatpush1.msra.mxu0 %v880
  %905 = vmatprep.subr.mxu0 0.0
  %906 = vmatpush1.msra.mxu0 %v881
  %907 = vmatprep.subr.mxu0 0.0
  %908 = vmatpush1.msra.mxu0 %v882
  %909 = vmatprep.subr.mxu0 0.0
  %910 = vmatpush1.msra.mxu0 %v883
  %911 = vmatprep.subr.mxu0 0.0
  %912 = vmatpush1.msra.mxu0 %v884
  %913 = vmatprep.subr.mxu0 0.0
  %914 = vmatpush1.msra.mxu0 %v885
  %915 = vmatprep.subr.mxu0 0.0
  %916 = vmatpush1.msra.mxu0 %v886
  %917 = vmatprep.subr.mxu0 0.0
  %918 = vmatpush1.msra.mxu0 %v887
  %919 = vmatprep.subr.mxu0 0.0
  %920 = vmatpush1.msra.mxu0 %v888
  %921 = vmatprep.subr.mxu0 0.0
  %922 = vmatpush1.msra.mxu0 0.0
  %923 = vmatprep.subr.mxu0 0.0
  %924 = vmatpush1.msra.mxu0 0.0
  %925 = vmatprep.subr.mxu0 0.0
  %926 = vmatpush1.msra.mxu0 0.0
  %927 = vmatprep.subr.mxu0 0.0
  %928 = vmatpush1.msra.mxu0 0.0
  %929 = vmatprep.subr.mxu0 0.0
  %930 = vmatpush1.msra.mxu0 0.0
  %931 = vmatprep.subr.mxu0 0.0
  %932 = vmatpush1.msra.mxu0 0.0
  %933 = vmatprep.subr.mxu0 0.0
  %934 = vmatpush1.msra.mxu0 0.0
  %935 = vmatprep.subr.mxu0 0.0
  %936 = vmatpush1.msra.mxu0 0.0
  %937 = vmatprep.subr.mxu0 0.0
  %938 = vmatpush1.msra.mxu0 0.0
  %939 = vmatprep.subr.mxu0 0.0
  %940 = vmatpush1.msra.mxu0 0.0
  %941 = vmatprep.subr.mxu0 0.0
  %942 = vmatpush1.msra.mxu0 0.0
  %943 = vmatprep.subr.mxu0 0.0
  %944 = vmatpush1.msra.mxu0 0.0
  %945 = vmatprep.subr.mxu0 0.0
  %946 = vmatpush1.msra.mxu0 0.0
  %947 = vmatprep.subr.mxu0 0.0
  %948 = vmatpush1.msra.mxu0 0.0
  %949 = vmatprep.subr.mxu0 0.0
  %950 = vmatpush1.msra.mxu0 0.0
  %951 = vmatprep.subr.mxu0 0.0
  %952 = vmatpush1.msra.mxu0 0.0
  %953 = vmatprep.mubr.f32.mxu0 0.0
  %954 = vmatmul.mubr.f32.gmra.mrb[0].mxu0 %v739
  %v955 = vpop.f32.mrb[0].mxu0
  %v956 = vadd.f32 0.0, %v955
  %v957 = vpop.f32.mrb[0].mxu0
  %958 = vdwg.mxu0
  %959 = vmatprep.subr.mxu0 0.0
  %960 = vmatpush1.msra.mxu0 %v873
  %961 = vmatprep.subr.mxu0 0.0
  %962 = vmatpush1.msra.mxu0 %v874
  %963 = vmatprep.subr.mxu0 0.0
  %964 = vmatpush1.msra.mxu0 %v875
  %965 = vmatprep.subr.mxu0 0.0
  %966 = vmatpush1.msra.mxu0 %v876
  %967 = vmatprep.subr.mxu0 0.0
  %968 = vmatpush1.msra.mxu0 %v877
  %969 = vmatprep.subr.mxu0 0.0
  %970 = vmatpush1.msra.mxu0 %v878
  %971 = vmatprep.subr.mxu0 0.0
  %972 = vmatpush1.msra.mxu0 %v879
  %973 = vmatprep.subr.mxu0 0.0
  %974 = vmatpush1.msra.mxu0 %v880
  %975 = vmatprep.subr.mxu0 0.0
  %976 = vmatpush1.msra.mxu0 %v881
  %977 = vmatprep.subr.mxu0 0.0
  %978 = vmatpush1.msra.mxu0 %v882
  %979 = vmatprep.subr.mxu0 0.0
  %980 = vmatpush1.msra.mxu0 %v883
  %981 = vmatprep.subr.mxu0 0.0
  %982 = vmatpush1.msra.mxu0 %v884
  %983 = vmatprep.subr.mxu0 0.0
  %984 = vmatpush1.msra.mxu0 %v885
  %985 = vmatprep.subr.mxu0 0.0
  %986 = vmatpush1.msra.mxu0 %v886
  %987 = vmatprep.subr.mxu0 0.0
  %988 = vmatpush1.msra.mxu0 %v887
  %989 = vmatprep.subr.mxu0 0.0
  %990 = vmatpush1.msra.mxu0 %v888
  %991 = vmatprep.subr.mxu0 0.0
  %992 = vmatpush1.msra.mxu0 0.0
  %993 = vmatprep.subr.mxu0 0.0
  %994 = vmatpush1.msra.mxu0 0.0
  %995 = vmatprep.subr.mxu0 0.0
  %996 = vmatpush1.msra.mxu0 0.0
  %997 = vmatprep.subr.mxu0 0.0
  %998 = vmatpush1.msra.mxu0 0.0
  %999 = vmatprep.subr.mxu0 0.0
  %1000 = vmatpush1.msra.mxu0 0.0
  %1001 = vmatprep.subr.mxu0 0.0
  %1002 = vmatpush1.msra.mxu0 0.0
  %1003 = vmatprep.subr.mxu0 0.0
  %1004 = vmatpush1.msra.mxu0 0.0
  %1005 = vmatprep.subr.mxu0 0.0
  %1006 = vmatpush1.msra.mxu0 0.0
  %1007 = vmatprep.subr.mxu0 0.0
  %1008 = vmatpush1.msra.mxu0 0.0
  %1009 = vmatprep.subr.mxu0 0.0
  %1010 = vmatpush1.msra.mxu0 0.0
  %1011 = vmatprep.subr.mxu0 0.0
  %1012 = vmatpush1.msra.mxu0 0.0
  %1013 = vmatprep.subr.mxu0 0.0
  %1014 = vmatpush1.msra.mxu0 0.0
  %1015 = vmatprep.subr.mxu0 0.0
  %1016 = vmatpush1.msra.mxu0 0.0
  %1017 = vmatprep.subr.mxu0 0.0
  %1018 = vmatpush1.msra.mxu0 0.0
  %1019 = vmatprep.subr.mxu0 0.0
  %1020 = vmatpush1.msra.mxu0 0.0
  %1021 = vmatprep.subr.mxu0 0.0
  %1022 = vmatpush1.msra.mxu0 0.0
  %1023 = vmatprep.mubr.f32.mxu0 0.0
  %1024 = vmatmul.mubr.f32.gmra.mrb[0].mxu0 %v872
  %v1025 = vpop.f32.mrb[0].mxu0
  %v1026 = vadd.f32 0.0, %v1025
  %v1027 = vpop.f32.mrb[0].mxu0
  %1028 = vdwg.mxu0
  %v1029 = vmul.f32 %v956, 0.00048828125
  %v1030 = vmul.f32 %v1026, 0.00048828125
  %v1031 = vmul.f32 %v1029, %v1029
  %v1032 = vsub.f32 %v1030, %v1031
  %v1033 = vld [vmem:[%s2] sm:$0x1]
  %v1034 = vadd.f32 %v1032, 1e-05
  %v1035 = vrsqrt.pop %v1034
  %v1036 = vmul.f32 %v1033, %v1035
  %v1037 = vld [vmem:[%s3] sm:$0x1]
  %v1038 = vmul.f32 %v1029, %v1036
  %v1039 = vsub.f32 %v1037, %v1038
  %v1041 = vlaneseq
  %v1042 = vshrl.u32 %v1041, 7
  %v1043 = vsub.s32 0, %v1042
  %v1044 = vrot.slane %v1036, %v1043
  %v1046 = vmul.f32 %v417, %v1044
  %v1047 = vmul.f32 %v420, %v1044
  %v1048 = vmul.f32 %v425, %v1044
  %v1049 = vmul.f32 %v428, %v1044
  %v1050 = vmul.f32 %v433, %v1044
  %v1051 = vmul.f32 %v436, %v1044
  %v1052 = vmul.f32 %v441, %v1044
  %v1053 = vmul.f32 %v444, %v1044
  %v1054 = vmul.f32 %v449, %v1044
  %v1055 = vmul.f32 %v452, %v1044
  %v1056 = vmul.f32 %v457, %v1044
  %v1057 = vmul.f32 %v460, %v1044
  %v1058 = vmul.f32 %v465, %v1044
  %v1059 = vmul.f32 %v468, %v1044
  %v1060 = vmul.f32 %v473, %v1044
  %v1061 = vmul.f32 %v476, %v1044
  %v1062 = vmul.f32 %v481, %v1044
  %v1063 = vmul.f32 %v484, %v1044
  %v1064 = vmul.f32 %v489, %v1044
  %v1065 = vmul.f32 %v492, %v1044
  %v1066 = vmul.f32 %v497, %v1044
  %v1067 = vmul.f32 %v500, %v1044
  %v1068 = vmul.f32 %v505, %v1044
  %v1069 = vmul.f32 %v508, %v1044
  %v1070 = vmul.f32 %v513, %v1044
  %v1071 = vmul.f32 %v516, %v1044
  %v1072 = vmul.f32 %v521, %v1044
  %v1073 = vmul.f32 %v524, %v1044
  %v1074 = vmul.f32 %v529, %v1044
  %v1075 = vmul.f32 %v532, %v1044
  %v1076 = vmul.f32 %v537, %v1044
  %v1077 = vmul.f32 %v540, %v1044
  %v1078 = vmul.f32 %v545, %v1044
  %v1079 = vmul.f32 %v548, %v1044
  %v1080 = vmul.f32 %v553, %v1044
  %v1081 = vmul.f32 %v556, %v1044
  %v1082 = vmul.f32 %v561, %v1044
  %v1083 = vmul.f32 %v564, %v1044
  %v1084 = vmul.f32 %v569, %v1044
  %v1085 = vmul.f32 %v572, %v1044
  %v1086 = vmul.f32 %v577, %v1044
  %v1087 = vmul.f32 %v580, %v1044
  %v1088 = vmul.f32 %v585, %v1044
  %v1089 = vmul.f32 %v588, %v1044
  %v1090 = vmul.f32 %v593, %v1044
  %v1091 = vmul.f32 %v596, %v1044
  %v1092 = vmul.f32 %v601, %v1044
  %v1093 = vmul.f32 %v604, %v1044
  %v1094 = vmul.f32 %v609, %v1044
  %v1095 = vmul.f32 %v612, %v1044
  %v1096 = vmul.f32 %v617, %v1044
  %v1097 = vmul.f32 %v620, %v1044
  %v1098 = vmul.f32 %v625, %v1044
  %v1099 = vmul.f32 %v628, %v1044
  %v1100 = vmul.f32 %v633, %v1044
  %v1101 = vmul.f32 %v636, %v1044
  %v1102 = vmul.f32 %v641, %v1044
  %v1103 = vmul.f32 %v644, %v1044
  %v1104 = vmul.f32 %v649, %v1044
  %v1105 = vmul.f32 %v652, %v1044
  %v1106 = vmul.f32 %v657, %v1044
  %v1107 = vmul.f32 %v660, %v1044
  %v1108 = vmul.f32 %v665, %v1044
  %v1109 = vmul.f32 %v668, %v1044
  %v1111 = vlaneseq
  %v1112 = vshrl.u32 %v1111, 7
  %v1113 = vsub.s32 0, %v1112
  %v1114 = vrot.slane %v1039, %v1113
  %v1116 = vadd.f32 %v1046, %v1114
  %v1117 = vadd.f32 %v1047, %v1114
  %v1118 = vadd.f32 %v1048, %v1114
  %v1119 = vadd.f32 %v1049, %v1114
  %v1120 = vadd.f32 %v1050, %v1114
  %v1121 = vadd.f32 %v1051, %v1114
  %v1122 = vadd.f32 %v1052, %v1114
  %v1123 = vadd.f32 %v1053, %v1114
  %v1124 = vadd.f32 %v1054, %v1114
  %v1125 = vadd.f32 %v1055, %v1114
  %v1126 = vadd.f32 %v1056, %v1114
  %v1127 = vadd.f32 %v1057, %v1114
  %v1128 = vadd.f32 %v1058, %v1114
  %v1129 = vadd.f32 %v1059, %v1114
  %v1130 = vadd.f32 %v1060, %v1114
  %v1131 = vadd.f32 %v1061, %v1114
  %v1132 = vadd.f32 %v1062, %v1114
  %v1133 = vadd.f32 %v1063, %v1114
  %v1134 = vadd.f32 %v1064, %v1114
  %v1135 = vadd.f32 %v1065, %v1114
  %v1136 = vadd.f32 %v1066, %v1114
  %v1137 = vadd.f32 %v1067, %v1114
  %v1138 = vadd.f32 %v1068, %v1114
  %v1139 = vadd.f32 %v1069, %v1114
  %v1140 = vadd.f32 %v1070, %v1114
  %v1141 = vadd.f32 %v1071, %v1114
  %v1142 = vadd.f32 %v1072, %v1114
  %v1143 = vadd.f32 %v1073, %v1114
  %v1144 = vadd.f32 %v1074, %v1114
  %v1145 = vadd.f32 %v1075, %v1114
  %v1146 = vadd.f32 %v1076, %v1114
  %v1147 = vadd.f32 %v1077, %v1114
  %v1148 = vadd.f32 %v1078, %v1114
  %v1149 = vadd.f32 %v1079, %v1114
  %v1150 = vadd.f32 %v1080, %v1114
  %v1151 = vadd.f32 %v1081, %v1114
  %v1152 = vadd.f32 %v1082, %v1114
  %v1153 = vadd.f32 %v1083, %v1114
  %v1154 = vadd.f32 %v1084, %v1114
  %v1155 = vadd.f32 %v1085, %v1114
  %v1156 = vadd.f32 %v1086, %v1114
  %v1157 = vadd.f32 %v1087, %v1114
  %v1158 = vadd.f32 %v1088, %v1114
  %v1159 = vadd.f32 %v1089, %v1114
  %v1160 = vadd.f32 %v1090, %v1114
  %v1161 = vadd.f32 %v1091, %v1114
  %v1162 = vadd.f32 %v1092, %v1114
  %v1163 = vadd.f32 %v1093, %v1114
  %v1164 = vadd.f32 %v1094, %v1114
  %v1165 = vadd.f32 %v1095, %v1114
  %v1166 = vadd.f32 %v1096, %v1114
  %v1167 = vadd.f32 %v1097, %v1114
  %v1168 = vadd.f32 %v1098, %v1114
  %v1169 = vadd.f32 %v1099, %v1114
  %v1170 = vadd.f32 %v1100, %v1114
  %v1171 = vadd.f32 %v1101, %v1114
  %v1172 = vadd.f32 %v1102, %v1114
  %v1173 = vadd.f32 %v1103, %v1114
  %v1174 = vadd.f32 %v1104, %v1114
  %v1175 = vadd.f32 %v1105, %v1114
  %v1176 = vadd.f32 %v1106, %v1114
  %v1177 = vadd.f32 %v1107, %v1114
  %v1178 = vadd.f32 %v1108, %v1114
  %v1179 = vadd.f32 %v1109, %v1114
  %vm1180 = vcmp.ge.f32.partialorder %v1116, 0.0
  %vm1181 = vcmp.ge.f32.partialorder %v1117, 0.0
  %vm1182 = vcmp.ge.f32.partialorder %v1118, 0.0
  %vm1183 = vcmp.ge.f32.partialorder %v1119, 0.0
  %vm1184 = vcmp.ge.f32.partialorder %v1120, 0.0
  %vm1185 = vcmp.ge.f32.partialorder %v1121, 0.0
  %vm1186 = vcmp.ge.f32.partialorder %v1122, 0.0
  %vm1187 = vcmp.ge.f32.partialorder %v1123, 0.0
  %vm1188 = vcmp.ge.f32.partialorder %v1124, 0.0
  %vm1189 = vcmp.ge.f32.partialorder %v1125, 0.0
  %vm1190 = vcmp.ge.f32.partialorder %v1126, 0.0
  %vm1191 = vcmp.ge.f32.partialorder %v1127, 0.0
  %vm1192 = vcmp.ge.f32.partialorder %v1128, 0.0
  %vm1193 = vcmp.ge.f32.partialorder %v1129, 0.0
  %vm1194 = vcmp.ge.f32.partialorder %v1130, 0.0
  %vm1195 = vcmp.ge.f32.partialorder %v1131, 0.0
  %vm1196 = vcmp.ge.f32.partialorder %v1132, 0.0
  %vm1197 = vcmp.ge.f32.partialorder %v1133, 0.0
  %vm1198 = vcmp.ge.f32.partialorder %v1134, 0.0
  %vm1199 = vcmp.ge.f32.partialorder %v1135, 0.0
  %vm1200 = vcmp.ge.f32.partialorder %v1136, 0.0
  %vm1201 = vcmp.ge.f32.partialorder %v1137, 0.0
  %vm1202 = vcmp.ge.f32.partialorder %v1138, 0.0
  %vm1203 = vcmp.ge.f32.partialorder %v1139, 0.0
  %vm1204 = vcmp.ge.f32.partialorder %v1140, 0.0
  %vm1205 = vcmp.ge.f32.partialorder %v1141, 0.0
  %vm1206 = vcmp.ge.f32.partialorder %v1142, 0.0
  %vm1207 = vcmp.ge.f32.partialorder %v1143, 0.0
  %vm1208 = vcmp.ge.f32.partialorder %v1144, 0.0
  %vm1209 = vcmp.ge.f32.partialorder %v1145, 0.0
  %vm1210 = vcmp.ge.f32.partialorder %v1146, 0.0
  %vm1211 = vcmp.ge.f32.partialorder %v1147, 0.0
  %vm1212 = vcmp.ge.f32.partialorder %v1148, 0.0
  %vm1213 = vcmp.ge.f32.partialorder %v1149, 0.0
  %vm1214 = vcmp.ge.f32.partialorder %v1150, 0.0
  %vm1215 = vcmp.ge.f32.partialorder %v1151, 0.0
  %vm1216 = vcmp.ge.f32.partialorder %v1152, 0.0
  %vm1217 = vcmp.ge.f32.partialorder %v1153, 0.0
  %vm1218 = vcmp.ge.f32.partialorder %v1154, 0.0
  %vm1219 = vcmp.ge.f32.partialorder %v1155, 0.0
  %vm1220 = vcmp.ge.f32.partialorder %v1156, 0.0
  %vm1221 = vcmp.ge.f32.partialorder %v1157, 0.0
  %vm1222 = vcmp.ge.f32.partialorder %v1158, 0.0
  %vm1223 = vcmp.ge.f32.partialorder %v1159, 0.0
  %vm1224 = vcmp.ge.f32.partialorder %v1160, 0.0
  %vm1225 = vcmp.ge.f32.partialorder %v1161, 0.0
  %vm1226 = vcmp.ge.f32.partialorder %v1162, 0.0
  %vm1227 = vcmp.ge.f32.partialorder %v1163, 0.0
  %vm1228 = vcmp.ge.f32.partialorder %v1164, 0.0
  %vm1229 = vcmp.ge.f32.partialorder %v1165, 0.0
  %vm1230 = vcmp.ge.f32.partialorder %v1166, 0.0
  %vm1231 = vcmp.ge.f32.partialorder %v1167, 0.0
  %vm1232 = vcmp.ge.f32.partialorder %v1168, 0.0
  %vm1233 = vcmp.ge.f32.partialorder %v1169, 0.0
  %vm1234 = vcmp.ge.f32.partialorder %v1170, 0.0
  %vm1235 = vcmp.ge.f32.partialorder %v1171, 0.0
  %vm1236 = vcmp.ge.f32.partialorder %v1172, 0.0
  %vm1237 = vcmp.ge.f32.partialorder %v1173, 0.0
  %vm1238 = vcmp.ge.f32.partialorder %v1174, 0.0
  %vm1239 = vcmp.ge.f32.partialorder %v1175, 0.0
  %vm1240 = vcmp.ge.f32.partialorder %v1176, 0.0
  %vm1241 = vcmp.ge.f32.partialorder %v1177, 0.0
  %vm1242 = vcmp.ge.f32.partialorder %v1178, 0.0
  %vm1243 = vcmp.ge.f32.partialorder %v1179, 0.0
  %v1244 = vmul.f32 %v1116, 0.2
  %v1245 = vmul.f32 %v1117, 0.2
  %v1246 = vmul.f32 %v1118, 0.2
  %v1247 = vmul.f32 %v1119, 0.2
  %v1248 = vmul.f32 %v1120, 0.2
  %v1249 = vmul.f32 %v1121, 0.2
  %v1250 = vmul.f32 %v1122, 0.2
  %v1251 = vmul.f32 %v1123, 0.2
  %v1252 = vmul.f32 %v1124, 0.2
  %v1253 = vmul.f32 %v1125, 0.2
  %v1254 = vmul.f32 %v1126, 0.2
  %v1255 = vmul.f32 %v1127, 0.2
  %v1256 = vmul.f32 %v1128, 0.2
  %v1257 = vmul.f32 %v1129, 0.2
  %v1258 = vmul.f32 %v1130, 0.2
  %v1259 = vmul.f32 %v1131, 0.2
  %v1260 = vmul.f32 %v1132, 0.2
  %v1261 = vmul.f32 %v1133, 0.2
  %v1262 = vmul.f32 %v1134, 0.2
  %v1263 = vmul.f32 %v1135, 0.2
  %v1264 = vmul.f32 %v1136, 0.2
  %v1265 = vmul.f32 %v1137, 0.2
  %v1266 = vmul.f32 %v1138, 0.2
  %v1267 = vmul.f32 %v1139, 0.2
  %v1268 = vmul.f32 %v1140, 0.2
  %v1269 = vmul.f32 %v1141, 0.2
  %v1270 = vmul.f32 %v1142, 0.2
  %v1271 = vmul.f32 %v1143, 0.2
  %v1272 = vmul.f32 %v1144, 0.2
  %v1273 = vmul.f32 %v1145, 0.2
  %v1274 = vmul.f32 %v1146, 0.2
  %v1275 = vmul.f32 %v1147, 0.2
  %v1276 = vmul.f32 %v1148, 0.2
  %v1277 = vmul.f32 %v1149, 0.2
  %v1278 = vmul.f32 %v1150, 0.2
  %v1279 = vmul.f32 %v1151, 0.2
  %v1280 = vmul.f32 %v1152, 0.2
  %v1281 = vmul.f32 %v1153, 0.2
  %v1282 = vmul.f32 %v1154, 0.2
  %v1283 = vmul.f32 %v1155, 0.2
  %v1284 = vmul.f32 %v1156, 0.2
  %v1285 = vmul.f32 %v1157, 0.2
  %v1286 = vmul.f32 %v1158, 0.2
  %v1287 = vmul.f32 %v1159, 0.2
  %v1288 = vmul.f32 %v1160, 0.2
  %v1289 = vmul.f32 %v1161, 0.2
  %v1290 = vmul.f32 %v1162, 0.2
  %v1291 = vmul.f32 %v1163, 0.2
  %v1292 = vmul.f32 %v1164, 0.2
  %v1293 = vmul.f32 %v1165, 0.2
  %v1294 = vmul.f32 %v1166, 0.2
  %v1295 = vmul.f32 %v1167, 0.2
  %v1296 = vmul.f32 %v1168, 0.2
  %v1297 = vmul.f32 %v1169, 0.2
  %v1298 = vmul.f32 %v1170, 0.2
  %v1299 = vmul.f32 %v1171, 0.2
  %v1300 = vmul.f32 %v1172, 0.2
  %v1301 = vmul.f32 %v1173, 0.2
  %v1302 = vmul.f32 %v1174, 0.2
  %v1303 = vmul.f32 %v1175, 0.2
  %v1304 = vmul.f32 %v1176, 0.2
  %v1305 = vmul.f32 %v1177, 0.2
  %v1306 = vmul.f32 %v1178, 0.2
  %v1307 = vmul.f32 %v1179, 0.2
  %v1308 = vsel %vm1180, %v1116, %v1244
  %v1309 = vsel %vm1181, %v1117, %v1245
  %v1310 = vsel %vm1182, %v1118, %v1246
  %v1311 = vsel %vm1183, %v1119, %v1247
  %v1312 = vsel %vm1184, %v1120, %v1248
  %v1313 = vsel %vm1185, %v1121, %v1249
  %v1314 = vsel %vm1186, %v1122, %v1250
  %v1315 = vsel %vm1187, %v1123, %v1251
  %v1316 = vsel %vm1188, %v1124, %v1252
  %v1317 = vsel %vm1189, %v1125, %v1253
  %v1318 = vsel %vm1190, %v1126, %v1254
  %v1319 = vsel %vm1191, %v1127, %v1255
  %v1320 = vsel %vm1192, %v1128, %v1256
  %v1321 = vsel %vm1193, %v1129, %v1257
  %v1322 = vsel %vm1194, %v1130, %v1258
  %v1323 = vsel %vm1195, %v1131, %v1259
  %v1324 = vsel %vm1196, %v1132, %v1260
  %v1325 = vsel %vm1197, %v1133, %v1261
  %v1326 = vsel %vm1198, %v1134, %v1262
  %v1327 = vsel %vm1199, %v1135, %v1263
  %v1328 = vsel %vm1200, %v1136, %v1264
  %v1329 = vsel %vm1201, %v1137, %v1265
  %v1330 = vsel %vm1202, %v1138, %v1266
  %v1331 = vsel %vm1203, %v1139, %v1267
  %v1332 = vsel %vm1204, %v1140, %v1268
  %v1333 = vsel %vm1205, %v1141, %v1269
  %v1334 = vsel %vm1206, %v1142, %v1270
  %v1335 = vsel %vm1207, %v1143, %v1271
  %v1336 = vsel %vm1208, %v1144, %v1272
  %v1337 = vsel %vm1209, %v1145, %v1273
  %v1338 = vsel %vm1210, %v1146, %v1274
  %v1339 = vsel %vm1211, %v1147, %v1275
  %v1340 = vsel %vm1212, %v1148, %v1276
  %v1341 = vsel %vm1213, %v1149, %v1277
  %v1342 = vsel %vm1214, %v1150, %v1278
  %v1343 = vsel %vm1215, %v1151, %v1279
  %v1344 = vsel %vm1216, %v1152, %v1280
  %v1345 = vsel %vm1217, %v1153, %v1281
  %v1346 = vsel %vm1218, %v1154, %v1282
  %v1347 = vsel %vm1219, %v1155, %v1283
  %v1348 = vsel %vm1220, %v1156, %v1284
  %v1349 = vsel %vm1221, %v1157, %v1285
  %v1350 = vsel %vm1222, %v1158, %v1286
  %v1351 = vsel %vm1223, %v1159, %v1287
  %v1352 = vsel %vm1224, %v1160, %v1288
  %v1353 = vsel %vm1225, %v1161, %v1289
  %v1354 = vsel %vm1226, %v1162, %v1290
  %v1355 = vsel %vm1227, %v1163, %v1291
  %v1356 = vsel %vm1228, %v1164, %v1292
  %v1357 = vsel %vm1229, %v1165, %v1293
  %v1358 = vsel %vm1230, %v1166, %v1294
  %v1359 = vsel %vm1231, %v1167, %v1295
  %v1360 = vsel %vm1232, %v1168, %v1296
  %v1361 = vsel %vm1233, %v1169, %v1297
  %v1362 = vsel %vm1234, %v1170, %v1298
  %v1363 = vsel %vm1235, %v1171, %v1299
  %v1364 = vsel %vm1236, %v1172, %v1300
  %v1365 = vsel %vm1237, %v1173, %v1301
  %v1366 = vsel %vm1238, %v1174, %v1302
  %v1367 = vsel %vm1239, %v1175, %v1303
  %v1368 = vsel %vm1240, %v1176, %v1304
  %v1369 = vsel %vm1241, %v1177, %v1305
  %v1370 = vsel %vm1242, %v1178, %v1306
  %v1371 = vsel %vm1243, %v1179, %v1307
  %v1372 = vxor.u32 %v1308, 2147483648
  %v1373 = vxor.u32 %v1309, 2147483648
  %v1374 = vxor.u32 %v1310, 2147483648
  %v1375 = vxor.u32 %v1311, 2147483648
  %v1376 = vxor.u32 %v1312, 2147483648
  %v1377 = vxor.u32 %v1313, 2147483648
  %v1378 = vxor.u32 %v1314, 2147483648
  %v1379 = vxor.u32 %v1315, 2147483648
  %v1380 = vxor.u32 %v1316, 2147483648
  %v1381 = vxor.u32 %v1317, 2147483648
  %v1382 = vxor.u32 %v1318, 2147483648
  %v1383 = vxor.u32 %v1319, 2147483648
  %v1384 = vxor.u32 %v1320, 2147483648
  %v1385 = vxor.u32 %v1321, 2147483648
  %v1386 = vxor.u32 %v1322, 2147483648
  %v1387 = vxor.u32 %v1323, 2147483648
  %v1388 = vxor.u32 %v1324, 2147483648
  %v1389 = vxor.u32 %v1325, 2147483648
  %v1390 = vxor.u32 %v1326, 2147483648
  %v1391 = vxor.u32 %v1327, 2147483648
  %v1392 = vxor.u32 %v1328, 2147483648
  %v1393 = vxor.u32 %v1329, 2147483648
  %v1394 = vxor.u32 %v1330, 2147483648
  %v1395 = vxor.u32 %v1331, 2147483648
  %v1396 = vxor.u32 %v1332, 2147483648
  %v1397 = vxor.u32 %v1333, 2147483648
  %v1398 = vxor.u32 %v1334, 2147483648
  %v1399 = vxor.u32 %v1335, 2147483648
  %v1400 = vxor.u32 %v1336, 2147483648
  %v1401 = vxor.u32 %v1337, 2147483648
  %v1402 = vxor.u32 %v1338, 2147483648
  %v1403 = vxor.u32 %v1339, 2147483648
  %v1404 = vxor.u32 %v1340, 2147483648
  %v1405 = vxor.u32 %v1341, 2147483648
  %v1406 = vxor.u32 %v1342, 2147483648
  %v1407 = vxor.u32 %v1343, 2147483648
  %v1408 = vxor.u32 %v1344, 2147483648
  %v1409 = vxor.u32 %v1345, 2147483648
  %v1410 = vxor.u32 %v1346, 2147483648
  %v1411 = vxor.u32 %v1347, 2147483648
  %v1412 = vxor.u32 %v1348, 2147483648
  %v1413 = vxor.u32 %v1349, 2147483648
  %v1414 = vxor.u32 %v1350, 2147483648
  %v1415 = vxor.u32 %v1351, 2147483648
  %v1416 = vxor.u32 %v1352, 2147483648
  %v1417 = vxor.u32 %v1353, 2147483648
  %v1418 = vxor.u32 %v1354, 2147483648
  %v1419 = vxor.u32 %v1355, 2147483648
  %v1420 = vxor.u32 %v1356, 2147483648
  %v1421 = vxor.u32 %v1357, 2147483648
  %v1422 = vxor.u32 %v1358, 2147483648
  %v1423 = vxor.u32 %v1359, 2147483648
  %v1424 = vxor.u32 %v1360, 2147483648
  %v1425 = vxor.u32 %v1361, 2147483648
  %v1426 = vxor.u32 %v1362, 2147483648
  %v1427 = vxor.u32 %v1363, 2147483648
  %v1428 = vxor.u32 %v1364, 2147483648
  %v1429 = vxor.u32 %v1365, 2147483648
  %v1430 = vxor.u32 %v1366, 2147483648
  %v1431 = vxor.u32 %v1367, 2147483648
  %v1432 = vxor.u32 %v1368, 2147483648
  %v1433 = vxor.u32 %v1369, 2147483648
  %v1434 = vxor.u32 %v1370, 2147483648
  %v1435 = vxor.u32 %v1371, 2147483648
  %v1436 = vmul.f32 %v1372, 1.442695
  %v1437 = vpow.pop %v1436
  %v1438 = vmul.f32 %v1373, 1.442695
  %v1439 = vpow.pop %v1438
  %v1440 = vmul.f32 %v1374, 1.442695
  %v1441 = vpow.pop %v1440
  %v1442 = vmul.f32 %v1375, 1.442695
  %v1443 = vpow.pop %v1442
  %v1444 = vmul.f32 %v1376, 1.442695
  %v1445 = vpow.pop %v1444
  %v1446 = vmul.f32 %v1377, 1.442695
  %v1447 = vpow.pop %v1446
  %v1448 = vmul.f32 %v1378, 1.442695
  %v1449 = vpow.pop %v1448
  %v1450 = vmul.f32 %v1379, 1.442695
  %v1451 = vpow.pop %v1450
  %v1452 = vmul.f32 %v1380, 1.442695
  %v1453 = vpow.pop %v1452
  %v1454 = vmul.f32 %v1381, 1.442695
  %v1455 = vpow.pop %v1454
  %v1456 = vmul.f32 %v1382, 1.442695
  %v1457 = vpow.pop %v1456
  %v1458 = vmul.f32 %v1383, 1.442695
  %v1459 = vpow.pop %v1458
  %v1460 = vmul.f32 %v1384, 1.442695
  %v1461 = vpow.pop %v1460
  %v1462 = vmul.f32 %v1385, 1.442695
  %v1463 = vpow.pop %v1462
  %v1464 = vmul.f32 %v1386, 1.442695
  %v1465 = vpow.pop %v1464
  %v1466 = vmul.f32 %v1387, 1.442695
  %v1467 = vpow.pop %v1466
  %v1468 = vmul.f32 %v1388, 1.442695
  %v1469 = vpow.pop %v1468
  %v1470 = vmul.f32 %v1389, 1.442695
  %v1471 = vpow.pop %v1470
  %v1472 = vmul.f32 %v1390, 1.442695
  %v1473 = vpow.pop %v1472
  %v1474 = vmul.f32 %v1391, 1.442695
  %v1475 = vpow.pop %v1474
  %v1476 = vmul.f32 %v1392, 1.442695
  %v1477 = vpow.pop %v1476
  %v1478 = vmul.f32 %v1393, 1.442695
  %v1479 = vpow.pop %v1478
  %v1480 = vmul.f32 %v1394, 1.442695
  %v1481 = vpow.pop %v1480
  %v1482 = vmul.f32 %v1395, 1.442695
  %v1483 = vpow.pop %v1482
  %v1484 = vmul.f32 %v1396, 1.442695
  %v1485 = vpow.pop %v1484
  %v1486 = vmul.f32 %v1397, 1.442695
  %v1487 = vpow.pop %v1486
  %v1488 = vmul.f32 %v1398, 1.442695
  %v1489 = vpow.pop %v1488
  %v1490 = vmul.f32 %v1399, 1.442695
  %v1491 = vpow.pop %v1490
  %v1492 = vmul.f32 %v1400, 1.442695
  %v1493 = vpow.pop %v1492
  %v1494 = vmul.f32 %v1401, 1.442695
  %v1495 = vpow.pop %v1494
  %v1496 = vmul.f32 %v1402, 1.442695
  %v1497 = vpow.pop %v1496
  %v1498 = vmul.f32 %v1403, 1.442695
  %v1499 = vpow.pop %v1498
  %v1500 = vmul.f32 %v1404, 1.442695
  %v1501 = vpow.pop %v1500
  %v1502 = vmul.f32 %v1405, 1.442695
  %v1503 = vpow.pop %v1502
  %v1504 = vmul.f32 %v1406, 1.442695
  %v1505 = vpow.pop %v1504
  %v1506 = vmul.f32 %v1407, 1.442695
  %v1507 = vpow.pop %v1506
  %v1508 = vmul.f32 %v1408, 1.442695
  %v1509 = vpow.pop %v1508
  %v1510 = vmul.f32 %v1409, 1.442695
  %v1511 = vpow.pop %v1510
  %v1512 = vmul.f32 %v1410, 1.442695
  %v1513 = vpow.pop %v1512
  %v1514 = vmul.f32 %v1411, 1.442695
  %v1515 = vpow.pop %v1514
  %v1516 = vmul.f32 %v1412, 1.442695
  %v1517 = vpow.pop %v1516
  %v1518 = vmul.f32 %v1413, 1.442695
  %v1519 = vpow.pop %v1518
  %v1520 = vmul.f32 %v1414, 1.442695
  %v1521 = vpow.pop %v1520
  %v1522 = vmul.f32 %v1415, 1.442695
  %v1523 = vpow.pop %v1522
  %v1524 = vmul.f32 %v1416, 1.442695
  %v1525 = vpow.pop %v1524
  %v1526 = vmul.f32 %v1417, 1.442695
  %v1527 = vpow.pop %v1526
  %v1528 = vmul.f32 %v1418, 1.442695
  %v1529 = vpow.pop %v1528
  %v1530 = vmul.f32 %v1419, 1.442695
  %v1531 = vpow.pop %v1530
  %v1532 = vmul.f32 %v1420, 1.442695
  %v1533 = vpow.pop %v1532
  %v1534 = vmul.f32 %v1421, 1.442695
  %v1535 = vpow.pop %v1534
  %v1536 = vmul.f32 %v1422, 1.442695
  %v1537 = vpow.pop %v1536
  %v1538 = vmul.f32 %v1423, 1.442695
  %v1539 = vpow.pop %v1538
  %v1540 = vmul.f32 %v1424, 1.442695
  %v1541 = vpow.pop %v1540
  %v1542 = vmul.f32 %v1425, 1.442695
  %v1543 = vpow.pop %v1542
  %v1544 = vmul.f32 %v1426, 1.442695
  %v1545 = vpow.pop %v1544
  %v1546 = vmul.f32 %v1427, 1.442695
  %v1547 = vpow.pop %v1546
  %v1548 = vmul.f32 %v1428, 1.442695
  %v1549 = vpow.pop %v1548
  %v1550 = vmul.f32 %v1429, 1.442695
  %v1551 = vpow.pop %v1550
  %v1552 = vmul.f32 %v1430, 1.442695
  %v1553 = vpow.pop %v1552
  %v1554 = vmul.f32 %v1431, 1.442695
  %v1555 = vpow.pop %v1554
  %v1556 = vmul.f32 %v1432, 1.442695
  %v1557 = vpow.pop %v1556
  %v1558 = vmul.f32 %v1433, 1.442695
  %v1559 = vpow.pop %v1558
  %v1560 = vmul.f32 %v1434, 1.442695
  %v1561 = vpow.pop %v1560
  %v1562 = vmul.f32 %v1435, 1.442695
  %v1563 = vpow.pop %v1562
  %v1564 = vadd.f32 %v1437, 1.0
  %v1565 = vadd.f32 %v1439, 1.0
  %v1566 = vadd.f32 %v1441, 1.0
  %v1567 = vadd.f32 %v1443, 1.0
  %v1568 = vadd.f32 %v1445, 1.0
  %v1569 = vadd.f32 %v1447, 1.0
  %v1570 = vadd.f32 %v1449, 1.0
  %v1571 = vadd.f32 %v1451, 1.0
  %v1572 = vadd.f32 %v1453, 1.0
  %v1573 = vadd.f32 %v1455, 1.0
  %v1574 = vadd.f32 %v1457, 1.0
  %v1575 = vadd.f32 %v1459, 1.0
  %v1576 = vadd.f32 %v1461, 1.0
  %v1577 = vadd.f32 %v1463, 1.0
  %v1578 = vadd.f32 %v1465, 1.0
  %v1579 = vadd.f32 %v1467, 1.0
  %v1580 = vadd.f32 %v1469, 1.0
  %v1581 = vadd.f32 %v1471, 1.0
  %v1582 = vadd.f32 %v1473, 1.0
  %v1583 = vadd.f32 %v1475, 1.0
  %v1584 = vadd.f32 %v1477, 1.0
  %v1585 = vadd.f32 %v1479, 1.0
  %v1586 = vadd.f32 %v1481, 1.0
  %v1587 = vadd.f32 %v1483, 1.0
  %v1588 = vadd.f32 %v1485, 1.0
  %v1589 = vadd.f32 %v1487, 1.0
  %v1590 = vadd.f32 %v1489, 1.0
  %v1591 = vadd.f32 %v1491, 1.0
  %v1592 = vadd.f32 %v1493, 1.0
  %v1593 = vadd.f32 %v1495, 1.0
  %v1594 = vadd.f32 %v1497, 1.0
  %v1595 = vadd.f32 %v1499, 1.0
  %v1596 = vadd.f32 %v1501, 1.0
  %v1597 = vadd.f32 %v1503, 1.0
  %v1598 = vadd.f32 %v1505, 1.0
  %v1599 = vadd.f32 %v1507, 1.0
  %v1600 = vadd.f32 %v1509, 1.0
  %v1601 = vadd.f32 %v1511, 1.0
  %v1602 = vadd.f32 %v1513, 1.0
  %v1603 = vadd.f32 %v1515, 1.0
  %v1604 = vadd.f32 %v1517, 1.0
  %v1605 = vadd.f32 %v1519, 1.0
  %v1606 = vadd.f32 %v1521, 1.0
  %v1607 = vadd.f32 %v1523, 1.0
  %v1608 = vadd.f32 %v1525, 1.0
  %v1609 = vadd.f32 %v1527, 1.0
  %v1610 = vadd.f32 %v1529, 1.0
  %v1611 = vadd.f32 %v1531, 1.0
  %v1612 = vadd.f32 %v1533, 1.0
  %v1613 = vadd.f32 %v1535, 1.0
  %v1614 = vadd.f32 %v1537, 1.0
  %v1615 = vadd.f32 %v1539, 1.0
  %v1616 = vadd.f32 %v1541, 1.0
  %v1617 = vadd.f32 %v1543, 1.0
  %v1618 = vadd.f32 %v1545, 1.0
  %v1619 = vadd.f32 %v1547, 1.0
  %v1620 = vadd.f32 %v1549, 1.0
  %v1621 = vadd.f32 %v1551, 1.0
  %v1622 = vadd.f32 %v1553, 1.0
  %v1623 = vadd.f32 %v1555, 1.0
  %v1624 = vadd.f32 %v1557, 1.0
  %v1625 = vadd.f32 %v1559, 1.0
  %v1626 = vadd.f32 %v1561, 1.0
  %v1627 = vadd.f32 %v1563, 1.0
  %v1628 = vrcp.pop %v1564
  %v1629 = vmul.f32 1.0, %v1628
  %v1630 = vrcp.pop %v1565
  %v1631 = vmul.f32 1.0, %v1630
  %v1632 = vrcp.pop %v1566
  %v1633 = vmul.f32 1.0, %v1632
  %v1634 = vrcp.pop %v1567
  %v1635 = vmul.f32 1.0, %v1634
  %v1636 = vrcp.pop %v1568
  %v1637 = vmul.f32 1.0, %v1636
  %v1638 = vrcp.pop %v1569
  %v1639 = vmul.f32 1.0, %v1638
  %v1640 = vrcp.pop %v1570
  %v1641 = vmul.f32 1.0, %v1640
  %v1642 = vrcp.pop %v1571
  %v1643 = vmul.f32 1.0, %v1642
  %v1644 = vrcp.pop %v1572
  %v1645 = vmul.f32 1.0, %v1644
  %v1646 = vrcp.pop %v1573
  %v1647 = vmul.f32 1.0, %v1646
  %v1648 = vrcp.pop %v1574
  %v1649 = vmul.f32 1.0, %v1648
  %v1650 = vrcp.pop %v1575
  %v1651 = vmul.f32 1.0, %v1650
  %v1652 = vrcp.pop %v1576
  %v1653 = vmul.f32 1.0, %v1652
  %v1654 = vrcp.pop %v1577
  %v1655 = vmul.f32 1.0, %v1654
  %v1656 = vrcp.pop %v1578
  %v1657 = vmul.f32 1.0, %v1656
  %v1658 = vrcp.pop %v1579
  %v1659 = vmul.f32 1.0, %v1658
  %v1660 = vrcp.pop %v1580
  %v1661 = vmul.f32 1.0, %v1660
  %v1662 = vrcp.pop %v1581
  %v1663 = vmul.f32 1.0, %v1662
  %v1664 = vrcp.pop %v1582
  %v1665 = vmul.f32 1.0, %v1664
  %v1666 = vrcp.pop %v1583
  %v1667 = vmul.f32 1.0, %v1666
  %v1668 = vrcp.pop %v1584
  %v1669 = vmul.f32 1.0, %v1668
  %v1670 = vrcp.pop %v1585
  %v1671 = vmul.f32 1.0, %v1670
  %v1672 = vrcp.pop %v1586
  %v1673 = vmul.f32 1.0, %v1672
  %v1674 = vrcp.pop %v1587
  %v1675 = vmul.f32 1.0, %v1674
  %v1676 = vrcp.pop %v1588
  %v1677 = vmul.f32 1.0, %v1676
  %v1678 = vrcp.pop %v1589
  %v1679 = vmul.f32 1.0, %v1678
  %v1680 = vrcp.pop %v1590
  %v1681 = vmul.f32 1.0, %v1680
  %v1682 = vrcp.pop %v1591
  %v1683 = vmul.f32 1.0, %v1682
  %v1684 = vrcp.pop %v1592
  %v1685 = vmul.f32 1.0, %v1684
  %v1686 = vrcp.pop %v1593
  %v1687 = vmul.f32 1.0, %v1686
  %v1688 = vrcp.pop %v1594
  %v1689 = vmul.f32 1.0, %v1688
  %v1690 = vrcp.pop %v1595
  %v1691 = vmul.f32 1.0, %v1690
  %v1692 = vrcp.pop %v1596
  %v1693 = vmul.f32 1.0, %v1692
  %v1694 = vrcp.pop %v1597
  %v1695 = vmul.f32 1.0, %v1694
  %v1696 = vrcp.pop %v1598
  %v1697 = vmul.f32 1.0, %v1696
  %v1698 = vrcp.pop %v1599
  %v1699 = vmul.f32 1.0, %v1698
  %v1700 = vrcp.pop %v1600
  %v1701 = vmul.f32 1.0, %v1700
  %v1702 = vrcp.pop %v1601
  %v1703 = vmul.f32 1.0, %v1702
  %v1704 = vrcp.pop %v1602
  %v1705 = vmul.f32 1.0, %v1704
  %v1706 = vrcp.pop %v1603
  %v1707 = vmul.f32 1.0, %v1706
  %v1708 = vrcp.pop %v1604
  %v1709 = vmul.f32 1.0, %v1708
  %v1710 = vrcp.pop %v1605
  %v1711 = vmul.f32 1.0, %v1710
  %v1712 = vrcp.pop %v1606
  %v1713 = vmul.f32 1.0, %v1712
  %v1714 = vrcp.pop %v1607
  %v1715 = vmul.f32 1.0, %v1714
  %v1716 = vrcp.pop %v1608
  %v1717 = vmul.f32 1.0, %v1716
  %v1718 = vrcp.pop %v1609
  %v1719 = vmul.f32 1.0, %v1718
  %v1720 = vrcp.pop %v1610
  %v1721 = vmul.f32 1.0, %v1720
  %v1722 = vrcp.pop %v1611
  %v1723 = vmul.f32 1.0, %v1722
  %v1724 = vrcp.pop %v1612
  %v1725 = vmul.f32 1.0, %v1724
  %v1726 = vrcp.pop %v1613
  %v1727 = vmul.f32 1.0, %v1726
  %v1728 = vrcp.pop %v1614
  %v1729 = vmul.f32 1.0, %v1728
  %v1730 = vrcp.pop %v1615
  %v1731 = vmul.f32 1.0, %v1730
  %v1732 = vrcp.pop %v1616
  %v1733 = vmul.f32 1.0, %v1732
  %v1734 = vrcp.pop %v1617
  %v1735 = vmul.f32 1.0, %v1734
  %v1736 = vrcp.pop %v1618
  %v1737 = vmul.f32 1.0, %v1736
  %v1738 = vrcp.pop %v1619
  %v1739 = vmul.f32 1.0, %v1738
  %v1740 = vrcp.pop %v1620
  %v1741 = vmul.f32 1.0, %v1740
  %v1742 = vrcp.pop %v1621
  %v1743 = vmul.f32 1.0, %v1742
  %v1744 = vrcp.pop %v1622
  %v1745 = vmul.f32 1.0, %v1744
  %v1746 = vrcp.pop %v1623
  %v1747 = vmul.f32 1.0, %v1746
  %v1748 = vrcp.pop %v1624
  %v1749 = vmul.f32 1.0, %v1748
  %v1750 = vrcp.pop %v1625
  %v1751 = vmul.f32 1.0, %v1750
  %v1752 = vrcp.pop %v1626
  %v1753 = vmul.f32 1.0, %v1752
  %v1754 = vrcp.pop %v1627
  %v1755 = vmul.f32 1.0, %v1754
  %1756 = vst [vmem:[%s5] sm:$0xff] %v1629
  %1757 = vst [vmem:[%s5 + $0x8] sm:$0xff] %v1631
  %1758 = vst [vmem:[%s5 + $0x10] sm:$0xff] %v1633
  %1759 = vst [vmem:[%s5 + $0x18] sm:$0xff] %v1635
  %1760 = vst [vmem:[%s5 + $0x20] sm:$0xff] %v1637
  %1761 = vst [vmem:[%s5 + $0x28] sm:$0xff] %v1639
  %1762 = vst [vmem:[%s5 + $0x30] sm:$0xff] %v1641
  %1763 = vst [vmem:[%s5 + $0x38] sm:$0xff] %v1643
  %1764 = vst [vmem:[%s5 + $0x40] sm:$0xff] %v1645
  %1765 = vst [vmem:[%s5 + $0x48] sm:$0xff] %v1647
  %1766 = vst [vmem:[%s5 + $0x50] sm:$0xff] %v1649
  %1767 = vst [vmem:[%s5 + $0x58] sm:$0xff] %v1651
  %1768 = vst [vmem:[%s5 + $0x60] sm:$0xff] %v1653
  %1769 = vst [vmem:[%s5 + $0x68] sm:$0xff] %v1655
  %1770 = vst [vmem:[%s5 + $0x70] sm:$0xff] %v1657
  %1771 = vst [vmem:[%s5 + $0x78] sm:$0xff] %v1659
  %1772 = vst [vmem:[%s5 + $0x80] sm:$0xff] %v1661
  %1773 = vst [vmem:[%s5 + $0x88] sm:$0xff] %v1663
  %1774 = vst [vmem:[%s5 + $0x90] sm:$0xff] %v1665
  %1775 = vst [vmem:[%s5 + $0x98] sm:$0xff] %v1667
  %1776 = vst [vmem:[%s5 + $0xa0] sm:$0xff] %v1669
  %1777 = vst [vmem:[%s5 + $0xa8] sm:$0xff] %v1671
  %1778 = vst [vmem:[%s5 + $0xb0] sm:$0xff] %v1673
  %1779 = vst [vmem:[%s5 + $0xb8] sm:$0xff] %v1675
  %1780 = vst [vmem:[%s5 + $0xc0] sm:$0xff] %v1677
  %1781 = vst [vmem:[%s5 + $0xc8] sm:$0xff] %v1679
  %1782 = vst [vmem:[%s5 + $0xd0] sm:$0xff] %v1681
  %1783 = vst [vmem:[%s5 + $0xd8] sm:$0xff] %v1683
  %1784 = vst [vmem:[%s5 + $0xe0] sm:$0xff] %v1685
  %1785 = vst [vmem:[%s5 + $0xe8] sm:$0xff] %v1687
  %1786 = vst [vmem:[%s5 + $0xf0] sm:$0xff] %v1689
  %1787 = vst [vmem:[%s5 + $0xf8] sm:$0xff] %v1691
  %1788 = vst [vmem:[%s5 + $0x100] sm:$0xff] %v1693
  %1789 = vst [vmem:[%s5 + $0x108] sm:$0xff] %v1695
  %1790 = vst [vmem:[%s5 + $0x110] sm:$0xff] %v1697
  %1791 = vst [vmem:[%s5 + $0x118] sm:$0xff] %v1699
  %1792 = vst [vmem:[%s5 + $0x120] sm:$0xff] %v1701
  %1793 = vst [vmem:[%s5 + $0x128] sm:$0xff] %v1703
  %1794 = vst [vmem:[%s5 + $0x130] sm:$0xff] %v1705
  %1795 = vst [vmem:[%s5 + $0x138] sm:$0xff] %v1707
  %1796 = vst [vmem:[%s5 + $0x140] sm:$0xff] %v1709
  %1797 = vst [vmem:[%s5 + $0x148] sm:$0xff] %v1711
  %1798 = vst [vmem:[%s5 + $0x150] sm:$0xff] %v1713
  %1799 = vst [vmem:[%s5 + $0x158] sm:$0xff] %v1715
  %1800 = vst [vmem:[%s5 + $0x160] sm:$0xff] %v1717
  %1801 = vst [vmem:[%s5 + $0x168] sm:$0xff] %v1719
  %1802 = vst [vmem:[%s5 + $0x170] sm:$0xff] %v1721
  %1803 = vst [vmem:[%s5 + $0x178] sm:$0xff] %v1723
  %1804 = vst [vmem:[%s5 + $0x180] sm:$0xff] %v1725
  %1805 = vst [vmem:[%s5 + $0x188] sm:$0xff] %v1727
  %1806 = vst [vmem:[%s5 + $0x190] sm:$0xff] %v1729
  %1807 = vst [vmem:[%s5 + $0x198] sm:$0xff] %v1731
  %1808 = vst [vmem:[%s5 + $0x1a0] sm:$0xff] %v1733
  %1809 = vst [vmem:[%s5 + $0x1a8] sm:$0xff] %v1735
  %1810 = vst [vmem:[%s5 + $0x1b0] sm:$0xff] %v1737
  %1811 = vst [vmem:[%s5 + $0x1b8] sm:$0xff] %v1739
  %1812 = vst [vmem:[%s5 + $0x1c0] sm:$0xff] %v1741
  %1813 = vst [vmem:[%s5 + $0x1c8] sm:$0xff] %v1743
  %1814 = vst [vmem:[%s5 + $0x1d0] sm:$0xff] %v1745
  %1815 = vst [vmem:[%s5 + $0x1d8] sm:$0xff] %v1747
  %1816 = vst [vmem:[%s5 + $0x1e0] sm:$0xff] %v1749
  %1817 = vst [vmem:[%s5 + $0x1e8] sm:$0xff] %v1751
  %1818 = vst [vmem:[%s5 + $0x1f0] sm:$0xff] %v1753
  %1819 = vst [vmem:[%s5 + $0x1f8] sm:$0xff] %v1755
  // Predicated region
  $region22: #{net_forward.15} parent=0 // pred_check
    _
  $region23: #{net_forward.15} parent=0 // pred_check_branch
    %1821 = sbr.rel (0) target = $region25
  $region24: #{net_forward.15} parent=0 // pred_region
    _
  $region25: #{net_forward.15} parent=0 // pred_fallthru
    _
  // Predicated region
  $region26: #{net_forward.15} parent=0 // pred_check
    _
  $region27: #{net_forward.15} parent=0 // pred_check_branch
    %1823 = sbr.rel (0) target = $region29
  $region28: #{net_forward.15} parent=0 // pred_region
    _
  $region29: #{net_forward.15} parent=0 // pred_fallthru
    _

</llo_original>
